<compile_context>
chip_gen: v6e
topology: v6e:2x2x1
jax: 0.10.0
libtpu: 0.0.40
codegen_flags: <defaults>
</compile_context>

<pallas_src>
import functools

import jax
import jax.numpy as jnp
from jax import lax
from jax.experimental import pallas as pl

# ----------------------------- small ViT config -----------------------------
PATCH = 4            # patch size ("ViT-H/14" -> /4 here)
IMG = 16             # image height = width
GRID_HW = IMG // PATCH
S = GRID_HW * GRID_HW + 1   # 17 real tokens (class token + patches)
SP = 24              # padded token count (multiple of 8 sublanes)
D = 32               # transformer width
NUM_HEADS = 4
HEAD_DIM = D // NUM_HEADS
MLP_DIM = 4 * D
L = 3                # number of residual attention blocks (>= 2)
OUT = 16             # visual projection dim (CLIP embedding dim)
NUM_FG = 3
NUM_BG = 2
LOGIT_SCALE = 100.0
NEG_BIG = -1e30


# ------------------------------ shared math ----------------------------------
def _ln(x, g, b):
    mu = jnp.mean(x, axis=-1, keepdims=True)
    xc = x - mu
    var = jnp.mean(xc * xc, axis=-1, keepdims=True)
    return xc * lax.rsqrt(var + 1e-5) * g + b


def _erf(x):
    # Abramowitz & Stegun 7.1.26 (|err| < 1.5e-7, well below the fp16 precision of the
    # reference model); only Mosaic-safe ops.
    a1, a2, a3, a4, a5 = 0.254829592, -0.284496736, 1.421413741, -1.453152027, 1.061405429
    p = 0.3275911
    sgn = jnp.where(x >= 0.0, 1.0, -1.0)
    ax = jnp.abs(x)
    t = 1.0 / (1.0 + p * ax)
    poly = ((((a5 * t + a4) * t + a3) * t + a2) * t + a1) * t
    return sgn * (1.0 - poly * jnp.exp(-ax * ax))


def _gelu(x):
    return 0.5 * x * (1.0 + _erf(x * (2.0 ** -0.5)))


def _softmax(s):
    m = jnp.max(s, axis=-1, keepdims=True)
    e = jnp.exp(s - m)
    return e / jnp.sum(e, axis=-1, keepdims=True)   # exact division (feeds carried state)


def _mxdot(a, b):
    # bf16 MXU inputs, f32 accumulation (reference model is fp16).
    return jnp.dot(a.astype(jnp.bfloat16), b.astype(jnp.bfloat16),
                   preferred_element_type=jnp.float32)


def _mxdot_nt(a, b):
    # a @ b.T (contract last dims), bf16 inputs, f32 accumulation.
    return lax.dot_general(a.astype(jnp.bfloat16), b.astype(jnp.bfloat16),
                           (((1,), (1,)), ((), ())),
                           preferred_element_type=jnp.float32)


# ------------------------- single fused forward kernel -----------------------
def _openclip_kernel(x0_ref,
                     ln1_g_ref, ln1_b_ref, wqkv_ref, bqkv_ref, wo_ref, bo_ref,
                     ln2_g_ref, ln2_b_ref, w1_ref, b1_ref, w2_ref, b2_ref,
                     hln1_g_ref, hln1_b_ref, hwv_ref, hbv_ref, hwo_ref, hbo_ref,
                     lnpost_g_ref, lnpost_b_ref, proj_ref, text_ref,
                     imgf_ref, attn_mean_ref, seg_ref,
                     *, num_blocks, num_heads, head_dim, s_real, scale, num_fg, logit_scale):
    sp, d = x0_ref.shape

    # validity masks, built once (single invocation, no grid)
    row2 = lax.broadcasted_iota(jnp.int32, (sp, sp), 0)
    col2 = lax.broadcasted_iota(jnp.int32, (sp, sp), 1)
    key_valid = col2 < s_real                                           # [SP,SP]
    ridx = lax.broadcasted_iota(jnp.int32, (sp, 1), 0)
    qrow_valid = (ridx < s_real).astype(jnp.float32)                    # [SP,1]
    patch_valid = ((ridx >= 1) & (ridx < s_real)).astype(jnp.float32)   # patch tokens only
    # Diagonal seed on pad tokens keeps the head's column/row renormalisations finite;
    # the real 17x17 block is untouched.
    eye_pad = jnp.where((row2 == col2) & (row2 >= s_real), 1.0, 0.0)

    x = x0_ref[...]                                                     # [SP,D] (post ln_pre)
    attn_sum = [eye_pad for _ in range(num_heads)]                      # per-head map sums
    feats = []

    # ------------------ first L-1 residual attention blocks ------------------
    for i in range(num_blocks):
        ln_x = _ln(x, ln1_g_ref[i], ln1_b_ref[i])
        feats.append(ln_x)                                              # fuse_feature=True

        qkv = _mxdot(ln_x, wqkv_ref[i]) + bqkv_ref[i]                   # fused QKV, [SP,3D]
        ctx_parts = []
        for h in range(num_heads):
            o = h * head_dim
            qh = qkv[:, o:o + head_dim] * scale
            kh = qkv[:, d + o:d + o + head_dim]
            vh = qkv[:, 2 * d + o:2 * d + o + head_dim]
            s = _mxdot_nt(qh, kh)                                       # [SP,SP]
            p = _softmax(jnp.where(key_valid, s, NEG_BIG))              # mask pad keys
            attn_sum[h] = attn_sum[h] + p * qrow_valid                  # exclude pad queries
            ctx_parts.append(_mxdot(p, vh))                             # [SP,head_dim]
        ctx = jnp.concatenate(ctx_parts, axis=-1)                       # heads on lane axis
        x = x + _mxdot(ctx, wo_ref[i]) + bo_ref[i]                      # residual (ls_1=Id)

        hmid = _mxdot(_ln(x, ln2_g_ref[i], ln2_b_ref[i]), w1_ref[i]) + b1_ref[i]
        x = x + _mxdot(_gelu(hmid), w2_ref[i]) + b2_ref[i]              # residual (ls_2=Id)

    feats.append(x)                                                     # last slot = raw x

    tn = text_ref[...]                                                  # pre-normalised text

    # ----------- head: in-place attn-map renorm + custom_attn + classify -----
    attn_state = attn_sum          # carries the reference's in-place /= mutations
    seg_parts = []
    w_heads = []
    for kth in range(num_blocks + 1):
        w_heads = []
        new_state = []
        for h in range(num_heads):
            a = attn_state[h]
            a = a / jnp.sum(a, axis=-2, keepdims=True)
            a = a / jnp.sum(a, axis=-1, keepdims=True)
            new_state.append(a)                                         # persists to next kth
            w = (a + a.T) * 0.5
            w = w - jnp.max(w, axis=-2, keepdims=True) * 0.2
            w = jnp.maximum(w, 0.0)
            w = w / jnp.sum(w, axis=-1, keepdims=True)
            w_heads.append(w)
        attn_state = new_state

        feat = feats[kth]
        ln_x = _ln(feat, hln1_g_ref[...], hln1_b_ref[...])
        v = _mxdot(ln_x, hwv_ref[...]) + hbv_ref[...]                   # V slice only, [SP,D]
        ctx = jnp.concatenate(
            [_mxdot(w_heads[h], v[:, h * head_dim:(h + 1) * head_dim])
             for h in range(num_heads)], axis=-1)                       # [SP,D]
        out = _mxdot(ctx, hwo_ref[...]) + hbo_ref[...] - feat           # out_proj(w@v) - feat

        y = _ln(out, lnpost_g_ref[...], lnpost_b_ref[...])              # ln_post
        img_f = _mxdot(y, proj_ref[...])                                # visual proj, [SP,OUT]
        imgf_ref[kth] = img_f

        # classify (cosine-similarity softmax); 1e-12 only guards all-zero pad rows
        xn = img_f * lax.rsqrt(jnp.sum(img_f * img_f, axis=-1, keepdims=True) + 1e-12)
        logits = logit_scale * lax.dot_general(xn, tn, (((1,), (1,)), ((), ())),
                                               preferred_element_type=jnp.float32)
        soft = _softmax(logits)
        seg_parts.append(soft[:, :num_fg] * patch_valid)                # [SP,num_fg]

    # ------------------ segmentation combine (computed exactly once) ---------
    attn_mean = sum(w_heads) * (1.0 / num_heads)                        # last kth's weights
    seg_last = seg_parts[-1]
    thr = jnp.max(seg_last, axis=0, keepdims=True) * 0.1
    seg_last = jnp.where(seg_last < thr, 0.0, seg_last)
    seg_prev = sum(seg_parts[:-1]) * (0.2 / num_blocks)
    seg_val = (jnp.dot(attn_mean, seg_last, preferred_element_type=jnp.float32)
               + seg_prev) * patch_valid
    denom = jnp.maximum(jnp.max(seg_val, axis=0, keepdims=True), 1.0)
    seg_val = seg_val / denom

    attn_mean_ref[...] = attn_mean
    seg_ref[...] = seg_val


# --------------------------------- glue --------------------------------------
def upsample_pos_emb(emb, new_size):
    n = emb.shape[0] - 1
    side = int(round(n ** 0.5))
    if new_size == (side, side):
        return emb  # bilinear interpolation to the same size is the identity
    # TODO(synk): general bilinear interpolation of positional embedding for new_size != grid.
    raise NotImplementedError("pos-emb interpolation only implemented for identity size")


def stack_block_params(blocks):
    keys = ('ln1_g', 'ln1_b', 'wqkv', 'bqkv', 'wo', 'bo',
            'ln2_g', 'ln2_b', 'w1', 'b1', 'w2', 'b2')
    return {k: jnp.stack([blk[k] for blk in blocks], axis=0) for k in keys}


def init_params(key):
    def nrm(k, shape, scale=0.02):
        return scale * jax.random.normal(k, shape, jnp.float32)

    keys = iter(jax.random.split(key, 8 * L + 16))
    params = {
        "conv_w": nrm(next(keys), (D, 3, PATCH, PATCH), 0.05),   # Conv2d(3, D, P, P, bias=False)
        "class_emb": nrm(next(keys), (D,), 0.05),
        "pos_emb": nrm(next(keys), (S, D), 0.05),
        "ln_pre": (jnp.ones((1, D), jnp.float32), jnp.zeros((1, D), jnp.float32)),
        "ln_post": (jnp.ones((1, D), jnp.float32), jnp.zeros((1, D), jnp.float32)),
        "proj": nrm(next(keys), (D, OUT), 0.05),
        "blocks": [],
    }
    for _ in range(L):
        params["blocks"].append(dict(
            ln1_g=jnp.ones((1, D), jnp.float32), ln1_b=jnp.zeros((1, D), jnp.float32),
            wqkv=nrm(next(keys), (D, 3 * D)), bqkv=nrm(next(keys), (1, 3 * D), 0.01),
            wo=nrm(next(keys), (D, D)), bo=nrm(next(keys), (1, D), 0.01),
            ln2_g=jnp.ones((1, D), jnp.float32), ln2_b=jnp.zeros((1, D), jnp.float32),
            w1=nrm(next(keys), (D, MLP_DIM)), b1=nrm(next(keys), (1, MLP_DIM), 0.01),
            w2=nrm(next(keys), (MLP_DIM, D)), b2=nrm(next(keys), (1, D), 0.01),
        ))
    return params


@jax.jit
def openclip_forward(params, img, fg_text, bg_text):
    # img: [1, 3, H, W] NCHW (PyTorch layout), float32 (ref uses fp16)
    b, c_in, h_img, w_img = img.shape
    assert b == 1, "reference .squeeze() semantics require batch=1"
    gh, gw = h_img // PATCH, w_img // PATCH
    n_patch = gh * gw
    s_real = n_patch + 1
    assert s_real <= SP

    # -------- hoisted (tiny XLA ops): patch-embed + class token + pos + ln_pre --------
    patches = img[0].reshape(c_in, gh, PATCH, gw, PATCH)
    patches = jnp.transpose(patches, (1, 3, 0, 2, 4)).reshape(n_patch, c_in * PATCH * PATCH)
    w_patch = params["conv_w"].reshape(D, c_in * PATCH * PATCH).T
    tok = patches @ w_patch
    pos = upsample_pos_emb(params["pos_emb"], (gh, gw))
    x_real = jnp.concatenate([params["class_emb"][None, :], tok], axis=0) + pos
    x_real = _ln(x_real, params["ln_pre"][0], params["ln_pre"][1])
    x0 = jnp.zeros((SP, D), jnp.float32).at[:s_real].set(x_real)

    # -------- hoisted text-feature normalisation --------
    text = jnp.concatenate([fg_text, bg_text, jnp.mean(fg_text, axis=0, keepdims=True)], axis=0)
    tn = text * lax.rsqrt(jnp.sum(text * text, axis=-1, keepdims=True))
    num_fg = fg_text.shape[0]

    stk = stack_block_params(params["blocks"][:-1])
    last = params["blocks"][-1]
    hwv = last["wqkv"][:, 2 * D:3 * D]        # only V of the last block is ever used
    hbv = last["bqkv"][:, 2 * D:3 * D]

    bf = lambda a: a.astype(jnp.bfloat16)     # matrix weights fed to the MXU as bf16

    kernel = functools.partial(
        _openclip_kernel, num_blocks=L - 1, num_heads=NUM_HEADS, head_dim=HEAD_DIM,
        s_real=s_real, scale=HEAD_DIM ** -0.5, num_fg=num_fg, logit_scale=LOGIT_SCALE)

    img_feature_p, attn_mean_p, seg_p = pl.pallas_call(
        kernel,
        out_shape=(jax.ShapeDtypeStruct((L, SP, OUT), jnp.float32),     # projected features
                   jax.ShapeDtypeStruct((SP, SP), jnp.float32),         # head-mean attn map
                   jax.ShapeDtypeStruct((SP, num_fg), jnp.float32)),    # segmentation
    )(x0,
      stk['ln1_g'], stk['ln1_b'], bf(stk['wqkv']), stk['bqkv'], bf(stk['wo']), stk['bo'],
      stk['ln2_g'], stk['ln2_b'], bf(stk['w1']), stk['b1'], bf(stk['w2']), stk['b2'],
      last['ln1_g'], last['ln1_b'], bf(hwv), hbv, bf(last['wo']), last['bo'],
      params['ln_post'][0], params['ln_post'][1], bf(params['proj']), tn)

    img_feature = img_feature_p[:, :s_real, :]                          # drop pad tokens
    attn_map = attn_mean_p[1:s_real, 1:s_real]
    seg = seg_p[1:s_real, :]

    return {"seg": seg,
            "img_part_features": img_feature,
            "mid_feature": None,
            "attn_map": attn_map}


if __name__ == "__main__":
    key = jax.random.PRNGKey(0)
    k_par, k_img, k_fg, k_bg = jax.random.split(key, 4)
    params = init_params(k_par)
    img = jax.random.normal(k_img, (1, 3, IMG, IMG), jnp.float32)
    fg_text_features = jax.random.normal(k_fg, (NUM_FG, OUT), jnp.float32)
    bg_text_features = jax.random.normal(k_bg, (NUM_BG, OUT), jnp.float32)

    out = openclip_forward(params, img, fg_text_features, bg_text_features)
    jax.block_until_ready(out)

    assert out["seg"].shape == (S - 1, NUM_FG)
    assert out["img_part_features"].shape == (L, S, OUT)
    assert out["attn_map"].shape == (S - 1, S - 1)
    for k, v in out.items():
        if v is not None:
            assert bool(jnp.all(jnp.isfinite(v))), f"non-finite values in {k}"
    print("KERNEL_OK")
</pallas_src>

<mosaic_0001>
module attributes {stable_mosaic.version = 11 : i64} {
  func.func @_openclip_kernel(%arg0: memref<24x32xf32, #tpu.memory_space<vmem>>, %arg1: memref<2x1x32xf32, #tpu.memory_space<vmem>>, %arg2: memref<2x1x32xf32, #tpu.memory_space<vmem>>, %arg3: memref<2x32x96xbf16, #tpu.memory_space<vmem>>, %arg4: memref<2x1x96xf32, #tpu.memory_space<vmem>>, %arg5: memref<2x32x32xbf16, #tpu.memory_space<vmem>>, %arg6: memref<2x1x32xf32, #tpu.memory_space<vmem>>, %arg7: memref<2x1x32xf32, #tpu.memory_space<vmem>>, %arg8: memref<2x1x32xf32, #tpu.memory_space<vmem>>, %arg9: memref<2x32x128xbf16, #tpu.memory_space<vmem>>, %arg10: memref<2x1x128xf32, #tpu.memory_space<vmem>>, %arg11: memref<2x128x32xbf16, #tpu.memory_space<vmem>>, %arg12: memref<2x1x32xf32, #tpu.memory_space<vmem>>, %arg13: memref<1x32xf32, #tpu.memory_space<vmem>>, %arg14: memref<1x32xf32, #tpu.memory_space<vmem>>, %arg15: memref<32x32xbf16, #tpu.memory_space<vmem>>, %arg16: memref<1x32xf32, #tpu.memory_space<vmem>>, %arg17: memref<32x32xbf16, #tpu.memory_space<vmem>>, %arg18: memref<1x32xf32, #tpu.memory_space<vmem>>, %arg19: memref<1x32xf32, #tpu.memory_space<vmem>>, %arg20: memref<1x32xf32, #tpu.memory_space<vmem>>, %arg21: memref<32x16xbf16, #tpu.memory_space<vmem>>, %arg22: memref<6x16xf32, #tpu.memory_space<vmem>>, %arg23: memref<3x24x16xf32, #tpu.memory_space<vmem>>, %arg24: memref<24x24xf32, #tpu.memory_space<vmem>>, %arg25: memref<24x3xf32, #tpu.memory_space<vmem>>) attributes {dimension_semantics = [], scalar_prefetch = 0 : i64, scratch_operands = 0 : i64, tpu.core_type = #tpu.core_type<tc>} {
    %0 = tpu.iota {dimensions = array<i32: 0>} : vector<24x24xi32>
    %1 = tpu.iota {dimensions = array<i32: 1>} : vector<24x24xi32>
    %c17_i32 = arith.constant 17 : i32
    %2 = vector.broadcast %c17_i32 : i32 to vector<24x24xi32>
    %3 = arith.cmpi slt, %1, %2 : vector<24x24xi32>
    %4 = tpu.iota {dimensions = array<i32: 0>} : vector<24x1xi32>
    %c17_i32_0 = arith.constant 17 : i32
    %5 = vector.broadcast %c17_i32_0 : i32 to vector<24x1xi32>
    %6 = arith.cmpi slt, %4, %5 : vector<24x1xi32>
    %7 = arith.extui %6 : vector<24x1xi1> to vector<24x1xi32>
    %8 = arith.sitofp %7 : vector<24x1xi32> to vector<24x1xf32>
    %c1_i32 = arith.constant 1 : i32
    %9 = vector.broadcast %c1_i32 : i32 to vector<24x1xi32>
    %10 = arith.cmpi sge, %4, %9 : vector<24x1xi32>
    %c17_i32_1 = arith.constant 17 : i32
    %11 = vector.broadcast %c17_i32_1 : i32 to vector<24x1xi32>
    %12 = arith.cmpi slt, %4, %11 : vector<24x1xi32>
    %13 = arith.andi %10, %12 : vector<24x1xi1>
    %14 = arith.extui %13 : vector<24x1xi1> to vector<24x1xi32>
    %15 = arith.sitofp %14 : vector<24x1xi32> to vector<24x1xf32>
    %16 = arith.cmpi eq, %0, %1 : vector<24x24xi32>
    %c17_i32_2 = arith.constant 17 : i32
    %17 = vector.broadcast %c17_i32_2 : i32 to vector<24x24xi32>
    %18 = arith.cmpi sge, %0, %17 : vector<24x24xi32>
    %19 = arith.andi %16, %18 : vector<24x24xi1>
    %cst = arith.constant 1.000000e+00 : f32
    %cst_3 = arith.constant 0.000000e+00 : f32
    %20 = vector.broadcast %cst : f32 to vector<24x24xf32>
    %21 = vector.broadcast %cst_3 : f32 to vector<24x24xf32>
    %22 = arith.select %19, %20, %21 : vector<24x24xi1>, vector<24x24xf32>
    %c0 = arith.constant 0 : index
    %c0_4 = arith.constant 0 : index
    %23 = vector.load %arg0[%c0, %c0_4] : memref<24x32xf32, #tpu.memory_space<vmem>>, vector<24x32xf32>
    %c0_5 = arith.constant 0 : index
    %c0_6 = arith.constant 0 : index
    %c0_7 = arith.constant 0 : index
    %24 = vector.load %arg1[%c0_5, %c0_6, %c0_7] : memref<2x1x32xf32, #tpu.memory_space<vmem>>, vector<1x1x32xf32>
    %25 = vector.shape_cast %24 : vector<1x1x32xf32> to vector<1x32xf32>
    %c0_8 = arith.constant 0 : index
    %c0_9 = arith.constant 0 : index
    %c0_10 = arith.constant 0 : index
    %26 = vector.load %arg2[%c0_8, %c0_9, %c0_10] : memref<2x1x32xf32, #tpu.memory_space<vmem>>, vector<1x1x32xf32>
    %27 = vector.shape_cast %26 : vector<1x1x32xf32> to vector<1x32xf32>
    %cst_11 = arith.constant dense<0.000000e+00> : vector<24xf32>
    %28 = vector.multi_reduction <add>, %23, %cst_11 [1] : vector<24x32xf32> to vector<24xf32>
    %29 = vector.shape_cast %28 : vector<24xf32> to vector<24x1xf32>
    %cst_12 = arith.constant 3.200000e+01 : f32
    %30 = vector.broadcast %cst_12 : f32 to vector<24x1xf32>
    %31 = arith.divf %29, %30 : vector<24x1xf32>
    %32 = vector.broadcast %31 : vector<24x1xf32> to vector<24x32xf32>
    %33 = arith.subf %23, %32 : vector<24x32xf32>
    %34 = arith.mulf %33, %33 : vector<24x32xf32>
    %cst_13 = arith.constant dense<0.000000e+00> : vector<24xf32>
    %35 = vector.multi_reduction <add>, %34, %cst_13 [1] : vector<24x32xf32> to vector<24xf32>
    %36 = vector.shape_cast %35 : vector<24xf32> to vector<24x1xf32>
    %cst_14 = arith.constant 3.200000e+01 : f32
    %37 = vector.broadcast %cst_14 : f32 to vector<24x1xf32>
    %38 = arith.divf %36, %37 : vector<24x1xf32>
    %cst_15 = arith.constant 9.99999974E-6 : f32
    %39 = vector.broadcast %cst_15 : f32 to vector<24x1xf32>
    %40 = arith.addf %38, %39 : vector<24x1xf32>
    %41 = math.rsqrt %40 : vector<24x1xf32>
    %42 = vector.broadcast %41 : vector<24x1xf32> to vector<24x32xf32>
    %43 = arith.mulf %33, %42 : vector<24x32xf32>
    %44 = vector.broadcast %25 : vector<1x32xf32> to vector<24x32xf32>
    %45 = arith.mulf %43, %44 : vector<24x32xf32>
    %46 = vector.broadcast %27 : vector<1x32xf32> to vector<24x32xf32>
    %47 = arith.addf %45, %46 : vector<24x32xf32>
    %c0_16 = arith.constant 0 : index
    %c0_17 = arith.constant 0 : index
    %c0_18 = arith.constant 0 : index
    %48 = vector.load %arg3[%c0_16, %c0_17, %c0_18] : memref<2x32x96xbf16, #tpu.memory_space<vmem>>, vector<1x32x96xbf16>
    %49 = vector.shape_cast %48 : vector<1x32x96xbf16> to vector<32x96xbf16>
    %50 = arith.truncf %47 : vector<24x32xf32> to vector<24x32xbf16>
    %cst_19 = arith.constant dense<0.000000e+00> : vector<24x96xf32>
    %51 = tpu.matmul %50, %49, %cst_19 {dimension_numbers = #tpu.dot_dimension_numbers<[1], [0], [0], [1], [0, 0, 1, 1], [], []>} : vector<24x32xbf16>, vector<32x96xbf16>, vector<24x96xf32> -> vector<24x96xf32>
    %c0_20 = arith.constant 0 : index
    %c0_21 = arith.constant 0 : index
    %c0_22 = arith.constant 0 : index
    %52 = vector.load %arg4[%c0_20, %c0_21, %c0_22] : memref<2x1x96xf32, #tpu.memory_space<vmem>>, vector<1x1x96xf32>
    %53 = vector.shape_cast %52 : vector<1x1x96xf32> to vector<1x96xf32>
    %54 = vector.broadcast %53 : vector<1x96xf32> to vector<24x96xf32>
    %55 = arith.addf %51, %54 : vector<24x96xf32>
    %56 = vector.extract_strided_slice %55 {offsets = [0, 0], sizes = [24, 8], strides = [1, 1]} : vector<24x96xf32> to vector<24x8xf32>
    %cst_23 = arith.constant 0.353553385 : f32
    %57 = vector.broadcast %cst_23 : f32 to vector<24x8xf32>
    %58 = arith.mulf %56, %57 : vector<24x8xf32>
    %59 = vector.extract_strided_slice %55 {offsets = [0, 32], sizes = [24, 8], strides = [1, 1]} : vector<24x96xf32> to vector<24x8xf32>
    %60 = vector.extract_strided_slice %55 {offsets = [0, 64], sizes = [24, 8], strides = [1, 1]} : vector<24x96xf32> to vector<24x8xf32>
    %61 = arith.truncf %58 : vector<24x8xf32> to vector<24x8xbf16>
    %62 = arith.truncf %59 : vector<24x8xf32> to vector<24x8xbf16>
    %cst_24 = arith.constant dense<0.000000e+00> : vector<24x24xf32>
    %63 = tpu.matmul %61, %62, %cst_24 {dimension_numbers = #tpu.dot_dimension_numbers<[1], [1], [0], [0], [0, 0, 1, 0], [], []>} : vector<24x8xbf16>, vector<24x8xbf16>, vector<24x24xf32> -> vector<24x24xf32>
    %cst_25 = arith.constant -1.000000e+30 : f32
    %64 = vector.broadcast %cst_25 : f32 to vector<24x24xf32>
    %65 = arith.select %3, %63, %64 : vector<24x24xi1>, vector<24x24xf32>
    %cst_26 = arith.constant dense<0xFF800000> : vector<24xf32>
    %66 = vector.multi_reduction <maximumf>, %65, %cst_26 [1] : vector<24x24xf32> to vector<24xf32>
    %67 = vector.shape_cast %66 : vector<24xf32> to vector<24x1xf32>
    %68 = vector.broadcast %67 : vector<24x1xf32> to vector<24x24xf32>
    %69 = arith.subf %65, %68 : vector<24x24xf32>
    %70 = math.exp %69 : vector<24x24xf32>
    %cst_27 = arith.constant dense<0.000000e+00> : vector<24xf32>
    %71 = vector.multi_reduction <add>, %70, %cst_27 [1] : vector<24x24xf32> to vector<24xf32>
    %72 = vector.shape_cast %71 : vector<24xf32> to vector<24x1xf32>
    %73 = vector.broadcast %72 : vector<24x1xf32> to vector<24x24xf32>
    %74 = arith.divf %70, %73 : vector<24x24xf32>
    %75 = vector.broadcast %8 : vector<24x1xf32> to vector<24x24xf32>
    %76 = arith.mulf %74, %75 : vector<24x24xf32>
    %77 = arith.addf %22, %76 : vector<24x24xf32>
    %78 = arith.truncf %74 : vector<24x24xf32> to vector<24x24xbf16>
    %79 = arith.truncf %60 : vector<24x8xf32> to vector<24x8xbf16>
    %cst_28 = arith.constant dense<0.000000e+00> : vector<24x8xf32>
    %80 = tpu.matmul %78, %79, %cst_28 {dimension_numbers = #tpu.dot_dimension_numbers<[1], [0], [0], [1], [0, 0, 1, 1], [], []>} : vector<24x24xbf16>, vector<24x8xbf16>, vector<24x8xf32> -> vector<24x8xf32>
    %81 = vector.extract_strided_slice %55 {offsets = [0, 8], sizes = [24, 8], strides = [1, 1]} : vector<24x96xf32> to vector<24x8xf32>
    %cst_29 = arith.constant 0.353553385 : f32
    %82 = vector.broadcast %cst_29 : f32 to vector<24x8xf32>
    %83 = arith.mulf %81, %82 : vector<24x8xf32>
    %84 = vector.extract_strided_slice %55 {offsets = [0, 40], sizes = [24, 8], strides = [1, 1]} : vector<24x96xf32> to vector<24x8xf32>
    %85 = vector.extract_strided_slice %55 {offsets = [0, 72], sizes = [24, 8], strides = [1, 1]} : vector<24x96xf32> to vector<24x8xf32>
    %86 = arith.truncf %83 : vector<24x8xf32> to vector<24x8xbf16>
    %87 = arith.truncf %84 : vector<24x8xf32> to vector<24x8xbf16>
    %cst_30 = arith.constant dense<0.000000e+00> : vector<24x24xf32>
    %88 = tpu.matmul %86, %87, %cst_30 {dimension_numbers = #tpu.dot_dimension_numbers<[1], [1], [0], [0], [0, 0, 1, 0], [], []>} : vector<24x8xbf16>, vector<24x8xbf16>, vector<24x24xf32> -> vector<24x24xf32>
    %cst_31 = arith.constant -1.000000e+30 : f32
    %89 = vector.broadcast %cst_31 : f32 to vector<24x24xf32>
    %90 = arith.select %3, %88, %89 : vector<24x24xi1>, vector<24x24xf32>
    %cst_32 = arith.constant dense<0xFF800000> : vector<24xf32>
    %91 = vector.multi_reduction <maximumf>, %90, %cst_32 [1] : vector<24x24xf32> to vector<24xf32>
    %92 = vector.shape_cast %91 : vector<24xf32> to vector<24x1xf32>
    %93 = vector.broadcast %92 : vector<24x1xf32> to vector<24x24xf32>
    %94 = arith.subf %90, %93 : vector<24x24xf32>
    %95 = math.exp %94 : vector<24x24xf32>
    %cst_33 = arith.constant dense<0.000000e+00> : vector<24xf32>
    %96 = vector.multi_reduction <add>, %95, %cst_33 [1] : vector<24x24xf32> to vector<24xf32>
    %97 = vector.shape_cast %96 : vector<24xf32> to vector<24x1xf32>
    %98 = vector.broadcast %97 : vector<24x1xf32> to vector<24x24xf32>
    %99 = arith.divf %95, %98 : vector<24x24xf32>
    %100 = vector.broadcast %8 : vector<24x1xf32> to vector<24x24xf32>
    %101 = arith.mulf %99, %100 : vector<24x24xf32>
    %102 = arith.addf %22, %101 : vector<24x24xf32>
    %103 = arith.truncf %99 : vector<24x24xf32> to vector<24x24xbf16>
    %104 = arith.truncf %85 : vector<24x8xf32> to vector<24x8xbf16>
    %cst_34 = arith.constant dense<0.000000e+00> : vector<24x8xf32>
    %105 = tpu.matmul %103, %104, %cst_34 {dimension_numbers = #tpu.dot_dimension_numbers<[1], [0], [0], [1], [0, 0, 1, 1], [], []>} : vector<24x24xbf16>, vector<24x8xbf16>, vector<24x8xf32> -> vector<24x8xf32>
    %106 = vector.extract_strided_slice %55 {offsets = [0, 16], sizes = [24, 8], strides = [1, 1]} : vector<24x96xf32> to vector<24x8xf32>
    %cst_35 = arith.constant 0.353553385 : f32
    %107 = vector.broadcast %cst_35 : f32 to vector<24x8xf32>
    %108 = arith.mulf %106, %107 : vector<24x8xf32>
    %109 = vector.extract_strided_slice %55 {offsets = [0, 48], sizes = [24, 8], strides = [1, 1]} : vector<24x96xf32> to vector<24x8xf32>
    %110 = vector.extract_strided_slice %55 {offsets = [0, 80], sizes = [24, 8], strides = [1, 1]} : vector<24x96xf32> to vector<24x8xf32>
    %111 = arith.truncf %108 : vector<24x8xf32> to vector<24x8xbf16>
    %112 = arith.truncf %109 : vector<24x8xf32> to vector<24x8xbf16>
    %cst_36 = arith.constant dense<0.000000e+00> : vector<24x24xf32>
    %113 = tpu.matmul %111, %112, %cst_36 {dimension_numbers = #tpu.dot_dimension_numbers<[1], [1], [0], [0], [0, 0, 1, 0], [], []>} : vector<24x8xbf16>, vector<24x8xbf16>, vector<24x24xf32> -> vector<24x24xf32>
    %cst_37 = arith.constant -1.000000e+30 : f32
    %114 = vector.broadcast %cst_37 : f32 to vector<24x24xf32>
    %115 = arith.select %3, %113, %114 : vector<24x24xi1>, vector<24x24xf32>
    %cst_38 = arith.constant dense<0xFF800000> : vector<24xf32>
    %116 = vector.multi_reduction <maximumf>, %115, %cst_38 [1] : vector<24x24xf32> to vector<24xf32>
    %117 = vector.shape_cast %116 : vector<24xf32> to vector<24x1xf32>
    %118 = vector.broadcast %117 : vector<24x1xf32> to vector<24x24xf32>
    %119 = arith.subf %115, %118 : vector<24x24xf32>
    %120 = math.exp %119 : vector<24x24xf32>
    %cst_39 = arith.constant dense<0.000000e+00> : vector<24xf32>
    %121 = vector.multi_reduction <add>, %120, %cst_39 [1] : vector<24x24xf32> to vector<24xf32>
    %122 = vector.shape_cast %121 : vector<24xf32> to vector<24x1xf32>
    %123 = vector.broadcast %122 : vector<24x1xf32> to vector<24x24xf32>
    %124 = arith.divf %120, %123 : vector<24x24xf32>
    %125 = vector.broadcast %8 : vector<24x1xf32> to vector<24x24xf32>
    %126 = arith.mulf %124, %125 : vector<24x24xf32>
    %127 = arith.addf %22, %126 : vector<24x24xf32>
    %128 = arith.truncf %124 : vector<24x24xf32> to vector<24x24xbf16>
    %129 = arith.truncf %110 : vector<24x8xf32> to vector<24x8xbf16>
    %cst_40 = arith.constant dense<0.000000e+00> : vector<24x8xf32>
    %130 = tpu.matmul %128, %129, %cst_40 {dimension_numbers = #tpu.dot_dimension_numbers<[1], [0], [0], [1], [0, 0, 1, 1], [], []>} : vector<24x24xbf16>, vector<24x8xbf16>, vector<24x8xf32> -> vector<24x8xf32>
    %131 = vector.extract_strided_slice %55 {offsets = [0, 24], sizes = [24, 8], strides = [1, 1]} : vector<24x96xf32> to vector<24x8xf32>
    %cst_41 = arith.constant 0.353553385 : f32
    %132 = vector.broadcast %cst_41 : f32 to vector<24x8xf32>
    %133 = arith.mulf %131, %132 : vector<24x8xf32>
    %134 = vector.extract_strided_slice %55 {offsets = [0, 56], sizes = [24, 8], strides = [1, 1]} : vector<24x96xf32> to vector<24x8xf32>
    %135 = vector.extract_strided_slice %55 {offsets = [0, 88], sizes = [24, 8], strides = [1, 1]} : vector<24x96xf32> to vector<24x8xf32>
    %136 = arith.truncf %133 : vector<24x8xf32> to vector<24x8xbf16>
    %137 = arith.truncf %134 : vector<24x8xf32> to vector<24x8xbf16>
    %cst_42 = arith.constant dense<0.000000e+00> : vector<24x24xf32>
    %138 = tpu.matmul %136, %137, %cst_42 {dimension_numbers = #tpu.dot_dimension_numbers<[1], [1], [0], [0], [0, 0, 1, 0], [], []>} : vector<24x8xbf16>, vector<24x8xbf16>, vector<24x24xf32> -> vector<24x24xf32>
    %cst_43 = arith.constant -1.000000e+30 : f32
    %139 = vector.broadcast %cst_43 : f32 to vector<24x24xf32>
    %140 = arith.select %3, %138, %139 : vector<24x24xi1>, vector<24x24xf32>
    %cst_44 = arith.constant dense<0xFF800000> : vector<24xf32>
    %141 = vector.multi_reduction <maximumf>, %140, %cst_44 [1] : vector<24x24xf32> to vector<24xf32>
    %142 = vector.shape_cast %141 : vector<24xf32> to vector<24x1xf32>
    %143 = vector.broadcast %142 : vector<24x1xf32> to vector<24x24xf32>
    %144 = arith.subf %140, %143 : vector<24x24xf32>
    %145 = math.exp %144 : vector<24x24xf32>
    %cst_45 = arith.constant dense<0.000000e+00> : vector<24xf32>
    %146 = vector.multi_reduction <add>, %145, %cst_45 [1] : vector<24x24xf32> to vector<24xf32>
    %147 = vector.shape_cast %146 : vector<24xf32> to vector<24x1xf32>
    %148 = vector.broadcast %147 : vector<24x1xf32> to vector<24x24xf32>
    %149 = arith.divf %145, %148 : vector<24x24xf32>
    %150 = vector.broadcast %8 : vector<24x1xf32> to vector<24x24xf32>
    %151 = arith.mulf %149, %150 : vector<24x24xf32>
    %152 = arith.addf %22, %151 : vector<24x24xf32>
    %153 = arith.truncf %149 : vector<24x24xf32> to vector<24x24xbf16>
    %154 = arith.truncf %135 : vector<24x8xf32> to vector<24x8xbf16>
    %cst_46 = arith.constant dense<0.000000e+00> : vector<24x8xf32>
    %155 = tpu.matmul %153, %154, %cst_46 {dimension_numbers = #tpu.dot_dimension_numbers<[1], [0], [0], [1], [0, 0, 1, 1], [], []>} : vector<24x24xbf16>, vector<24x8xbf16>, vector<24x8xf32> -> vector<24x8xf32>
    %156 = tpu.concatenate %80, %105, %130, %155 in 1 : vector<24x8xf32>, vector<24x8xf32>, vector<24x8xf32>, vector<24x8xf32> -> vector<24x32xf32>
    %c0_47 = arith.constant 0 : index
    %c0_48 = arith.constant 0 : index
    %c0_49 = arith.constant 0 : index
    %157 = vector.load %arg5[%c0_47, %c0_48, %c0_49] : memref<2x32x32xbf16, #tpu.memory_space<vmem>>, vector<1x32x32xbf16>
    %158 = vector.shape_cast %157 : vector<1x32x32xbf16> to vector<32x32xbf16>
    %159 = arith.truncf %156 : vector<24x32xf32> to vector<24x32xbf16>
    %cst_50 = arith.constant dense<0.000000e+00> : vector<24x32xf32>
    %160 = tpu.matmul %159, %158, %cst_50 {dimension_numbers = #tpu.dot_dimension_numbers<[1], [0], [0], [1], [0, 0, 1, 1], [], []>} : vector<24x32xbf16>, vector<32x32xbf16>, vector<24x32xf32> -> vector<24x32xf32>
    %161 = arith.addf %23, %160 : vector<24x32xf32>
    %c0_51 = arith.constant 0 : index
    %c0_52 = arith.constant 0 : index
    %c0_53 = arith.constant 0 : index
    %162 = vector.load %arg6[%c0_51, %c0_52, %c0_53] : memref<2x1x32xf32, #tpu.memory_space<vmem>>, vector<1x1x32xf32>
    %163 = vector.shape_cast %162 : vector<1x1x32xf32> to vector<1x32xf32>
    %164 = vector.broadcast %163 : vector<1x32xf32> to vector<24x32xf32>
    %165 = arith.addf %161, %164 : vector<24x32xf32>
    %c0_54 = arith.constant 0 : index
    %c0_55 = arith.constant 0 : index
    %c0_56 = arith.constant 0 : index
    %166 = vector.load %arg7[%c0_54, %c0_55, %c0_56] : memref<2x1x32xf32, #tpu.memory_space<vmem>>, vector<1x1x32xf32>
    %167 = vector.shape_cast %166 : vector<1x1x32xf32> to vector<1x32xf32>
    %c0_57 = arith.constant 0 : index
    %c0_58 = arith.constant 0 : index
    %c0_59 = arith.constant 0 : index
    %168 = vector.load %arg8[%c0_57, %c0_58, %c0_59] : memref<2x1x32xf32, #tpu.memory_space<vmem>>, vector<1x1x32xf32>
    %169 = vector.shape_cast %168 : vector<1x1x32xf32> to vector<1x32xf32>
    %cst_60 = arith.constant dense<0.000000e+00> : vector<24xf32>
    %170 = vector.multi_reduction <add>, %165, %cst_60 [1] : vector<24x32xf32> to vector<24xf32>
    %171 = vector.shape_cast %170 : vector<24xf32> to vector<24x1xf32>
    %cst_61 = arith.constant 3.200000e+01 : f32
    %172 = vector.broadcast %cst_61 : f32 to vector<24x1xf32>
    %173 = arith.divf %171, %172 : vector<24x1xf32>
    %174 = vector.broadcast %173 : vector<24x1xf32> to vector<24x32xf32>
    %175 = arith.subf %165, %174 : vector<24x32xf32>
    %176 = arith.mulf %175, %175 : vector<24x32xf32>
    %cst_62 = arith.constant dense<0.000000e+00> : vector<24xf32>
    %177 = vector.multi_reduction <add>, %176, %cst_62 [1] : vector<24x32xf32> to vector<24xf32>
    %178 = vector.shape_cast %177 : vector<24xf32> to vector<24x1xf32>
    %cst_63 = arith.constant 3.200000e+01 : f32
    %179 = vector.broadcast %cst_63 : f32 to vector<24x1xf32>
    %180 = arith.divf %178, %179 : vector<24x1xf32>
    %cst_64 = arith.constant 9.99999974E-6 : f32
    %181 = vector.broadcast %cst_64 : f32 to vector<24x1xf32>
    %182 = arith.addf %180, %181 : vector<24x1xf32>
    %183 = math.rsqrt %182 : vector<24x1xf32>
    %184 = vector.broadcast %183 : vector<24x1xf32> to vector<24x32xf32>
    %185 = arith.mulf %175, %184 : vector<24x32xf32>
    %186 = vector.broadcast %167 : vector<1x32xf32> to vector<24x32xf32>
    %187 = arith.mulf %185, %186 : vector<24x32xf32>
    %188 = vector.broadcast %169 : vector<1x32xf32> to vector<24x32xf32>
    %189 = arith.addf %187, %188 : vector<24x32xf32>
    %c0_65 = arith.constant 0 : index
    %c0_66 = arith.constant 0 : index
    %c0_67 = arith.constant 0 : index
    %190 = vector.load %arg9[%c0_65, %c0_66, %c0_67] : memref<2x32x128xbf16, #tpu.memory_space<vmem>>, vector<1x32x128xbf16>
    %191 = vector.shape_cast %190 : vector<1x32x128xbf16> to vector<32x128xbf16>
    %192 = arith.truncf %189 : vector<24x32xf32> to vector<24x32xbf16>
    %cst_68 = arith.constant dense<0.000000e+00> : vector<24x128xf32>
    %193 = tpu.matmul %192, %191, %cst_68 {dimension_numbers = #tpu.dot_dimension_numbers<[1], [0], [0], [1], [0, 0, 1, 1], [], []>} : vector<24x32xbf16>, vector<32x128xbf16>, vector<24x128xf32> -> vector<24x128xf32>
    %c0_69 = arith.constant 0 : index
    %c0_70 = arith.constant 0 : index
    %c0_71 = arith.constant 0 : index
    %194 = vector.load %arg10[%c0_69, %c0_70, %c0_71] : memref<2x1x128xf32, #tpu.memory_space<vmem>>, vector<1x1x128xf32>
    %195 = vector.shape_cast %194 : vector<1x1x128xf32> to vector<1x128xf32>
    %196 = vector.broadcast %195 : vector<1x128xf32> to vector<24x128xf32>
    %197 = arith.addf %193, %196 : vector<24x128xf32>
    %cst_72 = arith.constant 5.000000e-01 : f32
    %198 = vector.broadcast %cst_72 : f32 to vector<24x128xf32>
    %199 = arith.mulf %198, %197 : vector<24x128xf32>
    %cst_73 = arith.constant 0.707106769 : f32
    %200 = vector.broadcast %cst_73 : f32 to vector<24x128xf32>
    %201 = arith.mulf %197, %200 : vector<24x128xf32>
    %cst_74 = arith.constant 0.000000e+00 : f32
    %202 = vector.broadcast %cst_74 : f32 to vector<24x128xf32>
    %203 = arith.cmpf oge, %201, %202 : vector<24x128xf32>
    %cst_75 = arith.constant 1.000000e+00 : f32
    %cst_76 = arith.constant -1.000000e+00 : f32
    %204 = vector.broadcast %cst_75 : f32 to vector<24x128xf32>
    %205 = vector.broadcast %cst_76 : f32 to vector<24x128xf32>
    %206 = arith.select %203, %204, %205 : vector<24x128xi1>, vector<24x128xf32>
    %207 = math.absf %201 : vector<24x128xf32>
    %cst_77 = arith.constant 0.327591091 : f32
    %208 = vector.broadcast %cst_77 : f32 to vector<24x128xf32>
    %209 = arith.mulf %208, %207 : vector<24x128xf32>
    %cst_78 = arith.constant 1.000000e+00 : f32
    %210 = vector.broadcast %cst_78 : f32 to vector<24x128xf32>
    %211 = arith.addf %210, %209 : vector<24x128xf32>
    %cst_79 = arith.constant 1.000000e+00 : f32
    %212 = vector.broadcast %cst_79 : f32 to vector<24x128xf32>
    %213 = arith.divf %212, %211 : vector<24x128xf32>
    %cst_80 = arith.constant 1.06140542 : f32
    %214 = vector.broadcast %cst_80 : f32 to vector<24x128xf32>
    %215 = arith.mulf %214, %213 : vector<24x128xf32>
    %cst_81 = arith.constant -1.45315206 : f32
    %216 = vector.broadcast %cst_81 : f32 to vector<24x128xf32>
    %217 = arith.addf %215, %216 : vector<24x128xf32>
    %218 = arith.mulf %217, %213 : vector<24x128xf32>
    %cst_82 = arith.constant 1.42141378 : f32
    %219 = vector.broadcast %cst_82 : f32 to vector<24x128xf32>
    %220 = arith.addf %218, %219 : vector<24x128xf32>
    %221 = arith.mulf %220, %213 : vector<24x128xf32>
    %cst_83 = arith.constant -0.284496725 : f32
    %222 = vector.broadcast %cst_83 : f32 to vector<24x128xf32>
    %223 = arith.addf %221, %222 : vector<24x128xf32>
    %224 = arith.mulf %223, %213 : vector<24x128xf32>
    %cst_84 = arith.constant 0.254829586 : f32
    %225 = vector.broadcast %cst_84 : f32 to vector<24x128xf32>
    %226 = arith.addf %224, %225 : vector<24x128xf32>
    %227 = arith.mulf %226, %213 : vector<24x128xf32>
    %cst_85 = arith.constant 0.000000e+00 : f32
    %228 = vector.broadcast %cst_85 : f32 to vector<24x128xf32>
    %229 = arith.subf %228, %207 : vector<24x128xf32>
    %230 = arith.mulf %229, %207 : vector<24x128xf32>
    %231 = math.exp %230 : vector<24x128xf32>
    %232 = arith.mulf %227, %231 : vector<24x128xf32>
    %cst_86 = arith.constant 1.000000e+00 : f32
    %233 = vector.broadcast %cst_86 : f32 to vector<24x128xf32>
    %234 = arith.subf %233, %232 : vector<24x128xf32>
    %235 = arith.mulf %206, %234 : vector<24x128xf32>
    %cst_87 = arith.constant 1.000000e+00 : f32
    %236 = vector.broadcast %cst_87 : f32 to vector<24x128xf32>
    %237 = arith.addf %236, %235 : vector<24x128xf32>
    %238 = arith.mulf %199, %237 : vector<24x128xf32>
    %c0_88 = arith.constant 0 : index
    %c0_89 = arith.constant 0 : index
    %c0_90 = arith.constant 0 : index
    %239 = vector.load %arg11[%c0_88, %c0_89, %c0_90] : memref<2x128x32xbf16, #tpu.memory_space<vmem>>, vector<1x128x32xbf16>
    %240 = vector.shape_cast %239 : vector<1x128x32xbf16> to vector<128x32xbf16>
    %241 = arith.truncf %238 : vector<24x128xf32> to vector<24x128xbf16>
    %cst_91 = arith.constant dense<0.000000e+00> : vector<24x32xf32>
    %242 = tpu.matmul %241, %240, %cst_91 {dimension_numbers = #tpu.dot_dimension_numbers<[1], [0], [0], [1], [0, 0, 1, 1], [], []>} : vector<24x128xbf16>, vector<128x32xbf16>, vector<24x32xf32> -> vector<24x32xf32>
    %243 = arith.addf %165, %242 : vector<24x32xf32>
    %c0_92 = arith.constant 0 : index
    %c0_93 = arith.constant 0 : index
    %c0_94 = arith.constant 0 : index
    %244 = vector.load %arg12[%c0_92, %c0_93, %c0_94] : memref<2x1x32xf32, #tpu.memory_space<vmem>>, vector<1x1x32xf32>
    %245 = vector.shape_cast %244 : vector<1x1x32xf32> to vector<1x32xf32>
    %246 = vector.broadcast %245 : vector<1x32xf32> to vector<24x32xf32>
    %247 = arith.addf %243, %246 : vector<24x32xf32>
    %c1 = arith.constant 1 : index
    %c0_95 = arith.constant 0 : index
    %c0_96 = arith.constant 0 : index
    %248 = vector.load %arg1[%c1, %c0_95, %c0_96] : memref<2x1x32xf32, #tpu.memory_space<vmem>>, vector<1x1x32xf32>
    %249 = vector.shape_cast %248 : vector<1x1x32xf32> to vector<1x32xf32>
    %c1_97 = arith.constant 1 : index
    %c0_98 = arith.constant 0 : index
    %c0_99 = arith.constant 0 : index
    %250 = vector.load %arg2[%c1_97, %c0_98, %c0_99] : memref<2x1x32xf32, #tpu.memory_space<vmem>>, vector<1x1x32xf32>
    %251 = vector.shape_cast %250 : vector<1x1x32xf32> to vector<1x32xf32>
    %cst_100 = arith.constant dense<0.000000e+00> : vector<24xf32>
    %252 = vector.multi_reduction <add>, %247, %cst_100 [1] : vector<24x32xf32> to vector<24xf32>
    %253 = vector.shape_cast %252 : vector<24xf32> to vector<24x1xf32>
    %cst_101 = arith.constant 3.200000e+01 : f32
    %254 = vector.broadcast %cst_101 : f32 to vector<24x1xf32>
    %255 = arith.divf %253, %254 : vector<24x1xf32>
    %256 = vector.broadcast %255 : vector<24x1xf32> to vector<24x32xf32>
    %257 = arith.subf %247, %256 : vector<24x32xf32>
    %258 = arith.mulf %257, %257 : vector<24x32xf32>
    %cst_102 = arith.constant dense<0.000000e+00> : vector<24xf32>
    %259 = vector.multi_reduction <add>, %258, %cst_102 [1] : vector<24x32xf32> to vector<24xf32>
    %260 = vector.shape_cast %259 : vector<24xf32> to vector<24x1xf32>
    %cst_103 = arith.constant 3.200000e+01 : f32
    %261 = vector.broadcast %cst_103 : f32 to vector<24x1xf32>
    %262 = arith.divf %260, %261 : vector<24x1xf32>
    %cst_104 = arith.constant 9.99999974E-6 : f32
    %263 = vector.broadcast %cst_104 : f32 to vector<24x1xf32>
    %264 = arith.addf %262, %263 : vector<24x1xf32>
    %265 = math.rsqrt %264 : vector<24x1xf32>
    %266 = vector.broadcast %265 : vector<24x1xf32> to vector<24x32xf32>
    %267 = arith.mulf %257, %266 : vector<24x32xf32>
    %268 = vector.broadcast %249 : vector<1x32xf32> to vector<24x32xf32>
    %269 = arith.mulf %267, %268 : vector<24x32xf32>
    %270 = vector.broadcast %251 : vector<1x32xf32> to vector<24x32xf32>
    %271 = arith.addf %269, %270 : vector<24x32xf32>
    %c1_105 = arith.constant 1 : index
    %c0_106 = arith.constant 0 : index
    %c0_107 = arith.constant 0 : index
    %272 = vector.load %arg3[%c1_105, %c0_106, %c0_107] : memref<2x32x96xbf16, #tpu.memory_space<vmem>>, vector<1x32x96xbf16>
    %273 = vector.shape_cast %272 : vector<1x32x96xbf16> to vector<32x96xbf16>
    %274 = arith.truncf %271 : vector<24x32xf32> to vector<24x32xbf16>
    %cst_108 = arith.constant dense<0.000000e+00> : vector<24x96xf32>
    %275 = tpu.matmul %274, %273, %cst_108 {dimension_numbers = #tpu.dot_dimension_numbers<[1], [0], [0], [1], [0, 0, 1, 1], [], []>} : vector<24x32xbf16>, vector<32x96xbf16>, vector<24x96xf32> -> vector<24x96xf32>
    %c1_109 = arith.constant 1 : index
    %c0_110 = arith.constant 0 : index
    %c0_111 = arith.constant 0 : index
    %276 = vector.load %arg4[%c1_109, %c0_110, %c0_111] : memref<2x1x96xf32, #tpu.memory_space<vmem>>, vector<1x1x96xf32>
    %277 = vector.shape_cast %276 : vector<1x1x96xf32> to vector<1x96xf32>
    %278 = vector.broadcast %277 : vector<1x96xf32> to vector<24x96xf32>
    %279 = arith.addf %275, %278 : vector<24x96xf32>
    %280 = vector.extract_strided_slice %279 {offsets = [0, 0], sizes = [24, 8], strides = [1, 1]} : vector<24x96xf32> to vector<24x8xf32>
    %cst_112 = arith.constant 0.353553385 : f32
    %281 = vector.broadcast %cst_112 : f32 to vector<24x8xf32>
    %282 = arith.mulf %280, %281 : vector<24x8xf32>
    %283 = vector.extract_strided_slice %279 {offsets = [0, 32], sizes = [24, 8], strides = [1, 1]} : vector<24x96xf32> to vector<24x8xf32>
    %284 = vector.extract_strided_slice %279 {offsets = [0, 64], sizes = [24, 8], strides = [1, 1]} : vector<24x96xf32> to vector<24x8xf32>
    %285 = arith.truncf %282 : vector<24x8xf32> to vector<24x8xbf16>
    %286 = arith.truncf %283 : vector<24x8xf32> to vector<24x8xbf16>
    %cst_113 = arith.constant dense<0.000000e+00> : vector<24x24xf32>
    %287 = tpu.matmul %285, %286, %cst_113 {dimension_numbers = #tpu.dot_dimension_numbers<[1], [1], [0], [0], [0, 0, 1, 0], [], []>} : vector<24x8xbf16>, vector<24x8xbf16>, vector<24x24xf32> -> vector<24x24xf32>
    %cst_114 = arith.constant -1.000000e+30 : f32
    %288 = vector.broadcast %cst_114 : f32 to vector<24x24xf32>
    %289 = arith.select %3, %287, %288 : vector<24x24xi1>, vector<24x24xf32>
    %cst_115 = arith.constant dense<0xFF800000> : vector<24xf32>
    %290 = vector.multi_reduction <maximumf>, %289, %cst_115 [1] : vector<24x24xf32> to vector<24xf32>
    %291 = vector.shape_cast %290 : vector<24xf32> to vector<24x1xf32>
    %292 = vector.broadcast %291 : vector<24x1xf32> to vector<24x24xf32>
    %293 = arith.subf %289, %292 : vector<24x24xf32>
    %294 = math.exp %293 : vector<24x24xf32>
    %cst_116 = arith.constant dense<0.000000e+00> : vector<24xf32>
    %295 = vector.multi_reduction <add>, %294, %cst_116 [1] : vector<24x24xf32> to vector<24xf32>
    %296 = vector.shape_cast %295 : vector<24xf32> to vector<24x1xf32>
    %297 = vector.broadcast %296 : vector<24x1xf32> to vector<24x24xf32>
    %298 = arith.divf %294, %297 : vector<24x24xf32>
    %299 = vector.broadcast %8 : vector<24x1xf32> to vector<24x24xf32>
    %300 = arith.mulf %298, %299 : vector<24x24xf32>
    %301 = arith.addf %77, %300 : vector<24x24xf32>
    %302 = arith.truncf %298 : vector<24x24xf32> to vector<24x24xbf16>
    %303 = arith.truncf %284 : vector<24x8xf32> to vector<24x8xbf16>
    %cst_117 = arith.constant dense<0.000000e+00> : vector<24x8xf32>
    %304 = tpu.matmul %302, %303, %cst_117 {dimension_numbers = #tpu.dot_dimension_numbers<[1], [0], [0], [1], [0, 0, 1, 1], [], []>} : vector<24x24xbf16>, vector<24x8xbf16>, vector<24x8xf32> -> vector<24x8xf32>
    %305 = vector.extract_strided_slice %279 {offsets = [0, 8], sizes = [24, 8], strides = [1, 1]} : vector<24x96xf32> to vector<24x8xf32>
    %cst_118 = arith.constant 0.353553385 : f32
    %306 = vector.broadcast %cst_118 : f32 to vector<24x8xf32>
    %307 = arith.mulf %305, %306 : vector<24x8xf32>
    %308 = vector.extract_strided_slice %279 {offsets = [0, 40], sizes = [24, 8], strides = [1, 1]} : vector<24x96xf32> to vector<24x8xf32>
    %309 = vector.extract_strided_slice %279 {offsets = [0, 72], sizes = [24, 8], strides = [1, 1]} : vector<24x96xf32> to vector<24x8xf32>
    %310 = arith.truncf %307 : vector<24x8xf32> to vector<24x8xbf16>
    %311 = arith.truncf %308 : vector<24x8xf32> to vector<24x8xbf16>
    %cst_119 = arith.constant dense<0.000000e+00> : vector<24x24xf32>
    %312 = tpu.matmul %310, %311, %cst_119 {dimension_numbers = #tpu.dot_dimension_numbers<[1], [1], [0], [0], [0, 0, 1, 0], [], []>} : vector<24x8xbf16>, vector<24x8xbf16>, vector<24x24xf32> -> vector<24x24xf32>
    %cst_120 = arith.constant -1.000000e+30 : f32
    %313 = vector.broadcast %cst_120 : f32 to vector<24x24xf32>
    %314 = arith.select %3, %312, %313 : vector<24x24xi1>, vector<24x24xf32>
    %cst_121 = arith.constant dense<0xFF800000> : vector<24xf32>
    %315 = vector.multi_reduction <maximumf>, %314, %cst_121 [1] : vector<24x24xf32> to vector<24xf32>
    %316 = vector.shape_cast %315 : vector<24xf32> to vector<24x1xf32>
    %317 = vector.broadcast %316 : vector<24x1xf32> to vector<24x24xf32>
    %318 = arith.subf %314, %317 : vector<24x24xf32>
    %319 = math.exp %318 : vector<24x24xf32>
    %cst_122 = arith.constant dense<0.000000e+00> : vector<24xf32>
    %320 = vector.multi_reduction <add>, %319, %cst_122 [1] : vector<24x24xf32> to vector<24xf32>
    %321 = vector.shape_cast %320 : vector<24xf32> to vector<24x1xf32>
    %322 = vector.broadcast %321 : vector<24x1xf32> to vector<24x24xf32>
    %323 = arith.divf %319, %322 : vector<24x24xf32>
    %324 = vector.broadcast %8 : vector<24x1xf32> to vector<24x24xf32>
    %325 = arith.mulf %323, %324 : vector<24x24xf32>
    %326 = arith.addf %102, %325 : vector<24x24xf32>
    %327 = arith.truncf %323 : vector<24x24xf32> to vector<24x24xbf16>
    %328 = arith.truncf %309 : vector<24x8xf32> to vector<24x8xbf16>
    %cst_123 = arith.constant dense<0.000000e+00> : vector<24x8xf32>
    %329 = tpu.matmul %327, %328, %cst_123 {dimension_numbers = #tpu.dot_dimension_numbers<[1], [0], [0], [1], [0, 0, 1, 1], [], []>} : vector<24x24xbf16>, vector<24x8xbf16>, vector<24x8xf32> -> vector<24x8xf32>
    %330 = vector.extract_strided_slice %279 {offsets = [0, 16], sizes = [24, 8], strides = [1, 1]} : vector<24x96xf32> to vector<24x8xf32>
    %cst_124 = arith.constant 0.353553385 : f32
    %331 = vector.broadcast %cst_124 : f32 to vector<24x8xf32>
    %332 = arith.mulf %330, %331 : vector<24x8xf32>
    %333 = vector.extract_strided_slice %279 {offsets = [0, 48], sizes = [24, 8], strides = [1, 1]} : vector<24x96xf32> to vector<24x8xf32>
    %334 = vector.extract_strided_slice %279 {offsets = [0, 80], sizes = [24, 8], strides = [1, 1]} : vector<24x96xf32> to vector<24x8xf32>
    %335 = arith.truncf %332 : vector<24x8xf32> to vector<24x8xbf16>
    %336 = arith.truncf %333 : vector<24x8xf32> to vector<24x8xbf16>
    %cst_125 = arith.constant dense<0.000000e+00> : vector<24x24xf32>
    %337 = tpu.matmul %335, %336, %cst_125 {dimension_numbers = #tpu.dot_dimension_numbers<[1], [1], [0], [0], [0, 0, 1, 0], [], []>} : vector<24x8xbf16>, vector<24x8xbf16>, vector<24x24xf32> -> vector<24x24xf32>
    %cst_126 = arith.constant -1.000000e+30 : f32
    %338 = vector.broadcast %cst_126 : f32 to vector<24x24xf32>
    %339 = arith.select %3, %337, %338 : vector<24x24xi1>, vector<24x24xf32>
    %cst_127 = arith.constant dense<0xFF800000> : vector<24xf32>
    %340 = vector.multi_reduction <maximumf>, %339, %cst_127 [1] : vector<24x24xf32> to vector<24xf32>
    %341 = vector.shape_cast %340 : vector<24xf32> to vector<24x1xf32>
    %342 = vector.broadcast %341 : vector<24x1xf32> to vector<24x24xf32>
    %343 = arith.subf %339, %342 : vector<24x24xf32>
    %344 = math.exp %343 : vector<24x24xf32>
    %cst_128 = arith.constant dense<0.000000e+00> : vector<24xf32>
    %345 = vector.multi_reduction <add>, %344, %cst_128 [1] : vector<24x24xf32> to vector<24xf32>
    %346 = vector.shape_cast %345 : vector<24xf32> to vector<24x1xf32>
    %347 = vector.broadcast %346 : vector<24x1xf32> to vector<24x24xf32>
    %348 = arith.divf %344, %347 : vector<24x24xf32>
    %349 = vector.broadcast %8 : vector<24x1xf32> to vector<24x24xf32>
    %350 = arith.mulf %348, %349 : vector<24x24xf32>
    %351 = arith.addf %127, %350 : vector<24x24xf32>
    %352 = arith.truncf %348 : vector<24x24xf32> to vector<24x24xbf16>
    %353 = arith.truncf %334 : vector<24x8xf32> to vector<24x8xbf16>
    %cst_129 = arith.constant dense<0.000000e+00> : vector<24x8xf32>
    %354 = tpu.matmul %352, %353, %cst_129 {dimension_numbers = #tpu.dot_dimension_numbers<[1], [0], [0], [1], [0, 0, 1, 1], [], []>} : vector<24x24xbf16>, vector<24x8xbf16>, vector<24x8xf32> -> vector<24x8xf32>
    %355 = vector.extract_strided_slice %279 {offsets = [0, 24], sizes = [24, 8], strides = [1, 1]} : vector<24x96xf32> to vector<24x8xf32>
    %cst_130 = arith.constant 0.353553385 : f32
    %356 = vector.broadcast %cst_130 : f32 to vector<24x8xf32>
    %357 = arith.mulf %355, %356 : vector<24x8xf32>
    %358 = vector.extract_strided_slice %279 {offsets = [0, 56], sizes = [24, 8], strides = [1, 1]} : vector<24x96xf32> to vector<24x8xf32>
    %359 = vector.extract_strided_slice %279 {offsets = [0, 88], sizes = [24, 8], strides = [1, 1]} : vector<24x96xf32> to vector<24x8xf32>
    %360 = arith.truncf %357 : vector<24x8xf32> to vector<24x8xbf16>
    %361 = arith.truncf %358 : vector<24x8xf32> to vector<24x8xbf16>
    %cst_131 = arith.constant dense<0.000000e+00> : vector<24x24xf32>
    %362 = tpu.matmul %360, %361, %cst_131 {dimension_numbers = #tpu.dot_dimension_numbers<[1], [1], [0], [0], [0, 0, 1, 0], [], []>} : vector<24x8xbf16>, vector<24x8xbf16>, vector<24x24xf32> -> vector<24x24xf32>
    %cst_132 = arith.constant -1.000000e+30 : f32
    %363 = vector.broadcast %cst_132 : f32 to vector<24x24xf32>
    %364 = arith.select %3, %362, %363 : vector<24x24xi1>, vector<24x24xf32>
    %cst_133 = arith.constant dense<0xFF800000> : vector<24xf32>
    %365 = vector.multi_reduction <maximumf>, %364, %cst_133 [1] : vector<24x24xf32> to vector<24xf32>
    %366 = vector.shape_cast %365 : vector<24xf32> to vector<24x1xf32>
    %367 = vector.broadcast %366 : vector<24x1xf32> to vector<24x24xf32>
    %368 = arith.subf %364, %367 : vector<24x24xf32>
    %369 = math.exp %368 : vector<24x24xf32>
    %cst_134 = arith.constant dense<0.000000e+00> : vector<24xf32>
    %370 = vector.multi_reduction <add>, %369, %cst_134 [1] : vector<24x24xf32> to vector<24xf32>
    %371 = vector.shape_cast %370 : vector<24xf32> to vector<24x1xf32>
    %372 = vector.broadcast %371 : vector<24x1xf32> to vector<24x24xf32>
    %373 = arith.divf %369, %372 : vector<24x24xf32>
    %374 = vector.broadcast %8 : vector<24x1xf32> to vector<24x24xf32>
    %375 = arith.mulf %373, %374 : vector<24x24xf32>
    %376 = arith.addf %152, %375 : vector<24x24xf32>
    %377 = arith.truncf %373 : vector<24x24xf32> to vector<24x24xbf16>
    %378 = arith.truncf %359 : vector<24x8xf32> to vector<24x8xbf16>
    %cst_135 = arith.constant dense<0.000000e+00> : vector<24x8xf32>
    %379 = tpu.matmul %377, %378, %cst_135 {dimension_numbers = #tpu.dot_dimension_numbers<[1], [0], [0], [1], [0, 0, 1, 1], [], []>} : vector<24x24xbf16>, vector<24x8xbf16>, vector<24x8xf32> -> vector<24x8xf32>
    %380 = tpu.concatenate %304, %329, %354, %379 in 1 : vector<24x8xf32>, vector<24x8xf32>, vector<24x8xf32>, vector<24x8xf32> -> vector<24x32xf32>
    %c1_136 = arith.constant 1 : index
    %c0_137 = arith.constant 0 : index
    %c0_138 = arith.constant 0 : index
    %381 = vector.load %arg5[%c1_136, %c0_137, %c0_138] : memref<2x32x32xbf16, #tpu.memory_space<vmem>>, vector<1x32x32xbf16>
    %382 = vector.shape_cast %381 : vector<1x32x32xbf16> to vector<32x32xbf16>
    %383 = arith.truncf %380 : vector<24x32xf32> to vector<24x32xbf16>
    %cst_139 = arith.constant dense<0.000000e+00> : vector<24x32xf32>
    %384 = tpu.matmul %383, %382, %cst_139 {dimension_numbers = #tpu.dot_dimension_numbers<[1], [0], [0], [1], [0, 0, 1, 1], [], []>} : vector<24x32xbf16>, vector<32x32xbf16>, vector<24x32xf32> -> vector<24x32xf32>
    %385 = arith.addf %247, %384 : vector<24x32xf32>
    %c1_140 = arith.constant 1 : index
    %c0_141 = arith.constant 0 : index
    %c0_142 = arith.constant 0 : index
    %386 = vector.load %arg6[%c1_140, %c0_141, %c0_142] : memref<2x1x32xf32, #tpu.memory_space<vmem>>, vector<1x1x32xf32>
    %387 = vector.shape_cast %386 : vector<1x1x32xf32> to vector<1x32xf32>
    %388 = vector.broadcast %387 : vector<1x32xf32> to vector<24x32xf32>
    %389 = arith.addf %385, %388 : vector<24x32xf32>
    %c1_143 = arith.constant 1 : index
    %c0_144 = arith.constant 0 : index
    %c0_145 = arith.constant 0 : index
    %390 = vector.load %arg7[%c1_143, %c0_144, %c0_145] : memref<2x1x32xf32, #tpu.memory_space<vmem>>, vector<1x1x32xf32>
    %391 = vector.shape_cast %390 : vector<1x1x32xf32> to vector<1x32xf32>
    %c1_146 = arith.constant 1 : index
    %c0_147 = arith.constant 0 : index
    %c0_148 = arith.constant 0 : index
    %392 = vector.load %arg8[%c1_146, %c0_147, %c0_148] : memref<2x1x32xf32, #tpu.memory_space<vmem>>, vector<1x1x32xf32>
    %393 = vector.shape_cast %392 : vector<1x1x32xf32> to vector<1x32xf32>
    %cst_149 = arith.constant dense<0.000000e+00> : vector<24xf32>
    %394 = vector.multi_reduction <add>, %389, %cst_149 [1] : vector<24x32xf32> to vector<24xf32>
    %395 = vector.shape_cast %394 : vector<24xf32> to vector<24x1xf32>
    %cst_150 = arith.constant 3.200000e+01 : f32
    %396 = vector.broadcast %cst_150 : f32 to vector<24x1xf32>
    %397 = arith.divf %395, %396 : vector<24x1xf32>
    %398 = vector.broadcast %397 : vector<24x1xf32> to vector<24x32xf32>
    %399 = arith.subf %389, %398 : vector<24x32xf32>
    %400 = arith.mulf %399, %399 : vector<24x32xf32>
    %cst_151 = arith.constant dense<0.000000e+00> : vector<24xf32>
    %401 = vector.multi_reduction <add>, %400, %cst_151 [1] : vector<24x32xf32> to vector<24xf32>
    %402 = vector.shape_cast %401 : vector<24xf32> to vector<24x1xf32>
    %cst_152 = arith.constant 3.200000e+01 : f32
    %403 = vector.broadcast %cst_152 : f32 to vector<24x1xf32>
    %404 = arith.divf %402, %403 : vector<24x1xf32>
    %cst_153 = arith.constant 9.99999974E-6 : f32
    %405 = vector.broadcast %cst_153 : f32 to vector<24x1xf32>
    %406 = arith.addf %404, %405 : vector<24x1xf32>
    %407 = math.rsqrt %406 : vector<24x1xf32>
    %408 = vector.broadcast %407 : vector<24x1xf32> to vector<24x32xf32>
    %409 = arith.mulf %399, %408 : vector<24x32xf32>
    %410 = vector.broadcast %391 : vector<1x32xf32> to vector<24x32xf32>
    %411 = arith.mulf %409, %410 : vector<24x32xf32>
    %412 = vector.broadcast %393 : vector<1x32xf32> to vector<24x32xf32>
    %413 = arith.addf %411, %412 : vector<24x32xf32>
    %c1_154 = arith.constant 1 : index
    %c0_155 = arith.constant 0 : index
    %c0_156 = arith.constant 0 : index
    %414 = vector.load %arg9[%c1_154, %c0_155, %c0_156] : memref<2x32x128xbf16, #tpu.memory_space<vmem>>, vector<1x32x128xbf16>
    %415 = vector.shape_cast %414 : vector<1x32x128xbf16> to vector<32x128xbf16>
    %416 = arith.truncf %413 : vector<24x32xf32> to vector<24x32xbf16>
    %cst_157 = arith.constant dense<0.000000e+00> : vector<24x128xf32>
    %417 = tpu.matmul %416, %415, %cst_157 {dimension_numbers = #tpu.dot_dimension_numbers<[1], [0], [0], [1], [0, 0, 1, 1], [], []>} : vector<24x32xbf16>, vector<32x128xbf16>, vector<24x128xf32> -> vector<24x128xf32>
    %c1_158 = arith.constant 1 : index
    %c0_159 = arith.constant 0 : index
    %c0_160 = arith.constant 0 : index
    %418 = vector.load %arg10[%c1_158, %c0_159, %c0_160] : memref<2x1x128xf32, #tpu.memory_space<vmem>>, vector<1x1x128xf32>
    %419 = vector.shape_cast %418 : vector<1x1x128xf32> to vector<1x128xf32>
    %420 = vector.broadcast %419 : vector<1x128xf32> to vector<24x128xf32>
    %421 = arith.addf %417, %420 : vector<24x128xf32>
    %cst_161 = arith.constant 5.000000e-01 : f32
    %422 = vector.broadcast %cst_161 : f32 to vector<24x128xf32>
    %423 = arith.mulf %422, %421 : vector<24x128xf32>
    %cst_162 = arith.constant 0.707106769 : f32
    %424 = vector.broadcast %cst_162 : f32 to vector<24x128xf32>
    %425 = arith.mulf %421, %424 : vector<24x128xf32>
    %cst_163 = arith.constant 0.000000e+00 : f32
    %426 = vector.broadcast %cst_163 : f32 to vector<24x128xf32>
    %427 = arith.cmpf oge, %425, %426 : vector<24x128xf32>
    %cst_164 = arith.constant 1.000000e+00 : f32
    %cst_165 = arith.constant -1.000000e+00 : f32
    %428 = vector.broadcast %cst_164 : f32 to vector<24x128xf32>
    %429 = vector.broadcast %cst_165 : f32 to vector<24x128xf32>
    %430 = arith.select %427, %428, %429 : vector<24x128xi1>, vector<24x128xf32>
    %431 = math.absf %425 : vector<24x128xf32>
    %cst_166 = arith.constant 0.327591091 : f32
    %432 = vector.broadcast %cst_166 : f32 to vector<24x128xf32>
    %433 = arith.mulf %432, %431 : vector<24x128xf32>
    %cst_167 = arith.constant 1.000000e+00 : f32
    %434 = vector.broadcast %cst_167 : f32 to vector<24x128xf32>
    %435 = arith.addf %434, %433 : vector<24x128xf32>
    %cst_168 = arith.constant 1.000000e+00 : f32
    %436 = vector.broadcast %cst_168 : f32 to vector<24x128xf32>
    %437 = arith.divf %436, %435 : vector<24x128xf32>
    %cst_169 = arith.constant 1.06140542 : f32
    %438 = vector.broadcast %cst_169 : f32 to vector<24x128xf32>
    %439 = arith.mulf %438, %437 : vector<24x128xf32>
    %cst_170 = arith.constant -1.45315206 : f32
    %440 = vector.broadcast %cst_170 : f32 to vector<24x128xf32>
    %441 = arith.addf %439, %440 : vector<24x128xf32>
    %442 = arith.mulf %441, %437 : vector<24x128xf32>
    %cst_171 = arith.constant 1.42141378 : f32
    %443 = vector.broadcast %cst_171 : f32 to vector<24x128xf32>
    %444 = arith.addf %442, %443 : vector<24x128xf32>
    %445 = arith.mulf %444, %437 : vector<24x128xf32>
    %cst_172 = arith.constant -0.284496725 : f32
    %446 = vector.broadcast %cst_172 : f32 to vector<24x128xf32>
    %447 = arith.addf %445, %446 : vector<24x128xf32>
    %448 = arith.mulf %447, %437 : vector<24x128xf32>
    %cst_173 = arith.constant 0.254829586 : f32
    %449 = vector.broadcast %cst_173 : f32 to vector<24x128xf32>
    %450 = arith.addf %448, %449 : vector<24x128xf32>
    %451 = arith.mulf %450, %437 : vector<24x128xf32>
    %cst_174 = arith.constant 0.000000e+00 : f32
    %452 = vector.broadcast %cst_174 : f32 to vector<24x128xf32>
    %453 = arith.subf %452, %431 : vector<24x128xf32>
    %454 = arith.mulf %453, %431 : vector<24x128xf32>
    %455 = math.exp %454 : vector<24x128xf32>
    %456 = arith.mulf %451, %455 : vector<24x128xf32>
    %cst_175 = arith.constant 1.000000e+00 : f32
    %457 = vector.broadcast %cst_175 : f32 to vector<24x128xf32>
    %458 = arith.subf %457, %456 : vector<24x128xf32>
    %459 = arith.mulf %430, %458 : vector<24x128xf32>
    %cst_176 = arith.constant 1.000000e+00 : f32
    %460 = vector.broadcast %cst_176 : f32 to vector<24x128xf32>
    %461 = arith.addf %460, %459 : vector<24x128xf32>
    %462 = arith.mulf %423, %461 : vector<24x128xf32>
    %c1_177 = arith.constant 1 : index
    %c0_178 = arith.constant 0 : index
    %c0_179 = arith.constant 0 : index
    %463 = vector.load %arg11[%c1_177, %c0_178, %c0_179] : memref<2x128x32xbf16, #tpu.memory_space<vmem>>, vector<1x128x32xbf16>
    %464 = vector.shape_cast %463 : vector<1x128x32xbf16> to vector<128x32xbf16>
    %465 = arith.truncf %462 : vector<24x128xf32> to vector<24x128xbf16>
    %cst_180 = arith.constant dense<0.000000e+00> : vector<24x32xf32>
    %466 = tpu.matmul %465, %464, %cst_180 {dimension_numbers = #tpu.dot_dimension_numbers<[1], [0], [0], [1], [0, 0, 1, 1], [], []>} : vector<24x128xbf16>, vector<128x32xbf16>, vector<24x32xf32> -> vector<24x32xf32>
    %467 = arith.addf %389, %466 : vector<24x32xf32>
    %c1_181 = arith.constant 1 : index
    %c0_182 = arith.constant 0 : index
    %c0_183 = arith.constant 0 : index
    %468 = vector.load %arg12[%c1_181, %c0_182, %c0_183] : memref<2x1x32xf32, #tpu.memory_space<vmem>>, vector<1x1x32xf32>
    %469 = vector.shape_cast %468 : vector<1x1x32xf32> to vector<1x32xf32>
    %470 = vector.broadcast %469 : vector<1x32xf32> to vector<24x32xf32>
    %471 = arith.addf %467, %470 : vector<24x32xf32>
    %c0_184 = arith.constant 0 : index
    %c0_185 = arith.constant 0 : index
    %472 = vector.load %arg22[%c0_184, %c0_185] : memref<6x16xf32, #tpu.memory_space<vmem>>, vector<6x16xf32>
    %cst_186 = arith.constant dense<0.000000e+00> : vector<24xf32>
    %473 = vector.multi_reduction <add>, %301, %cst_186 [0] : vector<24x24xf32> to vector<24xf32>
    %474 = vector.shape_cast %473 : vector<24xf32> to vector<1x24xf32>
    %475 = vector.broadcast %474 : vector<1x24xf32> to vector<24x24xf32>
    %476 = arith.divf %301, %475 : vector<24x24xf32>
    %cst_187 = arith.constant dense<0.000000e+00> : vector<24xf32>
    %477 = vector.multi_reduction <add>, %476, %cst_187 [1] : vector<24x24xf32> to vector<24xf32>
    %478 = vector.shape_cast %477 : vector<24xf32> to vector<24x1xf32>
    %479 = vector.broadcast %478 : vector<24x1xf32> to vector<24x24xf32>
    %480 = arith.divf %476, %479 : vector<24x24xf32>
    %481 = tpu.transpose %480, [1, 0] : vector<24x24xf32> -> vector<24x24xf32>
    %482 = arith.addf %480, %481 : vector<24x24xf32>
    %cst_188 = arith.constant 5.000000e-01 : f32
    %483 = vector.broadcast %cst_188 : f32 to vector<24x24xf32>
    %484 = arith.mulf %482, %483 : vector<24x24xf32>
    %cst_189 = arith.constant dense<0xFF800000> : vector<24xf32>
    %485 = vector.multi_reduction <maximumf>, %484, %cst_189 [0] : vector<24x24xf32> to vector<24xf32>
    %486 = vector.shape_cast %485 : vector<24xf32> to vector<1x24xf32>
    %cst_190 = arith.constant 2.000000e-01 : f32
    %487 = vector.broadcast %cst_190 : f32 to vector<1x24xf32>
    %488 = arith.mulf %486, %487 : vector<1x24xf32>
    %489 = vector.broadcast %488 : vector<1x24xf32> to vector<24x24xf32>
    %490 = arith.subf %484, %489 : vector<24x24xf32>
    %cst_191 = arith.constant 0.000000e+00 : f32
    %491 = vector.broadcast %cst_191 : f32 to vector<24x24xf32>
    %492 = arith.maximumf %490, %491 : vector<24x24xf32>
    %cst_192 = arith.constant dense<0.000000e+00> : vector<24xf32>
    %493 = vector.multi_reduction <add>, %492, %cst_192 [1] : vector<24x24xf32> to vector<24xf32>
    %494 = vector.shape_cast %493 : vector<24xf32> to vector<24x1xf32>
    %495 = vector.broadcast %494 : vector<24x1xf32> to vector<24x24xf32>
    %496 = arith.divf %492, %495 : vector<24x24xf32>
    %cst_193 = arith.constant dense<0.000000e+00> : vector<24xf32>
    %497 = vector.multi_reduction <add>, %326, %cst_193 [0] : vector<24x24xf32> to vector<24xf32>
    %498 = vector.shape_cast %497 : vector<24xf32> to vector<1x24xf32>
    %499 = vector.broadcast %498 : vector<1x24xf32> to vector<24x24xf32>
    %500 = arith.divf %326, %499 : vector<24x24xf32>
    %cst_194 = arith.constant dense<0.000000e+00> : vector<24xf32>
    %501 = vector.multi_reduction <add>, %500, %cst_194 [1] : vector<24x24xf32> to vector<24xf32>
    %502 = vector.shape_cast %501 : vector<24xf32> to vector<24x1xf32>
    %503 = vector.broadcast %502 : vector<24x1xf32> to vector<24x24xf32>
    %504 = arith.divf %500, %503 : vector<24x24xf32>
    %505 = tpu.transpose %504, [1, 0] : vector<24x24xf32> -> vector<24x24xf32>
    %506 = arith.addf %504, %505 : vector<24x24xf32>
    %cst_195 = arith.constant 5.000000e-01 : f32
    %507 = vector.broadcast %cst_195 : f32 to vector<24x24xf32>
    %508 = arith.mulf %506, %507 : vector<24x24xf32>
    %cst_196 = arith.constant dense<0xFF800000> : vector<24xf32>
    %509 = vector.multi_reduction <maximumf>, %508, %cst_196 [0] : vector<24x24xf32> to vector<24xf32>
    %510 = vector.shape_cast %509 : vector<24xf32> to vector<1x24xf32>
    %cst_197 = arith.constant 2.000000e-01 : f32
    %511 = vector.broadcast %cst_197 : f32 to vector<1x24xf32>
    %512 = arith.mulf %510, %511 : vector<1x24xf32>
    %513 = vector.broadcast %512 : vector<1x24xf32> to vector<24x24xf32>
    %514 = arith.subf %508, %513 : vector<24x24xf32>
    %cst_198 = arith.constant 0.000000e+00 : f32
    %515 = vector.broadcast %cst_198 : f32 to vector<24x24xf32>
    %516 = arith.maximumf %514, %515 : vector<24x24xf32>
    %cst_199 = arith.constant dense<0.000000e+00> : vector<24xf32>
    %517 = vector.multi_reduction <add>, %516, %cst_199 [1] : vector<24x24xf32> to vector<24xf32>
    %518 = vector.shape_cast %517 : vector<24xf32> to vector<24x1xf32>
    %519 = vector.broadcast %518 : vector<24x1xf32> to vector<24x24xf32>
    %520 = arith.divf %516, %519 : vector<24x24xf32>
    %cst_200 = arith.constant dense<0.000000e+00> : vector<24xf32>
    %521 = vector.multi_reduction <add>, %351, %cst_200 [0] : vector<24x24xf32> to vector<24xf32>
    %522 = vector.shape_cast %521 : vector<24xf32> to vector<1x24xf32>
    %523 = vector.broadcast %522 : vector<1x24xf32> to vector<24x24xf32>
    %524 = arith.divf %351, %523 : vector<24x24xf32>
    %cst_201 = arith.constant dense<0.000000e+00> : vector<24xf32>
    %525 = vector.multi_reduction <add>, %524, %cst_201 [1] : vector<24x24xf32> to vector<24xf32>
    %526 = vector.shape_cast %525 : vector<24xf32> to vector<24x1xf32>
    %527 = vector.broadcast %526 : vector<24x1xf32> to vector<24x24xf32>
    %528 = arith.divf %524, %527 : vector<24x24xf32>
    %529 = tpu.transpose %528, [1, 0] : vector<24x24xf32> -> vector<24x24xf32>
    %530 = arith.addf %528, %529 : vector<24x24xf32>
    %cst_202 = arith.constant 5.000000e-01 : f32
    %531 = vector.broadcast %cst_202 : f32 to vector<24x24xf32>
    %532 = arith.mulf %530, %531 : vector<24x24xf32>
    %cst_203 = arith.constant dense<0xFF800000> : vector<24xf32>
    %533 = vector.multi_reduction <maximumf>, %532, %cst_203 [0] : vector<24x24xf32> to vector<24xf32>
    %534 = vector.shape_cast %533 : vector<24xf32> to vector<1x24xf32>
    %cst_204 = arith.constant 2.000000e-01 : f32
    %535 = vector.broadcast %cst_204 : f32 to vector<1x24xf32>
    %536 = arith.mulf %534, %535 : vector<1x24xf32>
    %537 = vector.broadcast %536 : vector<1x24xf32> to vector<24x24xf32>
    %538 = arith.subf %532, %537 : vector<24x24xf32>
    %cst_205 = arith.constant 0.000000e+00 : f32
    %539 = vector.broadcast %cst_205 : f32 to vector<24x24xf32>
    %540 = arith.maximumf %538, %539 : vector<24x24xf32>
    %cst_206 = arith.constant dense<0.000000e+00> : vector<24xf32>
    %541 = vector.multi_reduction <add>, %540, %cst_206 [1] : vector<24x24xf32> to vector<24xf32>
    %542 = vector.shape_cast %541 : vector<24xf32> to vector<24x1xf32>
    %543 = vector.broadcast %542 : vector<24x1xf32> to vector<24x24xf32>
    %544 = arith.divf %540, %543 : vector<24x24xf32>
    %cst_207 = arith.constant dense<0.000000e+00> : vector<24xf32>
    %545 = vector.multi_reduction <add>, %376, %cst_207 [0] : vector<24x24xf32> to vector<24xf32>
    %546 = vector.shape_cast %545 : vector<24xf32> to vector<1x24xf32>
    %547 = vector.broadcast %546 : vector<1x24xf32> to vector<24x24xf32>
    %548 = arith.divf %376, %547 : vector<24x24xf32>
    %cst_208 = arith.constant dense<0.000000e+00> : vector<24xf32>
    %549 = vector.multi_reduction <add>, %548, %cst_208 [1] : vector<24x24xf32> to vector<24xf32>
    %550 = vector.shape_cast %549 : vector<24xf32> to vector<24x1xf32>
    %551 = vector.broadcast %550 : vector<24x1xf32> to vector<24x24xf32>
    %552 = arith.divf %548, %551 : vector<24x24xf32>
    %553 = tpu.transpose %552, [1, 0] : vector<24x24xf32> -> vector<24x24xf32>
    %554 = arith.addf %552, %553 : vector<24x24xf32>
    %cst_209 = arith.constant 5.000000e-01 : f32
    %555 = vector.broadcast %cst_209 : f32 to vector<24x24xf32>
    %556 = arith.mulf %554, %555 : vector<24x24xf32>
    %cst_210 = arith.constant dense<0xFF800000> : vector<24xf32>
    %557 = vector.multi_reduction <maximumf>, %556, %cst_210 [0] : vector<24x24xf32> to vector<24xf32>
    %558 = vector.shape_cast %557 : vector<24xf32> to vector<1x24xf32>
    %cst_211 = arith.constant 2.000000e-01 : f32
    %559 = vector.broadcast %cst_211 : f32 to vector<1x24xf32>
    %560 = arith.mulf %558, %559 : vector<1x24xf32>
    %561 = vector.broadcast %560 : vector<1x24xf32> to vector<24x24xf32>
    %562 = arith.subf %556, %561 : vector<24x24xf32>
    %cst_212 = arith.constant 0.000000e+00 : f32
    %563 = vector.broadcast %cst_212 : f32 to vector<24x24xf32>
    %564 = arith.maximumf %562, %563 : vector<24x24xf32>
    %cst_213 = arith.constant dense<0.000000e+00> : vector<24xf32>
    %565 = vector.multi_reduction <add>, %564, %cst_213 [1] : vector<24x24xf32> to vector<24xf32>
    %566 = vector.shape_cast %565 : vector<24xf32> to vector<24x1xf32>
    %567 = vector.broadcast %566 : vector<24x1xf32> to vector<24x24xf32>
    %568 = arith.divf %564, %567 : vector<24x24xf32>
    %c0_214 = arith.constant 0 : index
    %c0_215 = arith.constant 0 : index
    %569 = vector.load %arg13[%c0_214, %c0_215] : memref<1x32xf32, #tpu.memory_space<vmem>>, vector<1x32xf32>
    %c0_216 = arith.constant 0 : index
    %c0_217 = arith.constant 0 : index
    %570 = vector.load %arg14[%c0_216, %c0_217] : memref<1x32xf32, #tpu.memory_space<vmem>>, vector<1x32xf32>
    %cst_218 = arith.constant dense<0.000000e+00> : vector<24xf32>
    %571 = vector.multi_reduction <add>, %47, %cst_218 [1] : vector<24x32xf32> to vector<24xf32>
    %572 = vector.shape_cast %571 : vector<24xf32> to vector<24x1xf32>
    %cst_219 = arith.constant 3.200000e+01 : f32
    %573 = vector.broadcast %cst_219 : f32 to vector<24x1xf32>
    %574 = arith.divf %572, %573 : vector<24x1xf32>
    %575 = vector.broadcast %574 : vector<24x1xf32> to vector<24x32xf32>
    %576 = arith.subf %47, %575 : vector<24x32xf32>
    %577 = arith.mulf %576, %576 : vector<24x32xf32>
    %cst_220 = arith.constant dense<0.000000e+00> : vector<24xf32>
    %578 = vector.multi_reduction <add>, %577, %cst_220 [1] : vector<24x32xf32> to vector<24xf32>
    %579 = vector.shape_cast %578 : vector<24xf32> to vector<24x1xf32>
    %cst_221 = arith.constant 3.200000e+01 : f32
    %580 = vector.broadcast %cst_221 : f32 to vector<24x1xf32>
    %581 = arith.divf %579, %580 : vector<24x1xf32>
    %cst_222 = arith.constant 9.99999974E-6 : f32
    %582 = vector.broadcast %cst_222 : f32 to vector<24x1xf32>
    %583 = arith.addf %581, %582 : vector<24x1xf32>
    %584 = math.rsqrt %583 : vector<24x1xf32>
    %585 = vector.broadcast %584 : vector<24x1xf32> to vector<24x32xf32>
    %586 = arith.mulf %576, %585 : vector<24x32xf32>
    %587 = vector.broadcast %569 : vector<1x32xf32> to vector<24x32xf32>
    %588 = arith.mulf %586, %587 : vector<24x32xf32>
    %589 = vector.broadcast %570 : vector<1x32xf32> to vector<24x32xf32>
    %590 = arith.addf %588, %589 : vector<24x32xf32>
    %c0_223 = arith.constant 0 : index
    %c0_224 = arith.constant 0 : index
    %591 = vector.load %arg15[%c0_223, %c0_224] : memref<32x32xbf16, #tpu.memory_space<vmem>>, vector<32x32xbf16>
    %592 = arith.truncf %590 : vector<24x32xf32> to vector<24x32xbf16>
    %cst_225 = arith.constant dense<0.000000e+00> : vector<24x32xf32>
    %593 = tpu.matmul %592, %591, %cst_225 {dimension_numbers = #tpu.dot_dimension_numbers<[1], [0], [0], [1], [0, 0, 1, 1], [], []>} : vector<24x32xbf16>, vector<32x32xbf16>, vector<24x32xf32> -> vector<24x32xf32>
    %c0_226 = arith.constant 0 : index
    %c0_227 = arith.constant 0 : index
    %594 = vector.load %arg16[%c0_226, %c0_227] : memref<1x32xf32, #tpu.memory_space<vmem>>, vector<1x32xf32>
    %595 = vector.broadcast %594 : vector<1x32xf32> to vector<24x32xf32>
    %596 = arith.addf %593, %595 : vector<24x32xf32>
    %597 = vector.extract_strided_slice %596 {offsets = [0, 0], sizes = [24, 8], strides = [1, 1]} : vector<24x32xf32> to vector<24x8xf32>
    %598 = arith.truncf %496 : vector<24x24xf32> to vector<24x24xbf16>
    %599 = arith.truncf %597 : vector<24x8xf32> to vector<24x8xbf16>
    %cst_228 = arith.constant dense<0.000000e+00> : vector<24x8xf32>
    %600 = tpu.matmul %598, %599, %cst_228 {dimension_numbers = #tpu.dot_dimension_numbers<[1], [0], [0], [1], [0, 0, 1, 1], [], []>} : vector<24x24xbf16>, vector<24x8xbf16>, vector<24x8xf32> -> vector<24x8xf32>
    %601 = vector.extract_strided_slice %596 {offsets = [0, 8], sizes = [24, 8], strides = [1, 1]} : vector<24x32xf32> to vector<24x8xf32>
    %602 = arith.truncf %520 : vector<24x24xf32> to vector<24x24xbf16>
    %603 = arith.truncf %601 : vector<24x8xf32> to vector<24x8xbf16>
    %cst_229 = arith.constant dense<0.000000e+00> : vector<24x8xf32>
    %604 = tpu.matmul %602, %603, %cst_229 {dimension_numbers = #tpu.dot_dimension_numbers<[1], [0], [0], [1], [0, 0, 1, 1], [], []>} : vector<24x24xbf16>, vector<24x8xbf16>, vector<24x8xf32> -> vector<24x8xf32>
    %605 = vector.extract_strided_slice %596 {offsets = [0, 16], sizes = [24, 8], strides = [1, 1]} : vector<24x32xf32> to vector<24x8xf32>
    %606 = arith.truncf %544 : vector<24x24xf32> to vector<24x24xbf16>
    %607 = arith.truncf %605 : vector<24x8xf32> to vector<24x8xbf16>
    %cst_230 = arith.constant dense<0.000000e+00> : vector<24x8xf32>
    %608 = tpu.matmul %606, %607, %cst_230 {dimension_numbers = #tpu.dot_dimension_numbers<[1], [0], [0], [1], [0, 0, 1, 1], [], []>} : vector<24x24xbf16>, vector<24x8xbf16>, vector<24x8xf32> -> vector<24x8xf32>
    %609 = vector.extract_strided_slice %596 {offsets = [0, 24], sizes = [24, 8], strides = [1, 1]} : vector<24x32xf32> to vector<24x8xf32>
    %610 = arith.truncf %568 : vector<24x24xf32> to vector<24x24xbf16>
    %611 = arith.truncf %609 : vector<24x8xf32> to vector<24x8xbf16>
    %cst_231 = arith.constant dense<0.000000e+00> : vector<24x8xf32>
    %612 = tpu.matmul %610, %611, %cst_231 {dimension_numbers = #tpu.dot_dimension_numbers<[1], [0], [0], [1], [0, 0, 1, 1], [], []>} : vector<24x24xbf16>, vector<24x8xbf16>, vector<24x8xf32> -> vector<24x8xf32>
    %613 = tpu.concatenate %600, %604, %608, %612 in 1 : vector<24x8xf32>, vector<24x8xf32>, vector<24x8xf32>, vector<24x8xf32> -> vector<24x32xf32>
    %c0_232 = arith.constant 0 : index
    %c0_233 = arith.constant 0 : index
    %614 = vector.load %arg17[%c0_232, %c0_233] : memref<32x32xbf16, #tpu.memory_space<vmem>>, vector<32x32xbf16>
    %615 = arith.truncf %613 : vector<24x32xf32> to vector<24x32xbf16>
    %cst_234 = arith.constant dense<0.000000e+00> : vector<24x32xf32>
    %616 = tpu.matmul %615, %614, %cst_234 {dimension_numbers = #tpu.dot_dimension_numbers<[1], [0], [0], [1], [0, 0, 1, 1], [], []>} : vector<24x32xbf16>, vector<32x32xbf16>, vector<24x32xf32> -> vector<24x32xf32>
    %c0_235 = arith.constant 0 : index
    %c0_236 = arith.constant 0 : index
    %617 = vector.load %arg18[%c0_235, %c0_236] : memref<1x32xf32, #tpu.memory_space<vmem>>, vector<1x32xf32>
    %618 = vector.broadcast %617 : vector<1x32xf32> to vector<24x32xf32>
    %619 = arith.addf %616, %618 : vector<24x32xf32>
    %620 = arith.subf %619, %47 : vector<24x32xf32>
    %c0_237 = arith.constant 0 : index
    %c0_238 = arith.constant 0 : index
    %621 = vector.load %arg19[%c0_237, %c0_238] : memref<1x32xf32, #tpu.memory_space<vmem>>, vector<1x32xf32>
    %c0_239 = arith.constant 0 : index
    %c0_240 = arith.constant 0 : index
    %622 = vector.load %arg20[%c0_239, %c0_240] : memref<1x32xf32, #tpu.memory_space<vmem>>, vector<1x32xf32>
    %cst_241 = arith.constant dense<0.000000e+00> : vector<24xf32>
    %623 = vector.multi_reduction <add>, %620, %cst_241 [1] : vector<24x32xf32> to vector<24xf32>
    %624 = vector.shape_cast %623 : vector<24xf32> to vector<24x1xf32>
    %cst_242 = arith.constant 3.200000e+01 : f32
    %625 = vector.broadcast %cst_242 : f32 to vector<24x1xf32>
    %626 = arith.divf %624, %625 : vector<24x1xf32>
    %627 = vector.broadcast %626 : vector<24x1xf32> to vector<24x32xf32>
    %628 = arith.subf %620, %627 : vector<24x32xf32>
    %629 = arith.mulf %628, %628 : vector<24x32xf32>
    %cst_243 = arith.constant dense<0.000000e+00> : vector<24xf32>
    %630 = vector.multi_reduction <add>, %629, %cst_243 [1] : vector<24x32xf32> to vector<24xf32>
    %631 = vector.shape_cast %630 : vector<24xf32> to vector<24x1xf32>
    %cst_244 = arith.constant 3.200000e+01 : f32
    %632 = vector.broadcast %cst_244 : f32 to vector<24x1xf32>
    %633 = arith.divf %631, %632 : vector<24x1xf32>
    %cst_245 = arith.constant 9.99999974E-6 : f32
    %634 = vector.broadcast %cst_245 : f32 to vector<24x1xf32>
    %635 = arith.addf %633, %634 : vector<24x1xf32>
    %636 = math.rsqrt %635 : vector<24x1xf32>
    %637 = vector.broadcast %636 : vector<24x1xf32> to vector<24x32xf32>
    %638 = arith.mulf %628, %637 : vector<24x32xf32>
    %639 = vector.broadcast %621 : vector<1x32xf32> to vector<24x32xf32>
    %640 = arith.mulf %638, %639 : vector<24x32xf32>
    %641 = vector.broadcast %622 : vector<1x32xf32> to vector<24x32xf32>
    %642 = arith.addf %640, %641 : vector<24x32xf32>
    %c0_246 = arith.constant 0 : index
    %c0_247 = arith.constant 0 : index
    %643 = vector.load %arg21[%c0_246, %c0_247] : memref<32x16xbf16, #tpu.memory_space<vmem>>, vector<32x16xbf16>
    %644 = arith.truncf %642 : vector<24x32xf32> to vector<24x32xbf16>
    %cst_248 = arith.constant dense<0.000000e+00> : vector<24x16xf32>
    %645 = tpu.matmul %644, %643, %cst_248 {dimension_numbers = #tpu.dot_dimension_numbers<[1], [0], [0], [1], [0, 0, 1, 1], [], []>} : vector<24x32xbf16>, vector<32x16xbf16>, vector<24x16xf32> -> vector<24x16xf32>
    %c0_249 = arith.constant 0 : index
    %c0_250 = arith.constant 0 : index
    %c0_251 = arith.constant 0 : index
    %646 = vector.load %arg23[%c0_249, %c0_250, %c0_251] : memref<3x24x16xf32, #tpu.memory_space<vmem>>, vector<1x24x16xf32>
    %647 = vector.shape_cast %646 : vector<1x24x16xf32> to vector<24x16xf32>
    %648 = vector.shape_cast %645 : vector<24x16xf32> to vector<1x24x16xf32>
    tpu.vector_store %arg23[%c0_249, %c0_250, %c0_251], %648 {strides = array<i32>} : memref<3x24x16xf32, #tpu.memory_space<vmem>>, vector<1x24x16xf32>,
    %649 = arith.mulf %645, %645 : vector<24x16xf32>
    %cst_252 = arith.constant dense<0.000000e+00> : vector<24xf32>
    %650 = vector.multi_reduction <add>, %649, %cst_252 [1] : vector<24x16xf32> to vector<24xf32>
    %651 = vector.shape_cast %650 : vector<24xf32> to vector<24x1xf32>
    %cst_253 = arith.constant 9.99999996E-13 : f32
    %652 = vector.broadcast %cst_253 : f32 to vector<24x1xf32>
    %653 = arith.addf %651, %652 : vector<24x1xf32>
    %654 = math.rsqrt %653 : vector<24x1xf32>
    %655 = vector.broadcast %654 : vector<24x1xf32> to vector<24x16xf32>
    %656 = arith.mulf %645, %655 : vector<24x16xf32>
    %cst_254 = arith.constant dense<0.000000e+00> : vector<24x6xf32>
    %657 = tpu.matmul %656, %472, %cst_254 {dimension_numbers = #tpu.dot_dimension_numbers<[1], [1], [0], [0], [0, 0, 1, 0], [], []>} : vector<24x16xf32>, vector<6x16xf32>, vector<24x6xf32> -> vector<24x6xf32>
    %cst_255 = arith.constant 1.000000e+02 : f32
    %658 = vector.broadcast %cst_255 : f32 to vector<24x6xf32>
    %659 = arith.mulf %658, %657 : vector<24x6xf32>
    %cst_256 = arith.constant dense<0xFF800000> : vector<24xf32>
    %660 = vector.multi_reduction <maximumf>, %659, %cst_256 [1] : vector<24x6xf32> to vector<24xf32>
    %661 = vector.shape_cast %660 : vector<24xf32> to vector<24x1xf32>
    %662 = vector.broadcast %661 : vector<24x1xf32> to vector<24x6xf32>
    %663 = arith.subf %659, %662 : vector<24x6xf32>
    %664 = math.exp %663 : vector<24x6xf32>
    %cst_257 = arith.constant dense<0.000000e+00> : vector<24xf32>
    %665 = vector.multi_reduction <add>, %664, %cst_257 [1] : vector<24x6xf32> to vector<24xf32>
    %666 = vector.shape_cast %665 : vector<24xf32> to vector<24x1xf32>
    %667 = vector.broadcast %666 : vector<24x1xf32> to vector<24x6xf32>
    %668 = arith.divf %664, %667 : vector<24x6xf32>
    %669 = vector.extract_strided_slice %668 {offsets = [0, 0], sizes = [24, 3], strides = [1, 1]} : vector<24x6xf32> to vector<24x3xf32>
    %670 = vector.broadcast %15 : vector<24x1xf32> to vector<24x3xf32>
    %671 = arith.mulf %669, %670 : vector<24x3xf32>
    %cst_258 = arith.constant dense<0.000000e+00> : vector<24xf32>
    %672 = vector.multi_reduction <add>, %480, %cst_258 [0] : vector<24x24xf32> to vector<24xf32>
    %673 = vector.shape_cast %672 : vector<24xf32> to vector<1x24xf32>
    %674 = vector.broadcast %673 : vector<1x24xf32> to vector<24x24xf32>
    %675 = arith.divf %480, %674 : vector<24x24xf32>
    %cst_259 = arith.constant dense<0.000000e+00> : vector<24xf32>
    %676 = vector.multi_reduction <add>, %675, %cst_259 [1] : vector<24x24xf32> to vector<24xf32>
    %677 = vector.shape_cast %676 : vector<24xf32> to vector<24x1xf32>
    %678 = vector.broadcast %677 : vector<24x1xf32> to vector<24x24xf32>
    %679 = arith.divf %675, %678 : vector<24x24xf32>
    %680 = tpu.transpose %679, [1, 0] : vector<24x24xf32> -> vector<24x24xf32>
    %681 = arith.addf %679, %680 : vector<24x24xf32>
    %cst_260 = arith.constant 5.000000e-01 : f32
    %682 = vector.broadcast %cst_260 : f32 to vector<24x24xf32>
    %683 = arith.mulf %681, %682 : vector<24x24xf32>
    %cst_261 = arith.constant dense<0xFF800000> : vector<24xf32>
    %684 = vector.multi_reduction <maximumf>, %683, %cst_261 [0] : vector<24x24xf32> to vector<24xf32>
    %685 = vector.shape_cast %684 : vector<24xf32> to vector<1x24xf32>
    %cst_262 = arith.constant 2.000000e-01 : f32
    %686 = vector.broadcast %cst_262 : f32 to vector<1x24xf32>
    %687 = arith.mulf %685, %686 : vector<1x24xf32>
    %688 = vector.broadcast %687 : vector<1x24xf32> to vector<24x24xf32>
    %689 = arith.subf %683, %688 : vector<24x24xf32>
    %cst_263 = arith.constant 0.000000e+00 : f32
    %690 = vector.broadcast %cst_263 : f32 to vector<24x24xf32>
    %691 = arith.maximumf %689, %690 : vector<24x24xf32>
    %cst_264 = arith.constant dense<0.000000e+00> : vector<24xf32>
    %692 = vector.multi_reduction <add>, %691, %cst_264 [1] : vector<24x24xf32> to vector<24xf32>
    %693 = vector.shape_cast %692 : vector<24xf32> to vector<24x1xf32>
    %694 = vector.broadcast %693 : vector<24x1xf32> to vector<24x24xf32>
    %695 = arith.divf %691, %694 : vector<24x24xf32>
    %cst_265 = arith.constant dense<0.000000e+00> : vector<24xf32>
    %696 = vector.multi_reduction <add>, %504, %cst_265 [0] : vector<24x24xf32> to vector<24xf32>
    %697 = vector.shape_cast %696 : vector<24xf32> to vector<1x24xf32>
    %698 = vector.broadcast %697 : vector<1x24xf32> to vector<24x24xf32>
    %699 = arith.divf %504, %698 : vector<24x24xf32>
    %cst_266 = arith.constant dense<0.000000e+00> : vector<24xf32>
    %700 = vector.multi_reduction <add>, %699, %cst_266 [1] : vector<24x24xf32> to vector<24xf32>
    %701 = vector.shape_cast %700 : vector<24xf32> to vector<24x1xf32>
    %702 = vector.broadcast %701 : vector<24x1xf32> to vector<24x24xf32>
    %703 = arith.divf %699, %702 : vector<24x24xf32>
    %704 = tpu.transpose %703, [1, 0] : vector<24x24xf32> -> vector<24x24xf32>
    %705 = arith.addf %703, %704 : vector<24x24xf32>
    %cst_267 = arith.constant 5.000000e-01 : f32
    %706 = vector.broadcast %cst_267 : f32 to vector<24x24xf32>
    %707 = arith.mulf %705, %706 : vector<24x24xf32>
    %cst_268 = arith.constant dense<0xFF800000> : vector<24xf32>
    %708 = vector.multi_reduction <maximumf>, %707, %cst_268 [0] : vector<24x24xf32> to vector<24xf32>
    %709 = vector.shape_cast %708 : vector<24xf32> to vector<1x24xf32>
    %cst_269 = arith.constant 2.000000e-01 : f32
    %710 = vector.broadcast %cst_269 : f32 to vector<1x24xf32>
    %711 = arith.mulf %709, %710 : vector<1x24xf32>
    %712 = vector.broadcast %711 : vector<1x24xf32> to vector<24x24xf32>
    %713 = arith.subf %707, %712 : vector<24x24xf32>
    %cst_270 = arith.constant 0.000000e+00 : f32
    %714 = vector.broadcast %cst_270 : f32 to vector<24x24xf32>
    %715 = arith.maximumf %713, %714 : vector<24x24xf32>
    %cst_271 = arith.constant dense<0.000000e+00> : vector<24xf32>
    %716 = vector.multi_reduction <add>, %715, %cst_271 [1] : vector<24x24xf32> to vector<24xf32>
    %717 = vector.shape_cast %716 : vector<24xf32> to vector<24x1xf32>
    %718 = vector.broadcast %717 : vector<24x1xf32> to vector<24x24xf32>
    %719 = arith.divf %715, %718 : vector<24x24xf32>
    %cst_272 = arith.constant dense<0.000000e+00> : vector<24xf32>
    %720 = vector.multi_reduction <add>, %528, %cst_272 [0] : vector<24x24xf32> to vector<24xf32>
    %721 = vector.shape_cast %720 : vector<24xf32> to vector<1x24xf32>
    %722 = vector.broadcast %721 : vector<1x24xf32> to vector<24x24xf32>
    %723 = arith.divf %528, %722 : vector<24x24xf32>
    %cst_273 = arith.constant dense<0.000000e+00> : vector<24xf32>
    %724 = vector.multi_reduction <add>, %723, %cst_273 [1] : vector<24x24xf32> to vector<24xf32>
    %725 = vector.shape_cast %724 : vector<24xf32> to vector<24x1xf32>
    %726 = vector.broadcast %725 : vector<24x1xf32> to vector<24x24xf32>
    %727 = arith.divf %723, %726 : vector<24x24xf32>
    %728 = tpu.transpose %727, [1, 0] : vector<24x24xf32> -> vector<24x24xf32>
    %729 = arith.addf %727, %728 : vector<24x24xf32>
    %cst_274 = arith.constant 5.000000e-01 : f32
    %730 = vector.broadcast %cst_274 : f32 to vector<24x24xf32>
    %731 = arith.mulf %729, %730 : vector<24x24xf32>
    %cst_275 = arith.constant dense<0xFF800000> : vector<24xf32>
    %732 = vector.multi_reduction <maximumf>, %731, %cst_275 [0] : vector<24x24xf32> to vector<24xf32>
    %733 = vector.shape_cast %732 : vector<24xf32> to vector<1x24xf32>
    %cst_276 = arith.constant 2.000000e-01 : f32
    %734 = vector.broadcast %cst_276 : f32 to vector<1x24xf32>
    %735 = arith.mulf %733, %734 : vector<1x24xf32>
    %736 = vector.broadcast %735 : vector<1x24xf32> to vector<24x24xf32>
    %737 = arith.subf %731, %736 : vector<24x24xf32>
    %cst_277 = arith.constant 0.000000e+00 : f32
    %738 = vector.broadcast %cst_277 : f32 to vector<24x24xf32>
    %739 = arith.maximumf %737, %738 : vector<24x24xf32>
    %cst_278 = arith.constant dense<0.000000e+00> : vector<24xf32>
    %740 = vector.multi_reduction <add>, %739, %cst_278 [1] : vector<24x24xf32> to vector<24xf32>
    %741 = vector.shape_cast %740 : vector<24xf32> to vector<24x1xf32>
    %742 = vector.broadcast %741 : vector<24x1xf32> to vector<24x24xf32>
    %743 = arith.divf %739, %742 : vector<24x24xf32>
    %cst_279 = arith.constant dense<0.000000e+00> : vector<24xf32>
    %744 = vector.multi_reduction <add>, %552, %cst_279 [0] : vector<24x24xf32> to vector<24xf32>
    %745 = vector.shape_cast %744 : vector<24xf32> to vector<1x24xf32>
    %746 = vector.broadcast %745 : vector<1x24xf32> to vector<24x24xf32>
    %747 = arith.divf %552, %746 : vector<24x24xf32>
    %cst_280 = arith.constant dense<0.000000e+00> : vector<24xf32>
    %748 = vector.multi_reduction <add>, %747, %cst_280 [1] : vector<24x24xf32> to vector<24xf32>
    %749 = vector.shape_cast %748 : vector<24xf32> to vector<24x1xf32>
    %750 = vector.broadcast %749 : vector<24x1xf32> to vector<24x24xf32>
    %751 = arith.divf %747, %750 : vector<24x24xf32>
    %752 = tpu.transpose %751, [1, 0] : vector<24x24xf32> -> vector<24x24xf32>
    %753 = arith.addf %751, %752 : vector<24x24xf32>
    %cst_281 = arith.constant 5.000000e-01 : f32
    %754 = vector.broadcast %cst_281 : f32 to vector<24x24xf32>
    %755 = arith.mulf %753, %754 : vector<24x24xf32>
    %cst_282 = arith.constant dense<0xFF800000> : vector<24xf32>
    %756 = vector.multi_reduction <maximumf>, %755, %cst_282 [0] : vector<24x24xf32> to vector<24xf32>
    %757 = vector.shape_cast %756 : vector<24xf32> to vector<1x24xf32>
    %cst_283 = arith.constant 2.000000e-01 : f32
    %758 = vector.broadcast %cst_283 : f32 to vector<1x24xf32>
    %759 = arith.mulf %757, %758 : vector<1x24xf32>
    %760 = vector.broadcast %759 : vector<1x24xf32> to vector<24x24xf32>
    %761 = arith.subf %755, %760 : vector<24x24xf32>
    %cst_284 = arith.constant 0.000000e+00 : f32
    %762 = vector.broadcast %cst_284 : f32 to vector<24x24xf32>
    %763 = arith.maximumf %761, %762 : vector<24x24xf32>
    %cst_285 = arith.constant dense<0.000000e+00> : vector<24xf32>
    %764 = vector.multi_reduction <add>, %763, %cst_285 [1] : vector<24x24xf32> to vector<24xf32>
    %765 = vector.shape_cast %764 : vector<24xf32> to vector<24x1xf32>
    %766 = vector.broadcast %765 : vector<24x1xf32> to vector<24x24xf32>
    %767 = arith.divf %763, %766 : vector<24x24xf32>
    %c0_286 = arith.constant 0 : index
    %c0_287 = arith.constant 0 : index
    %768 = vector.load %arg13[%c0_286, %c0_287] : memref<1x32xf32, #tpu.memory_space<vmem>>, vector<1x32xf32>
    %c0_288 = arith.constant 0 : index
    %c0_289 = arith.constant 0 : index
    %769 = vector.load %arg14[%c0_288, %c0_289] : memref<1x32xf32, #tpu.memory_space<vmem>>, vector<1x32xf32>
    %cst_290 = arith.constant dense<0.000000e+00> : vector<24xf32>
    %770 = vector.multi_reduction <add>, %271, %cst_290 [1] : vector<24x32xf32> to vector<24xf32>
    %771 = vector.shape_cast %770 : vector<24xf32> to vector<24x1xf32>
    %cst_291 = arith.constant 3.200000e+01 : f32
    %772 = vector.broadcast %cst_291 : f32 to vector<24x1xf32>
    %773 = arith.divf %771, %772 : vector<24x1xf32>
    %774 = vector.broadcast %773 : vector<24x1xf32> to vector<24x32xf32>
    %775 = arith.subf %271, %774 : vector<24x32xf32>
    %776 = arith.mulf %775, %775 : vector<24x32xf32>
    %cst_292 = arith.constant dense<0.000000e+00> : vector<24xf32>
    %777 = vector.multi_reduction <add>, %776, %cst_292 [1] : vector<24x32xf32> to vector<24xf32>
    %778 = vector.shape_cast %777 : vector<24xf32> to vector<24x1xf32>
    %cst_293 = arith.constant 3.200000e+01 : f32
    %779 = vector.broadcast %cst_293 : f32 to vector<24x1xf32>
    %780 = arith.divf %778, %779 : vector<24x1xf32>
    %cst_294 = arith.constant 9.99999974E-6 : f32
    %781 = vector.broadcast %cst_294 : f32 to vector<24x1xf32>
    %782 = arith.addf %780, %781 : vector<24x1xf32>
    %783 = math.rsqrt %782 : vector<24x1xf32>
    %784 = vector.broadcast %783 : vector<24x1xf32> to vector<24x32xf32>
    %785 = arith.mulf %775, %784 : vector<24x32xf32>
    %786 = vector.broadcast %768 : vector<1x32xf32> to vector<24x32xf32>
    %787 = arith.mulf %785, %786 : vector<24x32xf32>
    %788 = vector.broadcast %769 : vector<1x32xf32> to vector<24x32xf32>
    %789 = arith.addf %787, %788 : vector<24x32xf32>
    %c0_295 = arith.constant 0 : index
    %c0_296 = arith.constant 0 : index
    %790 = vector.load %arg15[%c0_295, %c0_296] : memref<32x32xbf16, #tpu.memory_space<vmem>>, vector<32x32xbf16>
    %791 = arith.truncf %789 : vector<24x32xf32> to vector<24x32xbf16>
    %cst_297 = arith.constant dense<0.000000e+00> : vector<24x32xf32>
    %792 = tpu.matmul %791, %790, %cst_297 {dimension_numbers = #tpu.dot_dimension_numbers<[1], [0], [0], [1], [0, 0, 1, 1], [], []>} : vector<24x32xbf16>, vector<32x32xbf16>, vector<24x32xf32> -> vector<24x32xf32>
    %c0_298 = arith.constant 0 : index
    %c0_299 = arith.constant 0 : index
    %793 = vector.load %arg16[%c0_298, %c0_299] : memref<1x32xf32, #tpu.memory_space<vmem>>, vector<1x32xf32>
    %794 = vector.broadcast %793 : vector<1x32xf32> to vector<24x32xf32>
    %795 = arith.addf %792, %794 : vector<24x32xf32>
    %796 = vector.extract_strided_slice %795 {offsets = [0, 0], sizes = [24, 8], strides = [1, 1]} : vector<24x32xf32> to vector<24x8xf32>
    %797 = arith.truncf %695 : vector<24x24xf32> to vector<24x24xbf16>
    %798 = arith.truncf %796 : vector<24x8xf32> to vector<24x8xbf16>
    %cst_300 = arith.constant dense<0.000000e+00> : vector<24x8xf32>
    %799 = tpu.matmul %797, %798, %cst_300 {dimension_numbers = #tpu.dot_dimension_numbers<[1], [0], [0], [1], [0, 0, 1, 1], [], []>} : vector<24x24xbf16>, vector<24x8xbf16>, vector<24x8xf32> -> vector<24x8xf32>
    %800 = vector.extract_strided_slice %795 {offsets = [0, 8], sizes = [24, 8], strides = [1, 1]} : vector<24x32xf32> to vector<24x8xf32>
    %801 = arith.truncf %719 : vector<24x24xf32> to vector<24x24xbf16>
    %802 = arith.truncf %800 : vector<24x8xf32> to vector<24x8xbf16>
    %cst_301 = arith.constant dense<0.000000e+00> : vector<24x8xf32>
    %803 = tpu.matmul %801, %802, %cst_301 {dimension_numbers = #tpu.dot_dimension_numbers<[1], [0], [0], [1], [0, 0, 1, 1], [], []>} : vector<24x24xbf16>, vector<24x8xbf16>, vector<24x8xf32> -> vector<24x8xf32>
    %804 = vector.extract_strided_slice %795 {offsets = [0, 16], sizes = [24, 8], strides = [1, 1]} : vector<24x32xf32> to vector<24x8xf32>
    %805 = arith.truncf %743 : vector<24x24xf32> to vector<24x24xbf16>
    %806 = arith.truncf %804 : vector<24x8xf32> to vector<24x8xbf16>
    %cst_302 = arith.constant dense<0.000000e+00> : vector<24x8xf32>
    %807 = tpu.matmul %805, %806, %cst_302 {dimension_numbers = #tpu.dot_dimension_numbers<[1], [0], [0], [1], [0, 0, 1, 1], [], []>} : vector<24x24xbf16>, vector<24x8xbf16>, vector<24x8xf32> -> vector<24x8xf32>
    %808 = vector.extract_strided_slice %795 {offsets = [0, 24], sizes = [24, 8], strides = [1, 1]} : vector<24x32xf32> to vector<24x8xf32>
    %809 = arith.truncf %767 : vector<24x24xf32> to vector<24x24xbf16>
    %810 = arith.truncf %808 : vector<24x8xf32> to vector<24x8xbf16>
    %cst_303 = arith.constant dense<0.000000e+00> : vector<24x8xf32>
    %811 = tpu.matmul %809, %810, %cst_303 {dimension_numbers = #tpu.dot_dimension_numbers<[1], [0], [0], [1], [0, 0, 1, 1], [], []>} : vector<24x24xbf16>, vector<24x8xbf16>, vector<24x8xf32> -> vector<24x8xf32>
    %812 = tpu.concatenate %799, %803, %807, %811 in 1 : vector<24x8xf32>, vector<24x8xf32>, vector<24x8xf32>, vector<24x8xf32> -> vector<24x32xf32>
    %c0_304 = arith.constant 0 : index
    %c0_305 = arith.constant 0 : index
    %813 = vector.load %arg17[%c0_304, %c0_305] : memref<32x32xbf16, #tpu.memory_space<vmem>>, vector<32x32xbf16>
    %814 = arith.truncf %812 : vector<24x32xf32> to vector<24x32xbf16>
    %cst_306 = arith.constant dense<0.000000e+00> : vector<24x32xf32>
    %815 = tpu.matmul %814, %813, %cst_306 {dimension_numbers = #tpu.dot_dimension_numbers<[1], [0], [0], [1], [0, 0, 1, 1], [], []>} : vector<24x32xbf16>, vector<32x32xbf16>, vector<24x32xf32> -> vector<24x32xf32>
    %c0_307 = arith.constant 0 : index
    %c0_308 = arith.constant 0 : index
    %816 = vector.load %arg18[%c0_307, %c0_308] : memref<1x32xf32, #tpu.memory_space<vmem>>, vector<1x32xf32>
    %817 = vector.broadcast %816 : vector<1x32xf32> to vector<24x32xf32>
    %818 = arith.addf %815, %817 : vector<24x32xf32>
    %819 = arith.subf %818, %271 : vector<24x32xf32>
    %c0_309 = arith.constant 0 : index
    %c0_310 = arith.constant 0 : index
    %820 = vector.load %arg19[%c0_309, %c0_310] : memref<1x32xf32, #tpu.memory_space<vmem>>, vector<1x32xf32>
    %c0_311 = arith.constant 0 : index
    %c0_312 = arith.constant 0 : index
    %821 = vector.load %arg20[%c0_311, %c0_312] : memref<1x32xf32, #tpu.memory_space<vmem>>, vector<1x32xf32>
    %cst_313 = arith.constant dense<0.000000e+00> : vector<24xf32>
    %822 = vector.multi_reduction <add>, %819, %cst_313 [1] : vector<24x32xf32> to vector<24xf32>
    %823 = vector.shape_cast %822 : vector<24xf32> to vector<24x1xf32>
    %cst_314 = arith.constant 3.200000e+01 : f32
    %824 = vector.broadcast %cst_314 : f32 to vector<24x1xf32>
    %825 = arith.divf %823, %824 : vector<24x1xf32>
    %826 = vector.broadcast %825 : vector<24x1xf32> to vector<24x32xf32>
    %827 = arith.subf %819, %826 : vector<24x32xf32>
    %828 = arith.mulf %827, %827 : vector<24x32xf32>
    %cst_315 = arith.constant dense<0.000000e+00> : vector<24xf32>
    %829 = vector.multi_reduction <add>, %828, %cst_315 [1] : vector<24x32xf32> to vector<24xf32>
    %830 = vector.shape_cast %829 : vector<24xf32> to vector<24x1xf32>
    %cst_316 = arith.constant 3.200000e+01 : f32
    %831 = vector.broadcast %cst_316 : f32 to vector<24x1xf32>
    %832 = arith.divf %830, %831 : vector<24x1xf32>
    %cst_317 = arith.constant 9.99999974E-6 : f32
    %833 = vector.broadcast %cst_317 : f32 to vector<24x1xf32>
    %834 = arith.addf %832, %833 : vector<24x1xf32>
    %835 = math.rsqrt %834 : vector<24x1xf32>
    %836 = vector.broadcast %835 : vector<24x1xf32> to vector<24x32xf32>
    %837 = arith.mulf %827, %836 : vector<24x32xf32>
    %838 = vector.broadcast %820 : vector<1x32xf32> to vector<24x32xf32>
    %839 = arith.mulf %837, %838 : vector<24x32xf32>
    %840 = vector.broadcast %821 : vector<1x32xf32> to vector<24x32xf32>
    %841 = arith.addf %839, %840 : vector<24x32xf32>
    %c0_318 = arith.constant 0 : index
    %c0_319 = arith.constant 0 : index
    %842 = vector.load %arg21[%c0_318, %c0_319] : memref<32x16xbf16, #tpu.memory_space<vmem>>, vector<32x16xbf16>
    %843 = arith.truncf %841 : vector<24x32xf32> to vector<24x32xbf16>
    %cst_320 = arith.constant dense<0.000000e+00> : vector<24x16xf32>
    %844 = tpu.matmul %843, %842, %cst_320 {dimension_numbers = #tpu.dot_dimension_numbers<[1], [0], [0], [1], [0, 0, 1, 1], [], []>} : vector<24x32xbf16>, vector<32x16xbf16>, vector<24x16xf32> -> vector<24x16xf32>
    %c1_321 = arith.constant 1 : index
    %c0_322 = arith.constant 0 : index
    %c0_323 = arith.constant 0 : index
    %845 = vector.load %arg23[%c1_321, %c0_322, %c0_323] : memref<3x24x16xf32, #tpu.memory_space<vmem>>, vector<1x24x16xf32>
    %846 = vector.shape_cast %845 : vector<1x24x16xf32> to vector<24x16xf32>
    %847 = vector.shape_cast %844 : vector<24x16xf32> to vector<1x24x16xf32>
    tpu.vector_store %arg23[%c1_321, %c0_322, %c0_323], %847 {strides = array<i32>} : memref<3x24x16xf32, #tpu.memory_space<vmem>>, vector<1x24x16xf32>,
    %848 = arith.mulf %844, %844 : vector<24x16xf32>
    %cst_324 = arith.constant dense<0.000000e+00> : vector<24xf32>
    %849 = vector.multi_reduction <add>, %848, %cst_324 [1] : vector<24x16xf32> to vector<24xf32>
    %850 = vector.shape_cast %849 : vector<24xf32> to vector<24x1xf32>
    %cst_325 = arith.constant 9.99999996E-13 : f32
    %851 = vector.broadcast %cst_325 : f32 to vector<24x1xf32>
    %852 = arith.addf %850, %851 : vector<24x1xf32>
    %853 = math.rsqrt %852 : vector<24x1xf32>
    %854 = vector.broadcast %853 : vector<24x1xf32> to vector<24x16xf32>
    %855 = arith.mulf %844, %854 : vector<24x16xf32>
    %cst_326 = arith.constant dense<0.000000e+00> : vector<24x6xf32>
    %856 = tpu.matmul %855, %472, %cst_326 {dimension_numbers = #tpu.dot_dimension_numbers<[1], [1], [0], [0], [0, 0, 1, 0], [], []>} : vector<24x16xf32>, vector<6x16xf32>, vector<24x6xf32> -> vector<24x6xf32>
    %cst_327 = arith.constant 1.000000e+02 : f32
    %857 = vector.broadcast %cst_327 : f32 to vector<24x6xf32>
    %858 = arith.mulf %857, %856 : vector<24x6xf32>
    %cst_328 = arith.constant dense<0xFF800000> : vector<24xf32>
    %859 = vector.multi_reduction <maximumf>, %858, %cst_328 [1] : vector<24x6xf32> to vector<24xf32>
    %860 = vector.shape_cast %859 : vector<24xf32> to vector<24x1xf32>
    %861 = vector.broadcast %860 : vector<24x1xf32> to vector<24x6xf32>
    %862 = arith.subf %858, %861 : vector<24x6xf32>
    %863 = math.exp %862 : vector<24x6xf32>
    %cst_329 = arith.constant dense<0.000000e+00> : vector<24xf32>
    %864 = vector.multi_reduction <add>, %863, %cst_329 [1] : vector<24x6xf32> to vector<24xf32>
    %865 = vector.shape_cast %864 : vector<24xf32> to vector<24x1xf32>
    %866 = vector.broadcast %865 : vector<24x1xf32> to vector<24x6xf32>
    %867 = arith.divf %863, %866 : vector<24x6xf32>
    %868 = vector.extract_strided_slice %867 {offsets = [0, 0], sizes = [24, 3], strides = [1, 1]} : vector<24x6xf32> to vector<24x3xf32>
    %869 = vector.broadcast %15 : vector<24x1xf32> to vector<24x3xf32>
    %870 = arith.mulf %868, %869 : vector<24x3xf32>
    %cst_330 = arith.constant dense<0.000000e+00> : vector<24xf32>
    %871 = vector.multi_reduction <add>, %679, %cst_330 [0] : vector<24x24xf32> to vector<24xf32>
    %872 = vector.shape_cast %871 : vector<24xf32> to vector<1x24xf32>
    %873 = vector.broadcast %872 : vector<1x24xf32> to vector<24x24xf32>
    %874 = arith.divf %679, %873 : vector<24x24xf32>
    %cst_331 = arith.constant dense<0.000000e+00> : vector<24xf32>
    %875 = vector.multi_reduction <add>, %874, %cst_331 [1] : vector<24x24xf32> to vector<24xf32>
    %876 = vector.shape_cast %875 : vector<24xf32> to vector<24x1xf32>
    %877 = vector.broadcast %876 : vector<24x1xf32> to vector<24x24xf32>
    %878 = arith.divf %874, %877 : vector<24x24xf32>
    %879 = tpu.transpose %878, [1, 0] : vector<24x24xf32> -> vector<24x24xf32>
    %880 = arith.addf %878, %879 : vector<24x24xf32>
    %cst_332 = arith.constant 5.000000e-01 : f32
    %881 = vector.broadcast %cst_332 : f32 to vector<24x24xf32>
    %882 = arith.mulf %880, %881 : vector<24x24xf32>
    %cst_333 = arith.constant dense<0xFF800000> : vector<24xf32>
    %883 = vector.multi_reduction <maximumf>, %882, %cst_333 [0] : vector<24x24xf32> to vector<24xf32>
    %884 = vector.shape_cast %883 : vector<24xf32> to vector<1x24xf32>
    %cst_334 = arith.constant 2.000000e-01 : f32
    %885 = vector.broadcast %cst_334 : f32 to vector<1x24xf32>
    %886 = arith.mulf %884, %885 : vector<1x24xf32>
    %887 = vector.broadcast %886 : vector<1x24xf32> to vector<24x24xf32>
    %888 = arith.subf %882, %887 : vector<24x24xf32>
    %cst_335 = arith.constant 0.000000e+00 : f32
    %889 = vector.broadcast %cst_335 : f32 to vector<24x24xf32>
    %890 = arith.maximumf %888, %889 : vector<24x24xf32>
    %cst_336 = arith.constant dense<0.000000e+00> : vector<24xf32>
    %891 = vector.multi_reduction <add>, %890, %cst_336 [1] : vector<24x24xf32> to vector<24xf32>
    %892 = vector.shape_cast %891 : vector<24xf32> to vector<24x1xf32>
    %893 = vector.broadcast %892 : vector<24x1xf32> to vector<24x24xf32>
    %894 = arith.divf %890, %893 : vector<24x24xf32>
    %cst_337 = arith.constant dense<0.000000e+00> : vector<24xf32>
    %895 = vector.multi_reduction <add>, %703, %cst_337 [0] : vector<24x24xf32> to vector<24xf32>
    %896 = vector.shape_cast %895 : vector<24xf32> to vector<1x24xf32>
    %897 = vector.broadcast %896 : vector<1x24xf32> to vector<24x24xf32>
    %898 = arith.divf %703, %897 : vector<24x24xf32>
    %cst_338 = arith.constant dense<0.000000e+00> : vector<24xf32>
    %899 = vector.multi_reduction <add>, %898, %cst_338 [1] : vector<24x24xf32> to vector<24xf32>
    %900 = vector.shape_cast %899 : vector<24xf32> to vector<24x1xf32>
    %901 = vector.broadcast %900 : vector<24x1xf32> to vector<24x24xf32>
    %902 = arith.divf %898, %901 : vector<24x24xf32>
    %903 = tpu.transpose %902, [1, 0] : vector<24x24xf32> -> vector<24x24xf32>
    %904 = arith.addf %902, %903 : vector<24x24xf32>
    %cst_339 = arith.constant 5.000000e-01 : f32
    %905 = vector.broadcast %cst_339 : f32 to vector<24x24xf32>
    %906 = arith.mulf %904, %905 : vector<24x24xf32>
    %cst_340 = arith.constant dense<0xFF800000> : vector<24xf32>
    %907 = vector.multi_reduction <maximumf>, %906, %cst_340 [0] : vector<24x24xf32> to vector<24xf32>
    %908 = vector.shape_cast %907 : vector<24xf32> to vector<1x24xf32>
    %cst_341 = arith.constant 2.000000e-01 : f32
    %909 = vector.broadcast %cst_341 : f32 to vector<1x24xf32>
    %910 = arith.mulf %908, %909 : vector<1x24xf32>
    %911 = vector.broadcast %910 : vector<1x24xf32> to vector<24x24xf32>
    %912 = arith.subf %906, %911 : vector<24x24xf32>
    %cst_342 = arith.constant 0.000000e+00 : f32
    %913 = vector.broadcast %cst_342 : f32 to vector<24x24xf32>
    %914 = arith.maximumf %912, %913 : vector<24x24xf32>
    %cst_343 = arith.constant dense<0.000000e+00> : vector<24xf32>
    %915 = vector.multi_reduction <add>, %914, %cst_343 [1] : vector<24x24xf32> to vector<24xf32>
    %916 = vector.shape_cast %915 : vector<24xf32> to vector<24x1xf32>
    %917 = vector.broadcast %916 : vector<24x1xf32> to vector<24x24xf32>
    %918 = arith.divf %914, %917 : vector<24x24xf32>
    %cst_344 = arith.constant dense<0.000000e+00> : vector<24xf32>
    %919 = vector.multi_reduction <add>, %727, %cst_344 [0] : vector<24x24xf32> to vector<24xf32>
    %920 = vector.shape_cast %919 : vector<24xf32> to vector<1x24xf32>
    %921 = vector.broadcast %920 : vector<1x24xf32> to vector<24x24xf32>
    %922 = arith.divf %727, %921 : vector<24x24xf32>
    %cst_345 = arith.constant dense<0.000000e+00> : vector<24xf32>
    %923 = vector.multi_reduction <add>, %922, %cst_345 [1] : vector<24x24xf32> to vector<24xf32>
    %924 = vector.shape_cast %923 : vector<24xf32> to vector<24x1xf32>
    %925 = vector.broadcast %924 : vector<24x1xf32> to vector<24x24xf32>
    %926 = arith.divf %922, %925 : vector<24x24xf32>
    %927 = tpu.transpose %926, [1, 0] : vector<24x24xf32> -> vector<24x24xf32>
    %928 = arith.addf %926, %927 : vector<24x24xf32>
    %cst_346 = arith.constant 5.000000e-01 : f32
    %929 = vector.broadcast %cst_346 : f32 to vector<24x24xf32>
    %930 = arith.mulf %928, %929 : vector<24x24xf32>
    %cst_347 = arith.constant dense<0xFF800000> : vector<24xf32>
    %931 = vector.multi_reduction <maximumf>, %930, %cst_347 [0] : vector<24x24xf32> to vector<24xf32>
    %932 = vector.shape_cast %931 : vector<24xf32> to vector<1x24xf32>
    %cst_348 = arith.constant 2.000000e-01 : f32
    %933 = vector.broadcast %cst_348 : f32 to vector<1x24xf32>
    %934 = arith.mulf %932, %933 : vector<1x24xf32>
    %935 = vector.broadcast %934 : vector<1x24xf32> to vector<24x24xf32>
    %936 = arith.subf %930, %935 : vector<24x24xf32>
    %cst_349 = arith.constant 0.000000e+00 : f32
    %937 = vector.broadcast %cst_349 : f32 to vector<24x24xf32>
    %938 = arith.maximumf %936, %937 : vector<24x24xf32>
    %cst_350 = arith.constant dense<0.000000e+00> : vector<24xf32>
    %939 = vector.multi_reduction <add>, %938, %cst_350 [1] : vector<24x24xf32> to vector<24xf32>
    %940 = vector.shape_cast %939 : vector<24xf32> to vector<24x1xf32>
    %941 = vector.broadcast %940 : vector<24x1xf32> to vector<24x24xf32>
    %942 = arith.divf %938, %941 : vector<24x24xf32>
    %cst_351 = arith.constant dense<0.000000e+00> : vector<24xf32>
    %943 = vector.multi_reduction <add>, %751, %cst_351 [0] : vector<24x24xf32> to vector<24xf32>
    %944 = vector.shape_cast %943 : vector<24xf32> to vector<1x24xf32>
    %945 = vector.broadcast %944 : vector<1x24xf32> to vector<24x24xf32>
    %946 = arith.divf %751, %945 : vector<24x24xf32>
    %cst_352 = arith.constant dense<0.000000e+00> : vector<24xf32>
    %947 = vector.multi_reduction <add>, %946, %cst_352 [1] : vector<24x24xf32> to vector<24xf32>
    %948 = vector.shape_cast %947 : vector<24xf32> to vector<24x1xf32>
    %949 = vector.broadcast %948 : vector<24x1xf32> to vector<24x24xf32>
    %950 = arith.divf %946, %949 : vector<24x24xf32>
    %951 = tpu.transpose %950, [1, 0] : vector<24x24xf32> -> vector<24x24xf32>
    %952 = arith.addf %950, %951 : vector<24x24xf32>
    %cst_353 = arith.constant 5.000000e-01 : f32
    %953 = vector.broadcast %cst_353 : f32 to vector<24x24xf32>
    %954 = arith.mulf %952, %953 : vector<24x24xf32>
    %cst_354 = arith.constant dense<0xFF800000> : vector<24xf32>
    %955 = vector.multi_reduction <maximumf>, %954, %cst_354 [0] : vector<24x24xf32> to vector<24xf32>
    %956 = vector.shape_cast %955 : vector<24xf32> to vector<1x24xf32>
    %cst_355 = arith.constant 2.000000e-01 : f32
    %957 = vector.broadcast %cst_355 : f32 to vector<1x24xf32>
    %958 = arith.mulf %956, %957 : vector<1x24xf32>
    %959 = vector.broadcast %958 : vector<1x24xf32> to vector<24x24xf32>
    %960 = arith.subf %954, %959 : vector<24x24xf32>
    %cst_356 = arith.constant 0.000000e+00 : f32
    %961 = vector.broadcast %cst_356 : f32 to vector<24x24xf32>
    %962 = arith.maximumf %960, %961 : vector<24x24xf32>
    %cst_357 = arith.constant dense<0.000000e+00> : vector<24xf32>
    %963 = vector.multi_reduction <add>, %962, %cst_357 [1] : vector<24x24xf32> to vector<24xf32>
    %964 = vector.shape_cast %963 : vector<24xf32> to vector<24x1xf32>
    %965 = vector.broadcast %964 : vector<24x1xf32> to vector<24x24xf32>
    %966 = arith.divf %962, %965 : vector<24x24xf32>
    %c0_358 = arith.constant 0 : index
    %c0_359 = arith.constant 0 : index
    %967 = vector.load %arg13[%c0_358, %c0_359] : memref<1x32xf32, #tpu.memory_space<vmem>>, vector<1x32xf32>
    %c0_360 = arith.constant 0 : index
    %c0_361 = arith.constant 0 : index
    %968 = vector.load %arg14[%c0_360, %c0_361] : memref<1x32xf32, #tpu.memory_space<vmem>>, vector<1x32xf32>
    %cst_362 = arith.constant dense<0.000000e+00> : vector<24xf32>
    %969 = vector.multi_reduction <add>, %471, %cst_362 [1] : vector<24x32xf32> to vector<24xf32>
    %970 = vector.shape_cast %969 : vector<24xf32> to vector<24x1xf32>
    %cst_363 = arith.constant 3.200000e+01 : f32
    %971 = vector.broadcast %cst_363 : f32 to vector<24x1xf32>
    %972 = arith.divf %970, %971 : vector<24x1xf32>
    %973 = vector.broadcast %972 : vector<24x1xf32> to vector<24x32xf32>
    %974 = arith.subf %471, %973 : vector<24x32xf32>
    %975 = arith.mulf %974, %974 : vector<24x32xf32>
    %cst_364 = arith.constant dense<0.000000e+00> : vector<24xf32>
    %976 = vector.multi_reduction <add>, %975, %cst_364 [1] : vector<24x32xf32> to vector<24xf32>
    %977 = vector.shape_cast %976 : vector<24xf32> to vector<24x1xf32>
    %cst_365 = arith.constant 3.200000e+01 : f32
    %978 = vector.broadcast %cst_365 : f32 to vector<24x1xf32>
    %979 = arith.divf %977, %978 : vector<24x1xf32>
    %cst_366 = arith.constant 9.99999974E-6 : f32
    %980 = vector.broadcast %cst_366 : f32 to vector<24x1xf32>
    %981 = arith.addf %979, %980 : vector<24x1xf32>
    %982 = math.rsqrt %981 : vector<24x1xf32>
    %983 = vector.broadcast %982 : vector<24x1xf32> to vector<24x32xf32>
    %984 = arith.mulf %974, %983 : vector<24x32xf32>
    %985 = vector.broadcast %967 : vector<1x32xf32> to vector<24x32xf32>
    %986 = arith.mulf %984, %985 : vector<24x32xf32>
    %987 = vector.broadcast %968 : vector<1x32xf32> to vector<24x32xf32>
    %988 = arith.addf %986, %987 : vector<24x32xf32>
    %c0_367 = arith.constant 0 : index
    %c0_368 = arith.constant 0 : index
    %989 = vector.load %arg15[%c0_367, %c0_368] : memref<32x32xbf16, #tpu.memory_space<vmem>>, vector<32x32xbf16>
    %990 = arith.truncf %988 : vector<24x32xf32> to vector<24x32xbf16>
    %cst_369 = arith.constant dense<0.000000e+00> : vector<24x32xf32>
    %991 = tpu.matmul %990, %989, %cst_369 {dimension_numbers = #tpu.dot_dimension_numbers<[1], [0], [0], [1], [0, 0, 1, 1], [], []>} : vector<24x32xbf16>, vector<32x32xbf16>, vector<24x32xf32> -> vector<24x32xf32>
    %c0_370 = arith.constant 0 : index
    %c0_371 = arith.constant 0 : index
    %992 = vector.load %arg16[%c0_370, %c0_371] : memref<1x32xf32, #tpu.memory_space<vmem>>, vector<1x32xf32>
    %993 = vector.broadcast %992 : vector<1x32xf32> to vector<24x32xf32>
    %994 = arith.addf %991, %993 : vector<24x32xf32>
    %995 = vector.extract_strided_slice %994 {offsets = [0, 0], sizes = [24, 8], strides = [1, 1]} : vector<24x32xf32> to vector<24x8xf32>
    %996 = arith.truncf %894 : vector<24x24xf32> to vector<24x24xbf16>
    %997 = arith.truncf %995 : vector<24x8xf32> to vector<24x8xbf16>
    %cst_372 = arith.constant dense<0.000000e+00> : vector<24x8xf32>
    %998 = tpu.matmul %996, %997, %cst_372 {dimension_numbers = #tpu.dot_dimension_numbers<[1], [0], [0], [1], [0, 0, 1, 1], [], []>} : vector<24x24xbf16>, vector<24x8xbf16>, vector<24x8xf32> -> vector<24x8xf32>
    %999 = vector.extract_strided_slice %994 {offsets = [0, 8], sizes = [24, 8], strides = [1, 1]} : vector<24x32xf32> to vector<24x8xf32>
    %1000 = arith.truncf %918 : vector<24x24xf32> to vector<24x24xbf16>
    %1001 = arith.truncf %999 : vector<24x8xf32> to vector<24x8xbf16>
    %cst_373 = arith.constant dense<0.000000e+00> : vector<24x8xf32>
    %1002 = tpu.matmul %1000, %1001, %cst_373 {dimension_numbers = #tpu.dot_dimension_numbers<[1], [0], [0], [1], [0, 0, 1, 1], [], []>} : vector<24x24xbf16>, vector<24x8xbf16>, vector<24x8xf32> -> vector<24x8xf32>
    %1003 = vector.extract_strided_slice %994 {offsets = [0, 16], sizes = [24, 8], strides = [1, 1]} : vector<24x32xf32> to vector<24x8xf32>
    %1004 = arith.truncf %942 : vector<24x24xf32> to vector<24x24xbf16>
    %1005 = arith.truncf %1003 : vector<24x8xf32> to vector<24x8xbf16>
    %cst_374 = arith.constant dense<0.000000e+00> : vector<24x8xf32>
    %1006 = tpu.matmul %1004, %1005, %cst_374 {dimension_numbers = #tpu.dot_dimension_numbers<[1], [0], [0], [1], [0, 0, 1, 1], [], []>} : vector<24x24xbf16>, vector<24x8xbf16>, vector<24x8xf32> -> vector<24x8xf32>
    %1007 = vector.extract_strided_slice %994 {offsets = [0, 24], sizes = [24, 8], strides = [1, 1]} : vector<24x32xf32> to vector<24x8xf32>
    %1008 = arith.truncf %966 : vector<24x24xf32> to vector<24x24xbf16>
    %1009 = arith.truncf %1007 : vector<24x8xf32> to vector<24x8xbf16>
    %cst_375 = arith.constant dense<0.000000e+00> : vector<24x8xf32>
    %1010 = tpu.matmul %1008, %1009, %cst_375 {dimension_numbers = #tpu.dot_dimension_numbers<[1], [0], [0], [1], [0, 0, 1, 1], [], []>} : vector<24x24xbf16>, vector<24x8xbf16>, vector<24x8xf32> -> vector<24x8xf32>
    %1011 = tpu.concatenate %998, %1002, %1006, %1010 in 1 : vector<24x8xf32>, vector<24x8xf32>, vector<24x8xf32>, vector<24x8xf32> -> vector<24x32xf32>
    %c0_376 = arith.constant 0 : index
    %c0_377 = arith.constant 0 : index
    %1012 = vector.load %arg17[%c0_376, %c0_377] : memref<32x32xbf16, #tpu.memory_space<vmem>>, vector<32x32xbf16>
    %1013 = arith.truncf %1011 : vector<24x32xf32> to vector<24x32xbf16>
    %cst_378 = arith.constant dense<0.000000e+00> : vector<24x32xf32>
    %1014 = tpu.matmul %1013, %1012, %cst_378 {dimension_numbers = #tpu.dot_dimension_numbers<[1], [0], [0], [1], [0, 0, 1, 1], [], []>} : vector<24x32xbf16>, vector<32x32xbf16>, vector<24x32xf32> -> vector<24x32xf32>
    %c0_379 = arith.constant 0 : index
    %c0_380 = arith.constant 0 : index
    %1015 = vector.load %arg18[%c0_379, %c0_380] : memref<1x32xf32, #tpu.memory_space<vmem>>, vector<1x32xf32>
    %1016 = vector.broadcast %1015 : vector<1x32xf32> to vector<24x32xf32>
    %1017 = arith.addf %1014, %1016 : vector<24x32xf32>
    %1018 = arith.subf %1017, %471 : vector<24x32xf32>
    %c0_381 = arith.constant 0 : index
    %c0_382 = arith.constant 0 : index
    %1019 = vector.load %arg19[%c0_381, %c0_382] : memref<1x32xf32, #tpu.memory_space<vmem>>, vector<1x32xf32>
    %c0_383 = arith.constant 0 : index
    %c0_384 = arith.constant 0 : index
    %1020 = vector.load %arg20[%c0_383, %c0_384] : memref<1x32xf32, #tpu.memory_space<vmem>>, vector<1x32xf32>
    %cst_385 = arith.constant dense<0.000000e+00> : vector<24xf32>
    %1021 = vector.multi_reduction <add>, %1018, %cst_385 [1] : vector<24x32xf32> to vector<24xf32>
    %1022 = vector.shape_cast %1021 : vector<24xf32> to vector<24x1xf32>
    %cst_386 = arith.constant 3.200000e+01 : f32
    %1023 = vector.broadcast %cst_386 : f32 to vector<24x1xf32>
    %1024 = arith.divf %1022, %1023 : vector<24x1xf32>
    %1025 = vector.broadcast %1024 : vector<24x1xf32> to vector<24x32xf32>
    %1026 = arith.subf %1018, %1025 : vector<24x32xf32>
    %1027 = arith.mulf %1026, %1026 : vector<24x32xf32>
    %cst_387 = arith.constant dense<0.000000e+00> : vector<24xf32>
    %1028 = vector.multi_reduction <add>, %1027, %cst_387 [1] : vector<24x32xf32> to vector<24xf32>
    %1029 = vector.shape_cast %1028 : vector<24xf32> to vector<24x1xf32>
    %cst_388 = arith.constant 3.200000e+01 : f32
    %1030 = vector.broadcast %cst_388 : f32 to vector<24x1xf32>
    %1031 = arith.divf %1029, %1030 : vector<24x1xf32>
    %cst_389 = arith.constant 9.99999974E-6 : f32
    %1032 = vector.broadcast %cst_389 : f32 to vector<24x1xf32>
    %1033 = arith.addf %1031, %1032 : vector<24x1xf32>
    %1034 = math.rsqrt %1033 : vector<24x1xf32>
    %1035 = vector.broadcast %1034 : vector<24x1xf32> to vector<24x32xf32>
    %1036 = arith.mulf %1026, %1035 : vector<24x32xf32>
    %1037 = vector.broadcast %1019 : vector<1x32xf32> to vector<24x32xf32>
    %1038 = arith.mulf %1036, %1037 : vector<24x32xf32>
    %1039 = vector.broadcast %1020 : vector<1x32xf32> to vector<24x32xf32>
    %1040 = arith.addf %1038, %1039 : vector<24x32xf32>
    %c0_390 = arith.constant 0 : index
    %c0_391 = arith.constant 0 : index
    %1041 = vector.load %arg21[%c0_390, %c0_391] : memref<32x16xbf16, #tpu.memory_space<vmem>>, vector<32x16xbf16>
    %1042 = arith.truncf %1040 : vector<24x32xf32> to vector<24x32xbf16>
    %cst_392 = arith.constant dense<0.000000e+00> : vector<24x16xf32>
    %1043 = tpu.matmul %1042, %1041, %cst_392 {dimension_numbers = #tpu.dot_dimension_numbers<[1], [0], [0], [1], [0, 0, 1, 1], [], []>} : vector<24x32xbf16>, vector<32x16xbf16>, vector<24x16xf32> -> vector<24x16xf32>
    %c2 = arith.constant 2 : index
    %c0_393 = arith.constant 0 : index
    %c0_394 = arith.constant 0 : index
    %1044 = vector.load %arg23[%c2, %c0_393, %c0_394] : memref<3x24x16xf32, #tpu.memory_space<vmem>>, vector<1x24x16xf32>
    %1045 = vector.shape_cast %1044 : vector<1x24x16xf32> to vector<24x16xf32>
    %1046 = vector.shape_cast %1043 : vector<24x16xf32> to vector<1x24x16xf32>
    tpu.vector_store %arg23[%c2, %c0_393, %c0_394], %1046 {strides = array<i32>} : memref<3x24x16xf32, #tpu.memory_space<vmem>>, vector<1x24x16xf32>,
    %1047 = arith.mulf %1043, %1043 : vector<24x16xf32>
    %cst_395 = arith.constant dense<0.000000e+00> : vector<24xf32>
    %1048 = vector.multi_reduction <add>, %1047, %cst_395 [1] : vector<24x16xf32> to vector<24xf32>
    %1049 = vector.shape_cast %1048 : vector<24xf32> to vector<24x1xf32>
    %cst_396 = arith.constant 9.99999996E-13 : f32
    %1050 = vector.broadcast %cst_396 : f32 to vector<24x1xf32>
    %1051 = arith.addf %1049, %1050 : vector<24x1xf32>
    %1052 = math.rsqrt %1051 : vector<24x1xf32>
    %1053 = vector.broadcast %1052 : vector<24x1xf32> to vector<24x16xf32>
    %1054 = arith.mulf %1043, %1053 : vector<24x16xf32>
    %cst_397 = arith.constant dense<0.000000e+00> : vector<24x6xf32>
    %1055 = tpu.matmul %1054, %472, %cst_397 {dimension_numbers = #tpu.dot_dimension_numbers<[1], [1], [0], [0], [0, 0, 1, 0], [], []>} : vector<24x16xf32>, vector<6x16xf32>, vector<24x6xf32> -> vector<24x6xf32>
    %cst_398 = arith.constant 1.000000e+02 : f32
    %1056 = vector.broadcast %cst_398 : f32 to vector<24x6xf32>
    %1057 = arith.mulf %1056, %1055 : vector<24x6xf32>
    %cst_399 = arith.constant dense<0xFF800000> : vector<24xf32>
    %1058 = vector.multi_reduction <maximumf>, %1057, %cst_399 [1] : vector<24x6xf32> to vector<24xf32>
    %1059 = vector.shape_cast %1058 : vector<24xf32> to vector<24x1xf32>
    %1060 = vector.broadcast %1059 : vector<24x1xf32> to vector<24x6xf32>
    %1061 = arith.subf %1057, %1060 : vector<24x6xf32>
    %1062 = math.exp %1061 : vector<24x6xf32>
    %cst_400 = arith.constant dense<0.000000e+00> : vector<24xf32>
    %1063 = vector.multi_reduction <add>, %1062, %cst_400 [1] : vector<24x6xf32> to vector<24xf32>
    %1064 = vector.shape_cast %1063 : vector<24xf32> to vector<24x1xf32>
    %1065 = vector.broadcast %1064 : vector<24x1xf32> to vector<24x6xf32>
    %1066 = arith.divf %1062, %1065 : vector<24x6xf32>
    %1067 = vector.extract_strided_slice %1066 {offsets = [0, 0], sizes = [24, 3], strides = [1, 1]} : vector<24x6xf32> to vector<24x3xf32>
    %1068 = vector.broadcast %15 : vector<24x1xf32> to vector<24x3xf32>
    %1069 = arith.mulf %1067, %1068 : vector<24x3xf32>
    %cst_401 = arith.constant 0.000000e+00 : f32
    %1070 = vector.broadcast %cst_401 : f32 to vector<24x24xf32>
    %1071 = arith.addf %1070, %894 : vector<24x24xf32>
    %1072 = arith.addf %1071, %918 : vector<24x24xf32>
    %1073 = arith.addf %1072, %942 : vector<24x24xf32>
    %1074 = arith.addf %1073, %966 : vector<24x24xf32>
    %cst_402 = arith.constant 2.500000e-01 : f32
    %1075 = vector.broadcast %cst_402 : f32 to vector<24x24xf32>
    %1076 = arith.mulf %1074, %1075 : vector<24x24xf32>
    %cst_403 = arith.constant dense<0xFF800000> : vector<3xf32>
    %1077 = vector.multi_reduction <maximumf>, %1069, %cst_403 [0] : vector<24x3xf32> to vector<3xf32>
    %1078 = vector.shape_cast %1077 : vector<3xf32> to vector<1x3xf32>
    %cst_404 = arith.constant 1.000000e-01 : f32
    %1079 = vector.broadcast %cst_404 : f32 to vector<1x3xf32>
    %1080 = arith.mulf %1078, %1079 : vector<1x3xf32>
    %1081 = vector.broadcast %1080 : vector<1x3xf32> to vector<24x3xf32>
    %1082 = arith.cmpf olt, %1069, %1081 : vector<24x3xf32>
    %cst_405 = arith.constant 0.000000e+00 : f32
    %1083 = vector.broadcast %cst_405 : f32 to vector<24x3xf32>
    %1084 = arith.select %1082, %1083, %1069 : vector<24x3xi1>, vector<24x3xf32>
    %cst_406 = arith.constant 0.000000e+00 : f32
    %1085 = vector.broadcast %cst_406 : f32 to vector<24x3xf32>
    %1086 = arith.addf %1085, %671 : vector<24x3xf32>
    %1087 = arith.addf %1086, %870 : vector<24x3xf32>
    %cst_407 = arith.constant 1.000000e-01 : f32
    %1088 = vector.broadcast %cst_407 : f32 to vector<24x3xf32>
    %1089 = arith.mulf %1087, %1088 : vector<24x3xf32>
    %cst_408 = arith.constant dense<0.000000e+00> : vector<24x3xf32>
    %1090 = tpu.matmul %1076, %1084, %cst_408 {dimension_numbers = #tpu.dot_dimension_numbers<[1], [0], [0], [1], [0, 0, 1, 1], [], []>} : vector<24x24xf32>, vector<24x3xf32>, vector<24x3xf32> -> vector<24x3xf32>
    %1091 = arith.addf %1090, %1089 : vector<24x3xf32>
    %1092 = vector.broadcast %15 : vector<24x1xf32> to vector<24x3xf32>
    %1093 = arith.mulf %1091, %1092 : vector<24x3xf32>
    %cst_409 = arith.constant dense<0xFF800000> : vector<3xf32>
    %1094 = vector.multi_reduction <maximumf>, %1093, %cst_409 [0] : vector<24x3xf32> to vector<3xf32>
    %1095 = vector.shape_cast %1094 : vector<3xf32> to vector<1x3xf32>
    %cst_410 = arith.constant 1.000000e+00 : f32
    %1096 = vector.broadcast %cst_410 : f32 to vector<1x3xf32>
    %1097 = arith.maximumf %1095, %1096 : vector<1x3xf32>
    %1098 = vector.broadcast %1097 : vector<1x3xf32> to vector<24x3xf32>
    %1099 = arith.divf %1093, %1098 : vector<24x3xf32>
    %c0_411 = arith.constant 0 : index
    %c0_412 = arith.constant 0 : index
    %1100 = vector.load %arg24[%c0_411, %c0_412] : memref<24x24xf32, #tpu.memory_space<vmem>>, vector<24x24xf32>
    tpu.vector_store %arg24[%c0_411, %c0_412], %1076 {strides = array<i32>} : memref<24x24xf32, #tpu.memory_space<vmem>>, vector<24x24xf32>,
    %c0_413 = arith.constant 0 : index
    %c0_414 = arith.constant 0 : index
    %1101 = vector.load %arg25[%c0_413, %c0_414] : memref<24x3xf32, #tpu.memory_space<vmem>>, vector<24x3xf32>
    tpu.vector_store %arg25[%c0_413, %c0_414], %1099 {strides = array<i32>} : memref<24x3xf32, #tpu.memory_space<vmem>>, vector<24x3xf32>,
    return
  }
}

</mosaic_0001>

<llo_original>
// kernel: squeeze.1
$region0: #{squeeze.1}
  %s0 = inlined_call_operand.vmem [shape: f32[1,3,16,16], index: 0, kind: input, shape index: {}]
  %s1 = inlined_call_operand.vmem [shape: bf16[3,4,4,4,4], index: 1, kind: output, shape index: {}]
  $region1: #{squeeze.1} parent=0
    #allocation0 [shape = 'u8[196608]{0}', space=vmem, size = 0x30000, scoped, tag = 'scoped mem for output reshape']
    %v2 = vld [vmem:[%s0] sm:$0xff]
    %vm3 = vcmask 31744
    %4 = vst.msk [vmem:[#allocation0] ss:$8 sm:$0xf] %vm3, %v2
    %5 = vst.msk [vmem:[#allocation0] ss:$8 sm:$0xf0] %vm3, %v2
    %s6 = scalar_lea.vmem %s0, 8
    %v7 = vld [vmem:[%s6] sm:$0xff]
    %vm8 = vcmask 31744
    %s9 = scalar_lea.vmem [#allocation0], 64
    %10 = vst.msk [vmem:[%s9] ss:$8 sm:$0xf] %vm8, %v7
    %s11 = scalar_lea.vmem [#allocation0], 64
    %12 = vst.msk [vmem:[%s11] ss:$8 sm:$0xf0] %vm8, %v7
    %s13 = scalar_lea.vmem %s0, 16
    %v14 = vld [vmem:[%s13] sm:$0xff]
    %vm15 = vcmask 31744
    %s16 = scalar_lea.vmem [#allocation0], 128
    %17 = vst.msk [vmem:[%s16] ss:$8 sm:$0xf] %vm15, %v14
    %s18 = scalar_lea.vmem [#allocation0], 128
    %19 = vst.msk [vmem:[%s18] ss:$8 sm:$0xf0] %vm15, %v14
    %s20 = scalar_lea.vmem %s0, 24
    %v21 = vld [vmem:[%s20] sm:$0xff]
    %vm22 = vcmask 31744
    %s23 = scalar_lea.vmem [#allocation0], 192
    %24 = vst.msk [vmem:[%s23] ss:$8 sm:$0xf] %vm22, %v21
    %s25 = scalar_lea.vmem [#allocation0], 192
    %26 = vst.msk [vmem:[%s25] ss:$8 sm:$0xf0] %vm22, %v21
    %s27 = scalar_lea.vmem %s0, 32
    %v28 = vld [vmem:[%s27] sm:$0xff]
    %vm29 = vcmask 31744
    %s30 = scalar_lea.vmem [#allocation0], 256
    %31 = vst.msk [vmem:[%s30] ss:$8 sm:$0xf] %vm29, %v28
    %s32 = scalar_lea.vmem [#allocation0], 256
    %33 = vst.msk [vmem:[%s32] ss:$8 sm:$0xf0] %vm29, %v28
    %s34 = scalar_lea.vmem %s0, 40
    %v35 = vld [vmem:[%s34] sm:$0xff]
    %vm36 = vcmask 31744
    %s37 = scalar_lea.vmem [#allocation0], 320
    %38 = vst.msk [vmem:[%s37] ss:$8 sm:$0xf] %vm36, %v35
    %s39 = scalar_lea.vmem [#allocation0], 320
    %40 = vst.msk [vmem:[%s39] ss:$8 sm:$0xf0] %vm36, %v35
    %v41 = vld [vmem:[%s0] sm:$0xff]
    %42 = vrot.lane.b32.xlu0 %v41, 124
    %v43 = vpop.permute.xlu0 %42
    %vm44 = vcmask 31744
    %s45 = scalar_lea.vmem [#allocation0], 1
    %46 = vst.msk [vmem:[%s45] ss:$8 sm:$0xf] %vm44, %v43
    %s47 = scalar_lea.vmem [#allocation0], 1
    %48 = vst.msk [vmem:[%s47] ss:$8 sm:$0xf0] %vm44, %v43
    %s49 = scalar_lea.vmem %s0, 8
    %v50 = vld [vmem:[%s49] sm:$0xff]
    %51 = vrot.lane.b32.xlu0 %v50, 124
    %v52 = vpop.permute.xlu0 %51
    %vm53 = vcmask 31744
    %s54 = scalar_lea.vmem [#allocation0], 65
    %55 = vst.msk [vmem:[%s54] ss:$8 sm:$0xf] %vm53, %v52
    %s56 = scalar_lea.vmem [#allocation0], 65
    %57 = vst.msk [vmem:[%s56] ss:$8 sm:$0xf0] %vm53, %v52
    %s58 = scalar_lea.vmem %s0, 16
    %v59 = vld [vmem:[%s58] sm:$0xff]
    %60 = vrot.lane.b32.xlu0 %v59, 124
    %v61 = vpop.permute.xlu0 %60
    %vm62 = vcmask 31744
    %s63 = scalar_lea.vmem [#allocation0], 129
    %64 = vst.msk [vmem:[%s63] ss:$8 sm:$0xf] %vm62, %v61
    %s65 = scalar_lea.vmem [#allocation0], 129
    %66 = vst.msk [vmem:[%s65] ss:$8 sm:$0xf0] %vm62, %v61
    %s67 = scalar_lea.vmem %s0, 24
    %v68 = vld [vmem:[%s67] sm:$0xff]
    %69 = vrot.lane.b32.xlu0 %v68, 124
    %v70 = vpop.permute.xlu0 %69
    %vm71 = vcmask 31744
    %s72 = scalar_lea.vmem [#allocation0], 193
    %73 = vst.msk [vmem:[%s72] ss:$8 sm:$0xf] %vm71, %v70
    %s74 = scalar_lea.vmem [#allocation0], 193
    %75 = vst.msk [vmem:[%s74] ss:$8 sm:$0xf0] %vm71, %v70
    %s76 = scalar_lea.vmem %s0, 32
    %v77 = vld [vmem:[%s76] sm:$0xff]
    %78 = vrot.lane.b32.xlu0 %v77, 124
    %v79 = vpop.permute.xlu0 %78
    %vm80 = vcmask 31744
    %s81 = scalar_lea.vmem [#allocation0], 257
    %82 = vst.msk [vmem:[%s81] ss:$8 sm:$0xf] %vm80, %v79
    %s83 = scalar_lea.vmem [#allocation0], 257
    %84 = vst.msk [vmem:[%s83] ss:$8 sm:$0xf0] %vm80, %v79
    %s85 = scalar_lea.vmem %s0, 40
    %v86 = vld [vmem:[%s85] sm:$0xff]
    %87 = vrot.lane.b32.xlu0 %v86, 124
    %v88 = vpop.permute.xlu0 %87
    %vm89 = vcmask 31744
    %s90 = scalar_lea.vmem [#allocation0], 321
    %91 = vst.msk [vmem:[%s90] ss:$8 sm:$0xf] %vm89, %v88
    %s92 = scalar_lea.vmem [#allocation0], 321
    %93 = vst.msk [vmem:[%s92] ss:$8 sm:$0xf0] %vm89, %v88
    %v94 = vld [vmem:[%s0] sm:$0xff]
    %95 = vrot.lane.b32.xlu0 %v94, 120
    %v96 = vpop.permute.xlu0 %95
    %vm97 = vcmask 31744
    %s98 = scalar_lea.vmem [#allocation0], 2
    %99 = vst.msk [vmem:[%s98] ss:$8 sm:$0xf] %vm97, %v96
    %s100 = scalar_lea.vmem [#allocation0], 2
    %101 = vst.msk [vmem:[%s100] ss:$8 sm:$0xf0] %vm97, %v96
    %s102 = scalar_lea.vmem %s0, 8
    %v103 = vld [vmem:[%s102] sm:$0xff]
    %104 = vrot.lane.b32.xlu0 %v103, 120
    %v105 = vpop.permute.xlu0 %104
    %vm106 = vcmask 31744
    %s107 = scalar_lea.vmem [#allocation0], 66
    %108 = vst.msk [vmem:[%s107] ss:$8 sm:$0xf] %vm106, %v105
    %s109 = scalar_lea.vmem [#allocation0], 66
    %110 = vst.msk [vmem:[%s109] ss:$8 sm:$0xf0] %vm106, %v105
    %s111 = scalar_lea.vmem %s0, 16
    %v112 = vld [vmem:[%s111] sm:$0xff]
    %113 = vrot.lane.b32.xlu0 %v112, 120
    %v114 = vpop.permute.xlu0 %113
    %vm115 = vcmask 31744
    %s116 = scalar_lea.vmem [#allocation0], 130
    %117 = vst.msk [vmem:[%s116] ss:$8 sm:$0xf] %vm115, %v114
    %s118 = scalar_lea.vmem [#allocation0], 130
    %119 = vst.msk [vmem:[%s118] ss:$8 sm:$0xf0] %vm115, %v114
    %s120 = scalar_lea.vmem %s0, 24
    %v121 = vld [vmem:[%s120] sm:$0xff]
    %122 = vrot.lane.b32.xlu0 %v121, 120
    %v123 = vpop.permute.xlu0 %122
    %vm124 = vcmask 31744
    %s125 = scalar_lea.vmem [#allocation0], 194
    %126 = vst.msk [vmem:[%s125] ss:$8 sm:$0xf] %vm124, %v123
    %s127 = scalar_lea.vmem [#allocation0], 194
    %128 = vst.msk [vmem:[%s127] ss:$8 sm:$0xf0] %vm124, %v123
    %s129 = scalar_lea.vmem %s0, 32
    %v130 = vld [vmem:[%s129] sm:$0xff]
    %131 = vrot.lane.b32.xlu0 %v130, 120
    %v132 = vpop.permute.xlu0 %131
    %vm133 = vcmask 31744
    %s134 = scalar_lea.vmem [#allocation0], 258
    %135 = vst.msk [vmem:[%s134] ss:$8 sm:$0xf] %vm133, %v132
    %s136 = scalar_lea.vmem [#allocation0], 258
    %137 = vst.msk [vmem:[%s136] ss:$8 sm:$0xf0] %vm133, %v132
    %s138 = scalar_lea.vmem %s0, 40
    %v139 = vld [vmem:[%s138] sm:$0xff]
    %140 = vrot.lane.b32.xlu0 %v139, 120
    %v141 = vpop.permute.xlu0 %140
    %vm142 = vcmask 31744
    %s143 = scalar_lea.vmem [#allocation0], 322
    %144 = vst.msk [vmem:[%s143] ss:$8 sm:$0xf] %vm142, %v141
    %s145 = scalar_lea.vmem [#allocation0], 322
    %146 = vst.msk [vmem:[%s145] ss:$8 sm:$0xf0] %vm142, %v141
    %v147 = vld [vmem:[%s0] sm:$0xff]
    %148 = vrot.lane.b32.xlu0 %v147, 116
    %v149 = vpop.permute.xlu0 %148
    %vm150 = vcmask 31744
    %s151 = scalar_lea.vmem [#allocation0], 3
    %152 = vst.msk [vmem:[%s151] ss:$8 sm:$0xf] %vm150, %v149
    %s153 = scalar_lea.vmem [#allocation0], 3
    %154 = vst.msk [vmem:[%s153] ss:$8 sm:$0xf0] %vm150, %v149
    %s155 = scalar_lea.vmem %s0, 8
    %v156 = vld [vmem:[%s155] sm:$0xff]
    %157 = vrot.lane.b32.xlu0 %v156, 116
    %v158 = vpop.permute.xlu0 %157
    %vm159 = vcmask 31744
    %s160 = scalar_lea.vmem [#allocation0], 67
    %161 = vst.msk [vmem:[%s160] ss:$8 sm:$0xf] %vm159, %v158
    %s162 = scalar_lea.vmem [#allocation0], 67
    %163 = vst.msk [vmem:[%s162] ss:$8 sm:$0xf0] %vm159, %v158
    %s164 = scalar_lea.vmem %s0, 16
    %v165 = vld [vmem:[%s164] sm:$0xff]
    %166 = vrot.lane.b32.xlu0 %v165, 116
    %v167 = vpop.permute.xlu0 %166
    %vm168 = vcmask 31744
    %s169 = scalar_lea.vmem [#allocation0], 131
    %170 = vst.msk [vmem:[%s169] ss:$8 sm:$0xf] %vm168, %v167
    %s171 = scalar_lea.vmem [#allocation0], 131
    %172 = vst.msk [vmem:[%s171] ss:$8 sm:$0xf0] %vm168, %v167
    %s173 = scalar_lea.vmem %s0, 24
    %v174 = vld [vmem:[%s173] sm:$0xff]
    %175 = vrot.lane.b32.xlu0 %v174, 116
    %v176 = vpop.permute.xlu0 %175
    %vm177 = vcmask 31744
    %s178 = scalar_lea.vmem [#allocation0], 195
    %179 = vst.msk [vmem:[%s178] ss:$8 sm:$0xf] %vm177, %v176
    %s180 = scalar_lea.vmem [#allocation0], 195
    %181 = vst.msk [vmem:[%s180] ss:$8 sm:$0xf0] %vm177, %v176
    %s182 = scalar_lea.vmem %s0, 32
    %v183 = vld [vmem:[%s182] sm:$0xff]
    %184 = vrot.lane.b32.xlu0 %v183, 116
    %v185 = vpop.permute.xlu0 %184
    %vm186 = vcmask 31744
    %s187 = scalar_lea.vmem [#allocation0], 259
    %188 = vst.msk [vmem:[%s187] ss:$8 sm:$0xf] %vm186, %v185
    %s189 = scalar_lea.vmem [#allocation0], 259
    %190 = vst.msk [vmem:[%s189] ss:$8 sm:$0xf0] %vm186, %v185
    %s191 = scalar_lea.vmem %s0, 40
    %v192 = vld [vmem:[%s191] sm:$0xff]
    %193 = vrot.lane.b32.xlu0 %v192, 116
    %v194 = vpop.permute.xlu0 %193
    %vm195 = vcmask 31744
    %s196 = scalar_lea.vmem [#allocation0], 323
    %197 = vst.msk [vmem:[%s196] ss:$8 sm:$0xf] %vm195, %v194
    %s198 = scalar_lea.vmem [#allocation0], 323
    %199 = vst.msk [vmem:[%s198] ss:$8 sm:$0xf0] %vm195, %v194
    %s201 = smul.u32 2, 2
    %s202 = sshll.u32 1, %s201
    %s203 = ssub.s32 %s202, 1
    %s204 = sshrl.u32 %s201, 1
    %v205 = vld [vmem:[#allocation0] sm:%s203]
    %v206 = vpack.c.bf16 0.0, %v205
    %s207 = sshll.u32 1, %s204
    %s208 = ssub.s32 %s207, 1
    %209 = vst [vmem:[%s1] sm:%s208] %v206
    %s210 = scalar_lea.vmem [#allocation0], 8
    %v211 = vld [vmem:[%s210] sm:%s203]
    %v212 = vpack.c.bf16 0.0, %v211
    %s213 = sshll.u32 1, %s204
    %s214 = ssub.s32 %s213, 1
    %s215 = scalar_lea.vmem %s1, 2
    %216 = vst [vmem:[%s215] sm:%s214] %v212
    %s217 = scalar_lea.vmem [#allocation0], 16
    %v218 = vld [vmem:[%s217] sm:%s203]
    %v219 = vpack.c.bf16 0.0, %v218
    %s220 = sshll.u32 1, %s204
    %s221 = ssub.s32 %s220, 1
    %s222 = smul.addr 2, 2
    %s223 = scalar_lea.vmem %s1, %s222
    %224 = vst [vmem:[%s223] sm:%s221] %v219
    %s225 = scalar_lea.vmem [#allocation0], 24
    %v226 = vld [vmem:[%s225] sm:%s203]
    %v227 = vpack.c.bf16 0.0, %v226
    %s228 = sshll.u32 1, %s204
    %s229 = ssub.s32 %s228, 1
    %s230 = smul.addr 2, 3
    %s231 = scalar_lea.vmem %s1, %s230
    %232 = vst [vmem:[%s231] sm:%s229] %v227
    %s233 = scalar_lea.vmem [#allocation0], 32
    %v234 = vld [vmem:[%s233] sm:%s203]
    %v235 = vpack.c.bf16 0.0, %v234
    %s236 = sshll.u32 1, %s204
    %s237 = ssub.s32 %s236, 1
    %s238 = smul.addr 2, 4
    %s239 = scalar_lea.vmem %s1, %s238
    %240 = vst [vmem:[%s239] sm:%s237] %v235
    %s241 = scalar_lea.vmem [#allocation0], 40
    %v242 = vld [vmem:[%s241] sm:%s203]
    %v243 = vpack.c.bf16 0.0, %v242
    %s244 = sshll.u32 1, %s204
    %s245 = ssub.s32 %s244, 1
    %s246 = smul.addr 2, 5
    %s247 = scalar_lea.vmem %s1, %s246
    %248 = vst [vmem:[%s247] sm:%s245] %v243
    %s249 = scalar_lea.vmem [#allocation0], 48
    %v250 = vld [vmem:[%s249] sm:%s203]
    %v251 = vpack.c.bf16 0.0, %v250
    %s252 = sshll.u32 1, %s204
    %s253 = ssub.s32 %s252, 1
    %s254 = smul.addr 2, 6
    %s255 = scalar_lea.vmem %s1, %s254
    %256 = vst [vmem:[%s255] sm:%s253] %v251
    %s257 = scalar_lea.vmem [#allocation0], 56
    %v258 = vld [vmem:[%s257] sm:%s203]
    %v259 = vpack.c.bf16 0.0, %v258
    %s260 = sshll.u32 1, %s204
    %s261 = ssub.s32 %s260, 1
    %s262 = smul.addr 2, 7
    %s263 = scalar_lea.vmem %s1, %s262
    %264 = vst [vmem:[%s263] sm:%s261] %v259
    %s265 = scalar_lea.vmem [#allocation0], 64
    %v266 = vld [vmem:[%s265] sm:%s203]
    %v267 = vpack.c.bf16 0.0, %v266
    %s268 = sshll.u32 1, %s204
    %s269 = ssub.s32 %s268, 1
    %s270 = smul.addr 2, 8
    %s271 = scalar_lea.vmem %s1, %s270
    %272 = vst [vmem:[%s271] sm:%s269] %v267
    %s273 = scalar_lea.vmem [#allocation0], 72
    %v274 = vld [vmem:[%s273] sm:%s203]
    %v275 = vpack.c.bf16 0.0, %v274
    %s276 = sshll.u32 1, %s204
    %s277 = ssub.s32 %s276, 1
    %s278 = smul.addr 2, 9
    %s279 = scalar_lea.vmem %s1, %s278
    %280 = vst [vmem:[%s279] sm:%s277] %v275
    %s281 = scalar_lea.vmem [#allocation0], 80
    %v282 = vld [vmem:[%s281] sm:%s203]
    %v283 = vpack.c.bf16 0.0, %v282
    %s284 = sshll.u32 1, %s204
    %s285 = ssub.s32 %s284, 1
    %s286 = smul.addr 2, 10
    %s287 = scalar_lea.vmem %s1, %s286
    %288 = vst [vmem:[%s287] sm:%s285] %v283
    %s289 = scalar_lea.vmem [#allocation0], 88
    %v290 = vld [vmem:[%s289] sm:%s203]
    %v291 = vpack.c.bf16 0.0, %v290
    %s292 = sshll.u32 1, %s204
    %s293 = ssub.s32 %s292, 1
    %s294 = smul.addr 2, 11
    %s295 = scalar_lea.vmem %s1, %s294
    %296 = vst [vmem:[%s295] sm:%s293] %v291
    %s297 = scalar_lea.vmem [#allocation0], 96
    %v298 = vld [vmem:[%s297] sm:%s203]
    %v299 = vpack.c.bf16 0.0, %v298
    %s300 = sshll.u32 1, %s204
    %s301 = ssub.s32 %s300, 1
    %s302 = smul.addr 2, 12
    %s303 = scalar_lea.vmem %s1, %s302
    %304 = vst [vmem:[%s303] sm:%s301] %v299
    %s305 = scalar_lea.vmem [#allocation0], 104
    %v306 = vld [vmem:[%s305] sm:%s203]
    %v307 = vpack.c.bf16 0.0, %v306
    %s308 = sshll.u32 1, %s204
    %s309 = ssub.s32 %s308, 1
    %s310 = smul.addr 2, 13
    %s311 = scalar_lea.vmem %s1, %s310
    %312 = vst [vmem:[%s311] sm:%s309] %v307
    %s313 = scalar_lea.vmem [#allocation0], 112
    %v314 = vld [vmem:[%s313] sm:%s203]
    %v315 = vpack.c.bf16 0.0, %v314
    %s316 = sshll.u32 1, %s204
    %s317 = ssub.s32 %s316, 1
    %s318 = smul.addr 2, 14
    %s319 = scalar_lea.vmem %s1, %s318
    %320 = vst [vmem:[%s319] sm:%s317] %v315
    %s321 = scalar_lea.vmem [#allocation0], 120
    %v322 = vld [vmem:[%s321] sm:%s203]
    %v323 = vpack.c.bf16 0.0, %v322
    %s324 = sshll.u32 1, %s204
    %s325 = ssub.s32 %s324, 1
    %s326 = smul.addr 2, 15
    %s327 = scalar_lea.vmem %s1, %s326
    %328 = vst [vmem:[%s327] sm:%s325] %v323
    %s329 = scalar_lea.vmem [#allocation0], 128
    %v330 = vld [vmem:[%s329] sm:%s203]
    %v331 = vpack.c.bf16 0.0, %v330
    %s332 = sshll.u32 1, %s204
    %s333 = ssub.s32 %s332, 1
    %s334 = smul.addr 2, 16
    %s335 = scalar_lea.vmem %s1, %s334
    %336 = vst [vmem:[%s335] sm:%s333] %v331
    %s337 = scalar_lea.vmem [#allocation0], 136
    %v338 = vld [vmem:[%s337] sm:%s203]
    %v339 = vpack.c.bf16 0.0, %v338
    %s340 = sshll.u32 1, %s204
    %s341 = ssub.s32 %s340, 1
    %s342 = smul.addr 2, 17
    %s343 = scalar_lea.vmem %s1, %s342
    %344 = vst [vmem:[%s343] sm:%s341] %v339
    %s345 = scalar_lea.vmem [#allocation0], 144
    %v346 = vld [vmem:[%s345] sm:%s203]
    %v347 = vpack.c.bf16 0.0, %v346
    %s348 = sshll.u32 1, %s204
    %s349 = ssub.s32 %s348, 1
    %s350 = smul.addr 2, 18
    %s351 = scalar_lea.vmem %s1, %s350
    %352 = vst [vmem:[%s351] sm:%s349] %v347
    %s353 = scalar_lea.vmem [#allocation0], 152
    %v354 = vld [vmem:[%s353] sm:%s203]
    %v355 = vpack.c.bf16 0.0, %v354
    %s356 = sshll.u32 1, %s204
    %s357 = ssub.s32 %s356, 1
    %s358 = smul.addr 2, 19
    %s359 = scalar_lea.vmem %s1, %s358
    %360 = vst [vmem:[%s359] sm:%s357] %v355
    %s361 = scalar_lea.vmem [#allocation0], 160
    %v362 = vld [vmem:[%s361] sm:%s203]
    %v363 = vpack.c.bf16 0.0, %v362
    %s364 = sshll.u32 1, %s204
    %s365 = ssub.s32 %s364, 1
    %s366 = smul.addr 2, 20
    %s367 = scalar_lea.vmem %s1, %s366
    %368 = vst [vmem:[%s367] sm:%s365] %v363
    %s369 = scalar_lea.vmem [#allocation0], 168
    %v370 = vld [vmem:[%s369] sm:%s203]
    %v371 = vpack.c.bf16 0.0, %v370
    %s372 = sshll.u32 1, %s204
    %s373 = ssub.s32 %s372, 1
    %s374 = smul.addr 2, 21
    %s375 = scalar_lea.vmem %s1, %s374
    %376 = vst [vmem:[%s375] sm:%s373] %v371
    %s377 = scalar_lea.vmem [#allocation0], 176
    %v378 = vld [vmem:[%s377] sm:%s203]
    %v379 = vpack.c.bf16 0.0, %v378
    %s380 = sshll.u32 1, %s204
    %s381 = ssub.s32 %s380, 1
    %s382 = smul.addr 2, 22
    %s383 = scalar_lea.vmem %s1, %s382
    %384 = vst [vmem:[%s383] sm:%s381] %v379
    %s385 = scalar_lea.vmem [#allocation0], 184
    %v386 = vld [vmem:[%s385] sm:%s203]
    %v387 = vpack.c.bf16 0.0, %v386
    %s388 = sshll.u32 1, %s204
    %s389 = ssub.s32 %s388, 1
    %s390 = smul.addr 2, 23
    %s391 = scalar_lea.vmem %s1, %s390
    %392 = vst [vmem:[%s391] sm:%s389] %v387
    %s393 = scalar_lea.vmem [#allocation0], 192
    %v394 = vld [vmem:[%s393] sm:%s203]
    %v395 = vpack.c.bf16 0.0, %v394
    %s396 = sshll.u32 1, %s204
    %s397 = ssub.s32 %s396, 1
    %s398 = smul.addr 2, 24
    %s399 = scalar_lea.vmem %s1, %s398
    %400 = vst [vmem:[%s399] sm:%s397] %v395
    %s401 = scalar_lea.vmem [#allocation0], 200
    %v402 = vld [vmem:[%s401] sm:%s203]
    %v403 = vpack.c.bf16 0.0, %v402
    %s404 = sshll.u32 1, %s204
    %s405 = ssub.s32 %s404, 1
    %s406 = smul.addr 2, 25
    %s407 = scalar_lea.vmem %s1, %s406
    %408 = vst [vmem:[%s407] sm:%s405] %v403
    %s409 = scalar_lea.vmem [#allocation0], 208
    %v410 = vld [vmem:[%s409] sm:%s203]
    %v411 = vpack.c.bf16 0.0, %v410
    %s412 = sshll.u32 1, %s204
    %s413 = ssub.s32 %s412, 1
    %s414 = smul.addr 2, 26
    %s415 = scalar_lea.vmem %s1, %s414
    %416 = vst [vmem:[%s415] sm:%s413] %v411
    %s417 = scalar_lea.vmem [#allocation0], 216
    %v418 = vld [vmem:[%s417] sm:%s203]
    %v419 = vpack.c.bf16 0.0, %v418
    %s420 = sshll.u32 1, %s204
    %s421 = ssub.s32 %s420, 1
    %s422 = smul.addr 2, 27
    %s423 = scalar_lea.vmem %s1, %s422
    %424 = vst [vmem:[%s423] sm:%s421] %v419
    %s425 = scalar_lea.vmem [#allocation0], 224
    %v426 = vld [vmem:[%s425] sm:%s203]
    %v427 = vpack.c.bf16 0.0, %v426
    %s428 = sshll.u32 1, %s204
    %s429 = ssub.s32 %s428, 1
    %s430 = smul.addr 2, 28
    %s431 = scalar_lea.vmem %s1, %s430
    %432 = vst [vmem:[%s431] sm:%s429] %v427
    %s433 = scalar_lea.vmem [#allocation0], 232
    %v434 = vld [vmem:[%s433] sm:%s203]
    %v435 = vpack.c.bf16 0.0, %v434
    %s436 = sshll.u32 1, %s204
    %s437 = ssub.s32 %s436, 1
    %s438 = smul.addr 2, 29
    %s439 = scalar_lea.vmem %s1, %s438
    %440 = vst [vmem:[%s439] sm:%s437] %v435
    %s441 = scalar_lea.vmem [#allocation0], 240
    %v442 = vld [vmem:[%s441] sm:%s203]
    %v443 = vpack.c.bf16 0.0, %v442
    %s444 = sshll.u32 1, %s204
    %s445 = ssub.s32 %s444, 1
    %s446 = smul.addr 2, 30
    %s447 = scalar_lea.vmem %s1, %s446
    %448 = vst [vmem:[%s447] sm:%s445] %v443
    %s449 = scalar_lea.vmem [#allocation0], 248
    %v450 = vld [vmem:[%s449] sm:%s203]
    %v451 = vpack.c.bf16 0.0, %v450
    %s452 = sshll.u32 1, %s204
    %s453 = ssub.s32 %s452, 1
    %s454 = smul.addr 2, 31
    %s455 = scalar_lea.vmem %s1, %s454
    %456 = vst [vmem:[%s455] sm:%s453] %v451
    %s457 = scalar_lea.vmem [#allocation0], 256
    %v458 = vld [vmem:[%s457] sm:%s203]
    %v459 = vpack.c.bf16 0.0, %v458
    %s460 = sshll.u32 1, %s204
    %s461 = ssub.s32 %s460, 1
    %s462 = smul.addr 2, 32
    %s463 = scalar_lea.vmem %s1, %s462
    %464 = vst [vmem:[%s463] sm:%s461] %v459
    %s465 = scalar_lea.vmem [#allocation0], 264
    %v466 = vld [vmem:[%s465] sm:%s203]
    %v467 = vpack.c.bf16 0.0, %v466
    %s468 = sshll.u32 1, %s204
    %s469 = ssub.s32 %s468, 1
    %s470 = smul.addr 2, 33
    %s471 = scalar_lea.vmem %s1, %s470
    %472 = vst [vmem:[%s471] sm:%s469] %v467
    %s473 = scalar_lea.vmem [#allocation0], 272
    %v474 = vld [vmem:[%s473] sm:%s203]
    %v475 = vpack.c.bf16 0.0, %v474
    %s476 = sshll.u32 1, %s204
    %s477 = ssub.s32 %s476, 1
    %s478 = smul.addr 2, 34
    %s479 = scalar_lea.vmem %s1, %s478
    %480 = vst [vmem:[%s479] sm:%s477] %v475
    %s481 = scalar_lea.vmem [#allocation0], 280
    %v482 = vld [vmem:[%s481] sm:%s203]
    %v483 = vpack.c.bf16 0.0, %v482
    %s484 = sshll.u32 1, %s204
    %s485 = ssub.s32 %s484, 1
    %s486 = smul.addr 2, 35
    %s487 = scalar_lea.vmem %s1, %s486
    %488 = vst [vmem:[%s487] sm:%s485] %v483
    %s489 = scalar_lea.vmem [#allocation0], 288
    %v490 = vld [vmem:[%s489] sm:%s203]
    %v491 = vpack.c.bf16 0.0, %v490
    %s492 = sshll.u32 1, %s204
    %s493 = ssub.s32 %s492, 1
    %s494 = smul.addr 2, 36
    %s495 = scalar_lea.vmem %s1, %s494
    %496 = vst [vmem:[%s495] sm:%s493] %v491
    %s497 = scalar_lea.vmem [#allocation0], 296
    %v498 = vld [vmem:[%s497] sm:%s203]
    %v499 = vpack.c.bf16 0.0, %v498
    %s500 = sshll.u32 1, %s204
    %s501 = ssub.s32 %s500, 1
    %s502 = smul.addr 2, 37
    %s503 = scalar_lea.vmem %s1, %s502
    %504 = vst [vmem:[%s503] sm:%s501] %v499
    %s505 = scalar_lea.vmem [#allocation0], 304
    %v506 = vld [vmem:[%s505] sm:%s203]
    %v507 = vpack.c.bf16 0.0, %v506
    %s508 = sshll.u32 1, %s204
    %s509 = ssub.s32 %s508, 1
    %s510 = smul.addr 2, 38
    %s511 = scalar_lea.vmem %s1, %s510
    %512 = vst [vmem:[%s511] sm:%s509] %v507
    %s513 = scalar_lea.vmem [#allocation0], 312
    %v514 = vld [vmem:[%s513] sm:%s203]
    %v515 = vpack.c.bf16 0.0, %v514
    %s516 = sshll.u32 1, %s204
    %s517 = ssub.s32 %s516, 1
    %s518 = smul.addr 2, 39
    %s519 = scalar_lea.vmem %s1, %s518
    %520 = vst [vmem:[%s519] sm:%s517] %v515
    %s521 = scalar_lea.vmem [#allocation0], 320
    %v522 = vld [vmem:[%s521] sm:%s203]
    %v523 = vpack.c.bf16 0.0, %v522
    %s524 = sshll.u32 1, %s204
    %s525 = ssub.s32 %s524, 1
    %s526 = smul.addr 2, 40
    %s527 = scalar_lea.vmem %s1, %s526
    %528 = vst [vmem:[%s527] sm:%s525] %v523
    %s529 = scalar_lea.vmem [#allocation0], 328
    %v530 = vld [vmem:[%s529] sm:%s203]
    %v531 = vpack.c.bf16 0.0, %v530
    %s532 = sshll.u32 1, %s204
    %s533 = ssub.s32 %s532, 1
    %s534 = smul.addr 2, 41
    %s535 = scalar_lea.vmem %s1, %s534
    %536 = vst [vmem:[%s535] sm:%s533] %v531
    %s537 = scalar_lea.vmem [#allocation0], 336
    %v538 = vld [vmem:[%s537] sm:%s203]
    %v539 = vpack.c.bf16 0.0, %v538
    %s540 = sshll.u32 1, %s204
    %s541 = ssub.s32 %s540, 1
    %s542 = smul.addr 2, 42
    %s543 = scalar_lea.vmem %s1, %s542
    %544 = vst [vmem:[%s543] sm:%s541] %v539
    %s545 = scalar_lea.vmem [#allocation0], 344
    %v546 = vld [vmem:[%s545] sm:%s203]
    %v547 = vpack.c.bf16 0.0, %v546
    %s548 = sshll.u32 1, %s204
    %s549 = ssub.s32 %s548, 1
    %s550 = smul.addr 2, 43
    %s551 = scalar_lea.vmem %s1, %s550
    %552 = vst [vmem:[%s551] sm:%s549] %v547
    %s553 = scalar_lea.vmem [#allocation0], 352
    %v554 = vld [vmem:[%s553] sm:%s203]
    %v555 = vpack.c.bf16 0.0, %v554
    %s556 = sshll.u32 1, %s204
    %s557 = ssub.s32 %s556, 1
    %s558 = smul.addr 2, 44
    %s559 = scalar_lea.vmem %s1, %s558
    %560 = vst [vmem:[%s559] sm:%s557] %v555
    %s561 = scalar_lea.vmem [#allocation0], 360
    %v562 = vld [vmem:[%s561] sm:%s203]
    %v563 = vpack.c.bf16 0.0, %v562
    %s564 = sshll.u32 1, %s204
    %s565 = ssub.s32 %s564, 1
    %s566 = smul.addr 2, 45
    %s567 = scalar_lea.vmem %s1, %s566
    %568 = vst [vmem:[%s567] sm:%s565] %v563
    %s569 = scalar_lea.vmem [#allocation0], 368
    %v570 = vld [vmem:[%s569] sm:%s203]
    %v571 = vpack.c.bf16 0.0, %v570
    %s572 = sshll.u32 1, %s204
    %s573 = ssub.s32 %s572, 1
    %s574 = smul.addr 2, 46
    %s575 = scalar_lea.vmem %s1, %s574
    %576 = vst [vmem:[%s575] sm:%s573] %v571
    %s577 = scalar_lea.vmem [#allocation0], 376
    %v578 = vld [vmem:[%s577] sm:%s203]
    %v579 = vpack.c.bf16 0.0, %v578
    %s580 = sshll.u32 1, %s204
    %s581 = ssub.s32 %s580, 1
    %s582 = smul.addr 2, 47
    %s583 = scalar_lea.vmem %s1, %s582
    %584 = vst [vmem:[%s583] sm:%s581] %v579

// kernel: openclip_forward.1
$region0: #{openclip_forward.1}
  #allocation0 [shape = 'u32[]', space=smem, size = 0x4, offset = 0x4, fixed_abs, tag = 'smem constant byte address 0x4 - core index']
  #allocation1 [shape = 'u32[144,128]{1,0:T(1,128)}', space=vmem, size = 0x12000, scoped, tag = 'internal scratch']
  %s0 = inlined_call_operand.vmem [shape: f32[24,32], index: 0, kind: input, shape index: {}]
  %s1 = inlined_call_operand.vmem [shape: f32[2,1,32], index: 1, kind: input, shape index: {}]
  %s2 = inlined_call_operand.vmem [shape: f32[2,1,32], index: 2, kind: input, shape index: {}]
  %s3 = inlined_call_operand.vmem [shape: bf16[2,32,96], index: 3, kind: input, shape index: {}]
  %s4 = inlined_call_operand.vmem [shape: f32[2,1,96], index: 4, kind: input, shape index: {}]
  %s5 = inlined_call_operand.vmem [shape: bf16[2,32,32], index: 5, kind: input, shape index: {}]
  %s6 = inlined_call_operand.vmem [shape: f32[2,1,32], index: 6, kind: input, shape index: {}]
  %s7 = inlined_call_operand.vmem [shape: f32[2,1,32], index: 7, kind: input, shape index: {}]
  %s8 = inlined_call_operand.vmem [shape: f32[2,1,32], index: 8, kind: input, shape index: {}]
  %s9 = inlined_call_operand.vmem [shape: bf16[2,32,128], index: 9, kind: input, shape index: {}]
  %s10 = inlined_call_operand.vmem [shape: f32[2,1,128], index: 10, kind: input, shape index: {}]
  %s11 = inlined_call_operand.vmem [shape: bf16[2,128,32], index: 11, kind: input, shape index: {}]
  %s12 = inlined_call_operand.vmem [shape: f32[2,1,32], index: 12, kind: input, shape index: {}]
  %s13 = inlined_call_operand.vmem [shape: f32[1,32], index: 13, kind: input, shape index: {}]
  %s14 = inlined_call_operand.vmem [shape: f32[1,32], index: 14, kind: input, shape index: {}]
  %s15 = inlined_call_operand.vmem [shape: bf16[32,32], index: 15, kind: input, shape index: {}]
  %s16 = inlined_call_operand.vmem [shape: f32[1,32], index: 16, kind: input, shape index: {}]
  %s17 = inlined_call_operand.vmem [shape: bf16[32,32], index: 17, kind: input, shape index: {}]
  %s18 = inlined_call_operand.vmem [shape: f32[1,32], index: 18, kind: input, shape index: {}]
  %s19 = inlined_call_operand.vmem [shape: f32[1,32], index: 19, kind: input, shape index: {}]
  %s20 = inlined_call_operand.vmem [shape: f32[1,32], index: 20, kind: input, shape index: {}]
  %s21 = inlined_call_operand.vmem [shape: bf16[32,16], index: 21, kind: input, shape index: {}]
  %s22 = inlined_call_operand.vmem [shape: f32[6,16], index: 22, kind: input, shape index: {}]
  %s23 = inlined_call_operand.vmem [shape: f32[3,24,16], index: 23, kind: output, shape index: {0}]
  %s24 = inlined_call_operand.vmem [shape: f32[24,24], index: 24, kind: output, shape index: {1}]
  %s25 = inlined_call_operand.vmem [shape: f32[24,3], index: 25, kind: output, shape index: {2}]
  %26 = xla_tuple %s23, %s24, %s25
  %s27 = sld [smem:[#allocation0]]
  $region118: #{openclip_forward.1} parent=0
    _
  %s29 = ssub.s32 1, %s27
  %s30 = scalar_select 0, %s29, %s27
  // Predicated region
  $region2: #{openclip_forward.1} parent=0 // pred_check
    _
  $region3: #{openclip_forward.1} parent=0 // pred_check_branch
    %32 = sbr.rel (0) target = $region5
  $region4: #{openclip_forward.1} parent=0 // pred_region
    _
  $region5: #{openclip_forward.1} parent=0 // pred_fallthru
    _
  // Predicated region
  $region6: #{openclip_forward.1} parent=0 // pred_check
    _
  $region7: #{openclip_forward.1} parent=0 // pred_check_branch
    %34 = sbr.rel (0) target = $region9
  $region8: #{openclip_forward.1} parent=0 // pred_region
    _
  $region9: #{openclip_forward.1} parent=0 // pred_fallthru
    _
  // Predicated region
  $region10: #{openclip_forward.1} parent=0 // pred_check
    _
  $region11: #{openclip_forward.1} parent=0 // pred_check_branch
    %36 = sbr.rel (0) target = $region13
  $region12: #{openclip_forward.1} parent=0 // pred_region
    _
  $region13: #{openclip_forward.1} parent=0 // pred_fallthru
    _
  // Predicated region
  $region14: #{openclip_forward.1} parent=0 // pred_check
    _
  $region15: #{openclip_forward.1} parent=0 // pred_check_branch
    %38 = sbr.rel (0) target = $region17
  $region16: #{openclip_forward.1} parent=0 // pred_region
    _
  $region17: #{openclip_forward.1} parent=0 // pred_fallthru
    _
  // Predicated region
  $region18: #{openclip_forward.1} parent=0 // pred_check
    _
  $region19: #{openclip_forward.1} parent=0 // pred_check_branch
    %40 = sbr.rel (0) target = $region21
  $region20: #{openclip_forward.1} parent=0 // pred_region
    _
  $region21: #{openclip_forward.1} parent=0 // pred_fallthru
    _
  // Predicated region
  $region22: #{openclip_forward.1} parent=0 // pred_check
    _
  $region23: #{openclip_forward.1} parent=0 // pred_check_branch
    %42 = sbr.rel (0) target = $region25
  $region24: #{openclip_forward.1} parent=0 // pred_region
    _
  $region25: #{openclip_forward.1} parent=0 // pred_fallthru
    _
  // Predicated region
  $region26: #{openclip_forward.1} parent=0 // pred_check
    _
  $region27: #{openclip_forward.1} parent=0 // pred_check_branch
    %44 = sbr.rel (0) target = $region29
  $region28: #{openclip_forward.1} parent=0 // pred_region
    _
  $region29: #{openclip_forward.1} parent=0 // pred_fallthru
    _
  // Predicated region
  $region30: #{openclip_forward.1} parent=0 // pred_check
    _
  $region31: #{openclip_forward.1} parent=0 // pred_check_branch
    %46 = sbr.rel (0) target = $region33
  $region32: #{openclip_forward.1} parent=0 // pred_region
    _
  $region33: #{openclip_forward.1} parent=0 // pred_fallthru
    _
  // Predicated region
  $region34: #{openclip_forward.1} parent=0 // pred_check
    _
  $region35: #{openclip_forward.1} parent=0 // pred_check_branch
    %48 = sbr.rel (0) target = $region37
  $region36: #{openclip_forward.1} parent=0 // pred_region
    _
  $region37: #{openclip_forward.1} parent=0 // pred_fallthru
    _
  // Predicated region
  $region38: #{openclip_forward.1} parent=0 // pred_check
    _
  $region39: #{openclip_forward.1} parent=0 // pred_check_branch
    %50 = sbr.rel (0) target = $region41
  $region40: #{openclip_forward.1} parent=0 // pred_region
    _
  $region41: #{openclip_forward.1} parent=0 // pred_fallthru
    _
  // Predicated region
  $region42: #{openclip_forward.1} parent=0 // pred_check
    _
  $region43: #{openclip_forward.1} parent=0 // pred_check_branch
    %52 = sbr.rel (0) target = $region45
  $region44: #{openclip_forward.1} parent=0 // pred_region
    _
  $region45: #{openclip_forward.1} parent=0 // pred_fallthru
    _
  // Predicated region
  $region46: #{openclip_forward.1} parent=0 // pred_check
    _
  $region47: #{openclip_forward.1} parent=0 // pred_check_branch
    %54 = sbr.rel (0) target = $region49
  $region48: #{openclip_forward.1} parent=0 // pred_region
    _
  $region49: #{openclip_forward.1} parent=0 // pred_fallthru
    _
  // Predicated region
  $region50: #{openclip_forward.1} parent=0 // pred_check
    _
  $region51: #{openclip_forward.1} parent=0 // pred_check_branch
    %56 = sbr.rel (0) target = $region53
  $region52: #{openclip_forward.1} parent=0 // pred_region
    _
  $region53: #{openclip_forward.1} parent=0 // pred_fallthru
    _
  // Predicated region
  $region54: #{openclip_forward.1} parent=0 // pred_check
    _
  $region55: #{openclip_forward.1} parent=0 // pred_check_branch
    %58 = sbr.rel (0) target = $region57
  $region56: #{openclip_forward.1} parent=0 // pred_region
    _
  $region57: #{openclip_forward.1} parent=0 // pred_fallthru
    _
  // Predicated region
  $region58: #{openclip_forward.1} parent=0 // pred_check
    _
  $region59: #{openclip_forward.1} parent=0 // pred_check_branch
    %60 = sbr.rel (0) target = $region61
  $region60: #{openclip_forward.1} parent=0 // pred_region
    _
  $region61: #{openclip_forward.1} parent=0 // pred_fallthru
    _
  // Predicated region
  $region62: #{openclip_forward.1} parent=0 // pred_check
    _
  $region63: #{openclip_forward.1} parent=0 // pred_check_branch
    %62 = sbr.rel (0) target = $region65
  $region64: #{openclip_forward.1} parent=0 // pred_region
    _
  $region65: #{openclip_forward.1} parent=0 // pred_fallthru
    _
  // Predicated region
  $region66: #{openclip_forward.1} parent=0 // pred_check
    _
  $region67: #{openclip_forward.1} parent=0 // pred_check_branch
    %64 = sbr.rel (0) target = $region69
  $region68: #{openclip_forward.1} parent=0 // pred_region
    _
  $region69: #{openclip_forward.1} parent=0 // pred_fallthru
    _
  // Predicated region
  $region70: #{openclip_forward.1} parent=0 // pred_check
    _
  $region71: #{openclip_forward.1} parent=0 // pred_check_branch
    %66 = sbr.rel (0) target = $region73
  $region72: #{openclip_forward.1} parent=0 // pred_region
    _
  $region73: #{openclip_forward.1} parent=0 // pred_fallthru
    _
  // Predicated region
  $region74: #{openclip_forward.1} parent=0 // pred_check
    _
  $region75: #{openclip_forward.1} parent=0 // pred_check_branch
    %68 = sbr.rel (0) target = $region77
  $region76: #{openclip_forward.1} parent=0 // pred_region
    _
  $region77: #{openclip_forward.1} parent=0 // pred_fallthru
    _
  // Predicated region
  $region78: #{openclip_forward.1} parent=0 // pred_check
    _
  $region79: #{openclip_forward.1} parent=0 // pred_check_branch
    %70 = sbr.rel (0) target = $region81
  $region80: #{openclip_forward.1} parent=0 // pred_region
    _
  $region81: #{openclip_forward.1} parent=0 // pred_fallthru
    _
  // Predicated region
  $region82: #{openclip_forward.1} parent=0 // pred_check
    _
  $region83: #{openclip_forward.1} parent=0 // pred_check_branch
    %72 = sbr.rel (0) target = $region85
  $region84: #{openclip_forward.1} parent=0 // pred_region
    _
  $region85: #{openclip_forward.1} parent=0 // pred_fallthru
    _
  // Predicated region
  $region86: #{openclip_forward.1} parent=0 // pred_check
    _
  $region87: #{openclip_forward.1} parent=0 // pred_check_branch
    %74 = sbr.rel (0) target = $region89
  $region88: #{openclip_forward.1} parent=0 // pred_region
    _
  $region89: #{openclip_forward.1} parent=0 // pred_fallthru
    _
  // Predicated region
  $region90: #{openclip_forward.1} parent=0 // pred_check
    _
  $region91: #{openclip_forward.1} parent=0 // pred_check_branch
    %76 = sbr.rel (0) target = $region93
  $region92: #{openclip_forward.1} parent=0 // pred_region
    _
  $region93: #{openclip_forward.1} parent=0 // pred_fallthru
    _
  %v78 = vlaneseq
  %v79 = vshrl.u32 %v78, 7
  %v80 = vadd.s32 %v79, 8
  %v81 = vadd.s32 %v79, 16
  %v82 = vlaneseq
  %v83 = vand.u32 %v82, 127
  %vm84 = vcmp.lt.s32.totalorder %v83, 17
  %vm85 = vcmp.lt.s32.totalorder %v79, 17
  %vm86 = vcmp.lt.s32.totalorder %v80, 17
  %vm87 = vcmp.lt.s32.totalorder %v81, 17
  %v88 = vsel %vm85, 1, 0
  %v89 = vsel %vm86, 1, 0
  %v90 = vsel %vm87, 1, 0
  %v91 = vcvt.s32.f32 %v88
  %v92 = vcvt.s32.f32 %v89
  %v93 = vcvt.s32.f32 %v90
  %vm94 = vcmp.ge.s32.totalorder %v79, 1
  %vm95 = vcmp.ge.s32.totalorder %v80, 1
  %vm96 = vcmp.ge.s32.totalorder %v81, 1
  %vm97 = vmand %vm94, %vm85
  %vm98 = vmand %vm95, %vm86
  %vm99 = vmand %vm96, %vm87
  %v100 = vsel %vm97, 1, 0
  %v101 = vsel %vm98, 1, 0
  %v102 = vsel %vm99, 1, 0
  %v103 = vcvt.s32.f32 %v100
  %v104 = vcvt.s32.f32 %v101
  %v105 = vcvt.s32.f32 %v102
  %vm106 = vcmp.eq.s32.totalorder %v79, %v83
  %vm107 = vcmp.eq.s32.totalorder %v80, %v83
  %vm108 = vcmp.eq.s32.totalorder %v81, %v83
  %vm109 = vcmp.ge.s32.totalorder %v79, 17
  %vm110 = vcmp.ge.s32.totalorder %v80, 17
  %vm111 = vcmp.ge.s32.totalorder %v81, 17
  %vm112 = vmand %vm106, %vm109
  %vm113 = vmand %vm107, %vm110
  %vm114 = vmand %vm108, %vm111
  %v115 = vsel %vm112, 1.0, 0.0
  %v116 = vsel %vm113, 1.0, 0.0
  %v117 = vsel %vm114, 1.0, 0.0
  %v118 = vld [vmem:[%s0] sm:$0xff]
  %v119 = vld [vmem:[%s0 + $0x8] sm:$0xff]
  %v120 = vld [vmem:[%s0 + $0x10] sm:$0xff]
  %v121 = vld [vmem:[%s1] sm:$0x1]
  %v122 = vld [vmem:[%s2] sm:$0x1]
  %vm123 = vcmask 261120
  %v124 = vsel %vm123, %v118, 0.0
  %125 = vadd.xlane.f32.xlu0 %v124
  %v126 = vpop.xlane.xlu0 %125
  %v127 = vsel %vm123, %v119, 0.0
  %128 = vadd.xlane.f32.xlu0 %v127
  %v129 = vpop.xlane.xlu0 %128
  %v130 = vsel %vm123, %v120, 0.0
  %131 = vadd.xlane.f32.xlu0 %v130
  %v132 = vpop.xlane.xlu0 %131
  %v133 = vrcp.pop 32.0
  %v134 = vmul.f32 %v126, %v133
  %v135 = vmul.f32 %v129, %v133
  %v136 = vmul.f32 %v132, %v133
  %v137 = vsub.f32 %v118, %v134
  %v138 = vsub.f32 %v119, %v135
  %v139 = vsub.f32 %v120, %v136
  %v140 = vmul.f32 %v137, %v137
  %v141 = vmul.f32 %v138, %v138
  %v142 = vmul.f32 %v139, %v139
  %v143 = vsel %vm123, %v140, 0.0
  %144 = vadd.xlane.f32.xlu0 %v143
  %v145 = vpop.xlane.xlu0 %144
  %v146 = vsel %vm123, %v141, 0.0
  %147 = vadd.xlane.f32.xlu0 %v146
  %v148 = vpop.xlane.xlu0 %147
  %v149 = vsel %vm123, %v142, 0.0
  %150 = vadd.xlane.f32.xlu0 %v149
  %v151 = vpop.xlane.xlu0 %150
  %v152 = vmul.f32 %v145, %v133
  %v153 = vmul.f32 %v148, %v133
  %v154 = vmul.f32 %v151, %v133
  %v155 = vadd.f32 %v152, 1e-05
  %v156 = vadd.f32 %v153, 1e-05
  %v157 = vadd.f32 %v154, 1e-05
  %v158 = vrsqrt.pop %v155
  %v159 = vrsqrt.pop %v156
  %v160 = vrsqrt.pop %v157
  %v161 = vmul.f32 %v137, %v158
  %v162 = vmul.f32 %v138, %v159
  %v163 = vmul.f32 %v139, %v160
  %v165 = vlaneseq
  %v166 = vshrl.u32 %v165, 7
  %v167 = vsub.s32 0, %v166
  %v168 = vrot.slane %v121, %v167
  %v170 = vmul.f32 %v161, %v168
  %v171 = vmul.f32 %v162, %v168
  %v172 = vmul.f32 %v163, %v168
  %v174 = vlaneseq
  %v175 = vshrl.u32 %v174, 7
  %v176 = vsub.s32 0, %v175
  %v177 = vrot.slane %v122, %v176
  %v179 = vadd.f32 %v170, %v177
  %v180 = vadd.f32 %v171, %v177
  %v181 = vadd.f32 %v172, %v177
  %v182 = vld [vmem:[%s3] sm:$0xf]
  %v183 = vld [vmem:[%s3 + $0x4] sm:$0xf]
  %v184 = vld [vmem:[%s3 + $0x8] sm:$0xf]
  %v185 = vld [vmem:[%s3 + $0xc] sm:$0xf]
  %v186 = vpack.c.bf16 %v180, %v179
  %v187 = vpack.c.bf16 %v181, %v181
  %v188 = vld [vmem:[%s4] sm:$0x1]
  %v190 = vlaneseq
  %v191 = vshrl.u32 %v190, 7
  %v192 = vsub.s32 0, %v191
  %v193 = vrot.slane %v188, %v192
  %v199 = vunpack.c.l.b16 %v182
  %v200 = vunpack.c.l.b16 %v183
  %v201 = vunpack.c.l.b16 %v184
  %v202 = vunpack.c.l.b16 %v185
  %v203 = vpack.c.b16 %v200, %v199
  %v204 = vpack.c.b16 %v202, %v201
  %v208 = vsel %vm123, %v186, 0
  %v211 = vsel %vm123, %v187, 0
  %213 = vmatprep.subr.bf16.mxu0 0
  %214 = vmatpush1.bf16.msra.mxu0 0
  %215 = vmatprep.subr.bf16.mxu0 0
  %216 = vmatpush1.bf16.msra.mxu0 0
  %217 = vmatprep.subr.bf16.mxu0 0
  %218 = vmatpush1.bf16.msra.mxu0 0
  %219 = vmatprep.subr.bf16.mxu0 0
  %220 = vmatpush1.bf16.msra.mxu0 0
  %221 = vmatprep.subr.bf16.mxu0 0
  %222 = vmatpush1.bf16.msra.mxu0 0
  %223 = vmatprep.subr.bf16.mxu0 0
  %224 = vmatpush1.bf16.msra.mxu0 0
  %225 = vmatprep.subr.bf16.mxu0 0
  %226 = vmatpush1.bf16.msra.mxu0 %v204
  %227 = vmatprep.subr.bf16.mxu0 0
  %228 = vmatpush1.bf16.msra.mxu0 %v203
  %229 = vmatprep.subr.bf16.mxu0 0
  %230 = vmatpush2.bf16.msra.mxu0 0
  %231 = vmatprep.subr.bf16.mxu0 0
  %232 = vmatpush2.bf16.msra.mxu0 0
  %233 = vmatprep.subr.bf16.mxu0 0
  %234 = vmatpush2.bf16.msra.mxu0 0
  %235 = vmatprep.subr.bf16.mxu0 0
  %236 = vmatpush2.bf16.msra.mxu0 0
  %237 = vmatprep.subr.bf16.mxu0 0
  %238 = vmatpush2.bf16.msra.mxu0 0
  %239 = vmatprep.subr.bf16.mxu0 0
  %240 = vmatpush2.bf16.msra.mxu0 0
  %241 = vmatprep.subr.bf16.mxu0 0
  %242 = vmatpush2.bf16.msra.mxu0 0
  %243 = vmatprep.subr.bf16.mxu0 0
  %244 = vmatpush2.bf16.msra.mxu0 0
  %245 = vmatprep.mubr.bf16.mxu0 0
  %246 = vmatmul.mubr.bf16.gmra.mxu0 %v208
  %v247 = vpop.f32.mrf.mxu0
  %v248 = vadd.f32 %v193, %v247
  %v249 = vpop.f32.mrf.mxu0
  %v250 = vpop.f32.mrf.mxu0
  %v251 = vadd.f32 %v193, %v250
  %v252 = vpop.f32.mrf.mxu0
  %253 = vmatprep.mubr.bf16.mxu0 0
  %254 = vmatmul.mubr.bf16.gmra.mxu0 %v211
  %v255 = vpop.f32.mrf.mxu0
  %v256 = vadd.f32 %v193, %v255
  %v257 = vpop.f32.mrf.mxu0
  %v258 = vpop.f32.mrf.mxu0
  %v259 = vpop.f32.mrf.mxu0
  %260 = vdwg.mxu0
  %v261 = vmul.f32 %v248, 0.35355338
  %v262 = vmul.f32 %v251, 0.35355338
  %v263 = vmul.f32 %v256, 0.35355338
  %v264 = vpack.c.bf16 %v262, %v261
  %v265 = vpack.c.bf16 %v263, %v263
  %v266 = vpack.c.bf16 %v251, %v248
  %v267 = vpack.c.bf16 %v256, %v256
  %270 = vrot.lane.b32.xlu0 %v266, 96
  %v271 = vpop.permute.xlu0 %270
  %272 = vrot.lane.b32.xlu0 %v267, 96
  %v273 = vpop.permute.xlu0 %272
  %vm274 = vcmask 64512
  %v276 = vsel %vm274, %v264, 0
  %v279 = vsel %vm274, %v265, 0
  %v282 = vsel %vm274, %v271, 0
  %v285 = vsel %vm274, %v273, 0
  %287 = vmatprep.subr.bf16.mxu0 0
  %288 = vmatpush1.bf16.xpose.msra.mxu0 0
  %289 = vmatprep.subr.bf16.mxu0 0
  %290 = vmatpush1.bf16.xpose.msra.mxu0 0
  %291 = vmatprep.subr.bf16.mxu0 0
  %292 = vmatpush1.bf16.xpose.msra.mxu0 0
  %293 = vmatprep.subr.bf16.mxu0 0
  %294 = vmatpush1.bf16.xpose.msra.mxu0 0
  %295 = vmatprep.subr.bf16.mxu0 0
  %296 = vmatpush1.bf16.xpose.msra.mxu0 0
  %297 = vmatprep.subr.bf16.mxu0 0
  %298 = vmatpush1.bf16.xpose.msra.mxu0 0
  %299 = vmatprep.subr.bf16.mxu0 0
  %300 = vmatpush1.bf16.xpose.msra.mxu0 %v285
  %301 = vmatprep.subr.bf16.mxu0 0
  %302 = vmatpush1.bf16.xpose.msra.mxu0 %v282
  %303 = vmatprep.subr.bf16.mxu0 0
  %304 = vmatpush2.bf16.xpose.msra.mxu0 0
  %305 = vmatprep.subr.bf16.mxu0 0
  %306 = vmatpush2.bf16.xpose.msra.mxu0 0
  %307 = vmatprep.subr.bf16.mxu0 0
  %308 = vmatpush2.bf16.xpose.msra.mxu0 0
  %309 = vmatprep.subr.bf16.mxu0 0
  %310 = vmatpush2.bf16.xpose.msra.mxu0 0
  %311 = vmatprep.subr.bf16.mxu0 0
  %312 = vmatpush2.bf16.xpose.msra.mxu0 0
  %313 = vmatprep.subr.bf16.mxu0 0
  %314 = vmatpush2.bf16.xpose.msra.mxu0 0
  %315 = vmatprep.subr.bf16.mxu0 0
  %316 = vmatpush2.bf16.xpose.msra.mxu0 0
  %317 = vmatprep.subr.bf16.mxu0 0
  %318 = vmatpush2.bf16.xpose.msra.mxu0 0
  %319 = vmatprep.mubr.bf16.mxu0 0
  %320 = vmatmul.mubr.bf16.gmra.mxu0 %v276
  %v321 = vpop.f32.mrf.mxu0
  %v322 = vadd.f32 0.0, %v321
  %v323 = vpop.f32.mrf.mxu0
  %v324 = vpop.f32.mrf.mxu0
  %v325 = vadd.f32 0.0, %v324
  %v326 = vpop.f32.mrf.mxu0
  %327 = vmatprep.mubr.bf16.mxu0 0
  %328 = vmatmul.mubr.bf16.gmra.mxu0 %v279
  %v329 = vpop.f32.mrf.mxu0
  %v330 = vadd.f32 0.0, %v329
  %v331 = vpop.f32.mrf.mxu0
  %v332 = vpop.f32.mrf.mxu0
  %v333 = vpop.f32.mrf.mxu0
  %334 = vdwg.mxu0
  %v335 = vsel %vm84, %v322, -1e+30
  %v336 = vsel %vm84, %v325, -1e+30
  %v337 = vsel %vm84, %v330, -1e+30
  %vm338 = vcmask 195584
  %v339 = vsel %vm338, %v335, -inf
  %340 = vmax.xlane.f32.xlu0 %v339
  %v341 = vpop.xlane.xlu0 %340
  %v342 = vsel %vm338, %v336, -inf
  %343 = vmax.xlane.f32.xlu0 %v342
  %v344 = vpop.xlane.xlu0 %343
  %v345 = vsel %vm338, %v337, -inf
  %346 = vmax.xlane.f32.xlu0 %v345
  %v347 = vpop.xlane.xlu0 %346
  %v348 = vsub.f32 %v335, %v341
  %v349 = vsub.f32 %v336, %v344
  %v350 = vsub.f32 %v337, %v347
  %v351 = vmul.f32 %v348, 1.442695
  %v352 = vpow.pop %v351
  %v353 = vmul.f32 %v349, 1.442695
  %v354 = vpow.pop %v353
  %v355 = vmul.f32 %v350, 1.442695
  %v356 = vpow.pop %v355
  %v357 = vsel %vm338, %v352, 0.0
  %358 = vadd.xlane.f32.xlu0 %v357
  %v359 = vpop.xlane.xlu0 %358
  %v360 = vsel %vm338, %v354, 0.0
  %361 = vadd.xlane.f32.xlu0 %v360
  %v362 = vpop.xlane.xlu0 %361
  %v363 = vsel %vm338, %v356, 0.0
  %364 = vadd.xlane.f32.xlu0 %v363
  %v365 = vpop.xlane.xlu0 %364
  %v366 = vrcp.pop %v359
  %v367 = vmul.f32 %v352, %v366
  %v368 = vrcp.pop %v362
  %v369 = vmul.f32 %v354, %v368
  %v370 = vrcp.pop %v365
  %v371 = vmul.f32 %v356, %v370
  %v372 = vmul.f32 %v367, %v91
  %v373 = vmul.f32 %v369, %v92
  %v374 = vmul.f32 %v371, %v93
  %v375 = vadd.f32 %v115, %v372
  %v376 = vadd.f32 %v116, %v373
  %v377 = vadd.f32 %v117, %v374
  %v378 = vpack.c.bf16 %v369, %v367
  %v379 = vpack.c.bf16 %v371, %v371
  %380 = vrot.lane.b32.xlu0 %v266, 64
  %v381 = vpop.permute.xlu0 %380
  %382 = vrot.lane.b32.xlu0 %v267, 64
  %v383 = vpop.permute.xlu0 %382
  %v386 = vsel %vm338, %v378, 0
  %v389 = vsel %vm338, %v379, 0
  %vm391 = vcmask 1043456
  %v393 = vsel %vm391, %v383, 0
  %395 = vmatprep.subr.bf16.mxu0 0
  %396 = vmatpush1.bf16.msra.mxu0 0
  %397 = vmatprep.subr.bf16.mxu0 0
  %398 = vmatpush1.bf16.msra.mxu0 0
  %399 = vmatprep.subr.bf16.mxu0 0
  %400 = vmatpush1.bf16.msra.mxu0 0
  %401 = vmatprep.subr.bf16.mxu0 0
  %402 = vmatpush1.bf16.msra.mxu0 0
  %403 = vmatprep.subr.bf16.mxu0 0
  %404 = vmatpush1.bf16.msra.mxu0 0
  %405 = vmatprep.subr.bf16.mxu0 0
  %406 = vmatpush1.bf16.msra.mxu0 0
  %407 = vmatprep.subr.bf16.mxu0 0
  %408 = vmatpush1.bf16.msra.mxu0 %v393
  %409 = vmatprep.subr.bf16.mxu0 0
  %410 = vmatpush1.bf16.msra.mxu0 %v381
  %411 = vmatprep.subr.bf16.mxu0 0
  %412 = vmatpush2.bf16.msra.mxu0 0
  %413 = vmatprep.subr.bf16.mxu0 0
  %414 = vmatpush2.bf16.msra.mxu0 0
  %415 = vmatprep.subr.bf16.mxu0 0
  %416 = vmatpush2.bf16.msra.mxu0 0
  %417 = vmatprep.subr.bf16.mxu0 0
  %418 = vmatpush2.bf16.msra.mxu0 0
  %419 = vmatprep.subr.bf16.mxu0 0
  %420 = vmatpush2.bf16.msra.mxu0 0
  %421 = vmatprep.subr.bf16.mxu0 0
  %422 = vmatpush2.bf16.msra.mxu0 0
  %423 = vmatprep.subr.bf16.mxu0 0
  %424 = vmatpush2.bf16.msra.mxu0 0
  %425 = vmatprep.subr.bf16.mxu0 0
  %426 = vmatpush2.bf16.msra.mxu0 0
  %427 = vmatprep.mubr.bf16.mxu0 0
  %428 = vmatmul.mubr.bf16.gmra.mxu0 %v386
  %v429 = vpop.f32.mrf.mxu0
  %v430 = vadd.f32 0.0, %v429
  %v431 = vpop.f32.mrf.mxu0
  %v432 = vpop.f32.mrf.mxu0
  %v433 = vadd.f32 0.0, %v432
  %v434 = vpop.f32.mrf.mxu0
  %435 = vmatprep.mubr.bf16.mxu0 0
  %436 = vmatmul.mubr.bf16.gmra.mxu0 %v389
  %v437 = vpop.f32.mrf.mxu0
  %v438 = vadd.f32 0.0, %v437
  %v439 = vpop.f32.mrf.mxu0
  %v440 = vpop.f32.mrf.mxu0
  %v441 = vpop.f32.mrf.mxu0
  %442 = vdwg.mxu0
  %445 = vrot.lane.b32.xlu0 %v264, 120
  %v446 = vpop.permute.xlu0 %445
  %447 = vrot.lane.b32.xlu0 %v265, 120
  %v448 = vpop.permute.xlu0 %447
  %449 = vrot.lane.b32.xlu0 %v266, 88
  %v450 = vpop.permute.xlu0 %449
  %451 = vrot.lane.b32.xlu0 %v267, 88
  %v452 = vpop.permute.xlu0 %451
  %v454 = vsel %vm274, %v446, 0
  %v457 = vsel %vm274, %v448, 0
  %v460 = vsel %vm274, %v450, 0
  %v463 = vsel %vm274, %v452, 0
  %465 = vmatprep.subr.bf16.mxu0 0
  %466 = vmatpush1.bf16.xpose.msra.mxu0 0
  %467 = vmatprep.subr.bf16.mxu0 0
  %468 = vmatpush1.bf16.xpose.msra.mxu0 0
  %469 = vmatprep.subr.bf16.mxu0 0
  %470 = vmatpush1.bf16.xpose.msra.mxu0 0
  %471 = vmatprep.subr.bf16.mxu0 0
  %472 = vmatpush1.bf16.xpose.msra.mxu0 0
  %473 = vmatprep.subr.bf16.mxu0 0
  %474 = vmatpush1.bf16.xpose.msra.mxu0 0
  %475 = vmatprep.subr.bf16.mxu0 0
  %476 = vmatpush1.bf16.xpose.msra.mxu0 0
  %477 = vmatprep.subr.bf16.mxu0 0
  %478 = vmatpush1.bf16.xpose.msra.mxu0 %v463
  %479 = vmatprep.subr.bf16.mxu0 0
  %480 = vmatpush1.bf16.xpose.msra.mxu0 %v460
  %481 = vmatprep.subr.bf16.mxu0 0
  %482 = vmatpush2.bf16.xpose.msra.mxu0 0
  %483 = vmatprep.subr.bf16.mxu0 0
  %484 = vmatpush2.bf16.xpose.msra.mxu0 0
  %485 = vmatprep.subr.bf16.mxu0 0
  %486 = vmatpush2.bf16.xpose.msra.mxu0 0
  %487 = vmatprep.subr.bf16.mxu0 0
  %488 = vmatpush2.bf16.xpose.msra.mxu0 0
  %489 = vmatprep.subr.bf16.mxu0 0
  %490 = vmatpush2.bf16.xpose.msra.mxu0 0
  %491 = vmatprep.subr.bf16.mxu0 0
  %492 = vmatpush2.bf16.xpose.msra.mxu0 0
  %493 = vmatprep.subr.bf16.mxu0 0
  %494 = vmatpush2.bf16.xpose.msra.mxu0 0
  %495 = vmatprep.subr.bf16.mxu0 0
  %496 = vmatpush2.bf16.xpose.msra.mxu0 0
  %497 = vmatprep.mubr.bf16.mxu0 0
  %498 = vmatmul.mubr.bf16.gmra.mxu0 %v454
  %v499 = vpop.f32.mrf.mxu0
  %v500 = vadd.f32 0.0, %v499
  %v501 = vpop.f32.mrf.mxu0
  %v502 = vpop.f32.mrf.mxu0
  %v503 = vadd.f32 0.0, %v502
  %v504 = vpop.f32.mrf.mxu0
  %505 = vmatprep.mubr.bf16.mxu0 0
  %506 = vmatmul.mubr.bf16.gmra.mxu0 %v457
  %v507 = vpop.f32.mrf.mxu0
  %v508 = vadd.f32 0.0, %v507
  %v509 = vpop.f32.mrf.mxu0
  %v510 = vpop.f32.mrf.mxu0
  %v511 = vpop.f32.mrf.mxu0
  %512 = vdwg.mxu0
  %v513 = vsel %vm84, %v500, -1e+30
  %v514 = vsel %vm84, %v503, -1e+30
  %v515 = vsel %vm84, %v508, -1e+30
  %v516 = vsel %vm338, %v513, -inf
  %517 = vmax.xlane.f32.xlu0 %v516
  %v518 = vpop.xlane.xlu0 %517
  %v519 = vsel %vm338, %v514, -inf
  %520 = vmax.xlane.f32.xlu0 %v519
  %v521 = vpop.xlane.xlu0 %520
  %v522 = vsel %vm338, %v515, -inf
  %523 = vmax.xlane.f32.xlu0 %v522
  %v524 = vpop.xlane.xlu0 %523
  %v525 = vsub.f32 %v513, %v518
  %v526 = vsub.f32 %v514, %v521
  %v527 = vsub.f32 %v515, %v524
  %v528 = vmul.f32 %v525, 1.442695
  %v529 = vpow.pop %v528
  %v530 = vmul.f32 %v526, 1.442695
  %v531 = vpow.pop %v530
  %v532 = vmul.f32 %v527, 1.442695
  %v533 = vpow.pop %v532
  %v534 = vsel %vm338, %v529, 0.0
  %535 = vadd.xlane.f32.xlu0 %v534
  %v536 = vpop.xlane.xlu0 %535
  %v537 = vsel %vm338, %v531, 0.0
  %538 = vadd.xlane.f32.xlu0 %v537
  %v539 = vpop.xlane.xlu0 %538
  %v540 = vsel %vm338, %v533, 0.0
  %541 = vadd.xlane.f32.xlu0 %v540
  %v542 = vpop.xlane.xlu0 %541
  %v543 = vrcp.pop %v536
  %v544 = vmul.f32 %v529, %v543
  %v545 = vrcp.pop %v539
  %v546 = vmul.f32 %v531, %v545
  %v547 = vrcp.pop %v542
  %v548 = vmul.f32 %v533, %v547
  %v549 = vmul.f32 %v544, %v91
  %v550 = vmul.f32 %v546, %v92
  %v551 = vmul.f32 %v548, %v93
  %v552 = vadd.f32 %v115, %v549
  %v553 = vadd.f32 %v116, %v550
  %v554 = vadd.f32 %v117, %v551
  %v555 = vpack.c.bf16 %v546, %v544
  %v556 = vpack.c.bf16 %v548, %v548
  %557 = vrot.lane.b32.xlu0 %v266, 56
  %v558 = vpop.permute.xlu0 %557
  %559 = vrot.lane.b32.xlu0 %v267, 56
  %v560 = vpop.permute.xlu0 %559
  %v563 = vsel %vm338, %v555, 0
  %v566 = vsel %vm338, %v556, 0
  %v569 = vsel %vm391, %v560, 0
  %571 = vmatprep.subr.bf16.mxu0 0
  %572 = vmatpush1.bf16.msra.mxu0 0
  %573 = vmatprep.subr.bf16.mxu0 0
  %574 = vmatpush1.bf16.msra.mxu0 0
  %575 = vmatprep.subr.bf16.mxu0 0
  %576 = vmatpush1.bf16.msra.mxu0 0
  %577 = vmatprep.subr.bf16.mxu0 0
  %578 = vmatpush1.bf16.msra.mxu0 0
  %579 = vmatprep.subr.bf16.mxu0 0
  %580 = vmatpush1.bf16.msra.mxu0 0
  %581 = vmatprep.subr.bf16.mxu0 0
  %582 = vmatpush1.bf16.msra.mxu0 0
  %583 = vmatprep.subr.bf16.mxu0 0
  %584 = vmatpush1.bf16.msra.mxu0 %v569
  %585 = vmatprep.subr.bf16.mxu0 0
  %586 = vmatpush1.bf16.msra.mxu0 %v558
  %587 = vmatprep.subr.bf16.mxu0 0
  %588 = vmatpush2.bf16.msra.mxu0 0
  %589 = vmatprep.subr.bf16.mxu0 0
  %590 = vmatpush2.bf16.msra.mxu0 0
  %591 = vmatprep.subr.bf16.mxu0 0
  %592 = vmatpush2.bf16.msra.mxu0 0
  %593 = vmatprep.subr.bf16.mxu0 0
  %594 = vmatpush2.bf16.msra.mxu0 0
  %595 = vmatprep.subr.bf16.mxu0 0
  %596 = vmatpush2.bf16.msra.mxu0 0
  %597 = vmatprep.subr.bf16.mxu0 0
  %598 = vmatpush2.bf16.msra.mxu0 0
  %599 = vmatprep.subr.bf16.mxu0 0
  %600 = vmatpush2.bf16.msra.mxu0 0
  %601 = vmatprep.subr.bf16.mxu0 0
  %602 = vmatpush2.bf16.msra.mxu0 0
  %603 = vmatprep.mubr.bf16.mxu0 0
  %604 = vmatmul.mubr.bf16.gmra.mxu0 %v563
  %v605 = vpop.f32.mrf.mxu0
  %v606 = vadd.f32 0.0, %v605
  %v607 = vpop.f32.mrf.mxu0
  %v608 = vpop.f32.mrf.mxu0
  %v609 = vadd.f32 0.0, %v608
  %v610 = vpop.f32.mrf.mxu0
  %611 = vmatprep.mubr.bf16.mxu0 0
  %612 = vmatmul.mubr.bf16.gmra.mxu0 %v566
  %v613 = vpop.f32.mrf.mxu0
  %v614 = vadd.f32 0.0, %v613
  %v615 = vpop.f32.mrf.mxu0
  %v616 = vpop.f32.mrf.mxu0
  %v617 = vpop.f32.mrf.mxu0
  %618 = vdwg.mxu0
  %619 = vrot.lane.b32.xlu0 %v264, 112
  %v620 = vpop.permute.xlu0 %619
  %621 = vrot.lane.b32.xlu0 %v265, 112
  %v622 = vpop.permute.xlu0 %621
  %623 = vrot.lane.b32.xlu0 %v266, 80
  %v624 = vpop.permute.xlu0 %623
  %625 = vrot.lane.b32.xlu0 %v267, 80
  %v626 = vpop.permute.xlu0 %625
  %v628 = vsel %vm274, %v620, 0
  %v631 = vsel %vm274, %v622, 0
  %v634 = vsel %vm274, %v624, 0
  %v637 = vsel %vm274, %v626, 0
  %639 = vmatprep.subr.bf16.mxu0 0
  %640 = vmatpush1.bf16.xpose.msra.mxu0 0
  %641 = vmatprep.subr.bf16.mxu0 0
  %642 = vmatpush1.bf16.xpose.msra.mxu0 0
  %643 = vmatprep.subr.bf16.mxu0 0
  %644 = vmatpush1.bf16.xpose.msra.mxu0 0
  %645 = vmatprep.subr.bf16.mxu0 0
  %646 = vmatpush1.bf16.xpose.msra.mxu0 0
  %647 = vmatprep.subr.bf16.mxu0 0
  %648 = vmatpush1.bf16.xpose.msra.mxu0 0
  %649 = vmatprep.subr.bf16.mxu0 0
  %650 = vmatpush1.bf16.xpose.msra.mxu0 0
  %651 = vmatprep.subr.bf16.mxu0 0
  %652 = vmatpush1.bf16.xpose.msra.mxu0 %v637
  %653 = vmatprep.subr.bf16.mxu0 0
  %654 = vmatpush1.bf16.xpose.msra.mxu0 %v634
  %655 = vmatprep.subr.bf16.mxu0 0
  %656 = vmatpush2.bf16.xpose.msra.mxu0 0
  %657 = vmatprep.subr.bf16.mxu0 0
  %658 = vmatpush2.bf16.xpose.msra.mxu0 0
  %659 = vmatprep.subr.bf16.mxu0 0
  %660 = vmatpush2.bf16.xpose.msra.mxu0 0
  %661 = vmatprep.subr.bf16.mxu0 0
  %662 = vmatpush2.bf16.xpose.msra.mxu0 0
  %663 = vmatprep.subr.bf16.mxu0 0
  %664 = vmatpush2.bf16.xpose.msra.mxu0 0
  %665 = vmatprep.subr.bf16.mxu0 0
  %666 = vmatpush2.bf16.xpose.msra.mxu0 0
  %667 = vmatprep.subr.bf16.mxu0 0
  %668 = vmatpush2.bf16.xpose.msra.mxu0 0
  %669 = vmatprep.subr.bf16.mxu0 0
  %670 = vmatpush2.bf16.xpose.msra.mxu0 0
  %671 = vmatprep.mubr.bf16.mxu0 0
  %672 = vmatmul.mubr.bf16.gmra.mxu0 %v628
  %v673 = vpop.f32.mrf.mxu0
  %v674 = vadd.f32 0.0, %v673
  %v675 = vpop.f32.mrf.mxu0
  %v676 = vpop.f32.mrf.mxu0
  %v677 = vadd.f32 0.0, %v676
  %v678 = vpop.f32.mrf.mxu0
  %679 = vmatprep.mubr.bf16.mxu0 0
  %680 = vmatmul.mubr.bf16.gmra.mxu0 %v631
  %v681 = vpop.f32.mrf.mxu0
  %v682 = vadd.f32 0.0, %v681
  %v683 = vpop.f32.mrf.mxu0
  %v684 = vpop.f32.mrf.mxu0
  %v685 = vpop.f32.mrf.mxu0
  %686 = vdwg.mxu0
  %v687 = vsel %vm84, %v674, -1e+30
  %v688 = vsel %vm84, %v677, -1e+30
  %v689 = vsel %vm84, %v682, -1e+30
  %v690 = vsel %vm338, %v687, -inf
  %691 = vmax.xlane.f32.xlu0 %v690
  %v692 = vpop.xlane.xlu0 %691
  %v693 = vsel %vm338, %v688, -inf
  %694 = vmax.xlane.f32.xlu0 %v693
  %v695 = vpop.xlane.xlu0 %694
  %v696 = vsel %vm338, %v689, -inf
  %697 = vmax.xlane.f32.xlu0 %v696
  %v698 = vpop.xlane.xlu0 %697
  %v699 = vsub.f32 %v687, %v692
  %v700 = vsub.f32 %v688, %v695
  %v701 = vsub.f32 %v689, %v698
  %v702 = vmul.f32 %v699, 1.442695
  %v703 = vpow.pop %v702
  %v704 = vmul.f32 %v700, 1.442695
  %v705 = vpow.pop %v704
  %v706 = vmul.f32 %v701, 1.442695
  %v707 = vpow.pop %v706
  %v708 = vsel %vm338, %v703, 0.0
  %709 = vadd.xlane.f32.xlu0 %v708
  %v710 = vpop.xlane.xlu0 %709
  %v711 = vsel %vm338, %v705, 0.0
  %712 = vadd.xlane.f32.xlu0 %v711
  %v713 = vpop.xlane.xlu0 %712
  %v714 = vsel %vm338, %v707, 0.0
  %715 = vadd.xlane.f32.xlu0 %v714
  %v716 = vpop.xlane.xlu0 %715
  %v717 = vrcp.pop %v710
  %v718 = vmul.f32 %v703, %v717
  %v719 = vrcp.pop %v713
  %v720 = vmul.f32 %v705, %v719
  %v721 = vrcp.pop %v716
  %v722 = vmul.f32 %v707, %v721
  %v723 = vmul.f32 %v718, %v91
  %v724 = vmul.f32 %v720, %v92
  %v725 = vmul.f32 %v722, %v93
  %v726 = vadd.f32 %v115, %v723
  %v727 = vadd.f32 %v116, %v724
  %v728 = vadd.f32 %v117, %v725
  %v729 = vpack.c.bf16 %v720, %v718
  %v730 = vpack.c.bf16 %v722, %v722
  %731 = vrot.lane.b32.xlu0 %v266, 48
  %v732 = vpop.permute.xlu0 %731
  %733 = vrot.lane.b32.xlu0 %v267, 48
  %v734 = vpop.permute.xlu0 %733
  %v737 = vsel %vm338, %v729, 0
  %v740 = vsel %vm338, %v730, 0
  %v743 = vsel %vm391, %v734, 0
  %745 = vmatprep.subr.bf16.mxu0 0
  %746 = vmatpush1.bf16.msra.mxu0 0
  %747 = vmatprep.subr.bf16.mxu0 0
  %748 = vmatpush1.bf16.msra.mxu0 0
  %749 = vmatprep.subr.bf16.mxu0 0
  %750 = vmatpush1.bf16.msra.mxu0 0
  %751 = vmatprep.subr.bf16.mxu0 0
  %752 = vmatpush1.bf16.msra.mxu0 0
  %753 = vmatprep.subr.bf16.mxu0 0
  %754 = vmatpush1.bf16.msra.mxu0 0
  %755 = vmatprep.subr.bf16.mxu0 0
  %756 = vmatpush1.bf16.msra.mxu0 0
  %757 = vmatprep.subr.bf16.mxu0 0
  %758 = vmatpush1.bf16.msra.mxu0 %v743
  %759 = vmatprep.subr.bf16.mxu0 0
  %760 = vmatpush1.bf16.msra.mxu0 %v732
  %761 = vmatprep.subr.bf16.mxu0 0
  %762 = vmatpush2.bf16.msra.mxu0 0
  %763 = vmatprep.subr.bf16.mxu0 0
  %764 = vmatpush2.bf16.msra.mxu0 0
  %765 = vmatprep.subr.bf16.mxu0 0
  %766 = vmatpush2.bf16.msra.mxu0 0
  %767 = vmatprep.subr.bf16.mxu0 0
  %768 = vmatpush2.bf16.msra.mxu0 0
  %769 = vmatprep.subr.bf16.mxu0 0
  %770 = vmatpush2.bf16.msra.mxu0 0
  %771 = vmatprep.subr.bf16.mxu0 0
  %772 = vmatpush2.bf16.msra.mxu0 0
  %773 = vmatprep.subr.bf16.mxu0 0
  %774 = vmatpush2.bf16.msra.mxu0 0
  %775 = vmatprep.subr.bf16.mxu0 0
  %776 = vmatpush2.bf16.msra.mxu0 0
  %777 = vmatprep.mubr.bf16.mxu0 0
  %778 = vmatmul.mubr.bf16.gmra.mxu0 %v737
  %v779 = vpop.f32.mrf.mxu0
  %v780 = vadd.f32 0.0, %v779
  %v781 = vpop.f32.mrf.mxu0
  %v782 = vpop.f32.mrf.mxu0
  %v783 = vadd.f32 0.0, %v782
  %v784 = vpop.f32.mrf.mxu0
  %785 = vmatprep.mubr.bf16.mxu0 0
  %786 = vmatmul.mubr.bf16.gmra.mxu0 %v740
  %v787 = vpop.f32.mrf.mxu0
  %v788 = vadd.f32 0.0, %v787
  %v789 = vpop.f32.mrf.mxu0
  %v790 = vpop.f32.mrf.mxu0
  %v791 = vpop.f32.mrf.mxu0
  %792 = vdwg.mxu0
  %793 = vrot.lane.b32.xlu0 %v264, 104
  %v794 = vpop.permute.xlu0 %793
  %795 = vrot.lane.b32.xlu0 %v265, 104
  %v796 = vpop.permute.xlu0 %795
  %797 = vrot.lane.b32.xlu0 %v266, 72
  %v798 = vpop.permute.xlu0 %797
  %799 = vrot.lane.b32.xlu0 %v267, 72
  %v800 = vpop.permute.xlu0 %799
  %v802 = vsel %vm274, %v794, 0
  %v805 = vsel %vm274, %v796, 0
  %v808 = vsel %vm274, %v798, 0
  %v811 = vsel %vm274, %v800, 0
  %813 = vmatprep.subr.bf16.mxu0 0
  %814 = vmatpush1.bf16.xpose.msra.mxu0 0
  %815 = vmatprep.subr.bf16.mxu0 0
  %816 = vmatpush1.bf16.xpose.msra.mxu0 0
  %817 = vmatprep.subr.bf16.mxu0 0
  %818 = vmatpush1.bf16.xpose.msra.mxu0 0
  %819 = vmatprep.subr.bf16.mxu0 0
  %820 = vmatpush1.bf16.xpose.msra.mxu0 0
  %821 = vmatprep.subr.bf16.mxu0 0
  %822 = vmatpush1.bf16.xpose.msra.mxu0 0
  %823 = vmatprep.subr.bf16.mxu0 0
  %824 = vmatpush1.bf16.xpose.msra.mxu0 0
  %825 = vmatprep.subr.bf16.mxu0 0
  %826 = vmatpush1.bf16.xpose.msra.mxu0 %v811
  %827 = vmatprep.subr.bf16.mxu0 0
  %828 = vmatpush1.bf16.xpose.msra.mxu0 %v808
  %829 = vmatprep.subr.bf16.mxu0 0
  %830 = vmatpush2.bf16.xpose.msra.mxu0 0
  %831 = vmatprep.subr.bf16.mxu0 0
  %832 = vmatpush2.bf16.xpose.msra.mxu0 0
  %833 = vmatprep.subr.bf16.mxu0 0
  %834 = vmatpush2.bf16.xpose.msra.mxu0 0
  %835 = vmatprep.subr.bf16.mxu0 0
  %836 = vmatpush2.bf16.xpose.msra.mxu0 0
  %837 = vmatprep.subr.bf16.mxu0 0
  %838 = vmatpush2.bf16.xpose.msra.mxu0 0
  %839 = vmatprep.subr.bf16.mxu0 0
  %840 = vmatpush2.bf16.xpose.msra.mxu0 0
  %841 = vmatprep.subr.bf16.mxu0 0
  %842 = vmatpush2.bf16.xpose.msra.mxu0 0
  %843 = vmatprep.subr.bf16.mxu0 0
  %844 = vmatpush2.bf16.xpose.msra.mxu0 0
  %845 = vmatprep.mubr.bf16.mxu0 0
  %846 = vmatmul.mubr.bf16.gmra.mxu0 %v802
  %v847 = vpop.f32.mrf.mxu0
  %v848 = vadd.f32 0.0, %v847
  %v849 = vpop.f32.mrf.mxu0
  %v850 = vpop.f32.mrf.mxu0
  %v851 = vadd.f32 0.0, %v850
  %v852 = vpop.f32.mrf.mxu0
  %853 = vmatprep.mubr.bf16.mxu0 0
  %854 = vmatmul.mubr.bf16.gmra.mxu0 %v805
  %v855 = vpop.f32.mrf.mxu0
  %v856 = vadd.f32 0.0, %v855
  %v857 = vpop.f32.mrf.mxu0
  %v858 = vpop.f32.mrf.mxu0
  %v859 = vpop.f32.mrf.mxu0
  %860 = vdwg.mxu0
  %v861 = vsel %vm84, %v848, -1e+30
  %v862 = vsel %vm84, %v851, -1e+30
  %v863 = vsel %vm84, %v856, -1e+30
  %v864 = vsel %vm338, %v861, -inf
  %865 = vmax.xlane.f32.xlu0 %v864
  %v866 = vpop.xlane.xlu0 %865
  %v867 = vsel %vm338, %v862, -inf
  %868 = vmax.xlane.f32.xlu0 %v867
  %v869 = vpop.xlane.xlu0 %868
  %v870 = vsel %vm338, %v863, -inf
  %871 = vmax.xlane.f32.xlu0 %v870
  %v872 = vpop.xlane.xlu0 %871
  %v873 = vsub.f32 %v861, %v866
  %v874 = vsub.f32 %v862, %v869
  %v875 = vsub.f32 %v863, %v872
  %v876 = vmul.f32 %v873, 1.442695
  %v877 = vpow.pop %v876
  %v878 = vmul.f32 %v874, 1.442695
  %v879 = vpow.pop %v878
  %v880 = vmul.f32 %v875, 1.442695
  %v881 = vpow.pop %v880
  %v882 = vsel %vm338, %v877, 0.0
  %883 = vadd.xlane.f32.xlu0 %v882
  %v884 = vpop.xlane.xlu0 %883
  %v885 = vsel %vm338, %v879, 0.0
  %886 = vadd.xlane.f32.xlu0 %v885
  %v887 = vpop.xlane.xlu0 %886
  %v888 = vsel %vm338, %v881, 0.0
  %889 = vadd.xlane.f32.xlu0 %v888
  %v890 = vpop.xlane.xlu0 %889
  %v891 = vrcp.pop %v884
  %v892 = vmul.f32 %v877, %v891
  %v893 = vrcp.pop %v887
  %v894 = vmul.f32 %v879, %v893
  %v895 = vrcp.pop %v890
  %v896 = vmul.f32 %v881, %v895
  %v897 = vmul.f32 %v892, %v91
  %v898 = vmul.f32 %v894, %v92
  %v899 = vmul.f32 %v896, %v93
  %v900 = vadd.f32 %v115, %v897
  %v901 = vadd.f32 %v116, %v898
  %v902 = vadd.f32 %v117, %v899
  %v903 = vpack.c.bf16 %v894, %v892
  %v904 = vpack.c.bf16 %v896, %v896
  %905 = vrot.lane.b32.xlu0 %v266, 40
  %v906 = vpop.permute.xlu0 %905
  %907 = vrot.lane.b32.xlu0 %v267, 40
  %v908 = vpop.permute.xlu0 %907
  %v911 = vsel %vm338, %v903, 0
  %v914 = vsel %vm338, %v904, 0
  %v917 = vsel %vm391, %v908, 0
  %919 = vmatprep.subr.bf16.mxu0 0
  %920 = vmatpush1.bf16.msra.mxu0 0
  %921 = vmatprep.subr.bf16.mxu0 0
  %922 = vmatpush1.bf16.msra.mxu0 0
  %923 = vmatprep.subr.bf16.mxu0 0
  %924 = vmatpush1.bf16.msra.mxu0 0
  %925 = vmatprep.subr.bf16.mxu0 0
  %926 = vmatpush1.bf16.msra.mxu0 0
  %927 = vmatprep.subr.bf16.mxu0 0
  %928 = vmatpush1.bf16.msra.mxu0 0
  %929 = vmatprep.subr.bf16.mxu0 0
  %930 = vmatpush1.bf16.msra.mxu0 0
  %931 = vmatprep.subr.bf16.mxu0 0
  %932 = vmatpush1.bf16.msra.mxu0 %v917
  %933 = vmatprep.subr.bf16.mxu0 0
  %934 = vmatpush1.bf16.msra.mxu0 %v906
  %935 = vmatprep.subr.bf16.mxu0 0
  %936 = vmatpush2.bf16.msra.mxu0 0
  %937 = vmatprep.subr.bf16.mxu0 0
  %938 = vmatpush2.bf16.msra.mxu0 0
  %939 = vmatprep.subr.bf16.mxu0 0
  %940 = vmatpush2.bf16.msra.mxu0 0
  %941 = vmatprep.subr.bf16.mxu0 0
  %942 = vmatpush2.bf16.msra.mxu0 0
  %943 = vmatprep.subr.bf16.mxu0 0
  %944 = vmatpush2.bf16.msra.mxu0 0
  %945 = vmatprep.subr.bf16.mxu0 0
  %946 = vmatpush2.bf16.msra.mxu0 0
  %947 = vmatprep.subr.bf16.mxu0 0
  %948 = vmatpush2.bf16.msra.mxu0 0
  %949 = vmatprep.subr.bf16.mxu0 0
  %950 = vmatpush2.bf16.msra.mxu0 0
  %951 = vmatprep.mubr.bf16.mxu0 0
  %952 = vmatmul.mubr.bf16.gmra.mxu0 %v911
  %v953 = vpop.f32.mrf.mxu0
  %v954 = vadd.f32 0.0, %v953
  %v955 = vpop.f32.mrf.mxu0
  %v956 = vpop.f32.mrf.mxu0
  %v957 = vadd.f32 0.0, %v956
  %v958 = vpop.f32.mrf.mxu0
  %959 = vmatprep.mubr.bf16.mxu0 0
  %960 = vmatmul.mubr.bf16.gmra.mxu0 %v914
  %v961 = vpop.f32.mrf.mxu0
  %v962 = vadd.f32 0.0, %v961
  %v963 = vpop.f32.mrf.mxu0
  %v964 = vpop.f32.mrf.mxu0
  %v965 = vpop.f32.mrf.mxu0
  %966 = vdwg.mxu0
  %970 = vrot.lane.b32.xlu0 %v606, 8
  %v971 = vpop.permute.xlu0 %970
  %972 = vrot.lane.b32.xlu0 %v609, 8
  %v973 = vpop.permute.xlu0 %972
  %974 = vrot.lane.b32.xlu0 %v614, 8
  %v975 = vpop.permute.xlu0 %974
  %982 = vrot.lane.b32.xlu0 %v780, 16
  %v983 = vpop.permute.xlu0 %982
  %984 = vrot.lane.b32.xlu0 %v783, 16
  %v985 = vpop.permute.xlu0 %984
  %986 = vrot.lane.b32.xlu0 %v788, 16
  %v987 = vpop.permute.xlu0 %986
  %994 = vrot.lane.b32.xlu0 %v954, 24
  %v995 = vpop.permute.xlu0 %994
  %996 = vrot.lane.b32.xlu0 %v957, 24
  %v997 = vpop.permute.xlu0 %996
  %998 = vrot.lane.b32.xlu0 %v962, 24
  %v999 = vpop.permute.xlu0 %998
  %v1003 = vsel %vm274, %v430, %v971
  %v1004 = vsel %vm274, %v433, %v973
  %v1005 = vsel %vm274, %v438, %v975
  %vm1006 = vcmask 130048
  %v1007 = vsel %vm1006, %v1003, %v983
  %v1008 = vsel %vm1006, %v1004, %v985
  %v1009 = vsel %vm1006, %v1005, %v987
  %v1010 = vsel %vm338, %v1007, %v995
  %v1011 = vsel %vm338, %v1008, %v997
  %v1012 = vsel %vm338, %v1009, %v999
  %v1013 = vld [vmem:[%s5] sm:$0xf]
  %v1014 = vld [vmem:[%s5 + $0x4] sm:$0xf]
  %v1015 = vld [vmem:[%s5 + $0x8] sm:$0xf]
  %v1016 = vld [vmem:[%s5 + $0xc] sm:$0xf]
  %v1017 = vpack.c.bf16 %v1011, %v1010
  %v1018 = vpack.c.bf16 %v1012, %v1012
  %v1023 = vunpack.c.l.b16 %v1013
  %v1024 = vunpack.c.l.b16 %v1014
  %v1025 = vunpack.c.l.b16 %v1015
  %v1026 = vunpack.c.l.b16 %v1016
  %v1027 = vpack.c.b16 %v1024, %v1023
  %v1028 = vpack.c.b16 %v1026, %v1025
  %v1032 = vsel %vm123, %v1017, 0
  %v1035 = vsel %vm123, %v1018, 0
  %1037 = vmatprep.subr.bf16.mxu0 0
  %1038 = vmatpush1.bf16.msra.mxu0 0
  %1039 = vmatprep.subr.bf16.mxu0 0
  %1040 = vmatpush1.bf16.msra.mxu0 0
  %1041 = vmatprep.subr.bf16.mxu0 0
  %1042 = vmatpush1.bf16.msra.mxu0 0
  %1043 = vmatprep.subr.bf16.mxu0 0
  %1044 = vmatpush1.bf16.msra.mxu0 0
  %1045 = vmatprep.subr.bf16.mxu0 0
  %1046 = vmatpush1.bf16.msra.mxu0 0
  %1047 = vmatprep.subr.bf16.mxu0 0
  %1048 = vmatpush1.bf16.msra.mxu0 0
  %1049 = vmatprep.subr.bf16.mxu0 0
  %1050 = vmatpush1.bf16.msra.mxu0 %v1028
  %1051 = vmatprep.subr.bf16.mxu0 0
  %1052 = vmatpush1.bf16.msra.mxu0 %v1027
  %1053 = vmatprep.subr.bf16.mxu0 0
  %1054 = vmatpush2.bf16.msra.mxu0 0
  %1055 = vmatprep.subr.bf16.mxu0 0
  %1056 = vmatpush2.bf16.msra.mxu0 0
  %1057 = vmatprep.subr.bf16.mxu0 0
  %1058 = vmatpush2.bf16.msra.mxu0 0
  %1059 = vmatprep.subr.bf16.mxu0 0
  %1060 = vmatpush2.bf16.msra.mxu0 0
  %1061 = vmatprep.subr.bf16.mxu0 0
  %1062 = vmatpush2.bf16.msra.mxu0 0
  %1063 = vmatprep.subr.bf16.mxu0 0
  %1064 = vmatpush2.bf16.msra.mxu0 0
  %1065 = vmatprep.subr.bf16.mxu0 0
  %1066 = vmatpush2.bf16.msra.mxu0 0
  %1067 = vmatprep.subr.bf16.mxu0 0
  %1068 = vmatpush2.bf16.msra.mxu0 0
  %1069 = vmatprep.mubr.bf16.mxu0 0
  %1070 = vmatmul.mubr.bf16.gmra.mxu0 %v1032
  %v1071 = vpop.f32.mrf.mxu0
  %v1072 = vadd.f32 0.0, %v1071
  %v1073 = vpop.f32.mrf.mxu0
  %v1074 = vpop.f32.mrf.mxu0
  %v1075 = vadd.f32 0.0, %v1074
  %v1076 = vpop.f32.mrf.mxu0
  %1077 = vmatprep.mubr.bf16.mxu0 0
  %1078 = vmatmul.mubr.bf16.gmra.mxu0 %v1035
  %v1079 = vpop.f32.mrf.mxu0
  %v1080 = vadd.f32 0.0, %v1079
  %v1081 = vpop.f32.mrf.mxu0
  %v1082 = vpop.f32.mrf.mxu0
  %v1083 = vpop.f32.mrf.mxu0
  %1084 = vdwg.mxu0
  %v1085 = vadd.f32 %v118, %v1072
  %v1086 = vadd.f32 %v119, %v1075
  %v1087 = vadd.f32 %v120, %v1080
  %v1088 = vld [vmem:[%s6] sm:$0x1]
  %v1090 = vlaneseq
  %v1091 = vshrl.u32 %v1090, 7
  %v1092 = vsub.s32 0, %v1091
  %v1093 = vrot.slane %v1088, %v1092
  %v1095 = vadd.f32 %v1085, %v1093
  %v1096 = vadd.f32 %v1086, %v1093
  %v1097 = vadd.f32 %v1087, %v1093
  %v1098 = vld [vmem:[%s7] sm:$0x1]
  %v1099 = vld [vmem:[%s8] sm:$0x1]
  %v1100 = vsel %vm123, %v1095, 0.0
  %1101 = vadd.xlane.f32.xlu0 %v1100
  %v1102 = vpop.xlane.xlu0 %1101
  %v1103 = vsel %vm123, %v1096, 0.0
  %1104 = vadd.xlane.f32.xlu0 %v1103
  %v1105 = vpop.xlane.xlu0 %1104
  %v1106 = vsel %vm123, %v1097, 0.0
  %1107 = vadd.xlane.f32.xlu0 %v1106
  %v1108 = vpop.xlane.xlu0 %1107
  %v1109 = vmul.f32 %v1102, %v133
  %v1110 = vmul.f32 %v1105, %v133
  %v1111 = vmul.f32 %v1108, %v133
  %v1112 = vsub.f32 %v1095, %v1109
  %v1113 = vsub.f32 %v1096, %v1110
  %v1114 = vsub.f32 %v1097, %v1111
  %v1115 = vmul.f32 %v1112, %v1112
  %v1116 = vmul.f32 %v1113, %v1113
  %v1117 = vmul.f32 %v1114, %v1114
  %v1118 = vsel %vm123, %v1115, 0.0
  %1119 = vadd.xlane.f32.xlu0 %v1118
  %v1120 = vpop.xlane.xlu0 %1119
  %v1121 = vsel %vm123, %v1116, 0.0
  %1122 = vadd.xlane.f32.xlu0 %v1121
  %v1123 = vpop.xlane.xlu0 %1122
  %v1124 = vsel %vm123, %v1117, 0.0
  %1125 = vadd.xlane.f32.xlu0 %v1124
  %v1126 = vpop.xlane.xlu0 %1125
  %v1127 = vmul.f32 %v1120, %v133
  %v1128 = vmul.f32 %v1123, %v133
  %v1129 = vmul.f32 %v1126, %v133
  %v1130 = vadd.f32 %v1127, 1e-05
  %v1131 = vadd.f32 %v1128, 1e-05
  %v1132 = vadd.f32 %v1129, 1e-05
  %v1133 = vrsqrt.pop %v1130
  %v1134 = vrsqrt.pop %v1131
  %v1135 = vrsqrt.pop %v1132
  %v1136 = vmul.f32 %v1112, %v1133
  %v1137 = vmul.f32 %v1113, %v1134
  %v1138 = vmul.f32 %v1114, %v1135
  %v1140 = vlaneseq
  %v1141 = vshrl.u32 %v1140, 7
  %v1142 = vsub.s32 0, %v1141
  %v1143 = vrot.slane %v1098, %v1142
  %v1145 = vmul.f32 %v1136, %v1143
  %v1146 = vmul.f32 %v1137, %v1143
  %v1147 = vmul.f32 %v1138, %v1143
  %v1149 = vlaneseq
  %v1150 = vshrl.u32 %v1149, 7
  %v1151 = vsub.s32 0, %v1150
  %v1152 = vrot.slane %v1099, %v1151
  %v1154 = vadd.f32 %v1145, %v1152
  %v1155 = vadd.f32 %v1146, %v1152
  %v1156 = vadd.f32 %v1147, %v1152
  %v1157 = vld [vmem:[%s9] sm:$0xf]
  %v1158 = vld [vmem:[%s9 + $0x4] sm:$0xf]
  %v1159 = vld [vmem:[%s9 + $0x8] sm:$0xf]
  %v1160 = vld [vmem:[%s9 + $0xc] sm:$0xf]
  %v1161 = vpack.c.bf16 %v1155, %v1154
  %v1162 = vpack.c.bf16 %v1156, %v1156
  %v1163 = vld [vmem:[%s10] sm:$0x1]
  %v1165 = vlaneseq
  %v1166 = vshrl.u32 %v1165, 7
  %v1167 = vsub.s32 0, %v1166
  %v1168 = vrot.slane %v1163, %v1167
  %v1174 = vunpack.c.l.b16 %v1157
  %v1175 = vunpack.c.l.b16 %v1158
  %v1176 = vunpack.c.l.b16 %v1159
  %v1177 = vunpack.c.l.b16 %v1160
  %v1178 = vpack.c.b16 %v1175, %v1174
  %v1179 = vpack.c.b16 %v1177, %v1176
  %v1183 = vsel %vm123, %v1161, 0
  %v1186 = vsel %vm123, %v1162, 0
  %1188 = vmatprep.subr.bf16.mxu0 0
  %1189 = vmatpush1.bf16.msra.mxu0 0
  %1190 = vmatprep.subr.bf16.mxu0 0
  %1191 = vmatpush1.bf16.msra.mxu0 0
  %1192 = vmatprep.subr.bf16.mxu0 0
  %1193 = vmatpush1.bf16.msra.mxu0 0
  %1194 = vmatprep.subr.bf16.mxu0 0
  %1195 = vmatpush1.bf16.msra.mxu0 0
  %1196 = vmatprep.subr.bf16.mxu0 0
  %1197 = vmatpush1.bf16.msra.mxu0 0
  %1198 = vmatprep.subr.bf16.mxu0 0
  %1199 = vmatpush1.bf16.msra.mxu0 0
  %1200 = vmatprep.subr.bf16.mxu0 0
  %1201 = vmatpush1.bf16.msra.mxu0 %v1179
  %1202 = vmatprep.subr.bf16.mxu0 0
  %1203 = vmatpush1.bf16.msra.mxu0 %v1178
  %1204 = vmatprep.subr.bf16.mxu0 0
  %1205 = vmatpush2.bf16.msra.mxu0 0
  %1206 = vmatprep.subr.bf16.mxu0 0
  %1207 = vmatpush2.bf16.msra.mxu0 0
  %1208 = vmatprep.subr.bf16.mxu0 0
  %1209 = vmatpush2.bf16.msra.mxu0 0
  %1210 = vmatprep.subr.bf16.mxu0 0
  %1211 = vmatpush2.bf16.msra.mxu0 0
  %1212 = vmatprep.subr.bf16.mxu0 0
  %1213 = vmatpush2.bf16.msra.mxu0 0
  %1214 = vmatprep.subr.bf16.mxu0 0
  %1215 = vmatpush2.bf16.msra.mxu0 0
  %1216 = vmatprep.subr.bf16.mxu0 0
  %1217 = vmatpush2.bf16.msra.mxu0 0
  %1218 = vmatprep.subr.bf16.mxu0 0
  %1219 = vmatpush2.bf16.msra.mxu0 0
  %1220 = vmatprep.mubr.bf16.mxu0 0
  %1221 = vmatmul.mubr.bf16.gmra.mxu0 %v1183
  %v1222 = vpop.f32.mrf.mxu0
  %v1223 = vadd.f32 %v1168, %v1222
  %v1224 = vpop.f32.mrf.mxu0
  %v1225 = vpop.f32.mrf.mxu0
  %v1226 = vadd.f32 %v1168, %v1225
  %v1227 = vpop.f32.mrf.mxu0
  %1228 = vmatprep.mubr.bf16.mxu0 0
  %1229 = vmatmul.mubr.bf16.gmra.mxu0 %v1186
  %v1230 = vpop.f32.mrf.mxu0
  %v1231 = vadd.f32 %v1168, %v1230
  %v1232 = vpop.f32.mrf.mxu0
  %v1233 = vpop.f32.mrf.mxu0
  %v1234 = vpop.f32.mrf.mxu0
  %1235 = vdwg.mxu0
  %v1236 = vmul.f32 %v1223, 0.5
  %v1237 = vmul.f32 %v1226, 0.5
  %v1238 = vmul.f32 %v1231, 0.5
  %v1239 = vmul.f32 %v1223, 0.70710677
  %v1240 = vmul.f32 %v1226, 0.70710677
  %v1241 = vmul.f32 %v1231, 0.70710677
  %vm1242 = vcmp.ge.f32.partialorder %v1239, 0.0
  %vm1243 = vcmp.ge.f32.partialorder %v1240, 0.0
  %vm1244 = vcmp.ge.f32.partialorder %v1241, 0.0
  %v1245 = vsel %vm1242, 1.0, -1.0
  %v1246 = vsel %vm1243, 1.0, -1.0
  %v1247 = vsel %vm1244, 1.0, -1.0
  %v1248 = vand.u32 2147483647, %v1239
  %v1249 = vand.u32 2147483647, %v1240
  %v1250 = vand.u32 2147483647, %v1241
  %v1251 = vmul.f32 %v1248, 0.3275911
  %v1252 = vmul.f32 %v1249, 0.3275911
  %v1253 = vmul.f32 %v1250, 0.3275911
  %v1254 = vadd.f32 %v1251, 1.0
  %v1255 = vadd.f32 %v1252, 1.0
  %v1256 = vadd.f32 %v1253, 1.0
  %v1257 = vrcp.pop %v1254
  %v1258 = vmul.f32 1.0, %v1257
  %v1259 = vrcp.pop %v1255
  %v1260 = vmul.f32 1.0, %v1259
  %v1261 = vrcp.pop %v1256
  %v1262 = vmul.f32 1.0, %v1261
  %v1263 = vmul.f32 %v1258, 1.0614054
  %v1264 = vmul.f32 %v1260, 1.0614054
  %v1265 = vmul.f32 %v1262, 1.0614054
  %v1266 = vadd.f32 %v1263, -1.4531521
  %v1267 = vadd.f32 %v1264, -1.4531521
  %v1268 = vadd.f32 %v1265, -1.4531521
  %v1269 = vmul.f32 %v1266, %v1258
  %v1270 = vmul.f32 %v1267, %v1260
  %v1271 = vmul.f32 %v1268, %v1262
  %v1272 = vadd.f32 %v1269, 1.4214138
  %v1273 = vadd.f32 %v1270, 1.4214138
  %v1274 = vadd.f32 %v1271, 1.4214138
  %v1275 = vmul.f32 %v1272, %v1258
  %v1276 = vmul.f32 %v1273, %v1260
  %v1277 = vmul.f32 %v1274, %v1262
  %v1278 = vadd.f32 %v1275, -0.28449672
  %v1279 = vadd.f32 %v1276, -0.28449672
  %v1280 = vadd.f32 %v1277, -0.28449672
  %v1281 = vmul.f32 %v1278, %v1258
  %v1282 = vmul.f32 %v1279, %v1260
  %v1283 = vmul.f32 %v1280, %v1262
  %v1284 = vadd.f32 %v1281, 0.2548296
  %v1285 = vadd.f32 %v1282, 0.2548296
  %v1286 = vadd.f32 %v1283, 0.2548296
  %v1287 = vmul.f32 %v1284, %v1258
  %v1288 = vmul.f32 %v1285, %v1260
  %v1289 = vmul.f32 %v1286, %v1262
  %v1290 = vsub.f32 0.0, %v1248
  %v1291 = vsub.f32 0.0, %v1249
  %v1292 = vsub.f32 0.0, %v1250
  %v1293 = vmul.f32 %v1290, %v1248
  %v1294 = vmul.f32 %v1291, %v1249
  %v1295 = vmul.f32 %v1292, %v1250
  %v1296 = vmul.f32 %v1293, 1.442695
  %v1297 = vpow.pop %v1296
  %v1298 = vmul.f32 %v1294, 1.442695
  %v1299 = vpow.pop %v1298
  %v1300 = vmul.f32 %v1295, 1.442695
  %v1301 = vpow.pop %v1300
  %v1302 = vmul.f32 %v1287, %v1297
  %v1303 = vmul.f32 %v1288, %v1299
  %v1304 = vmul.f32 %v1289, %v1301
  %v1305 = vsub.f32 1.0, %v1302
  %v1306 = vsub.f32 1.0, %v1303
  %v1307 = vsub.f32 1.0, %v1304
  %v1308 = vmul.f32 %v1245, %v1305
  %v1309 = vmul.f32 %v1246, %v1306
  %v1310 = vmul.f32 %v1247, %v1307
  %v1311 = vadd.f32 %v1308, 1.0
  %v1312 = vadd.f32 %v1309, 1.0
  %v1313 = vadd.f32 %v1310, 1.0
  %v1314 = vmul.f32 %v1236, %v1311
  %v1315 = vmul.f32 %v1237, %v1312
  %v1316 = vmul.f32 %v1238, %v1313
  %v1317 = vld [vmem:[%s11] sm:$0xf]
  %v1318 = vld [vmem:[%s11 + $0x4] sm:$0xf]
  %v1319 = vld [vmem:[%s11 + $0x8] sm:$0xf]
  %v1320 = vld [vmem:[%s11 + $0xc] sm:$0xf]
  %v1321 = vld [vmem:[%s11 + $0x10] sm:$0xf]
  %v1322 = vld [vmem:[%s11 + $0x14] sm:$0xf]
  %v1323 = vld [vmem:[%s11 + $0x18] sm:$0xf]
  %v1324 = vld [vmem:[%s11 + $0x1c] sm:$0xf]
  %v1325 = vld [vmem:[%s11 + $0x20] sm:$0xf]
  %v1326 = vld [vmem:[%s11 + $0x24] sm:$0xf]
  %v1327 = vld [vmem:[%s11 + $0x28] sm:$0xf]
  %v1328 = vld [vmem:[%s11 + $0x2c] sm:$0xf]
  %v1329 = vld [vmem:[%s11 + $0x30] sm:$0xf]
  %v1330 = vld [vmem:[%s11 + $0x34] sm:$0xf]
  %v1331 = vld [vmem:[%s11 + $0x38] sm:$0xf]
  %v1332 = vld [vmem:[%s11 + $0x3c] sm:$0xf]
  %v1333 = vpack.c.bf16 %v1315, %v1314
  %v1334 = vpack.c.bf16 %v1316, %v1316
  %v1351 = vunpack.c.l.b16 %v1317
  %v1352 = vunpack.c.l.b16 %v1318
  %v1353 = vunpack.c.l.b16 %v1319
  %v1354 = vunpack.c.l.b16 %v1320
  %v1355 = vunpack.c.l.b16 %v1321
  %v1356 = vunpack.c.l.b16 %v1322
  %v1357 = vunpack.c.l.b16 %v1323
  %v1358 = vunpack.c.l.b16 %v1324
  %v1359 = vunpack.c.l.b16 %v1325
  %v1360 = vunpack.c.l.b16 %v1326
  %v1361 = vunpack.c.l.b16 %v1327
  %v1362 = vunpack.c.l.b16 %v1328
  %v1363 = vunpack.c.l.b16 %v1329
  %v1364 = vunpack.c.l.b16 %v1330
  %v1365 = vunpack.c.l.b16 %v1331
  %v1366 = vunpack.c.l.b16 %v1332
  %v1367 = vpack.c.b16 %v1352, %v1351
  %v1368 = vpack.c.b16 %v1354, %v1353
  %v1369 = vpack.c.b16 %v1356, %v1355
  %v1370 = vpack.c.b16 %v1358, %v1357
  %v1371 = vpack.c.b16 %v1360, %v1359
  %v1372 = vpack.c.b16 %v1362, %v1361
  %v1373 = vpack.c.b16 %v1364, %v1363
  %v1374 = vpack.c.b16 %v1366, %v1365
  %1383 = vmatprep.subr.bf16.mxu0 0
  %1384 = vmatpush1.bf16.msra.mxu0 %v1374
  %1385 = vmatprep.subr.bf16.mxu0 0
  %1386 = vmatpush1.bf16.msra.mxu0 %v1373
  %1387 = vmatprep.subr.bf16.mxu0 0
  %1388 = vmatpush1.bf16.msra.mxu0 %v1372
  %1389 = vmatprep.subr.bf16.mxu0 0
  %1390 = vmatpush1.bf16.msra.mxu0 %v1371
  %1391 = vmatprep.subr.bf16.mxu0 0
  %1392 = vmatpush1.bf16.msra.mxu0 %v1370
  %1393 = vmatprep.subr.bf16.mxu0 0
  %1394 = vmatpush1.bf16.msra.mxu0 %v1369
  %1395 = vmatprep.subr.bf16.mxu0 0
  %1396 = vmatpush1.bf16.msra.mxu0 %v1368
  %1397 = vmatprep.subr.bf16.mxu0 0
  %1398 = vmatpush1.bf16.msra.mxu0 %v1367
  %1399 = vmatprep.subr.bf16.mxu0 0
  %1400 = vmatpush2.bf16.msra.mxu0 0
  %1401 = vmatprep.subr.bf16.mxu0 0
  %1402 = vmatpush2.bf16.msra.mxu0 0
  %1403 = vmatprep.subr.bf16.mxu0 0
  %1404 = vmatpush2.bf16.msra.mxu0 0
  %1405 = vmatprep.subr.bf16.mxu0 0
  %1406 = vmatpush2.bf16.msra.mxu0 0
  %1407 = vmatprep.subr.bf16.mxu0 0
  %1408 = vmatpush2.bf16.msra.mxu0 0
  %1409 = vmatprep.subr.bf16.mxu0 0
  %1410 = vmatpush2.bf16.msra.mxu0 0
  %1411 = vmatprep.subr.bf16.mxu0 0
  %1412 = vmatpush2.bf16.msra.mxu0 0
  %1413 = vmatprep.subr.bf16.mxu0 0
  %1414 = vmatpush2.bf16.msra.mxu0 0
  %1415 = vmatprep.mubr.bf16.mxu0 0
  %1416 = vmatmul.mubr.bf16.gmra.mxu0 %v1333
  %v1417 = vpop.f32.mrf.mxu0
  %v1418 = vadd.f32 0.0, %v1417
  %v1419 = vpop.f32.mrf.mxu0
  %v1420 = vpop.f32.mrf.mxu0
  %v1421 = vadd.f32 0.0, %v1420
  %v1422 = vpop.f32.mrf.mxu0
  %1423 = vmatprep.mubr.bf16.mxu0 0
  %1424 = vmatmul.mubr.bf16.gmra.mxu0 %v1334
  %v1425 = vpop.f32.mrf.mxu0
  %v1426 = vadd.f32 0.0, %v1425
  %v1427 = vpop.f32.mrf.mxu0
  %v1428 = vpop.f32.mrf.mxu0
  %v1429 = vpop.f32.mrf.mxu0
  %1430 = vdwg.mxu0
  %v1431 = vadd.f32 %v1095, %v1418
  %v1432 = vadd.f32 %v1096, %v1421
  %v1433 = vadd.f32 %v1097, %v1426
  %v1434 = vld [vmem:[%s12] sm:$0x1]
  %v1436 = vlaneseq
  %v1437 = vshrl.u32 %v1436, 7
  %v1438 = vsub.s32 0, %v1437
  %v1439 = vrot.slane %v1434, %v1438
  %v1441 = vadd.f32 %v1431, %v1439
  %v1442 = vadd.f32 %v1432, %v1439
  %v1443 = vadd.f32 %v1433, %v1439
  %s1444 = scalar_lea.vmem %s1, 1
  %v1445 = vld [vmem:[%s1444] sm:$0x1]
  %s1446 = scalar_lea.vmem %s2, 1
  %v1447 = vld [vmem:[%s1446] sm:$0x1]
  %v1448 = vsel %vm123, %v1441, 0.0
  %1449 = vadd.xlane.f32.xlu0 %v1448
  %v1450 = vpop.xlane.xlu0 %1449
  %v1451 = vsel %vm123, %v1442, 0.0
  %1452 = vadd.xlane.f32.xlu0 %v1451
  %v1453 = vpop.xlane.xlu0 %1452
  %v1454 = vsel %vm123, %v1443, 0.0
  %1455 = vadd.xlane.f32.xlu0 %v1454
  %v1456 = vpop.xlane.xlu0 %1455
  %v1457 = vmul.f32 %v1450, %v133
  %v1458 = vmul.f32 %v1453, %v133
  %v1459 = vmul.f32 %v1456, %v133
  %v1460 = vsub.f32 %v1441, %v1457
  %v1461 = vsub.f32 %v1442, %v1458
  %v1462 = vsub.f32 %v1443, %v1459
  %v1463 = vmul.f32 %v1460, %v1460
  %v1464 = vmul.f32 %v1461, %v1461
  %v1465 = vmul.f32 %v1462, %v1462
  %v1466 = vsel %vm123, %v1463, 0.0
  %1467 = vadd.xlane.f32.xlu0 %v1466
  %v1468 = vpop.xlane.xlu0 %1467
  %v1469 = vsel %vm123, %v1464, 0.0
  %1470 = vadd.xlane.f32.xlu0 %v1469
  %v1471 = vpop.xlane.xlu0 %1470
  %v1472 = vsel %vm123, %v1465, 0.0
  %1473 = vadd.xlane.f32.xlu0 %v1472
  %v1474 = vpop.xlane.xlu0 %1473
  %v1475 = vmul.f32 %v1468, %v133
  %v1476 = vmul.f32 %v1471, %v133
  %v1477 = vmul.f32 %v1474, %v133
  %v1478 = vadd.f32 %v1475, 1e-05
  %v1479 = vadd.f32 %v1476, 1e-05
  %v1480 = vadd.f32 %v1477, 1e-05
  %v1481 = vrsqrt.pop %v1478
  %v1482 = vrsqrt.pop %v1479
  %v1483 = vrsqrt.pop %v1480
  %v1484 = vmul.f32 %v1460, %v1481
  %v1485 = vmul.f32 %v1461, %v1482
  %v1486 = vmul.f32 %v1462, %v1483
  %v1488 = vlaneseq
  %v1489 = vshrl.u32 %v1488, 7
  %v1490 = vsub.s32 0, %v1489
  %v1491 = vrot.slane %v1445, %v1490
  %v1493 = vmul.f32 %v1484, %v1491
  %v1494 = vmul.f32 %v1485, %v1491
  %v1495 = vmul.f32 %v1486, %v1491
  %v1497 = vlaneseq
  %v1498 = vshrl.u32 %v1497, 7
  %v1499 = vsub.s32 0, %v1498
  %v1500 = vrot.slane %v1447, %v1499
  %v1502 = vadd.f32 %v1493, %v1500
  %v1503 = vadd.f32 %v1494, %v1500
  %v1504 = vadd.f32 %v1495, %v1500
  %s1505 = scalar_lea.vmem %s3, 16
  %v1506 = vld [vmem:[%s1505] sm:$0xf]
  %v1507 = vld [vmem:[%s1505 + $0x4] sm:$0xf]
  %v1508 = vld [vmem:[%s1505 + $0x8] sm:$0xf]
  %v1509 = vld [vmem:[%s1505 + $0xc] sm:$0xf]
  %v1510 = vpack.c.bf16 %v1503, %v1502
  %v1511 = vpack.c.bf16 %v1504, %v1504
  %s1512 = scalar_lea.vmem %s4, 1
  %v1513 = vld [vmem:[%s1512] sm:$0x1]
  %v1515 = vlaneseq
  %v1516 = vshrl.u32 %v1515, 7
  %v1517 = vsub.s32 0, %v1516
  %v1518 = vrot.slane %v1513, %v1517
  %v1524 = vunpack.c.l.b16 %v1506
  %v1525 = vunpack.c.l.b16 %v1507
  %v1526 = vunpack.c.l.b16 %v1508
  %v1527 = vunpack.c.l.b16 %v1509
  %v1528 = vpack.c.b16 %v1525, %v1524
  %v1529 = vpack.c.b16 %v1527, %v1526
  %v1533 = vsel %vm123, %v1510, 0
  %v1536 = vsel %vm123, %v1511, 0
  %1538 = vmatprep.subr.bf16.mxu0 0
  %1539 = vmatpush1.bf16.msra.mxu0 0
  %1540 = vmatprep.subr.bf16.mxu0 0
  %1541 = vmatpush1.bf16.msra.mxu0 0
  %1542 = vmatprep.subr.bf16.mxu0 0
  %1543 = vmatpush1.bf16.msra.mxu0 0
  %1544 = vmatprep.subr.bf16.mxu0 0
  %1545 = vmatpush1.bf16.msra.mxu0 0
  %1546 = vmatprep.subr.bf16.mxu0 0
  %1547 = vmatpush1.bf16.msra.mxu0 0
  %1548 = vmatprep.subr.bf16.mxu0 0
  %1549 = vmatpush1.bf16.msra.mxu0 0
  %1550 = vmatprep.subr.bf16.mxu0 0
  %1551 = vmatpush1.bf16.msra.mxu0 %v1529
  %1552 = vmatprep.subr.bf16.mxu0 0
  %1553 = vmatpush1.bf16.msra.mxu0 %v1528
  %1554 = vmatprep.subr.bf16.mxu0 0
  %1555 = vmatpush2.bf16.msra.mxu0 0
  %1556 = vmatprep.subr.bf16.mxu0 0
  %1557 = vmatpush2.bf16.msra.mxu0 0
  %1558 = vmatprep.subr.bf16.mxu0 0
  %1559 = vmatpush2.bf16.msra.mxu0 0
  %1560 = vmatprep.subr.bf16.mxu0 0
  %1561 = vmatpush2.bf16.msra.mxu0 0
  %1562 = vmatprep.subr.bf16.mxu0 0
  %1563 = vmatpush2.bf16.msra.mxu0 0
  %1564 = vmatprep.subr.bf16.mxu0 0
  %1565 = vmatpush2.bf16.msra.mxu0 0
  %1566 = vmatprep.subr.bf16.mxu0 0
  %1567 = vmatpush2.bf16.msra.mxu0 0
  %1568 = vmatprep.subr.bf16.mxu0 0
  %1569 = vmatpush2.bf16.msra.mxu0 0
  %1570 = vmatprep.mubr.bf16.mxu0 0
  %1571 = vmatmul.mubr.bf16.gmra.mxu0 %v1533
  %v1572 = vpop.f32.mrf.mxu0
  %v1573 = vadd.f32 %v1518, %v1572
  %v1574 = vpop.f32.mrf.mxu0
  %v1575 = vpop.f32.mrf.mxu0
  %v1576 = vadd.f32 %v1518, %v1575
  %v1577 = vpop.f32.mrf.mxu0
  %1578 = vmatprep.mubr.bf16.mxu0 0
  %1579 = vmatmul.mubr.bf16.gmra.mxu0 %v1536
  %v1580 = vpop.f32.mrf.mxu0
  %v1581 = vadd.f32 %v1518, %v1580
  %v1582 = vpop.f32.mrf.mxu0
  %v1583 = vpop.f32.mrf.mxu0
  %v1584 = vpop.f32.mrf.mxu0
  %1585 = vdwg.mxu0
  %v1586 = vmul.f32 %v1573, 0.35355338
  %v1587 = vmul.f32 %v1576, 0.35355338
  %v1588 = vmul.f32 %v1581, 0.35355338
  %v1589 = vpack.c.bf16 %v1587, %v1586
  %v1590 = vpack.c.bf16 %v1588, %v1588
  %v1591 = vpack.c.bf16 %v1576, %v1573
  %v1592 = vpack.c.bf16 %v1581, %v1581
  %1595 = vrot.lane.b32.xlu0 %v1591, 96
  %v1596 = vpop.permute.xlu0 %1595
  %1597 = vrot.lane.b32.xlu0 %v1592, 96
  %v1598 = vpop.permute.xlu0 %1597
  %v1600 = vsel %vm274, %v1589, 0
  %v1603 = vsel %vm274, %v1590, 0
  %v1606 = vsel %vm274, %v1596, 0
  %v1609 = vsel %vm274, %v1598, 0
  %1611 = vmatprep.subr.bf16.mxu0 0
  %1612 = vmatpush1.bf16.xpose.msra.mxu0 0
  %1613 = vmatprep.subr.bf16.mxu0 0
  %1614 = vmatpush1.bf16.xpose.msra.mxu0 0
  %1615 = vmatprep.subr.bf16.mxu0 0
  %1616 = vmatpush1.bf16.xpose.msra.mxu0 0
  %1617 = vmatprep.subr.bf16.mxu0 0
  %1618 = vmatpush1.bf16.xpose.msra.mxu0 0
  %1619 = vmatprep.subr.bf16.mxu0 0
  %1620 = vmatpush1.bf16.xpose.msra.mxu0 0
  %1621 = vmatprep.subr.bf16.mxu0 0
  %1622 = vmatpush1.bf16.xpose.msra.mxu0 0
  %1623 = vmatprep.subr.bf16.mxu0 0
  %1624 = vmatpush1.bf16.xpose.msra.mxu0 %v1609
  %1625 = vmatprep.subr.bf16.mxu0 0
  %1626 = vmatpush1.bf16.xpose.msra.mxu0 %v1606
  %1627 = vmatprep.subr.bf16.mxu0 0
  %1628 = vmatpush2.bf16.xpose.msra.mxu0 0
  %1629 = vmatprep.subr.bf16.mxu0 0
  %1630 = vmatpush2.bf16.xpose.msra.mxu0 0
  %1631 = vmatprep.subr.bf16.mxu0 0
  %1632 = vmatpush2.bf16.xpose.msra.mxu0 0
  %1633 = vmatprep.subr.bf16.mxu0 0
  %1634 = vmatpush2.bf16.xpose.msra.mxu0 0
  %1635 = vmatprep.subr.bf16.mxu0 0
  %1636 = vmatpush2.bf16.xpose.msra.mxu0 0
  %1637 = vmatprep.subr.bf16.mxu0 0
  %1638 = vmatpush2.bf16.xpose.msra.mxu0 0
  %1639 = vmatprep.subr.bf16.mxu0 0
  %1640 = vmatpush2.bf16.xpose.msra.mxu0 0
  %1641 = vmatprep.subr.bf16.mxu0 0
  %1642 = vmatpush2.bf16.xpose.msra.mxu0 0
  %1643 = vmatprep.mubr.bf16.mxu0 0
  %1644 = vmatmul.mubr.bf16.gmra.mxu0 %v1600
  %v1645 = vpop.f32.mrf.mxu0
  %v1646 = vadd.f32 0.0, %v1645
  %v1647 = vpop.f32.mrf.mxu0
  %v1648 = vpop.f32.mrf.mxu0
  %v1649 = vadd.f32 0.0, %v1648
  %v1650 = vpop.f32.mrf.mxu0
  %1651 = vmatprep.mubr.bf16.mxu0 0
  %1652 = vmatmul.mubr.bf16.gmra.mxu0 %v1603
  %v1653 = vpop.f32.mrf.mxu0
  %v1654 = vadd.f32 0.0, %v1653
  %v1655 = vpop.f32.mrf.mxu0
  %v1656 = vpop.f32.mrf.mxu0
  %v1657 = vpop.f32.mrf.mxu0
  %1658 = vdwg.mxu0
  %v1659 = vsel %vm84, %v1646, -1e+30
  %v1660 = vsel %vm84, %v1649, -1e+30
  %v1661 = vsel %vm84, %v1654, -1e+30
  %v1662 = vsel %vm338, %v1659, -inf
  %1663 = vmax.xlane.f32.xlu0 %v1662
  %v1664 = vpop.xlane.xlu0 %1663
  %v1665 = vsel %vm338, %v1660, -inf
  %1666 = vmax.xlane.f32.xlu0 %v1665
  %v1667 = vpop.xlane.xlu0 %1666
  %v1668 = vsel %vm338, %v1661, -inf
  %1669 = vmax.xlane.f32.xlu0 %v1668
  %v1670 = vpop.xlane.xlu0 %1669
  %v1671 = vsub.f32 %v1659, %v1664
  %v1672 = vsub.f32 %v1660, %v1667
  %v1673 = vsub.f32 %v1661, %v1670
  %v1674 = vmul.f32 %v1671, 1.442695
  %v1675 = vpow.pop %v1674
  %v1676 = vmul.f32 %v1672, 1.442695
  %v1677 = vpow.pop %v1676
  %v1678 = vmul.f32 %v1673, 1.442695
  %v1679 = vpow.pop %v1678
  %v1680 = vsel %vm338, %v1675, 0.0
  %1681 = vadd.xlane.f32.xlu0 %v1680
  %v1682 = vpop.xlane.xlu0 %1681
  %v1683 = vsel %vm338, %v1677, 0.0
  %1684 = vadd.xlane.f32.xlu0 %v1683
  %v1685 = vpop.xlane.xlu0 %1684
  %v1686 = vsel %vm338, %v1679, 0.0
  %1687 = vadd.xlane.f32.xlu0 %v1686
  %v1688 = vpop.xlane.xlu0 %1687
  %v1689 = vrcp.pop %v1682
  %v1690 = vmul.f32 %v1675, %v1689
  %v1691 = vrcp.pop %v1685
  %v1692 = vmul.f32 %v1677, %v1691
  %v1693 = vrcp.pop %v1688
  %v1694 = vmul.f32 %v1679, %v1693
  %v1695 = vmul.f32 %v1690, %v91
  %v1696 = vmul.f32 %v1692, %v92
  %v1697 = vmul.f32 %v1694, %v93
  %v1698 = vadd.f32 %v375, %v1695
  %v1699 = vadd.f32 %v376, %v1696
  %v1700 = vadd.f32 %v377, %v1697
  %v1701 = vpack.c.bf16 %v1692, %v1690
  %v1702 = vpack.c.bf16 %v1694, %v1694
  %1703 = vrot.lane.b32.xlu0 %v1591, 64
  %v1704 = vpop.permute.xlu0 %1703
  %1705 = vrot.lane.b32.xlu0 %v1592, 64
  %v1706 = vpop.permute.xlu0 %1705
  %v1709 = vsel %vm338, %v1701, 0
  %v1712 = vsel %vm338, %v1702, 0
  %v1715 = vsel %vm391, %v1706, 0
  %1717 = vmatprep.subr.bf16.mxu0 0
  %1718 = vmatpush1.bf16.msra.mxu0 0
  %1719 = vmatprep.subr.bf16.mxu0 0
  %1720 = vmatpush1.bf16.msra.mxu0 0
  %1721 = vmatprep.subr.bf16.mxu0 0
  %1722 = vmatpush1.bf16.msra.mxu0 0
  %1723 = vmatprep.subr.bf16.mxu0 0
  %1724 = vmatpush1.bf16.msra.mxu0 0
  %1725 = vmatprep.subr.bf16.mxu0 0
  %1726 = vmatpush1.bf16.msra.mxu0 0
  %1727 = vmatprep.subr.bf16.mxu0 0
  %1728 = vmatpush1.bf16.msra.mxu0 0
  %1729 = vmatprep.subr.bf16.mxu0 0
  %1730 = vmatpush1.bf16.msra.mxu0 %v1715
  %1731 = vmatprep.subr.bf16.mxu0 0
  %1732 = vmatpush1.bf16.msra.mxu0 %v1704
  %1733 = vmatprep.subr.bf16.mxu0 0
  %1734 = vmatpush2.bf16.msra.mxu0 0
  %1735 = vmatprep.subr.bf16.mxu0 0
  %1736 = vmatpush2.bf16.msra.mxu0 0
  %1737 = vmatprep.subr.bf16.mxu0 0
  %1738 = vmatpush2.bf16.msra.mxu0 0
  %1739 = vmatprep.subr.bf16.mxu0 0
  %1740 = vmatpush2.bf16.msra.mxu0 0
  %1741 = vmatprep.subr.bf16.mxu0 0
  %1742 = vmatpush2.bf16.msra.mxu0 0
  %1743 = vmatprep.subr.bf16.mxu0 0
  %1744 = vmatpush2.bf16.msra.mxu0 0
  %1745 = vmatprep.subr.bf16.mxu0 0
  %1746 = vmatpush2.bf16.msra.mxu0 0
  %1747 = vmatprep.subr.bf16.mxu0 0
  %1748 = vmatpush2.bf16.msra.mxu0 0
  %1749 = vmatprep.mubr.bf16.mxu0 0
  %1750 = vmatmul.mubr.bf16.gmra.mxu0 %v1709
  %v1751 = vpop.f32.mrf.mxu0
  %v1752 = vadd.f32 0.0, %v1751
  %v1753 = vpop.f32.mrf.mxu0
  %v1754 = vpop.f32.mrf.mxu0
  %v1755 = vadd.f32 0.0, %v1754
  %v1756 = vpop.f32.mrf.mxu0
  %1757 = vmatprep.mubr.bf16.mxu0 0
  %1758 = vmatmul.mubr.bf16.gmra.mxu0 %v1712
  %v1759 = vpop.f32.mrf.mxu0
  %v1760 = vadd.f32 0.0, %v1759
  %v1761 = vpop.f32.mrf.mxu0
  %v1762 = vpop.f32.mrf.mxu0
  %v1763 = vpop.f32.mrf.mxu0
  %1764 = vdwg.mxu0
  %1767 = vrot.lane.b32.xlu0 %v1589, 120
  %v1768 = vpop.permute.xlu0 %1767
  %1769 = vrot.lane.b32.xlu0 %v1590, 120
  %v1770 = vpop.permute.xlu0 %1769
  %1771 = vrot.lane.b32.xlu0 %v1591, 88
  %v1772 = vpop.permute.xlu0 %1771
  %1773 = vrot.lane.b32.xlu0 %v1592, 88
  %v1774 = vpop.permute.xlu0 %1773
  %v1776 = vsel %vm274, %v1768, 0
  %v1779 = vsel %vm274, %v1770, 0
  %v1782 = vsel %vm274, %v1772, 0
  %v1785 = vsel %vm274, %v1774, 0
  %1787 = vmatprep.subr.bf16.mxu0 0
  %1788 = vmatpush1.bf16.xpose.msra.mxu0 0
  %1789 = vmatprep.subr.bf16.mxu0 0
  %1790 = vmatpush1.bf16.xpose.msra.mxu0 0
  %1791 = vmatprep.subr.bf16.mxu0 0
  %1792 = vmatpush1.bf16.xpose.msra.mxu0 0
  %1793 = vmatprep.subr.bf16.mxu0 0
  %1794 = vmatpush1.bf16.xpose.msra.mxu0 0
  %1795 = vmatprep.subr.bf16.mxu0 0
  %1796 = vmatpush1.bf16.xpose.msra.mxu0 0
  %1797 = vmatprep.subr.bf16.mxu0 0
  %1798 = vmatpush1.bf16.xpose.msra.mxu0 0
  %1799 = vmatprep.subr.bf16.mxu0 0
  %1800 = vmatpush1.bf16.xpose.msra.mxu0 %v1785
  %1801 = vmatprep.subr.bf16.mxu0 0
  %1802 = vmatpush1.bf16.xpose.msra.mxu0 %v1782
  %1803 = vmatprep.subr.bf16.mxu0 0
  %1804 = vmatpush2.bf16.xpose.msra.mxu0 0
  %1805 = vmatprep.subr.bf16.mxu0 0
  %1806 = vmatpush2.bf16.xpose.msra.mxu0 0
  %1807 = vmatprep.subr.bf16.mxu0 0
  %1808 = vmatpush2.bf16.xpose.msra.mxu0 0
  %1809 = vmatprep.subr.bf16.mxu0 0
  %1810 = vmatpush2.bf16.xpose.msra.mxu0 0
  %1811 = vmatprep.subr.bf16.mxu0 0
  %1812 = vmatpush2.bf16.xpose.msra.mxu0 0
  %1813 = vmatprep.subr.bf16.mxu0 0
  %1814 = vmatpush2.bf16.xpose.msra.mxu0 0
  %1815 = vmatprep.subr.bf16.mxu0 0
  %1816 = vmatpush2.bf16.xpose.msra.mxu0 0
  %1817 = vmatprep.subr.bf16.mxu0 0
  %1818 = vmatpush2.bf16.xpose.msra.mxu0 0
  %1819 = vmatprep.mubr.bf16.mxu0 0
  %1820 = vmatmul.mubr.bf16.gmra.mxu0 %v1776
  %v1821 = vpop.f32.mrf.mxu0
  %v1822 = vadd.f32 0.0, %v1821
  %v1823 = vpop.f32.mrf.mxu0
  %v1824 = vpop.f32.mrf.mxu0
  %v1825 = vadd.f32 0.0, %v1824
  %v1826 = vpop.f32.mrf.mxu0
  %1827 = vmatprep.mubr.bf16.mxu0 0
  %1828 = vmatmul.mubr.bf16.gmra.mxu0 %v1779
  %v1829 = vpop.f32.mrf.mxu0
  %v1830 = vadd.f32 0.0, %v1829
  %v1831 = vpop.f32.mrf.mxu0
  %v1832 = vpop.f32.mrf.mxu0
  %v1833 = vpop.f32.mrf.mxu0
  %1834 = vdwg.mxu0
  %v1835 = vsel %vm84, %v1822, -1e+30
  %v1836 = vsel %vm84, %v1825, -1e+30
  %v1837 = vsel %vm84, %v1830, -1e+30
  %v1838 = vsel %vm338, %v1835, -inf
  %1839 = vmax.xlane.f32.xlu0 %v1838
  %v1840 = vpop.xlane.xlu0 %1839
  %v1841 = vsel %vm338, %v1836, -inf
  %1842 = vmax.xlane.f32.xlu0 %v1841
  %v1843 = vpop.xlane.xlu0 %1842
  %v1844 = vsel %vm338, %v1837, -inf
  %1845 = vmax.xlane.f32.xlu0 %v1844
  %v1846 = vpop.xlane.xlu0 %1845
  %v1847 = vsub.f32 %v1835, %v1840
  %v1848 = vsub.f32 %v1836, %v1843
  %v1849 = vsub.f32 %v1837, %v1846
  %v1850 = vmul.f32 %v1847, 1.442695
  %v1851 = vpow.pop %v1850
  %v1852 = vmul.f32 %v1848, 1.442695
  %v1853 = vpow.pop %v1852
  %v1854 = vmul.f32 %v1849, 1.442695
  %v1855 = vpow.pop %v1854
  %v1856 = vsel %vm338, %v1851, 0.0
  %1857 = vadd.xlane.f32.xlu0 %v1856
  %v1858 = vpop.xlane.xlu0 %1857
  %v1859 = vsel %vm338, %v1853, 0.0
  %1860 = vadd.xlane.f32.xlu0 %v1859
  %v1861 = vpop.xlane.xlu0 %1860
  %v1862 = vsel %vm338, %v1855, 0.0
  %1863 = vadd.xlane.f32.xlu0 %v1862
  %v1864 = vpop.xlane.xlu0 %1863
  %v1865 = vrcp.pop %v1858
  %v1866 = vmul.f32 %v1851, %v1865
  %v1867 = vrcp.pop %v1861
  %v1868 = vmul.f32 %v1853, %v1867
  %v1869 = vrcp.pop %v1864
  %v1870 = vmul.f32 %v1855, %v1869
  %v1871 = vmul.f32 %v1866, %v91
  %v1872 = vmul.f32 %v1868, %v92
  %v1873 = vmul.f32 %v1870, %v93
  %v1874 = vadd.f32 %v552, %v1871
  %v1875 = vadd.f32 %v553, %v1872
  %v1876 = vadd.f32 %v554, %v1873
  %v1877 = vpack.c.bf16 %v1868, %v1866
  %v1878 = vpack.c.bf16 %v1870, %v1870
  %1879 = vrot.lane.b32.xlu0 %v1591, 56
  %v1880 = vpop.permute.xlu0 %1879
  %1881 = vrot.lane.b32.xlu0 %v1592, 56
  %v1882 = vpop.permute.xlu0 %1881
  %v1885 = vsel %vm338, %v1877, 0
  %v1888 = vsel %vm338, %v1878, 0
  %v1891 = vsel %vm391, %v1882, 0
  %1893 = vmatprep.subr.bf16.mxu0 0
  %1894 = vmatpush1.bf16.msra.mxu0 0
  %1895 = vmatprep.subr.bf16.mxu0 0
  %1896 = vmatpush1.bf16.msra.mxu0 0
  %1897 = vmatprep.subr.bf16.mxu0 0
  %1898 = vmatpush1.bf16.msra.mxu0 0
  %1899 = vmatprep.subr.bf16.mxu0 0
  %1900 = vmatpush1.bf16.msra.mxu0 0
  %1901 = vmatprep.subr.bf16.mxu0 0
  %1902 = vmatpush1.bf16.msra.mxu0 0
  %1903 = vmatprep.subr.bf16.mxu0 0
  %1904 = vmatpush1.bf16.msra.mxu0 0
  %1905 = vmatprep.subr.bf16.mxu0 0
  %1906 = vmatpush1.bf16.msra.mxu0 %v1891
  %1907 = vmatprep.subr.bf16.mxu0 0
  %1908 = vmatpush1.bf16.msra.mxu0 %v1880
  %1909 = vmatprep.subr.bf16.mxu0 0
  %1910 = vmatpush2.bf16.msra.mxu0 0
  %1911 = vmatprep.subr.bf16.mxu0 0
  %1912 = vmatpush2.bf16.msra.mxu0 0
  %1913 = vmatprep.subr.bf16.mxu0 0
  %1914 = vmatpush2.bf16.msra.mxu0 0
  %1915 = vmatprep.subr.bf16.mxu0 0
  %1916 = vmatpush2.bf16.msra.mxu0 0
  %1917 = vmatprep.subr.bf16.mxu0 0
  %1918 = vmatpush2.bf16.msra.mxu0 0
  %1919 = vmatprep.subr.bf16.mxu0 0
  %1920 = vmatpush2.bf16.msra.mxu0 0
  %1921 = vmatprep.subr.bf16.mxu0 0
  %1922 = vmatpush2.bf16.msra.mxu0 0
  %1923 = vmatprep.subr.bf16.mxu0 0
  %1924 = vmatpush2.bf16.msra.mxu0 0
  %1925 = vmatprep.mubr.bf16.mxu0 0
  %1926 = vmatmul.mubr.bf16.gmra.mxu0 %v1885
  %v1927 = vpop.f32.mrf.mxu0
  %v1928 = vadd.f32 0.0, %v1927
  %v1929 = vpop.f32.mrf.mxu0
  %v1930 = vpop.f32.mrf.mxu0
  %v1931 = vadd.f32 0.0, %v1930
  %v1932 = vpop.f32.mrf.mxu0
  %1933 = vmatprep.mubr.bf16.mxu0 0
  %1934 = vmatmul.mubr.bf16.gmra.mxu0 %v1888
  %v1935 = vpop.f32.mrf.mxu0
  %v1936 = vadd.f32 0.0, %v1935
  %v1937 = vpop.f32.mrf.mxu0
  %v1938 = vpop.f32.mrf.mxu0
  %v1939 = vpop.f32.mrf.mxu0
  %1940 = vdwg.mxu0
  %1941 = vrot.lane.b32.xlu0 %v1589, 112
  %v1942 = vpop.permute.xlu0 %1941
  %1943 = vrot.lane.b32.xlu0 %v1590, 112
  %v1944 = vpop.permute.xlu0 %1943
  %1945 = vrot.lane.b32.xlu0 %v1591, 80
  %v1946 = vpop.permute.xlu0 %1945
  %1947 = vrot.lane.b32.xlu0 %v1592, 80
  %v1948 = vpop.permute.xlu0 %1947
  %v1950 = vsel %vm274, %v1942, 0
  %v1953 = vsel %vm274, %v1944, 0
  %v1956 = vsel %vm274, %v1946, 0
  %v1959 = vsel %vm274, %v1948, 0
  %1961 = vmatprep.subr.bf16.mxu0 0
  %1962 = vmatpush1.bf16.xpose.msra.mxu0 0
  %1963 = vmatprep.subr.bf16.mxu0 0
  %1964 = vmatpush1.bf16.xpose.msra.mxu0 0
  %1965 = vmatprep.subr.bf16.mxu0 0
  %1966 = vmatpush1.bf16.xpose.msra.mxu0 0
  %1967 = vmatprep.subr.bf16.mxu0 0
  %1968 = vmatpush1.bf16.xpose.msra.mxu0 0
  %1969 = vmatprep.subr.bf16.mxu0 0
  %1970 = vmatpush1.bf16.xpose.msra.mxu0 0
  %1971 = vmatprep.subr.bf16.mxu0 0
  %1972 = vmatpush1.bf16.xpose.msra.mxu0 0
  %1973 = vmatprep.subr.bf16.mxu0 0
  %1974 = vmatpush1.bf16.xpose.msra.mxu0 %v1959
  %1975 = vmatprep.subr.bf16.mxu0 0
  %1976 = vmatpush1.bf16.xpose.msra.mxu0 %v1956
  %1977 = vmatprep.subr.bf16.mxu0 0
  %1978 = vmatpush2.bf16.xpose.msra.mxu0 0
  %1979 = vmatprep.subr.bf16.mxu0 0
  %1980 = vmatpush2.bf16.xpose.msra.mxu0 0
  %1981 = vmatprep.subr.bf16.mxu0 0
  %1982 = vmatpush2.bf16.xpose.msra.mxu0 0
  %1983 = vmatprep.subr.bf16.mxu0 0
  %1984 = vmatpush2.bf16.xpose.msra.mxu0 0
  %1985 = vmatprep.subr.bf16.mxu0 0
  %1986 = vmatpush2.bf16.xpose.msra.mxu0 0
  %1987 = vmatprep.subr.bf16.mxu0 0
  %1988 = vmatpush2.bf16.xpose.msra.mxu0 0
  %1989 = vmatprep.subr.bf16.mxu0 0
  %1990 = vmatpush2.bf16.xpose.msra.mxu0 0
  %1991 = vmatprep.subr.bf16.mxu0 0
  %1992 = vmatpush2.bf16.xpose.msra.mxu0 0
  %1993 = vmatprep.mubr.bf16.mxu0 0
  %1994 = vmatmul.mubr.bf16.gmra.mxu0 %v1950
  %v1995 = vpop.f32.mrf.mxu0
  %v1996 = vadd.f32 0.0, %v1995
  %v1997 = vpop.f32.mrf.mxu0
  %v1998 = vpop.f32.mrf.mxu0
  %v1999 = vadd.f32 0.0, %v1998
  %v2000 = vpop.f32.mrf.mxu0
  %2001 = vmatprep.mubr.bf16.mxu0 0
  %2002 = vmatmul.mubr.bf16.gmra.mxu0 %v1953
  %v2003 = vpop.f32.mrf.mxu0
  %v2004 = vadd.f32 0.0, %v2003
  %v2005 = vpop.f32.mrf.mxu0
  %v2006 = vpop.f32.mrf.mxu0
  %v2007 = vpop.f32.mrf.mxu0
  %2008 = vdwg.mxu0
  %v2009 = vsel %vm84, %v1996, -1e+30
  %v2010 = vsel %vm84, %v1999, -1e+30
  %v2011 = vsel %vm84, %v2004, -1e+30
  %v2012 = vsel %vm338, %v2009, -inf
  %2013 = vmax.xlane.f32.xlu0 %v2012
  %v2014 = vpop.xlane.xlu0 %2013
  %v2015 = vsel %vm338, %v2010, -inf
  %2016 = vmax.xlane.f32.xlu0 %v2015
  %v2017 = vpop.xlane.xlu0 %2016
  %v2018 = vsel %vm338, %v2011, -inf
  %2019 = vmax.xlane.f32.xlu0 %v2018
  %v2020 = vpop.xlane.xlu0 %2019
  %v2021 = vsub.f32 %v2009, %v2014
  %v2022 = vsub.f32 %v2010, %v2017
  %v2023 = vsub.f32 %v2011, %v2020
  %v2024 = vmul.f32 %v2021, 1.442695
  %v2025 = vpow.pop %v2024
  %v2026 = vmul.f32 %v2022, 1.442695
  %v2027 = vpow.pop %v2026
  %v2028 = vmul.f32 %v2023, 1.442695
  %v2029 = vpow.pop %v2028
  %v2030 = vsel %vm338, %v2025, 0.0
  %2031 = vadd.xlane.f32.xlu0 %v2030
  %v2032 = vpop.xlane.xlu0 %2031
  %v2033 = vsel %vm338, %v2027, 0.0
  %2034 = vadd.xlane.f32.xlu0 %v2033
  %v2035 = vpop.xlane.xlu0 %2034
  %v2036 = vsel %vm338, %v2029, 0.0
  %2037 = vadd.xlane.f32.xlu0 %v2036
  %v2038 = vpop.xlane.xlu0 %2037
  %v2039 = vrcp.pop %v2032
  %v2040 = vmul.f32 %v2025, %v2039
  %v2041 = vrcp.pop %v2035
  %v2042 = vmul.f32 %v2027, %v2041
  %v2043 = vrcp.pop %v2038
  %v2044 = vmul.f32 %v2029, %v2043
  %v2045 = vmul.f32 %v2040, %v91
  %v2046 = vmul.f32 %v2042, %v92
  %v2047 = vmul.f32 %v2044, %v93
  %v2048 = vadd.f32 %v726, %v2045
  %v2049 = vadd.f32 %v727, %v2046
  %v2050 = vadd.f32 %v728, %v2047
  %v2051 = vpack.c.bf16 %v2042, %v2040
  %v2052 = vpack.c.bf16 %v2044, %v2044
  %2053 = vrot.lane.b32.xlu0 %v1591, 48
  %v2054 = vpop.permute.xlu0 %2053
  %2055 = vrot.lane.b32.xlu0 %v1592, 48
  %v2056 = vpop.permute.xlu0 %2055
  %v2059 = vsel %vm338, %v2051, 0
  %v2062 = vsel %vm338, %v2052, 0
  %v2065 = vsel %vm391, %v2056, 0
  %2067 = vmatprep.subr.bf16.mxu0 0
  %2068 = vmatpush1.bf16.msra.mxu0 0
  %2069 = vmatprep.subr.bf16.mxu0 0
  %2070 = vmatpush1.bf16.msra.mxu0 0
  %2071 = vmatprep.subr.bf16.mxu0 0
  %2072 = vmatpush1.bf16.msra.mxu0 0
  %2073 = vmatprep.subr.bf16.mxu0 0
  %2074 = vmatpush1.bf16.msra.mxu0 0
  %2075 = vmatprep.subr.bf16.mxu0 0
  %2076 = vmatpush1.bf16.msra.mxu0 0
  %2077 = vmatprep.subr.bf16.mxu0 0
  %2078 = vmatpush1.bf16.msra.mxu0 0
  %2079 = vmatprep.subr.bf16.mxu0 0
  %2080 = vmatpush1.bf16.msra.mxu0 %v2065
  %2081 = vmatprep.subr.bf16.mxu0 0
  %2082 = vmatpush1.bf16.msra.mxu0 %v2054
  %2083 = vmatprep.subr.bf16.mxu0 0
  %2084 = vmatpush2.bf16.msra.mxu0 0
  %2085 = vmatprep.subr.bf16.mxu0 0
  %2086 = vmatpush2.bf16.msra.mxu0 0
  %2087 = vmatprep.subr.bf16.mxu0 0
  %2088 = vmatpush2.bf16.msra.mxu0 0
  %2089 = vmatprep.subr.bf16.mxu0 0
  %2090 = vmatpush2.bf16.msra.mxu0 0
  %2091 = vmatprep.subr.bf16.mxu0 0
  %2092 = vmatpush2.bf16.msra.mxu0 0
  %2093 = vmatprep.subr.bf16.mxu0 0
  %2094 = vmatpush2.bf16.msra.mxu0 0
  %2095 = vmatprep.subr.bf16.mxu0 0
  %2096 = vmatpush2.bf16.msra.mxu0 0
  %2097 = vmatprep.subr.bf16.mxu0 0
  %2098 = vmatpush2.bf16.msra.mxu0 0
  %2099 = vmatprep.mubr.bf16.mxu0 0
  %2100 = vmatmul.mubr.bf16.gmra.mxu0 %v2059
  %v2101 = vpop.f32.mrf.mxu0
  %v2102 = vadd.f32 0.0, %v2101
  %v2103 = vpop.f32.mrf.mxu0
  %v2104 = vpop.f32.mrf.mxu0
  %v2105 = vadd.f32 0.0, %v2104
  %v2106 = vpop.f32.mrf.mxu0
  %2107 = vmatprep.mubr.bf16.mxu0 0
  %2108 = vmatmul.mubr.bf16.gmra.mxu0 %v2062
  %v2109 = vpop.f32.mrf.mxu0
  %v2110 = vadd.f32 0.0, %v2109
  %v2111 = vpop.f32.mrf.mxu0
  %v2112 = vpop.f32.mrf.mxu0
  %v2113 = vpop.f32.mrf.mxu0
  %2114 = vdwg.mxu0
  %2115 = vrot.lane.b32.xlu0 %v1589, 104
  %v2116 = vpop.permute.xlu0 %2115
  %2117 = vrot.lane.b32.xlu0 %v1590, 104
  %v2118 = vpop.permute.xlu0 %2117
  %2119 = vrot.lane.b32.xlu0 %v1591, 72
  %v2120 = vpop.permute.xlu0 %2119
  %2121 = vrot.lane.b32.xlu0 %v1592, 72
  %v2122 = vpop.permute.xlu0 %2121
  %v2124 = vsel %vm274, %v2116, 0
  %v2127 = vsel %vm274, %v2118, 0
  %v2130 = vsel %vm274, %v2120, 0
  %v2133 = vsel %vm274, %v2122, 0
  %2135 = vmatprep.subr.bf16.mxu0 0
  %2136 = vmatpush1.bf16.xpose.msra.mxu0 0
  %2137 = vmatprep.subr.bf16.mxu0 0
  %2138 = vmatpush1.bf16.xpose.msra.mxu0 0
  %2139 = vmatprep.subr.bf16.mxu0 0
  %2140 = vmatpush1.bf16.xpose.msra.mxu0 0
  %2141 = vmatprep.subr.bf16.mxu0 0
  %2142 = vmatpush1.bf16.xpose.msra.mxu0 0
  %2143 = vmatprep.subr.bf16.mxu0 0
  %2144 = vmatpush1.bf16.xpose.msra.mxu0 0
  %2145 = vmatprep.subr.bf16.mxu0 0
  %2146 = vmatpush1.bf16.xpose.msra.mxu0 0
  %2147 = vmatprep.subr.bf16.mxu0 0
  %2148 = vmatpush1.bf16.xpose.msra.mxu0 %v2133
  %2149 = vmatprep.subr.bf16.mxu0 0
  %2150 = vmatpush1.bf16.xpose.msra.mxu0 %v2130
  %2151 = vmatprep.subr.bf16.mxu0 0
  %2152 = vmatpush2.bf16.xpose.msra.mxu0 0
  %2153 = vmatprep.subr.bf16.mxu0 0
  %2154 = vmatpush2.bf16.xpose.msra.mxu0 0
  %2155 = vmatprep.subr.bf16.mxu0 0
  %2156 = vmatpush2.bf16.xpose.msra.mxu0 0
  %2157 = vmatprep.subr.bf16.mxu0 0
  %2158 = vmatpush2.bf16.xpose.msra.mxu0 0
  %2159 = vmatprep.subr.bf16.mxu0 0
  %2160 = vmatpush2.bf16.xpose.msra.mxu0 0
  %2161 = vmatprep.subr.bf16.mxu0 0
  %2162 = vmatpush2.bf16.xpose.msra.mxu0 0
  %2163 = vmatprep.subr.bf16.mxu0 0
  %2164 = vmatpush2.bf16.xpose.msra.mxu0 0
  %2165 = vmatprep.subr.bf16.mxu0 0
  %2166 = vmatpush2.bf16.xpose.msra.mxu0 0
  %2167 = vmatprep.mubr.bf16.mxu0 0
  %2168 = vmatmul.mubr.bf16.gmra.mxu0 %v2124
  %v2169 = vpop.f32.mrf.mxu0
  %v2170 = vadd.f32 0.0, %v2169
  %v2171 = vpop.f32.mrf.mxu0
  %v2172 = vpop.f32.mrf.mxu0
  %v2173 = vadd.f32 0.0, %v2172
  %v2174 = vpop.f32.mrf.mxu0
  %2175 = vmatprep.mubr.bf16.mxu0 0
  %2176 = vmatmul.mubr.bf16.gmra.mxu0 %v2127
  %v2177 = vpop.f32.mrf.mxu0
  %v2178 = vadd.f32 0.0, %v2177
  %v2179 = vpop.f32.mrf.mxu0
  %v2180 = vpop.f32.mrf.mxu0
  %v2181 = vpop.f32.mrf.mxu0
  %2182 = vdwg.mxu0
  %v2183 = vsel %vm84, %v2170, -1e+30
  %v2184 = vsel %vm84, %v2173, -1e+30
  %v2185 = vsel %vm84, %v2178, -1e+30
  %v2186 = vsel %vm338, %v2183, -inf
  %2187 = vmax.xlane.f32.xlu0 %v2186
  %v2188 = vpop.xlane.xlu0 %2187
  %v2189 = vsel %vm338, %v2184, -inf
  %2190 = vmax.xlane.f32.xlu0 %v2189
  %v2191 = vpop.xlane.xlu0 %2190
  %v2192 = vsel %vm338, %v2185, -inf
  %2193 = vmax.xlane.f32.xlu0 %v2192
  %v2194 = vpop.xlane.xlu0 %2193
  %v2195 = vsub.f32 %v2183, %v2188
  %v2196 = vsub.f32 %v2184, %v2191
  %v2197 = vsub.f32 %v2185, %v2194
  %v2198 = vmul.f32 %v2195, 1.442695
  %v2199 = vpow.pop %v2198
  %v2200 = vmul.f32 %v2196, 1.442695
  %v2201 = vpow.pop %v2200
  %v2202 = vmul.f32 %v2197, 1.442695
  %v2203 = vpow.pop %v2202
  %v2204 = vsel %vm338, %v2199, 0.0
  %2205 = vadd.xlane.f32.xlu0 %v2204
  %v2206 = vpop.xlane.xlu0 %2205
  %v2207 = vsel %vm338, %v2201, 0.0
  %2208 = vadd.xlane.f32.xlu0 %v2207
  %v2209 = vpop.xlane.xlu0 %2208
  %v2210 = vsel %vm338, %v2203, 0.0
  %2211 = vadd.xlane.f32.xlu0 %v2210
  %v2212 = vpop.xlane.xlu0 %2211
  %v2213 = vrcp.pop %v2206
  %v2214 = vmul.f32 %v2199, %v2213
  %v2215 = vrcp.pop %v2209
  %v2216 = vmul.f32 %v2201, %v2215
  %v2217 = vrcp.pop %v2212
  %v2218 = vmul.f32 %v2203, %v2217
  %v2219 = vmul.f32 %v2214, %v91
  %v2220 = vmul.f32 %v2216, %v92
  %v2221 = vmul.f32 %v2218, %v93
  %v2222 = vadd.f32 %v900, %v2219
  %v2223 = vadd.f32 %v901, %v2220
  %v2224 = vadd.f32 %v902, %v2221
  %v2225 = vpack.c.bf16 %v2216, %v2214
  %v2226 = vpack.c.bf16 %v2218, %v2218
  %2227 = vrot.lane.b32.xlu0 %v1591, 40
  %v2228 = vpop.permute.xlu0 %2227
  %2229 = vrot.lane.b32.xlu0 %v1592, 40
  %v2230 = vpop.permute.xlu0 %2229
  %v2233 = vsel %vm338, %v2225, 0
  %v2236 = vsel %vm338, %v2226, 0
  %v2239 = vsel %vm391, %v2230, 0
  %2241 = vmatprep.subr.bf16.mxu0 0
  %2242 = vmatpush1.bf16.msra.mxu0 0
  %2243 = vmatprep.subr.bf16.mxu0 0
  %2244 = vmatpush1.bf16.msra.mxu0 0
  %2245 = vmatprep.subr.bf16.mxu0 0
  %2246 = vmatpush1.bf16.msra.mxu0 0
  %2247 = vmatprep.subr.bf16.mxu0 0
  %2248 = vmatpush1.bf16.msra.mxu0 0
  %2249 = vmatprep.subr.bf16.mxu0 0
  %2250 = vmatpush1.bf16.msra.mxu0 0
  %2251 = vmatprep.subr.bf16.mxu0 0
  %2252 = vmatpush1.bf16.msra.mxu0 0
  %2253 = vmatprep.subr.bf16.mxu0 0
  %2254 = vmatpush1.bf16.msra.mxu0 %v2239
  %2255 = vmatprep.subr.bf16.mxu0 0
  %2256 = vmatpush1.bf16.msra.mxu0 %v2228
  %2257 = vmatprep.subr.bf16.mxu0 0
  %2258 = vmatpush2.bf16.msra.mxu0 0
  %2259 = vmatprep.subr.bf16.mxu0 0
  %2260 = vmatpush2.bf16.msra.mxu0 0
  %2261 = vmatprep.subr.bf16.mxu0 0
  %2262 = vmatpush2.bf16.msra.mxu0 0
  %2263 = vmatprep.subr.bf16.mxu0 0
  %2264 = vmatpush2.bf16.msra.mxu0 0
  %2265 = vmatprep.subr.bf16.mxu0 0
  %2266 = vmatpush2.bf16.msra.mxu0 0
  %2267 = vmatprep.subr.bf16.mxu0 0
  %2268 = vmatpush2.bf16.msra.mxu0 0
  %2269 = vmatprep.subr.bf16.mxu0 0
  %2270 = vmatpush2.bf16.msra.mxu0 0
  %2271 = vmatprep.subr.bf16.mxu0 0
  %2272 = vmatpush2.bf16.msra.mxu0 0
  %2273 = vmatprep.mubr.bf16.mxu0 0
  %2274 = vmatmul.mubr.bf16.gmra.mxu0 %v2233
  %v2275 = vpop.f32.mrf.mxu0
  %v2276 = vadd.f32 0.0, %v2275
  %v2277 = vpop.f32.mrf.mxu0
  %v2278 = vpop.f32.mrf.mxu0
  %v2279 = vadd.f32 0.0, %v2278
  %v2280 = vpop.f32.mrf.mxu0
  %2281 = vmatprep.mubr.bf16.mxu0 0
  %2282 = vmatmul.mubr.bf16.gmra.mxu0 %v2236
  %v2283 = vpop.f32.mrf.mxu0
  %v2284 = vadd.f32 0.0, %v2283
  %v2285 = vpop.f32.mrf.mxu0
  %v2286 = vpop.f32.mrf.mxu0
  %v2287 = vpop.f32.mrf.mxu0
  %2288 = vdwg.mxu0
  %2292 = vrot.lane.b32.xlu0 %v1928, 8
  %v2293 = vpop.permute.xlu0 %2292
  %2294 = vrot.lane.b32.xlu0 %v1931, 8
  %v2295 = vpop.permute.xlu0 %2294
  %2296 = vrot.lane.b32.xlu0 %v1936, 8
  %v2297 = vpop.permute.xlu0 %2296
  %2304 = vrot.lane.b32.xlu0 %v2102, 16
  %v2305 = vpop.permute.xlu0 %2304
  %2306 = vrot.lane.b32.xlu0 %v2105, 16
  %v2307 = vpop.permute.xlu0 %2306
  %2308 = vrot.lane.b32.xlu0 %v2110, 16
  %v2309 = vpop.permute.xlu0 %2308
  %2316 = vrot.lane.b32.xlu0 %v2276, 24
  %v2317 = vpop.permute.xlu0 %2316
  %2318 = vrot.lane.b32.xlu0 %v2279, 24
  %v2319 = vpop.permute.xlu0 %2318
  %2320 = vrot.lane.b32.xlu0 %v2284, 24
  %v2321 = vpop.permute.xlu0 %2320
  %v2325 = vsel %vm274, %v1752, %v2293
  %v2326 = vsel %vm274, %v1755, %v2295
  %v2327 = vsel %vm274, %v1760, %v2297
  %v2328 = vsel %vm1006, %v2325, %v2305
  %v2329 = vsel %vm1006, %v2326, %v2307
  %v2330 = vsel %vm1006, %v2327, %v2309
  %v2331 = vsel %vm338, %v2328, %v2317
  %v2332 = vsel %vm338, %v2329, %v2319
  %v2333 = vsel %vm338, %v2330, %v2321
  %s2334 = scalar_lea.vmem %s5, 16
  %v2335 = vld [vmem:[%s2334] sm:$0xf]
  %v2336 = vld [vmem:[%s2334 + $0x4] sm:$0xf]
  %v2337 = vld [vmem:[%s2334 + $0x8] sm:$0xf]
  %v2338 = vld [vmem:[%s2334 + $0xc] sm:$0xf]
  %v2339 = vpack.c.bf16 %v2332, %v2331
  %v2340 = vpack.c.bf16 %v2333, %v2333
  %v2345 = vunpack.c.l.b16 %v2335
  %v2346 = vunpack.c.l.b16 %v2336
  %v2347 = vunpack.c.l.b16 %v2337
  %v2348 = vunpack.c.l.b16 %v2338
  %v2349 = vpack.c.b16 %v2346, %v2345
  %v2350 = vpack.c.b16 %v2348, %v2347
  %v2354 = vsel %vm123, %v2339, 0
  %v2357 = vsel %vm123, %v2340, 0
  %2359 = vmatprep.subr.bf16.mxu0 0
  %2360 = vmatpush1.bf16.msra.mxu0 0
  %2361 = vmatprep.subr.bf16.mxu0 0
  %2362 = vmatpush1.bf16.msra.mxu0 0
  %2363 = vmatprep.subr.bf16.mxu0 0
  %2364 = vmatpush1.bf16.msra.mxu0 0
  %2365 = vmatprep.subr.bf16.mxu0 0
  %2366 = vmatpush1.bf16.msra.mxu0 0
  %2367 = vmatprep.subr.bf16.mxu0 0
  %2368 = vmatpush1.bf16.msra.mxu0 0
  %2369 = vmatprep.subr.bf16.mxu0 0
  %2370 = vmatpush1.bf16.msra.mxu0 0
  %2371 = vmatprep.subr.bf16.mxu0 0
  %2372 = vmatpush1.bf16.msra.mxu0 %v2350
  %2373 = vmatprep.subr.bf16.mxu0 0
  %2374 = vmatpush1.bf16.msra.mxu0 %v2349
  %2375 = vmatprep.subr.bf16.mxu0 0
  %2376 = vmatpush2.bf16.msra.mxu0 0
  %2377 = vmatprep.subr.bf16.mxu0 0
  %2378 = vmatpush2.bf16.msra.mxu0 0
  %2379 = vmatprep.subr.bf16.mxu0 0
  %2380 = vmatpush2.bf16.msra.mxu0 0
  %2381 = vmatprep.subr.bf16.mxu0 0
  %2382 = vmatpush2.bf16.msra.mxu0 0
  %2383 = vmatprep.subr.bf16.mxu0 0
  %2384 = vmatpush2.bf16.msra.mxu0 0
  %2385 = vmatprep.subr.bf16.mxu0 0
  %2386 = vmatpush2.bf16.msra.mxu0 0
  %2387 = vmatprep.subr.bf16.mxu0 0
  %2388 = vmatpush2.bf16.msra.mxu0 0
  %2389 = vmatprep.subr.bf16.mxu0 0
  %2390 = vmatpush2.bf16.msra.mxu0 0
  %2391 = vmatprep.mubr.bf16.mxu0 0
  %2392 = vmatmul.mubr.bf16.gmra.mxu0 %v2354
  %v2393 = vpop.f32.mrf.mxu0
  %v2394 = vadd.f32 0.0, %v2393
  %v2395 = vpop.f32.mrf.mxu0
  %v2396 = vpop.f32.mrf.mxu0
  %v2397 = vadd.f32 0.0, %v2396
  %v2398 = vpop.f32.mrf.mxu0
  %2399 = vmatprep.mubr.bf16.mxu0 0
  %2400 = vmatmul.mubr.bf16.gmra.mxu0 %v2357
  %v2401 = vpop.f32.mrf.mxu0
  %v2402 = vadd.f32 0.0, %v2401
  %v2403 = vpop.f32.mrf.mxu0
  %v2404 = vpop.f32.mrf.mxu0
  %v2405 = vpop.f32.mrf.mxu0
  %2406 = vdwg.mxu0
  %v2407 = vadd.f32 %v1441, %v2394
  %v2408 = vadd.f32 %v1442, %v2397
  %v2409 = vadd.f32 %v1443, %v2402
  %s2410 = scalar_lea.vmem %s6, 1
  %v2411 = vld [vmem:[%s2410] sm:$0x1]
  %v2413 = vlaneseq
  %v2414 = vshrl.u32 %v2413, 7
  %v2415 = vsub.s32 0, %v2414
  %v2416 = vrot.slane %v2411, %v2415
  %v2418 = vadd.f32 %v2407, %v2416
  %v2419 = vadd.f32 %v2408, %v2416
  %v2420 = vadd.f32 %v2409, %v2416
  %s2421 = scalar_lea.vmem %s7, 1
  %v2422 = vld [vmem:[%s2421] sm:$0x1]
  %s2423 = scalar_lea.vmem %s8, 1
  %v2424 = vld [vmem:[%s2423] sm:$0x1]
  %v2425 = vsel %vm123, %v2418, 0.0
  %2426 = vadd.xlane.f32.xlu0 %v2425
  %v2427 = vpop.xlane.xlu0 %2426
  %v2428 = vsel %vm123, %v2419, 0.0
  %2429 = vadd.xlane.f32.xlu0 %v2428
  %v2430 = vpop.xlane.xlu0 %2429
  %v2431 = vsel %vm123, %v2420, 0.0
  %2432 = vadd.xlane.f32.xlu0 %v2431
  %v2433 = vpop.xlane.xlu0 %2432
  %v2434 = vmul.f32 %v2427, %v133
  %v2435 = vmul.f32 %v2430, %v133
  %v2436 = vmul.f32 %v2433, %v133
  %v2437 = vsub.f32 %v2418, %v2434
  %v2438 = vsub.f32 %v2419, %v2435
  %v2439 = vsub.f32 %v2420, %v2436
  %v2440 = vmul.f32 %v2437, %v2437
  %v2441 = vmul.f32 %v2438, %v2438
  %v2442 = vmul.f32 %v2439, %v2439
  %v2443 = vsel %vm123, %v2440, 0.0
  %2444 = vadd.xlane.f32.xlu0 %v2443
  %v2445 = vpop.xlane.xlu0 %2444
  %v2446 = vsel %vm123, %v2441, 0.0
  %2447 = vadd.xlane.f32.xlu0 %v2446
  %v2448 = vpop.xlane.xlu0 %2447
  %v2449 = vsel %vm123, %v2442, 0.0
  %2450 = vadd.xlane.f32.xlu0 %v2449
  %v2451 = vpop.xlane.xlu0 %2450
  %v2452 = vmul.f32 %v2445, %v133
  %v2453 = vmul.f32 %v2448, %v133
  %v2454 = vmul.f32 %v2451, %v133
  %v2455 = vadd.f32 %v2452, 1e-05
  %v2456 = vadd.f32 %v2453, 1e-05
  %v2457 = vadd.f32 %v2454, 1e-05
  %v2458 = vrsqrt.pop %v2455
  %v2459 = vrsqrt.pop %v2456
  %v2460 = vrsqrt.pop %v2457
  %v2461 = vmul.f32 %v2437, %v2458
  %v2462 = vmul.f32 %v2438, %v2459
  %v2463 = vmul.f32 %v2439, %v2460
  %v2465 = vlaneseq
  %v2466 = vshrl.u32 %v2465, 7
  %v2467 = vsub.s32 0, %v2466
  %v2468 = vrot.slane %v2422, %v2467
  %v2470 = vmul.f32 %v2461, %v2468
  %v2471 = vmul.f32 %v2462, %v2468
  %v2472 = vmul.f32 %v2463, %v2468
  %v2474 = vlaneseq
  %v2475 = vshrl.u32 %v2474, 7
  %v2476 = vsub.s32 0, %v2475
  %v2477 = vrot.slane %v2424, %v2476
  %v2479 = vadd.f32 %v2470, %v2477
  %v2480 = vadd.f32 %v2471, %v2477
  %v2481 = vadd.f32 %v2472, %v2477
  %s2482 = scalar_lea.vmem %s9, 16
  %v2483 = vld [vmem:[%s2482] sm:$0xf]
  %v2484 = vld [vmem:[%s2482 + $0x4] sm:$0xf]
  %v2485 = vld [vmem:[%s2482 + $0x8] sm:$0xf]
  %v2486 = vld [vmem:[%s2482 + $0xc] sm:$0xf]
  %v2487 = vpack.c.bf16 %v2480, %v2479
  %v2488 = vpack.c.bf16 %v2481, %v2481
  %s2489 = scalar_lea.vmem %s10, 1
  %v2490 = vld [vmem:[%s2489] sm:$0x1]
  %v2492 = vlaneseq
  %v2493 = vshrl.u32 %v2492, 7
  %v2494 = vsub.s32 0, %v2493
  %v2495 = vrot.slane %v2490, %v2494
  %v2501 = vunpack.c.l.b16 %v2483
  %v2502 = vunpack.c.l.b16 %v2484
  %v2503 = vunpack.c.l.b16 %v2485
  %v2504 = vunpack.c.l.b16 %v2486
  %v2505 = vpack.c.b16 %v2502, %v2501
  %v2506 = vpack.c.b16 %v2504, %v2503
  %v2510 = vsel %vm123, %v2487, 0
  %v2513 = vsel %vm123, %v2488, 0
  %2515 = vmatprep.subr.bf16.mxu0 0
  %2516 = vmatpush1.bf16.msra.mxu0 0
  %2517 = vmatprep.subr.bf16.mxu0 0
  %2518 = vmatpush1.bf16.msra.mxu0 0
  %2519 = vmatprep.subr.bf16.mxu0 0
  %2520 = vmatpush1.bf16.msra.mxu0 0
  %2521 = vmatprep.subr.bf16.mxu0 0
  %2522 = vmatpush1.bf16.msra.mxu0 0
  %2523 = vmatprep.subr.bf16.mxu0 0
  %2524 = vmatpush1.bf16.msra.mxu0 0
  %2525 = vmatprep.subr.bf16.mxu0 0
  %2526 = vmatpush1.bf16.msra.mxu0 0
  %2527 = vmatprep.subr.bf16.mxu0 0
  %2528 = vmatpush1.bf16.msra.mxu0 %v2506
  %2529 = vmatprep.subr.bf16.mxu0 0
  %2530 = vmatpush1.bf16.msra.mxu0 %v2505
  %2531 = vmatprep.subr.bf16.mxu0 0
  %2532 = vmatpush2.bf16.msra.mxu0 0
  %2533 = vmatprep.subr.bf16.mxu0 0
  %2534 = vmatpush2.bf16.msra.mxu0 0
  %2535 = vmatprep.subr.bf16.mxu0 0
  %2536 = vmatpush2.bf16.msra.mxu0 0
  %2537 = vmatprep.subr.bf16.mxu0 0
  %2538 = vmatpush2.bf16.msra.mxu0 0
  %2539 = vmatprep.subr.bf16.mxu0 0
  %2540 = vmatpush2.bf16.msra.mxu0 0
  %2541 = vmatprep.subr.bf16.mxu0 0
  %2542 = vmatpush2.bf16.msra.mxu0 0
  %2543 = vmatprep.subr.bf16.mxu0 0
  %2544 = vmatpush2.bf16.msra.mxu0 0
  %2545 = vmatprep.subr.bf16.mxu0 0
  %2546 = vmatpush2.bf16.msra.mxu0 0
  %2547 = vmatprep.mubr.bf16.mxu0 0
  %2548 = vmatmul.mubr.bf16.gmra.mxu0 %v2510
  %v2549 = vpop.f32.mrf.mxu0
  %v2550 = vadd.f32 %v2495, %v2549
  %v2551 = vpop.f32.mrf.mxu0
  %v2552 = vpop.f32.mrf.mxu0
  %v2553 = vadd.f32 %v2495, %v2552
  %v2554 = vpop.f32.mrf.mxu0
  %2555 = vmatprep.mubr.bf16.mxu0 0
  %2556 = vmatmul.mubr.bf16.gmra.mxu0 %v2513
  %v2557 = vpop.f32.mrf.mxu0
  %v2558 = vadd.f32 %v2495, %v2557
  %v2559 = vpop.f32.mrf.mxu0
  %v2560 = vpop.f32.mrf.mxu0
  %v2561 = vpop.f32.mrf.mxu0
  %2562 = vdwg.mxu0
  %v2563 = vmul.f32 %v2550, 0.5
  %v2564 = vmul.f32 %v2553, 0.5
  %v2565 = vmul.f32 %v2558, 0.5
  %v2566 = vmul.f32 %v2550, 0.70710677
  %v2567 = vmul.f32 %v2553, 0.70710677
  %v2568 = vmul.f32 %v2558, 0.70710677
  %vm2569 = vcmp.ge.f32.partialorder %v2566, 0.0
  %vm2570 = vcmp.ge.f32.partialorder %v2567, 0.0
  %vm2571 = vcmp.ge.f32.partialorder %v2568, 0.0
  %v2572 = vsel %vm2569, 1.0, -1.0
  %v2573 = vsel %vm2570, 1.0, -1.0
  %v2574 = vsel %vm2571, 1.0, -1.0
  %v2575 = vand.u32 2147483647, %v2566
  %v2576 = vand.u32 2147483647, %v2567
  %v2577 = vand.u32 2147483647, %v2568
  %v2578 = vmul.f32 %v2575, 0.3275911
  %v2579 = vmul.f32 %v2576, 0.3275911
  %v2580 = vmul.f32 %v2577, 0.3275911
  %v2581 = vadd.f32 %v2578, 1.0
  %v2582 = vadd.f32 %v2579, 1.0
  %v2583 = vadd.f32 %v2580, 1.0
  %v2584 = vrcp.pop %v2581
  %v2585 = vmul.f32 1.0, %v2584
  %v2586 = vrcp.pop %v2582
  %v2587 = vmul.f32 1.0, %v2586
  %v2588 = vrcp.pop %v2583
  %v2589 = vmul.f32 1.0, %v2588
  %v2590 = vmul.f32 %v2585, 1.0614054
  %v2591 = vmul.f32 %v2587, 1.0614054
  %v2592 = vmul.f32 %v2589, 1.0614054
  %v2593 = vadd.f32 %v2590, -1.4531521
  %v2594 = vadd.f32 %v2591, -1.4531521
  %v2595 = vadd.f32 %v2592, -1.4531521
  %v2596 = vmul.f32 %v2593, %v2585
  %v2597 = vmul.f32 %v2594, %v2587
  %v2598 = vmul.f32 %v2595, %v2589
  %v2599 = vadd.f32 %v2596, 1.4214138
  %v2600 = vadd.f32 %v2597, 1.4214138
  %v2601 = vadd.f32 %v2598, 1.4214138
  %v2602 = vmul.f32 %v2599, %v2585
  %v2603 = vmul.f32 %v2600, %v2587
  %v2604 = vmul.f32 %v2601, %v2589
  %v2605 = vadd.f32 %v2602, -0.28449672
  %v2606 = vadd.f32 %v2603, -0.28449672
  %v2607 = vadd.f32 %v2604, -0.28449672
  %v2608 = vmul.f32 %v2605, %v2585
  %v2609 = vmul.f32 %v2606, %v2587
  %v2610 = vmul.f32 %v2607, %v2589
  %v2611 = vadd.f32 %v2608, 0.2548296
  %v2612 = vadd.f32 %v2609, 0.2548296
  %v2613 = vadd.f32 %v2610, 0.2548296
  %v2614 = vmul.f32 %v2611, %v2585
  %v2615 = vmul.f32 %v2612, %v2587
  %v2616 = vmul.f32 %v2613, %v2589
  %v2617 = vsub.f32 0.0, %v2575
  %v2618 = vsub.f32 0.0, %v2576
  %v2619 = vsub.f32 0.0, %v2577
  %v2620 = vmul.f32 %v2617, %v2575
  %v2621 = vmul.f32 %v2618, %v2576
  %v2622 = vmul.f32 %v2619, %v2577
  %v2623 = vmul.f32 %v2620, 1.442695
  %v2624 = vpow.pop %v2623
  %v2625 = vmul.f32 %v2621, 1.442695
  %v2626 = vpow.pop %v2625
  %v2627 = vmul.f32 %v2622, 1.442695
  %v2628 = vpow.pop %v2627
  %v2629 = vmul.f32 %v2614, %v2624
  %v2630 = vmul.f32 %v2615, %v2626
  %v2631 = vmul.f32 %v2616, %v2628
  %v2632 = vsub.f32 1.0, %v2629
  %v2633 = vsub.f32 1.0, %v2630
  %v2634 = vsub.f32 1.0, %v2631
  %v2635 = vmul.f32 %v2572, %v2632
  %v2636 = vmul.f32 %v2573, %v2633
  %v2637 = vmul.f32 %v2574, %v2634
  %v2638 = vadd.f32 %v2635, 1.0
  %v2639 = vadd.f32 %v2636, 1.0
  %v2640 = vadd.f32 %v2637, 1.0
  %v2641 = vmul.f32 %v2563, %v2638
  %v2642 = vmul.f32 %v2564, %v2639
  %v2643 = vmul.f32 %v2565, %v2640
  %s2644 = scalar_lea.vmem %s11, 64
  %v2645 = vld [vmem:[%s2644] sm:$0xf]
  %v2646 = vld [vmem:[%s2644 + $0x4] sm:$0xf]
  %v2647 = vld [vmem:[%s2644 + $0x8] sm:$0xf]
  %v2648 = vld [vmem:[%s2644 + $0xc] sm:$0xf]
  %v2649 = vld [vmem:[%s2644 + $0x10] sm:$0xf]
  %v2650 = vld [vmem:[%s2644 + $0x14] sm:$0xf]
  %v2651 = vld [vmem:[%s2644 + $0x18] sm:$0xf]
  %v2652 = vld [vmem:[%s2644 + $0x1c] sm:$0xf]
  %v2653 = vld [vmem:[%s2644 + $0x20] sm:$0xf]
  %v2654 = vld [vmem:[%s2644 + $0x24] sm:$0xf]
  %v2655 = vld [vmem:[%s2644 + $0x28] sm:$0xf]
  %v2656 = vld [vmem:[%s2644 + $0x2c] sm:$0xf]
  %v2657 = vld [vmem:[%s2644 + $0x30] sm:$0xf]
  %v2658 = vld [vmem:[%s2644 + $0x34] sm:$0xf]
  %v2659 = vld [vmem:[%s2644 + $0x38] sm:$0xf]
  %v2660 = vld [vmem:[%s2644 + $0x3c] sm:$0xf]
  %v2661 = vpack.c.bf16 %v2642, %v2641
  %v2662 = vpack.c.bf16 %v2643, %v2643
  %v2679 = vunpack.c.l.b16 %v2645
  %v2680 = vunpack.c.l.b16 %v2646
  %v2681 = vunpack.c.l.b16 %v2647
  %v2682 = vunpack.c.l.b16 %v2648
  %v2683 = vunpack.c.l.b16 %v2649
  %v2684 = vunpack.c.l.b16 %v2650
  %v2685 = vunpack.c.l.b16 %v2651
  %v2686 = vunpack.c.l.b16 %v2652
  %v2687 = vunpack.c.l.b16 %v2653
  %v2688 = vunpack.c.l.b16 %v2654
  %v2689 = vunpack.c.l.b16 %v2655
  %v2690 = vunpack.c.l.b16 %v2656
  %v2691 = vunpack.c.l.b16 %v2657
  %v2692 = vunpack.c.l.b16 %v2658
  %v2693 = vunpack.c.l.b16 %v2659
  %v2694 = vunpack.c.l.b16 %v2660
  %v2695 = vpack.c.b16 %v2680, %v2679
  %v2696 = vpack.c.b16 %v2682, %v2681
  %v2697 = vpack.c.b16 %v2684, %v2683
  %v2698 = vpack.c.b16 %v2686, %v2685
  %v2699 = vpack.c.b16 %v2688, %v2687
  %v2700 = vpack.c.b16 %v2690, %v2689
  %v2701 = vpack.c.b16 %v2692, %v2691
  %v2702 = vpack.c.b16 %v2694, %v2693
  %2711 = vmatprep.subr.bf16.mxu0 0
  %2712 = vmatpush1.bf16.msra.mxu0 %v2702
  %2713 = vmatprep.subr.bf16.mxu0 0
  %2714 = vmatpush1.bf16.msra.mxu0 %v2701
  %2715 = vmatprep.subr.bf16.mxu0 0
  %2716 = vmatpush1.bf16.msra.mxu0 %v2700
  %2717 = vmatprep.subr.bf16.mxu0 0
  %2718 = vmatpush1.bf16.msra.mxu0 %v2699
  %2719 = vmatprep.subr.bf16.mxu0 0
  %2720 = vmatpush1.bf16.msra.mxu0 %v2698
  %2721 = vmatprep.subr.bf16.mxu0 0
  %2722 = vmatpush1.bf16.msra.mxu0 %v2697
  %2723 = vmatprep.subr.bf16.mxu0 0
  %2724 = vmatpush1.bf16.msra.mxu0 %v2696
  %2725 = vmatprep.subr.bf16.mxu0 0
  %2726 = vmatpush1.bf16.msra.mxu0 %v2695
  %2727 = vmatprep.subr.bf16.mxu0 0
  %2728 = vmatpush2.bf16.msra.mxu0 0
  %2729 = vmatprep.subr.bf16.mxu0 0
  %2730 = vmatpush2.bf16.msra.mxu0 0
  %2731 = vmatprep.subr.bf16.mxu0 0
  %2732 = vmatpush2.bf16.msra.mxu0 0
  %2733 = vmatprep.subr.bf16.mxu0 0
  %2734 = vmatpush2.bf16.msra.mxu0 0
  %2735 = vmatprep.subr.bf16.mxu0 0
  %2736 = vmatpush2.bf16.msra.mxu0 0
  %2737 = vmatprep.subr.bf16.mxu0 0
  %2738 = vmatpush2.bf16.msra.mxu0 0
  %2739 = vmatprep.subr.bf16.mxu0 0
  %2740 = vmatpush2.bf16.msra.mxu0 0
  %2741 = vmatprep.subr.bf16.mxu0 0
  %2742 = vmatpush2.bf16.msra.mxu0 0
  %2743 = vmatprep.mubr.bf16.mxu0 0
  %2744 = vmatmul.mubr.bf16.gmra.mxu0 %v2661
  %v2745 = vpop.f32.mrf.mxu0
  %v2746 = vadd.f32 0.0, %v2745
  %v2747 = vpop.f32.mrf.mxu0
  %v2748 = vpop.f32.mrf.mxu0
  %v2749 = vadd.f32 0.0, %v2748
  %v2750 = vpop.f32.mrf.mxu0
  %2751 = vmatprep.mubr.bf16.mxu0 0
  %2752 = vmatmul.mubr.bf16.gmra.mxu0 %v2662
  %v2753 = vpop.f32.mrf.mxu0
  %v2754 = vadd.f32 0.0, %v2753
  %v2755 = vpop.f32.mrf.mxu0
  %v2756 = vpop.f32.mrf.mxu0
  %v2757 = vpop.f32.mrf.mxu0
  %2758 = vdwg.mxu0
  %v2759 = vadd.f32 %v2418, %v2746
  %v2760 = vadd.f32 %v2419, %v2749
  %v2761 = vadd.f32 %v2420, %v2754
  %s2762 = scalar_lea.vmem %s12, 1
  %v2763 = vld [vmem:[%s2762] sm:$0x1]
  %v2765 = vlaneseq
  %v2766 = vshrl.u32 %v2765, 7
  %v2767 = vsub.s32 0, %v2766
  %v2768 = vrot.slane %v2763, %v2767
  %v2770 = vadd.f32 %v2759, %v2768
  %v2771 = vadd.f32 %v2760, %v2768
  %v2772 = vadd.f32 %v2761, %v2768
  %v2773 = vld [vmem:[%s22] sm:$0x3f]
  %v2774 = vsel %vm338, %v1698, 0.0
  %v2775 = vsel %vm338, %v1699, 0.0
  %v2776 = vadd.f32 %v2774, %v2775
  %v2777 = vsel %vm338, %v1700, 0.0
  %v2778 = vadd.f32 %v2776, %v2777
  %v2779 = vrot.slane %v2778, 4
  %v2780 = vadd.f32 %v2778, %v2779
  %v2781 = vrot.slane %v2780, 2
  %v2782 = vadd.f32 %v2780, %v2781
  %v2783 = vrot.slane %v2782, 1
  %v2784 = vadd.f32 %v2782, %v2783
  %v2785 = vrcp.pop %v2784
  %v2786 = vmul.f32 %v1698, %v2785
  %v2787 = vmul.f32 %v1699, %v2785
  %v2788 = vmul.f32 %v1700, %v2785
  %v2789 = vsel %vm338, %v2786, 0.0
  %2790 = vadd.xlane.f32.xlu0 %v2789
  %v2791 = vpop.xlane.xlu0 %2790
  %v2792 = vsel %vm338, %v2787, 0.0
  %2793 = vadd.xlane.f32.xlu0 %v2792
  %v2794 = vpop.xlane.xlu0 %2793
  %v2795 = vsel %vm338, %v2788, 0.0
  %2796 = vadd.xlane.f32.xlu0 %v2795
  %v2797 = vpop.xlane.xlu0 %2796
  %v2798 = vrcp.pop %v2791
  %v2799 = vmul.f32 %v2786, %v2798
  %v2800 = vrcp.pop %v2794
  %v2801 = vmul.f32 %v2787, %v2800
  %v2802 = vrcp.pop %v2797
  %v2803 = vmul.f32 %v2788, %v2802
  %2804 = vxpose.xlu0.b32.start [1/16] %v2799, 128
  %2805 = vxpose.xlu0.b32.cont [2/16] %v2801, 128
  %2806 = vxpose.xlu0.b32.cont [3/16] %v2803, 128
  %2807 = vxpose.xlu0.b32.cont [4/16] 0.0, 128
  %2808 = vxpose.xlu0.b32.cont [5/16] 0.0, 128
  %2809 = vxpose.xlu0.b32.cont [6/16] 0.0, 128
  %2810 = vxpose.xlu0.b32.cont [7/16] 0.0, 128
  %2811 = vxpose.xlu0.b32.cont [8/16] 0.0, 128
  %2812 = vxpose.xlu0.b32.cont [9/16] 0.0, 128
  %2813 = vxpose.xlu0.b32.cont [10/16] 0.0, 128
  %2814 = vxpose.xlu0.b32.cont [11/16] 0.0, 128
  %2815 = vxpose.xlu0.b32.cont [12/16] 0.0, 128
  %2816 = vxpose.xlu0.b32.cont [13/16] 0.0, 128
  %2817 = vxpose.xlu0.b32.cont [14/16] 0.0, 128
  %2818 = vxpose.xlu0.b32.cont [15/16] 0.0, 128
  %2819 = vxpose.xlu0.b32.end [16/16] 0.0, 128
  %v2820 = vpop.trf.xlu0
  %v2821 = vpop.trf.xlu0
  %v2822 = vpop.trf.xlu0
  %v2823 = vpop.trf.xlu0
  %v2824 = vpop.trf.xlu0
  %v2825 = vpop.trf.xlu0
  %v2826 = vpop.trf.xlu0
  %v2827 = vpop.trf.xlu0
  %v2828 = vpop.trf.xlu0
  %v2829 = vpop.trf.xlu0
  %v2830 = vpop.trf.xlu0
  %v2831 = vpop.trf.xlu0
  %v2832 = vpop.trf.xlu0
  %v2833 = vpop.trf.xlu0
  %v2834 = vpop.trf.xlu0
  %v2835 = vpop.trf.xlu0
  %v2836 = vadd.f32 %v2799, %v2820
  %v2837 = vadd.f32 %v2801, %v2821
  %v2838 = vadd.f32 %v2803, %v2822
  %v2839 = vmul.f32 %v2836, 0.5
  %v2840 = vmul.f32 %v2837, 0.5
  %v2841 = vmul.f32 %v2838, 0.5
  %v2842 = vsel %vm338, %v2839, -inf
  %v2843 = vsel %vm338, %v2840, -inf
  %v2844 = vsel %vm338, %v2841, -inf
  %v2845 = vmax.f32 %v2842, %v2843
  %v2846 = vmax.f32 %v2845, %v2844
  %v2847 = vrot.slane %v2846, 4
  %v2848 = vmax.f32 %v2846, %v2847
  %v2849 = vrot.slane %v2848, 2
  %v2850 = vmax.f32 %v2848, %v2849
  %v2851 = vrot.slane %v2850, 1
  %v2852 = vmax.f32 %v2850, %v2851
  %v2853 = vmul.f32 %v2852, 0.2
  %v2854 = vsub.f32 %v2839, %v2853
  %v2855 = vsub.f32 %v2840, %v2853
  %v2856 = vsub.f32 %v2841, %v2853
  %v2857 = vmax.f32 %v2854, 0.0
  %v2858 = vmax.f32 %v2855, 0.0
  %v2859 = vmax.f32 %v2856, 0.0
  %v2860 = vsel %vm338, %v2857, 0.0
  %2861 = vadd.xlane.f32.xlu0 %v2860
  %v2862 = vpop.xlane.xlu0 %2861
  %v2863 = vsel %vm338, %v2858, 0.0
  %2864 = vadd.xlane.f32.xlu0 %v2863
  %v2865 = vpop.xlane.xlu0 %2864
  %v2866 = vsel %vm338, %v2859, 0.0
  %2867 = vadd.xlane.f32.xlu0 %v2866
  %v2868 = vpop.xlane.xlu0 %2867
  %v2869 = vrcp.pop %v2862
  %v2870 = vmul.f32 %v2857, %v2869
  %v2871 = vrcp.pop %v2865
  %v2872 = vmul.f32 %v2858, %v2871
  %v2873 = vrcp.pop %v2868
  %v2874 = vmul.f32 %v2859, %v2873
  %v2875 = vsel %vm338, %v1874, 0.0
  %v2876 = vsel %vm338, %v1875, 0.0
  %v2877 = vadd.f32 %v2875, %v2876
  %v2878 = vsel %vm338, %v1876, 0.0
  %v2879 = vadd.f32 %v2877, %v2878
  %v2880 = vrot.slane %v2879, 4
  %v2881 = vadd.f32 %v2879, %v2880
  %v2882 = vrot.slane %v2881, 2
  %v2883 = vadd.f32 %v2881, %v2882
  %v2884 = vrot.slane %v2883, 1
  %v2885 = vadd.f32 %v2883, %v2884
  %v2886 = vrcp.pop %v2885
  %v2887 = vmul.f32 %v1874, %v2886
  %v2888 = vmul.f32 %v1875, %v2886
  %v2889 = vmul.f32 %v1876, %v2886
  %v2890 = vsel %vm338, %v2887, 0.0
  %2891 = vadd.xlane.f32.xlu0 %v2890
  %v2892 = vpop.xlane.xlu0 %2891
  %v2893 = vsel %vm338, %v2888, 0.0
  %2894 = vadd.xlane.f32.xlu0 %v2893
  %v2895 = vpop.xlane.xlu0 %2894
  %v2896 = vsel %vm338, %v2889, 0.0
  %2897 = vadd.xlane.f32.xlu0 %v2896
  %v2898 = vpop.xlane.xlu0 %2897
  %v2899 = vrcp.pop %v2892
  %v2900 = vmul.f32 %v2887, %v2899
  %v2901 = vrcp.pop %v2895
  %v2902 = vmul.f32 %v2888, %v2901
  %v2903 = vrcp.pop %v2898
  %v2904 = vmul.f32 %v2889, %v2903
  %2905 = vxpose.xlu0.b32.start [1/16] %v2900, 128
  %2906 = vxpose.xlu0.b32.cont [2/16] %v2902, 128
  %2907 = vxpose.xlu0.b32.cont [3/16] %v2904, 128
  %2908 = vxpose.xlu0.b32.cont [4/16] 0.0, 128
  %2909 = vxpose.xlu0.b32.cont [5/16] 0.0, 128
  %2910 = vxpose.xlu0.b32.cont [6/16] 0.0, 128
  %2911 = vxpose.xlu0.b32.cont [7/16] 0.0, 128
  %2912 = vxpose.xlu0.b32.cont [8/16] 0.0, 128
  %2913 = vxpose.xlu0.b32.cont [9/16] 0.0, 128
  %2914 = vxpose.xlu0.b32.cont [10/16] 0.0, 128
  %2915 = vxpose.xlu0.b32.cont [11/16] 0.0, 128
  %2916 = vxpose.xlu0.b32.cont [12/16] 0.0, 128
  %2917 = vxpose.xlu0.b32.cont [13/16] 0.0, 128
  %2918 = vxpose.xlu0.b32.cont [14/16] 0.0, 128
  %2919 = vxpose.xlu0.b32.cont [15/16] 0.0, 128
  %2920 = vxpose.xlu0.b32.end [16/16] 0.0, 128
  %v2921 = vpop.trf.xlu0
  %v2922 = vpop.trf.xlu0
  %v2923 = vpop.trf.xlu0
  %v2924 = vpop.trf.xlu0
  %v2925 = vpop.trf.xlu0
  %v2926 = vpop.trf.xlu0
  %v2927 = vpop.trf.xlu0
  %v2928 = vpop.trf.xlu0
  %v2929 = vpop.trf.xlu0
  %v2930 = vpop.trf.xlu0
  %v2931 = vpop.trf.xlu0
  %v2932 = vpop.trf.xlu0
  %v2933 = vpop.trf.xlu0
  %v2934 = vpop.trf.xlu0
  %v2935 = vpop.trf.xlu0
  %v2936 = vpop.trf.xlu0
  %v2937 = vadd.f32 %v2900, %v2921
  %v2938 = vadd.f32 %v2902, %v2922
  %v2939 = vadd.f32 %v2904, %v2923
  %v2940 = vmul.f32 %v2937, 0.5
  %v2941 = vmul.f32 %v2938, 0.5
  %v2942 = vmul.f32 %v2939, 0.5
  %v2943 = vsel %vm338, %v2940, -inf
  %v2944 = vsel %vm338, %v2941, -inf
  %v2945 = vsel %vm338, %v2942, -inf
  %v2946 = vmax.f32 %v2943, %v2944
  %v2947 = vmax.f32 %v2946, %v2945
  %v2948 = vrot.slane %v2947, 4
  %v2949 = vmax.f32 %v2947, %v2948
  %v2950 = vrot.slane %v2949, 2
  %v2951 = vmax.f32 %v2949, %v2950
  %v2952 = vrot.slane %v2951, 1
  %v2953 = vmax.f32 %v2951, %v2952
  %v2954 = vmul.f32 %v2953, 0.2
  %v2955 = vsub.f32 %v2940, %v2954
  %v2956 = vsub.f32 %v2941, %v2954
  %v2957 = vsub.f32 %v2942, %v2954
  %v2958 = vmax.f32 %v2955, 0.0
  %v2959 = vmax.f32 %v2956, 0.0
  %v2960 = vmax.f32 %v2957, 0.0
  %v2961 = vsel %vm338, %v2958, 0.0
  %2962 = vadd.xlane.f32.xlu0 %v2961
  %v2963 = vpop.xlane.xlu0 %2962
  %v2964 = vsel %vm338, %v2959, 0.0
  %2965 = vadd.xlane.f32.xlu0 %v2964
  %v2966 = vpop.xlane.xlu0 %2965
  %v2967 = vsel %vm338, %v2960, 0.0
  %2968 = vadd.xlane.f32.xlu0 %v2967
  %v2969 = vpop.xlane.xlu0 %2968
  %v2970 = vrcp.pop %v2963
  %v2971 = vmul.f32 %v2958, %v2970
  %v2972 = vrcp.pop %v2966
  %v2973 = vmul.f32 %v2959, %v2972
  %v2974 = vrcp.pop %v2969
  %v2975 = vmul.f32 %v2960, %v2974
  %v2976 = vsel %vm338, %v2048, 0.0
  %v2977 = vsel %vm338, %v2049, 0.0
  %v2978 = vadd.f32 %v2976, %v2977
  %v2979 = vsel %vm338, %v2050, 0.0
  %v2980 = vadd.f32 %v2978, %v2979
  %v2981 = vrot.slane %v2980, 4
  %v2982 = vadd.f32 %v2980, %v2981
  %v2983 = vrot.slane %v2982, 2
  %v2984 = vadd.f32 %v2982, %v2983
  %v2985 = vrot.slane %v2984, 1
  %v2986 = vadd.f32 %v2984, %v2985
  %v2987 = vrcp.pop %v2986
  %v2988 = vmul.f32 %v2048, %v2987
  %v2989 = vmul.f32 %v2049, %v2987
  %v2990 = vmul.f32 %v2050, %v2987
  %v2991 = vsel %vm338, %v2988, 0.0
  %2992 = vadd.xlane.f32.xlu0 %v2991
  %v2993 = vpop.xlane.xlu0 %2992
  %v2994 = vsel %vm338, %v2989, 0.0
  %2995 = vadd.xlane.f32.xlu0 %v2994
  %v2996 = vpop.xlane.xlu0 %2995
  %v2997 = vsel %vm338, %v2990, 0.0
  %2998 = vadd.xlane.f32.xlu0 %v2997
  %v2999 = vpop.xlane.xlu0 %2998
  %v3000 = vrcp.pop %v2993
  %v3001 = vmul.f32 %v2988, %v3000
  %v3002 = vrcp.pop %v2996
  %v3003 = vmul.f32 %v2989, %v3002
  %v3004 = vrcp.pop %v2999
  %v3005 = vmul.f32 %v2990, %v3004
  %3006 = vxpose.xlu0.b32.start [1/16] %v3001, 128
  %3007 = vxpose.xlu0.b32.cont [2/16] %v3003, 128
  %3008 = vxpose.xlu0.b32.cont [3/16] %v3005, 128
  %3009 = vxpose.xlu0.b32.cont [4/16] 0.0, 128
  %3010 = vxpose.xlu0.b32.cont [5/16] 0.0, 128
  %3011 = vxpose.xlu0.b32.cont [6/16] 0.0, 128
  %3012 = vxpose.xlu0.b32.cont [7/16] 0.0, 128
  %3013 = vxpose.xlu0.b32.cont [8/16] 0.0, 128
  %3014 = vxpose.xlu0.b32.cont [9/16] 0.0, 128
  %3015 = vxpose.xlu0.b32.cont [10/16] 0.0, 128
  %3016 = vxpose.xlu0.b32.cont [11/16] 0.0, 128
  %3017 = vxpose.xlu0.b32.cont [12/16] 0.0, 128
  %3018 = vxpose.xlu0.b32.cont [13/16] 0.0, 128
  %3019 = vxpose.xlu0.b32.cont [14/16] 0.0, 128
  %3020 = vxpose.xlu0.b32.cont [15/16] 0.0, 128
  %3021 = vxpose.xlu0.b32.end [16/16] 0.0, 128
  %v3022 = vpop.trf.xlu0
  %v3023 = vpop.trf.xlu0
  %v3024 = vpop.trf.xlu0
  %v3025 = vpop.trf.xlu0
  %v3026 = vpop.trf.xlu0
  %v3027 = vpop.trf.xlu0
  %v3028 = vpop.trf.xlu0
  %v3029 = vpop.trf.xlu0
  %v3030 = vpop.trf.xlu0
  %v3031 = vpop.trf.xlu0
  %v3032 = vpop.trf.xlu0
  %v3033 = vpop.trf.xlu0
  %v3034 = vpop.trf.xlu0
  %v3035 = vpop.trf.xlu0
  %v3036 = vpop.trf.xlu0
  %v3037 = vpop.trf.xlu0
  %v3038 = vadd.f32 %v3001, %v3022
  %v3039 = vadd.f32 %v3003, %v3023
  %v3040 = vadd.f32 %v3005, %v3024
  %v3041 = vmul.f32 %v3038, 0.5
  %v3042 = vmul.f32 %v3039, 0.5
  %v3043 = vmul.f32 %v3040, 0.5
  %v3044 = vsel %vm338, %v3041, -inf
  %v3045 = vsel %vm338, %v3042, -inf
  %v3046 = vsel %vm338, %v3043, -inf
  %v3047 = vmax.f32 %v3044, %v3045
  %v3048 = vmax.f32 %v3047, %v3046
  %v3049 = vrot.slane %v3048, 4
  %v3050 = vmax.f32 %v3048, %v3049
  %v3051 = vrot.slane %v3050, 2
  %v3052 = vmax.f32 %v3050, %v3051
  %v3053 = vrot.slane %v3052, 1
  %v3054 = vmax.f32 %v3052, %v3053
  %v3055 = vmul.f32 %v3054, 0.2
  %v3056 = vsub.f32 %v3041, %v3055
  %v3057 = vsub.f32 %v3042, %v3055
  %v3058 = vsub.f32 %v3043, %v3055
  %v3059 = vmax.f32 %v3056, 0.0
  %v3060 = vmax.f32 %v3057, 0.0
  %v3061 = vmax.f32 %v3058, 0.0
  %v3062 = vsel %vm338, %v3059, 0.0
  %3063 = vadd.xlane.f32.xlu0 %v3062
  %v3064 = vpop.xlane.xlu0 %3063
  %v3065 = vsel %vm338, %v3060, 0.0
  %3066 = vadd.xlane.f32.xlu0 %v3065
  %v3067 = vpop.xlane.xlu0 %3066
  %v3068 = vsel %vm338, %v3061, 0.0
  %3069 = vadd.xlane.f32.xlu0 %v3068
  %v3070 = vpop.xlane.xlu0 %3069
  %v3071 = vrcp.pop %v3064
  %v3072 = vmul.f32 %v3059, %v3071
  %v3073 = vrcp.pop %v3067
  %v3074 = vmul.f32 %v3060, %v3073
  %v3075 = vrcp.pop %v3070
  %v3076 = vmul.f32 %v3061, %v3075
  %v3077 = vsel %vm338, %v2222, 0.0
  %v3078 = vsel %vm338, %v2223, 0.0
  %v3079 = vadd.f32 %v3077, %v3078
  %v3080 = vsel %vm338, %v2224, 0.0
  %v3081 = vadd.f32 %v3079, %v3080
  %v3082 = vrot.slane %v3081, 4
  %v3083 = vadd.f32 %v3081, %v3082
  %v3084 = vrot.slane %v3083, 2
  %v3085 = vadd.f32 %v3083, %v3084
  %v3086 = vrot.slane %v3085, 1
  %v3087 = vadd.f32 %v3085, %v3086
  %v3088 = vrcp.pop %v3087
  %v3089 = vmul.f32 %v2222, %v3088
  %v3090 = vmul.f32 %v2223, %v3088
  %v3091 = vmul.f32 %v2224, %v3088
  %v3092 = vsel %vm338, %v3089, 0.0
  %3093 = vadd.xlane.f32.xlu0 %v3092
  %v3094 = vpop.xlane.xlu0 %3093
  %v3095 = vsel %vm338, %v3090, 0.0
  %3096 = vadd.xlane.f32.xlu0 %v3095
  %v3097 = vpop.xlane.xlu0 %3096
  %v3098 = vsel %vm338, %v3091, 0.0
  %3099 = vadd.xlane.f32.xlu0 %v3098
  %v3100 = vpop.xlane.xlu0 %3099
  %v3101 = vrcp.pop %v3094
  %v3102 = vmul.f32 %v3089, %v3101
  %v3103 = vrcp.pop %v3097
  %v3104 = vmul.f32 %v3090, %v3103
  %v3105 = vrcp.pop %v3100
  %v3106 = vmul.f32 %v3091, %v3105
  %3107 = vxpose.xlu0.b32.start [1/16] %v3102, 128
  %3108 = vxpose.xlu0.b32.cont [2/16] %v3104, 128
  %3109 = vxpose.xlu0.b32.cont [3/16] %v3106, 128
  %3110 = vxpose.xlu0.b32.cont [4/16] 0.0, 128
  %3111 = vxpose.xlu0.b32.cont [5/16] 0.0, 128
  %3112 = vxpose.xlu0.b32.cont [6/16] 0.0, 128
  %3113 = vxpose.xlu0.b32.cont [7/16] 0.0, 128
  %3114 = vxpose.xlu0.b32.cont [8/16] 0.0, 128
  %3115 = vxpose.xlu0.b32.cont [9/16] 0.0, 128
  %3116 = vxpose.xlu0.b32.cont [10/16] 0.0, 128
  %3117 = vxpose.xlu0.b32.cont [11/16] 0.0, 128
  %3118 = vxpose.xlu0.b32.cont [12/16] 0.0, 128
  %3119 = vxpose.xlu0.b32.cont [13/16] 0.0, 128
  %3120 = vxpose.xlu0.b32.cont [14/16] 0.0, 128
  %3121 = vxpose.xlu0.b32.cont [15/16] 0.0, 128
  %3122 = vxpose.xlu0.b32.end [16/16] 0.0, 128
  %v3123 = vpop.trf.xlu0
  %v3124 = vpop.trf.xlu0
  %v3125 = vpop.trf.xlu0
  %v3126 = vpop.trf.xlu0
  %v3127 = vpop.trf.xlu0
  %v3128 = vpop.trf.xlu0
  %v3129 = vpop.trf.xlu0
  %v3130 = vpop.trf.xlu0
  %v3131 = vpop.trf.xlu0
  %v3132 = vpop.trf.xlu0
  %v3133 = vpop.trf.xlu0
  %v3134 = vpop.trf.xlu0
  %v3135 = vpop.trf.xlu0
  %v3136 = vpop.trf.xlu0
  %v3137 = vpop.trf.xlu0
  %v3138 = vpop.trf.xlu0
  %v3139 = vadd.f32 %v3102, %v3123
  %v3140 = vadd.f32 %v3104, %v3124
  %v3141 = vadd.f32 %v3106, %v3125
  %v3142 = vmul.f32 %v3139, 0.5
  %v3143 = vmul.f32 %v3140, 0.5
  %v3144 = vmul.f32 %v3141, 0.5
  %v3145 = vsel %vm338, %v3142, -inf
  %v3146 = vsel %vm338, %v3143, -inf
  %v3147 = vsel %vm338, %v3144, -inf
  %v3148 = vmax.f32 %v3145, %v3146
  %v3149 = vmax.f32 %v3148, %v3147
  %v3150 = vrot.slane %v3149, 4
  %v3151 = vmax.f32 %v3149, %v3150
  %v3152 = vrot.slane %v3151, 2
  %v3153 = vmax.f32 %v3151, %v3152
  %v3154 = vrot.slane %v3153, 1
  %v3155 = vmax.f32 %v3153, %v3154
  %v3156 = vmul.f32 %v3155, 0.2
  %v3157 = vsub.f32 %v3142, %v3156
  %v3158 = vsub.f32 %v3143, %v3156
  %v3159 = vsub.f32 %v3144, %v3156
  %v3160 = vmax.f32 %v3157, 0.0
  %v3161 = vmax.f32 %v3158, 0.0
  %v3162 = vmax.f32 %v3159, 0.0
  %v3163 = vsel %vm338, %v3160, 0.0
  %3164 = vadd.xlane.f32.xlu0 %v3163
  %v3165 = vpop.xlane.xlu0 %3164
  %v3166 = vsel %vm338, %v3161, 0.0
  %3167 = vadd.xlane.f32.xlu0 %v3166
  %v3168 = vpop.xlane.xlu0 %3167
  %v3169 = vsel %vm338, %v3162, 0.0
  %3170 = vadd.xlane.f32.xlu0 %v3169
  %v3171 = vpop.xlane.xlu0 %3170
  %v3172 = vrcp.pop %v3165
  %v3173 = vmul.f32 %v3160, %v3172
  %v3174 = vrcp.pop %v3168
  %v3175 = vmul.f32 %v3161, %v3174
  %v3176 = vrcp.pop %v3171
  %v3177 = vmul.f32 %v3162, %v3176
  %v3178 = vld [vmem:[%s13] sm:$0x1]
  %v3179 = vld [vmem:[%s14] sm:$0x1]
  %v3180 = vsel %vm123, %v179, 0.0
  %3181 = vadd.xlane.f32.xlu0 %v3180
  %v3182 = vpop.xlane.xlu0 %3181
  %v3183 = vsel %vm123, %v180, 0.0
  %3184 = vadd.xlane.f32.xlu0 %v3183
  %v3185 = vpop.xlane.xlu0 %3184
  %v3186 = vsel %vm123, %v181, 0.0
  %3187 = vadd.xlane.f32.xlu0 %v3186
  %v3188 = vpop.xlane.xlu0 %3187
  %v3189 = vmul.f32 %v3182, %v133
  %v3190 = vmul.f32 %v3185, %v133
  %v3191 = vmul.f32 %v3188, %v133
  %v3192 = vsub.f32 %v179, %v3189
  %v3193 = vsub.f32 %v180, %v3190
  %v3194 = vsub.f32 %v181, %v3191
  %v3195 = vmul.f32 %v3192, %v3192
  %v3196 = vmul.f32 %v3193, %v3193
  %v3197 = vmul.f32 %v3194, %v3194
  %v3198 = vsel %vm123, %v3195, 0.0
  %3199 = vadd.xlane.f32.xlu0 %v3198
  %v3200 = vpop.xlane.xlu0 %3199
  %v3201 = vsel %vm123, %v3196, 0.0
  %3202 = vadd.xlane.f32.xlu0 %v3201
  %v3203 = vpop.xlane.xlu0 %3202
  %v3204 = vsel %vm123, %v3197, 0.0
  %3205 = vadd.xlane.f32.xlu0 %v3204
  %v3206 = vpop.xlane.xlu0 %3205
  %v3207 = vmul.f32 %v3200, %v133
  %v3208 = vmul.f32 %v3203, %v133
  %v3209 = vmul.f32 %v3206, %v133
  %v3210 = vadd.f32 %v3207, 1e-05
  %v3211 = vadd.f32 %v3208, 1e-05
  %v3212 = vadd.f32 %v3209, 1e-05
  %v3213 = vrsqrt.pop %v3210
  %v3214 = vrsqrt.pop %v3211
  %v3215 = vrsqrt.pop %v3212
  %v3216 = vmul.f32 %v3192, %v3213
  %v3217 = vmul.f32 %v3193, %v3214
  %v3218 = vmul.f32 %v3194, %v3215
  %v3220 = vlaneseq
  %v3221 = vshrl.u32 %v3220, 7
  %v3222 = vsub.s32 0, %v3221
  %v3223 = vrot.slane %v3178, %v3222
  %v3225 = vmul.f32 %v3216, %v3223
  %v3226 = vmul.f32 %v3217, %v3223
  %v3227 = vmul.f32 %v3218, %v3223
  %v3229 = vlaneseq
  %v3230 = vshrl.u32 %v3229, 7
  %v3231 = vsub.s32 0, %v3230
  %v3232 = vrot.slane %v3179, %v3231
  %v3234 = vadd.f32 %v3225, %v3232
  %v3235 = vadd.f32 %v3226, %v3232
  %v3236 = vadd.f32 %v3227, %v3232
  %v3237 = vld [vmem:[%s15] sm:$0xf]
  %v3238 = vld [vmem:[%s15 + $0x4] sm:$0xf]
  %v3239 = vld [vmem:[%s15 + $0x8] sm:$0xf]
  %v3240 = vld [vmem:[%s15 + $0xc] sm:$0xf]
  %v3241 = vpack.c.bf16 %v3235, %v3234
  %v3242 = vpack.c.bf16 %v3236, %v3236
  %v3243 = vld [vmem:[%s16] sm:$0x1]
  %v3245 = vlaneseq
  %v3246 = vshrl.u32 %v3245, 7
  %v3247 = vsub.s32 0, %v3246
  %v3248 = vrot.slane %v3243, %v3247
  %v3254 = vunpack.c.l.b16 %v3237
  %v3255 = vunpack.c.l.b16 %v3238
  %v3256 = vunpack.c.l.b16 %v3239
  %v3257 = vunpack.c.l.b16 %v3240
  %v3258 = vpack.c.b16 %v3255, %v3254
  %v3259 = vpack.c.b16 %v3257, %v3256
  %v3263 = vsel %vm123, %v3241, 0
  %v3266 = vsel %vm123, %v3242, 0
  %3268 = vmatprep.subr.bf16.mxu0 0
  %3269 = vmatpush1.bf16.msra.mxu0 0
  %3270 = vmatprep.subr.bf16.mxu0 0
  %3271 = vmatpush1.bf16.msra.mxu0 0
  %3272 = vmatprep.subr.bf16.mxu0 0
  %3273 = vmatpush1.bf16.msra.mxu0 0
  %3274 = vmatprep.subr.bf16.mxu0 0
  %3275 = vmatpush1.bf16.msra.mxu0 0
  %3276 = vmatprep.subr.bf16.mxu0 0
  %3277 = vmatpush1.bf16.msra.mxu0 0
  %3278 = vmatprep.subr.bf16.mxu0 0
  %3279 = vmatpush1.bf16.msra.mxu0 0
  %3280 = vmatprep.subr.bf16.mxu0 0
  %3281 = vmatpush1.bf16.msra.mxu0 %v3259
  %3282 = vmatprep.subr.bf16.mxu0 0
  %3283 = vmatpush1.bf16.msra.mxu0 %v3258
  %3284 = vmatprep.subr.bf16.mxu0 0
  %3285 = vmatpush2.bf16.msra.mxu0 0
  %3286 = vmatprep.subr.bf16.mxu0 0
  %3287 = vmatpush2.bf16.msra.mxu0 0
  %3288 = vmatprep.subr.bf16.mxu0 0
  %3289 = vmatpush2.bf16.msra.mxu0 0
  %3290 = vmatprep.subr.bf16.mxu0 0
  %3291 = vmatpush2.bf16.msra.mxu0 0
  %3292 = vmatprep.subr.bf16.mxu0 0
  %3293 = vmatpush2.bf16.msra.mxu0 0
  %3294 = vmatprep.subr.bf16.mxu0 0
  %3295 = vmatpush2.bf16.msra.mxu0 0
  %3296 = vmatprep.subr.bf16.mxu0 0
  %3297 = vmatpush2.bf16.msra.mxu0 0
  %3298 = vmatprep.subr.bf16.mxu0 0
  %3299 = vmatpush2.bf16.msra.mxu0 0
  %3300 = vmatprep.mubr.bf16.mxu0 0
  %3301 = vmatmul.mubr.bf16.gmra.mxu0 %v3263
  %v3302 = vpop.f32.mrf.mxu0
  %v3303 = vadd.f32 %v3248, %v3302
  %v3304 = vpop.f32.mrf.mxu0
  %v3305 = vpop.f32.mrf.mxu0
  %v3306 = vadd.f32 %v3248, %v3305
  %v3307 = vpop.f32.mrf.mxu0
  %3308 = vmatprep.mubr.bf16.mxu0 0
  %3309 = vmatmul.mubr.bf16.gmra.mxu0 %v3266
  %v3310 = vpop.f32.mrf.mxu0
  %v3311 = vadd.f32 %v3248, %v3310
  %v3312 = vpop.f32.mrf.mxu0
  %v3313 = vpop.f32.mrf.mxu0
  %v3314 = vpop.f32.mrf.mxu0
  %3315 = vdwg.mxu0
  %v3316 = vpack.c.bf16 %v2872, %v2870
  %v3317 = vpack.c.bf16 %v2874, %v2874
  %v3318 = vpack.c.bf16 %v3306, %v3303
  %v3319 = vpack.c.bf16 %v3311, %v3311
  %v3321 = vsel %vm338, %v3316, 0
  %v3324 = vsel %vm338, %v3317, 0
  %v3327 = vsel %vm391, %v3319, 0
  %3329 = vmatprep.subr.bf16.mxu0 0
  %3330 = vmatpush1.bf16.msra.mxu0 0
  %3331 = vmatprep.subr.bf16.mxu0 0
  %3332 = vmatpush1.bf16.msra.mxu0 0
  %3333 = vmatprep.subr.bf16.mxu0 0
  %3334 = vmatpush1.bf16.msra.mxu0 0
  %3335 = vmatprep.subr.bf16.mxu0 0
  %3336 = vmatpush1.bf16.msra.mxu0 0
  %3337 = vmatprep.subr.bf16.mxu0 0
  %3338 = vmatpush1.bf16.msra.mxu0 0
  %3339 = vmatprep.subr.bf16.mxu0 0
  %3340 = vmatpush1.bf16.msra.mxu0 0
  %3341 = vmatprep.subr.bf16.mxu0 0
  %3342 = vmatpush1.bf16.msra.mxu0 %v3327
  %3343 = vmatprep.subr.bf16.mxu0 0
  %3344 = vmatpush1.bf16.msra.mxu0 %v3318
  %3345 = vmatprep.subr.bf16.mxu0 0
  %3346 = vmatpush2.bf16.msra.mxu0 0
  %3347 = vmatprep.subr.bf16.mxu0 0
  %3348 = vmatpush2.bf16.msra.mxu0 0
  %3349 = vmatprep.subr.bf16.mxu0 0
  %3350 = vmatpush2.bf16.msra.mxu0 0
  %3351 = vmatprep.subr.bf16.mxu0 0
  %3352 = vmatpush2.bf16.msra.mxu0 0
  %3353 = vmatprep.subr.bf16.mxu0 0
  %3354 = vmatpush2.bf16.msra.mxu0 0
  %3355 = vmatprep.subr.bf16.mxu0 0
  %3356 = vmatpush2.bf16.msra.mxu0 0
  %3357 = vmatprep.subr.bf16.mxu0 0
  %3358 = vmatpush2.bf16.msra.mxu0 0
  %3359 = vmatprep.subr.bf16.mxu0 0
  %3360 = vmatpush2.bf16.msra.mxu0 0
  %3361 = vmatprep.mubr.bf16.mxu0 0
  %3362 = vmatmul.mubr.bf16.gmra.mxu0 %v3321
  %v3363 = vpop.f32.mrf.mxu0
  %v3364 = vadd.f32 0.0, %v3363
  %v3365 = vpop.f32.mrf.mxu0
  %v3366 = vpop.f32.mrf.mxu0
  %v3367 = vadd.f32 0.0, %v3366
  %v3368 = vpop.f32.mrf.mxu0
  %3369 = vmatprep.mubr.bf16.mxu0 0
  %3370 = vmatmul.mubr.bf16.gmra.mxu0 %v3324
  %v3371 = vpop.f32.mrf.mxu0
  %v3372 = vadd.f32 0.0, %v3371
  %v3373 = vpop.f32.mrf.mxu0
  %v3374 = vpop.f32.mrf.mxu0
  %v3375 = vpop.f32.mrf.mxu0
  %3376 = vdwg.mxu0
  %v3377 = vpack.c.bf16 %v2973, %v2971
  %v3378 = vpack.c.bf16 %v2975, %v2975
  %3381 = vrot.lane.b32.xlu0 %v3318, 120
  %v3382 = vpop.permute.xlu0 %3381
  %3383 = vrot.lane.b32.xlu0 %v3319, 120
  %v3384 = vpop.permute.xlu0 %3383
  %v3387 = vsel %vm338, %v3377, 0
  %v3390 = vsel %vm338, %v3378, 0
  %v3393 = vsel %vm391, %v3384, 0
  %3395 = vmatprep.subr.bf16.mxu0 0
  %3396 = vmatpush1.bf16.msra.mxu0 0
  %3397 = vmatprep.subr.bf16.mxu0 0
  %3398 = vmatpush1.bf16.msra.mxu0 0
  %3399 = vmatprep.subr.bf16.mxu0 0
  %3400 = vmatpush1.bf16.msra.mxu0 0
  %3401 = vmatprep.subr.bf16.mxu0 0
  %3402 = vmatpush1.bf16.msra.mxu0 0
  %3403 = vmatprep.subr.bf16.mxu0 0
  %3404 = vmatpush1.bf16.msra.mxu0 0
  %3405 = vmatprep.subr.bf16.mxu0 0
  %3406 = vmatpush1.bf16.msra.mxu0 0
  %3407 = vmatprep.subr.bf16.mxu0 0
  %3408 = vmatpush1.bf16.msra.mxu0 %v3393
  %3409 = vmatprep.subr.bf16.mxu0 0
  %3410 = vmatpush1.bf16.msra.mxu0 %v3382
  %3411 = vmatprep.subr.bf16.mxu0 0
  %3412 = vmatpush2.bf16.msra.mxu0 0
  %3413 = vmatprep.subr.bf16.mxu0 0
  %3414 = vmatpush2.bf16.msra.mxu0 0
  %3415 = vmatprep.subr.bf16.mxu0 0
  %3416 = vmatpush2.bf16.msra.mxu0 0
  %3417 = vmatprep.subr.bf16.mxu0 0
  %3418 = vmatpush2.bf16.msra.mxu0 0
  %3419 = vmatprep.subr.bf16.mxu0 0
  %3420 = vmatpush2.bf16.msra.mxu0 0
  %3421 = vmatprep.subr.bf16.mxu0 0
  %3422 = vmatpush2.bf16.msra.mxu0 0
  %3423 = vmatprep.subr.bf16.mxu0 0
  %3424 = vmatpush2.bf16.msra.mxu0 0
  %3425 = vmatprep.subr.bf16.mxu0 0
  %3426 = vmatpush2.bf16.msra.mxu0 0
  %3427 = vmatprep.mubr.bf16.mxu0 0
  %3428 = vmatmul.mubr.bf16.gmra.mxu0 %v3387
  %v3429 = vpop.f32.mrf.mxu0
  %v3430 = vadd.f32 0.0, %v3429
  %v3431 = vpop.f32.mrf.mxu0
  %v3432 = vpop.f32.mrf.mxu0
  %v3433 = vadd.f32 0.0, %v3432
  %v3434 = vpop.f32.mrf.mxu0
  %3435 = vmatprep.mubr.bf16.mxu0 0
  %3436 = vmatmul.mubr.bf16.gmra.mxu0 %v3390
  %v3437 = vpop.f32.mrf.mxu0
  %v3438 = vadd.f32 0.0, %v3437
  %v3439 = vpop.f32.mrf.mxu0
  %v3440 = vpop.f32.mrf.mxu0
  %v3441 = vpop.f32.mrf.mxu0
  %3442 = vdwg.mxu0
  %v3443 = vpack.c.bf16 %v3074, %v3072
  %v3444 = vpack.c.bf16 %v3076, %v3076
  %3445 = vrot.lane.b32.xlu0 %v3318, 112
  %v3446 = vpop.permute.xlu0 %3445
  %3447 = vrot.lane.b32.xlu0 %v3319, 112
  %v3448 = vpop.permute.xlu0 %3447
  %v3451 = vsel %vm338, %v3443, 0
  %v3454 = vsel %vm338, %v3444, 0
  %v3457 = vsel %vm391, %v3448, 0
  %3459 = vmatprep.subr.bf16.mxu0 0
  %3460 = vmatpush1.bf16.msra.mxu0 0
  %3461 = vmatprep.subr.bf16.mxu0 0
  %3462 = vmatpush1.bf16.msra.mxu0 0
  %3463 = vmatprep.subr.bf16.mxu0 0
  %3464 = vmatpush1.bf16.msra.mxu0 0
  %3465 = vmatprep.subr.bf16.mxu0 0
  %3466 = vmatpush1.bf16.msra.mxu0 0
  %3467 = vmatprep.subr.bf16.mxu0 0
  %3468 = vmatpush1.bf16.msra.mxu0 0
  %3469 = vmatprep.subr.bf16.mxu0 0
  %3470 = vmatpush1.bf16.msra.mxu0 0
  %3471 = vmatprep.subr.bf16.mxu0 0
  %3472 = vmatpush1.bf16.msra.mxu0 %v3457
  %3473 = vmatprep.subr.bf16.mxu0 0
  %3474 = vmatpush1.bf16.msra.mxu0 %v3446
  %3475 = vmatprep.subr.bf16.mxu0 0
  %3476 = vmatpush2.bf16.msra.mxu0 0
  %3477 = vmatprep.subr.bf16.mxu0 0
  %3478 = vmatpush2.bf16.msra.mxu0 0
  %3479 = vmatprep.subr.bf16.mxu0 0
  %3480 = vmatpush2.bf16.msra.mxu0 0
  %3481 = vmatprep.subr.bf16.mxu0 0
  %3482 = vmatpush2.bf16.msra.mxu0 0
  %3483 = vmatprep.subr.bf16.mxu0 0
  %3484 = vmatpush2.bf16.msra.mxu0 0
  %3485 = vmatprep.subr.bf16.mxu0 0
  %3486 = vmatpush2.bf16.msra.mxu0 0
  %3487 = vmatprep.subr.bf16.mxu0 0
  %3488 = vmatpush2.bf16.msra.mxu0 0
  %3489 = vmatprep.subr.bf16.mxu0 0
  %3490 = vmatpush2.bf16.msra.mxu0 0
  %3491 = vmatprep.mubr.bf16.mxu0 0
  %3492 = vmatmul.mubr.bf16.gmra.mxu0 %v3451
  %v3493 = vpop.f32.mrf.mxu0
  %v3494 = vadd.f32 0.0, %v3493
  %v3495 = vpop.f32.mrf.mxu0
  %v3496 = vpop.f32.mrf.mxu0
  %v3497 = vadd.f32 0.0, %v3496
  %v3498 = vpop.f32.mrf.mxu0
  %3499 = vmatprep.mubr.bf16.mxu0 0
  %3500 = vmatmul.mubr.bf16.gmra.mxu0 %v3454
  %v3501 = vpop.f32.mrf.mxu0
  %v3502 = vadd.f32 0.0, %v3501
  %v3503 = vpop.f32.mrf.mxu0
  %v3504 = vpop.f32.mrf.mxu0
  %v3505 = vpop.f32.mrf.mxu0
  %3506 = vdwg.mxu0
  %v3507 = vpack.c.bf16 %v3175, %v3173
  %v3508 = vpack.c.bf16 %v3177, %v3177
  %3509 = vrot.lane.b32.xlu0 %v3318, 104
  %v3510 = vpop.permute.xlu0 %3509
  %3511 = vrot.lane.b32.xlu0 %v3319, 104
  %v3512 = vpop.permute.xlu0 %3511
  %v3515 = vsel %vm338, %v3507, 0
  %v3518 = vsel %vm338, %v3508, 0
  %v3521 = vsel %vm391, %v3512, 0
  %3523 = vmatprep.subr.bf16.mxu0 0
  %3524 = vmatpush1.bf16.msra.mxu0 0
  %3525 = vmatprep.subr.bf16.mxu0 0
  %3526 = vmatpush1.bf16.msra.mxu0 0
  %3527 = vmatprep.subr.bf16.mxu0 0
  %3528 = vmatpush1.bf16.msra.mxu0 0
  %3529 = vmatprep.subr.bf16.mxu0 0
  %3530 = vmatpush1.bf16.msra.mxu0 0
  %3531 = vmatprep.subr.bf16.mxu0 0
  %3532 = vmatpush1.bf16.msra.mxu0 0
  %3533 = vmatprep.subr.bf16.mxu0 0
  %3534 = vmatpush1.bf16.msra.mxu0 0
  %3535 = vmatprep.subr.bf16.mxu0 0
  %3536 = vmatpush1.bf16.msra.mxu0 %v3521
  %3537 = vmatprep.subr.bf16.mxu0 0
  %3538 = vmatpush1.bf16.msra.mxu0 %v3510
  %3539 = vmatprep.subr.bf16.mxu0 0
  %3540 = vmatpush2.bf16.msra.mxu0 0
  %3541 = vmatprep.subr.bf16.mxu0 0
  %3542 = vmatpush2.bf16.msra.mxu0 0
  %3543 = vmatprep.subr.bf16.mxu0 0
  %3544 = vmatpush2.bf16.msra.mxu0 0
  %3545 = vmatprep.subr.bf16.mxu0 0
  %3546 = vmatpush2.bf16.msra.mxu0 0
  %3547 = vmatprep.subr.bf16.mxu0 0
  %3548 = vmatpush2.bf16.msra.mxu0 0
  %3549 = vmatprep.subr.bf16.mxu0 0
  %3550 = vmatpush2.bf16.msra.mxu0 0
  %3551 = vmatprep.subr.bf16.mxu0 0
  %3552 = vmatpush2.bf16.msra.mxu0 0
  %3553 = vmatprep.subr.bf16.mxu0 0
  %3554 = vmatpush2.bf16.msra.mxu0 0
  %3555 = vmatprep.mubr.bf16.mxu0 0
  %3556 = vmatmul.mubr.bf16.gmra.mxu0 %v3515
  %v3557 = vpop.f32.mrf.mxu0
  %v3558 = vadd.f32 0.0, %v3557
  %v3559 = vpop.f32.mrf.mxu0
  %v3560 = vpop.f32.mrf.mxu0
  %v3561 = vadd.f32 0.0, %v3560
  %v3562 = vpop.f32.mrf.mxu0
  %3563 = vmatprep.mubr.bf16.mxu0 0
  %3564 = vmatmul.mubr.bf16.gmra.mxu0 %v3518
  %v3565 = vpop.f32.mrf.mxu0
  %v3566 = vadd.f32 0.0, %v3565
  %v3567 = vpop.f32.mrf.mxu0
  %v3568 = vpop.f32.mrf.mxu0
  %v3569 = vpop.f32.mrf.mxu0
  %3570 = vdwg.mxu0
  %3574 = vrot.lane.b32.xlu0 %v3430, 8
  %v3575 = vpop.permute.xlu0 %3574
  %3576 = vrot.lane.b32.xlu0 %v3433, 8
  %v3577 = vpop.permute.xlu0 %3576
  %3578 = vrot.lane.b32.xlu0 %v3438, 8
  %v3579 = vpop.permute.xlu0 %3578
  %3586 = vrot.lane.b32.xlu0 %v3494, 16
  %v3587 = vpop.permute.xlu0 %3586
  %3588 = vrot.lane.b32.xlu0 %v3497, 16
  %v3589 = vpop.permute.xlu0 %3588
  %3590 = vrot.lane.b32.xlu0 %v3502, 16
  %v3591 = vpop.permute.xlu0 %3590
  %3598 = vrot.lane.b32.xlu0 %v3558, 24
  %v3599 = vpop.permute.xlu0 %3598
  %3600 = vrot.lane.b32.xlu0 %v3561, 24
  %v3601 = vpop.permute.xlu0 %3600
  %3602 = vrot.lane.b32.xlu0 %v3566, 24
  %v3603 = vpop.permute.xlu0 %3602
  %v3607 = vsel %vm274, %v3364, %v3575
  %v3608 = vsel %vm274, %v3367, %v3577
  %v3609 = vsel %vm274, %v3372, %v3579
  %v3610 = vsel %vm1006, %v3607, %v3587
  %v3611 = vsel %vm1006, %v3608, %v3589
  %v3612 = vsel %vm1006, %v3609, %v3591
  %v3613 = vsel %vm338, %v3610, %v3599
  %v3614 = vsel %vm338, %v3611, %v3601
  %v3615 = vsel %vm338, %v3612, %v3603
  %v3616 = vld [vmem:[%s17] sm:$0xf]
  %v3617 = vld [vmem:[%s17 + $0x4] sm:$0xf]
  %v3618 = vld [vmem:[%s17 + $0x8] sm:$0xf]
  %v3619 = vld [vmem:[%s17 + $0xc] sm:$0xf]
  %v3620 = vpack.c.bf16 %v3614, %v3613
  %v3621 = vpack.c.bf16 %v3615, %v3615
  %v3622 = vld [vmem:[%s18] sm:$0x1]
  %v3624 = vlaneseq
  %v3625 = vshrl.u32 %v3624, 7
  %v3626 = vsub.s32 0, %v3625
  %v3627 = vrot.slane %v3622, %v3626
  %v3633 = vunpack.c.l.b16 %v3616
  %v3634 = vunpack.c.l.b16 %v3617
  %v3635 = vunpack.c.l.b16 %v3618
  %v3636 = vunpack.c.l.b16 %v3619
  %v3637 = vpack.c.b16 %v3634, %v3633
  %v3638 = vpack.c.b16 %v3636, %v3635
  %v3642 = vsel %vm123, %v3620, 0
  %v3645 = vsel %vm123, %v3621, 0
  %3647 = vmatprep.subr.bf16.mxu0 0
  %3648 = vmatpush1.bf16.msra.mxu0 0
  %3649 = vmatprep.subr.bf16.mxu0 0
  %3650 = vmatpush1.bf16.msra.mxu0 0
  %3651 = vmatprep.subr.bf16.mxu0 0
  %3652 = vmatpush1.bf16.msra.mxu0 0
  %3653 = vmatprep.subr.bf16.mxu0 0
  %3654 = vmatpush1.bf16.msra.mxu0 0
  %3655 = vmatprep.subr.bf16.mxu0 0
  %3656 = vmatpush1.bf16.msra.mxu0 0
  %3657 = vmatprep.subr.bf16.mxu0 0
  %3658 = vmatpush1.bf16.msra.mxu0 0
  %3659 = vmatprep.subr.bf16.mxu0 0
  %3660 = vmatpush1.bf16.msra.mxu0 %v3638
  %3661 = vmatprep.subr.bf16.mxu0 0
  %3662 = vmatpush1.bf16.msra.mxu0 %v3637
  %3663 = vmatprep.subr.bf16.mxu0 0
  %3664 = vmatpush2.bf16.msra.mxu0 0
  %3665 = vmatprep.subr.bf16.mxu0 0
  %3666 = vmatpush2.bf16.msra.mxu0 0
  %3667 = vmatprep.subr.bf16.mxu0 0
  %3668 = vmatpush2.bf16.msra.mxu0 0
  %3669 = vmatprep.subr.bf16.mxu0 0
  %3670 = vmatpush2.bf16.msra.mxu0 0
  %3671 = vmatprep.subr.bf16.mxu0 0
  %3672 = vmatpush2.bf16.msra.mxu0 0
  %3673 = vmatprep.subr.bf16.mxu0 0
  %3674 = vmatpush2.bf16.msra.mxu0 0
  %3675 = vmatprep.subr.bf16.mxu0 0
  %3676 = vmatpush2.bf16.msra.mxu0 0
  %3677 = vmatprep.subr.bf16.mxu0 0
  %3678 = vmatpush2.bf16.msra.mxu0 0
  %3679 = vmatprep.mubr.bf16.mxu0 0
  %3680 = vmatmul.mubr.bf16.gmra.mxu0 %v3642
  %v3681 = vpop.f32.mrf.mxu0
  %v3682 = vadd.f32 %v3627, %v3681
  %v3683 = vpop.f32.mrf.mxu0
  %v3684 = vpop.f32.mrf.mxu0
  %v3685 = vadd.f32 %v3627, %v3684
  %v3686 = vpop.f32.mrf.mxu0
  %3687 = vmatprep.mubr.bf16.mxu0 0
  %3688 = vmatmul.mubr.bf16.gmra.mxu0 %v3645
  %v3689 = vpop.f32.mrf.mxu0
  %v3690 = vadd.f32 %v3627, %v3689
  %v3691 = vpop.f32.mrf.mxu0
  %v3692 = vpop.f32.mrf.mxu0
  %v3693 = vpop.f32.mrf.mxu0
  %3694 = vdwg.mxu0
  %v3695 = vsub.f32 %v3682, %v179
  %v3696 = vsub.f32 %v3685, %v180
  %v3697 = vsub.f32 %v3690, %v181
  %v3698 = vld [vmem:[%s19] sm:$0x1]
  %v3699 = vld [vmem:[%s20] sm:$0x1]
  %v3700 = vsel %vm123, %v3695, 0.0
  %3701 = vadd.xlane.f32.xlu0 %v3700
  %v3702 = vpop.xlane.xlu0 %3701
  %v3703 = vsel %vm123, %v3696, 0.0
  %3704 = vadd.xlane.f32.xlu0 %v3703
  %v3705 = vpop.xlane.xlu0 %3704
  %v3706 = vsel %vm123, %v3697, 0.0
  %3707 = vadd.xlane.f32.xlu0 %v3706
  %v3708 = vpop.xlane.xlu0 %3707
  %v3709 = vmul.f32 %v3702, %v133
  %v3710 = vmul.f32 %v3705, %v133
  %v3711 = vmul.f32 %v3708, %v133
  %v3712 = vsub.f32 %v3695, %v3709
  %v3713 = vsub.f32 %v3696, %v3710
  %v3714 = vsub.f32 %v3697, %v3711
  %v3715 = vmul.f32 %v3712, %v3712
  %v3716 = vmul.f32 %v3713, %v3713
  %v3717 = vmul.f32 %v3714, %v3714
  %v3718 = vsel %vm123, %v3715, 0.0
  %3719 = vadd.xlane.f32.xlu0 %v3718
  %v3720 = vpop.xlane.xlu0 %3719
  %v3721 = vsel %vm123, %v3716, 0.0
  %3722 = vadd.xlane.f32.xlu0 %v3721
  %v3723 = vpop.xlane.xlu0 %3722
  %v3724 = vsel %vm123, %v3717, 0.0
  %3725 = vadd.xlane.f32.xlu0 %v3724
  %v3726 = vpop.xlane.xlu0 %3725
  %v3727 = vmul.f32 %v3720, %v133
  %v3728 = vmul.f32 %v3723, %v133
  %v3729 = vmul.f32 %v3726, %v133
  %v3730 = vadd.f32 %v3727, 1e-05
  %v3731 = vadd.f32 %v3728, 1e-05
  %v3732 = vadd.f32 %v3729, 1e-05
  %v3733 = vrsqrt.pop %v3730
  %v3734 = vrsqrt.pop %v3731
  %v3735 = vrsqrt.pop %v3732
  %v3736 = vmul.f32 %v3712, %v3733
  %v3737 = vmul.f32 %v3713, %v3734
  %v3738 = vmul.f32 %v3714, %v3735
  %v3740 = vlaneseq
  %v3741 = vshrl.u32 %v3740, 7
  %v3742 = vsub.s32 0, %v3741
  %v3743 = vrot.slane %v3698, %v3742
  %v3745 = vmul.f32 %v3736, %v3743
  %v3746 = vmul.f32 %v3737, %v3743
  %v3747 = vmul.f32 %v3738, %v3743
  %v3749 = vlaneseq
  %v3750 = vshrl.u32 %v3749, 7
  %v3751 = vsub.s32 0, %v3750
  %v3752 = vrot.slane %v3699, %v3751
  %v3754 = vadd.f32 %v3745, %v3752
  %v3755 = vadd.f32 %v3746, %v3752
  %v3756 = vadd.f32 %v3747, %v3752
  %v3757 = vld [vmem:[%s21] sm:$0xf]
  %v3758 = vld [vmem:[%s21 + $0x4] sm:$0xf]
  %v3759 = vld [vmem:[%s21 + $0x8] sm:$0xf]
  %v3760 = vld [vmem:[%s21 + $0xc] sm:$0xf]
  %v3761 = vpack.c.bf16 %v3755, %v3754
  %v3762 = vpack.c.bf16 %v3756, %v3756
  %v3767 = vunpack.c.l.b16 %v3757
  %v3768 = vunpack.c.l.b16 %v3758
  %v3769 = vunpack.c.l.b16 %v3759
  %v3770 = vunpack.c.l.b16 %v3760
  %v3771 = vpack.c.b16 %v3768, %v3767
  %v3772 = vpack.c.b16 %v3770, %v3769
  %v3776 = vsel %vm123, %v3761, 0
  %v3779 = vsel %vm123, %v3762, 0
  %3781 = vmatprep.subr.bf16.mxu0 0
  %3782 = vmatpush1.bf16.msra.mxu0 0
  %3783 = vmatprep.subr.bf16.mxu0 0
  %3784 = vmatpush1.bf16.msra.mxu0 0
  %3785 = vmatprep.subr.bf16.mxu0 0
  %3786 = vmatpush1.bf16.msra.mxu0 0
  %3787 = vmatprep.subr.bf16.mxu0 0
  %3788 = vmatpush1.bf16.msra.mxu0 0
  %3789 = vmatprep.subr.bf16.mxu0 0
  %3790 = vmatpush1.bf16.msra.mxu0 0
  %3791 = vmatprep.subr.bf16.mxu0 0
  %3792 = vmatpush1.bf16.msra.mxu0 0
  %3793 = vmatprep.subr.bf16.mxu0 0
  %3794 = vmatpush1.bf16.msra.mxu0 %v3772
  %3795 = vmatprep.subr.bf16.mxu0 0
  %3796 = vmatpush1.bf16.msra.mxu0 %v3771
  %3797 = vmatprep.subr.bf16.mxu0 0
  %3798 = vmatpush2.bf16.msra.mxu0 0
  %3799 = vmatprep.subr.bf16.mxu0 0
  %3800 = vmatpush2.bf16.msra.mxu0 0
  %3801 = vmatprep.subr.bf16.mxu0 0
  %3802 = vmatpush2.bf16.msra.mxu0 0
  %3803 = vmatprep.subr.bf16.mxu0 0
  %3804 = vmatpush2.bf16.msra.mxu0 0
  %3805 = vmatprep.subr.bf16.mxu0 0
  %3806 = vmatpush2.bf16.msra.mxu0 0
  %3807 = vmatprep.subr.bf16.mxu0 0
  %3808 = vmatpush2.bf16.msra.mxu0 0
  %3809 = vmatprep.subr.bf16.mxu0 0
  %3810 = vmatpush2.bf16.msra.mxu0 0
  %3811 = vmatprep.subr.bf16.mxu0 0
  %3812 = vmatpush2.bf16.msra.mxu0 0
  %3813 = vmatprep.mubr.bf16.mxu0 0
  %3814 = vmatmul.mubr.bf16.gmra.mxu0 %v3776
  %v3815 = vpop.f32.mrf.mxu0
  %v3816 = vadd.f32 0.0, %v3815
  %v3817 = vpop.f32.mrf.mxu0
  %v3818 = vpop.f32.mrf.mxu0
  %v3819 = vadd.f32 0.0, %v3818
  %v3820 = vpop.f32.mrf.mxu0
  %3821 = vmatprep.mubr.bf16.mxu0 0
  %3822 = vmatmul.mubr.bf16.gmra.mxu0 %v3779
  %v3823 = vpop.f32.mrf.mxu0
  %v3824 = vadd.f32 0.0, %v3823
  %v3825 = vpop.f32.mrf.mxu0
  %v3826 = vpop.f32.mrf.mxu0
  %v3827 = vpop.f32.mrf.mxu0
  %3828 = vdwg.mxu0
  %3829 = vst.msk [vmem:[%s23] sm:$0xff] %vm1006, %v3816
  %3830 = vst.msk [vmem:[%s23 + $0x8] sm:$0xff] %vm1006, %v3819
  %3831 = vst.msk [vmem:[%s23 + $0x10] sm:$0xff] %vm1006, %v3824
  %v3832 = vmul.f32 %v3816, %v3816
  %v3833 = vmul.f32 %v3819, %v3819
  %v3834 = vmul.f32 %v3824, %v3824
  %v3835 = vsel %vm1006, %v3832, 0.0
  %3836 = vadd.xlane.f32.xlu0 %v3835
  %v3837 = vpop.xlane.xlu0 %3836
  %v3838 = vsel %vm1006, %v3833, 0.0
  %3839 = vadd.xlane.f32.xlu0 %v3838
  %v3840 = vpop.xlane.xlu0 %3839
  %v3841 = vsel %vm1006, %v3834, 0.0
  %3842 = vadd.xlane.f32.xlu0 %v3841
  %v3843 = vpop.xlane.xlu0 %3842
  %v3844 = vadd.f32 %v3837, 1e-12
  %v3845 = vadd.f32 %v3840, 1e-12
  %v3846 = vadd.f32 %v3843, 1e-12
  %v3847 = vrsqrt.pop %v3844
  %v3848 = vrsqrt.pop %v3845
  %v3849 = vrsqrt.pop %v3846
  %v3850 = vmul.f32 %v3816, %v3847
  %v3851 = vmul.f32 %v3819, %v3848
  %v3852 = vmul.f32 %v3824, %v3849
  %v3854 = vsel %vm1006, %v3850, 0
  %v3857 = vsel %vm1006, %v3851, 0
  %v3860 = vsel %vm1006, %v3852, 0
  %v3863 = vsel %vm1006, %v2773, 0
  %3865 = vmatprep.subr.mxu0 0.0
  %3866 = vmatpush1.xpose.msra.mxu0 0.0
  %3867 = vmatprep.subr.mxu0 0.0
  %3868 = vmatpush1.xpose.msra.mxu0 0.0
  %3869 = vmatprep.subr.mxu0 0.0
  %3870 = vmatpush1.xpose.msra.mxu0 0.0
  %3871 = vmatprep.subr.mxu0 0.0
  %3872 = vmatpush1.xpose.msra.mxu0 0.0
  %3873 = vmatprep.subr.mxu0 0.0
  %3874 = vmatpush1.xpose.msra.mxu0 0.0
  %3875 = vmatprep.subr.mxu0 0.0
  %3876 = vmatpush1.xpose.msra.mxu0 0.0
  %3877 = vmatprep.subr.mxu0 0.0
  %3878 = vmatpush1.xpose.msra.mxu0 0.0
  %3879 = vmatprep.subr.mxu0 0.0
  %3880 = vmatpush1.xpose.msra.mxu0 0.0
  %3881 = vmatprep.subr.mxu0 0.0
  %3882 = vmatpush1.xpose.msra.mxu0 0.0
  %3883 = vmatprep.subr.mxu0 0.0
  %3884 = vmatpush1.xpose.msra.mxu0 0.0
  %3885 = vmatprep.subr.mxu0 0.0
  %3886 = vmatpush1.xpose.msra.mxu0 0.0
  %3887 = vmatprep.subr.mxu0 0.0
  %3888 = vmatpush1.xpose.msra.mxu0 0.0
  %3889 = vmatprep.subr.mxu0 0.0
  %3890 = vmatpush1.xpose.msra.mxu0 0.0
  %3891 = vmatprep.subr.mxu0 0.0
  %3892 = vmatpush1.xpose.msra.mxu0 0.0
  %3893 = vmatprep.subr.mxu0 0.0
  %3894 = vmatpush1.xpose.msra.mxu0 0.0
  %3895 = vmatprep.subr.mxu0 0.0
  %3896 = vmatpush1.xpose.msra.mxu0 %v3863
  %3897 = vmatprep.subr.mxu0 0.0
  %3898 = vmatpush2.xpose.msra.mxu0 0.0
  %3899 = vmatprep.subr.mxu0 0.0
  %3900 = vmatpush2.xpose.msra.mxu0 0.0
  %3901 = vmatprep.subr.mxu0 0.0
  %3902 = vmatpush2.xpose.msra.mxu0 0.0
  %3903 = vmatprep.subr.mxu0 0.0
  %3904 = vmatpush2.xpose.msra.mxu0 0.0
  %3905 = vmatprep.subr.mxu0 0.0
  %3906 = vmatpush2.xpose.msra.mxu0 0.0
  %3907 = vmatprep.subr.mxu0 0.0
  %3908 = vmatpush2.xpose.msra.mxu0 0.0
  %3909 = vmatprep.subr.mxu0 0.0
  %3910 = vmatpush2.xpose.msra.mxu0 0.0
  %3911 = vmatprep.subr.mxu0 0.0
  %3912 = vmatpush2.xpose.msra.mxu0 0.0
  %3913 = vmatprep.subr.mxu0 0.0
  %3914 = vmatpush2.xpose.msra.mxu0 0.0
  %3915 = vmatprep.subr.mxu0 0.0
  %3916 = vmatpush2.xpose.msra.mxu0 0.0
  %3917 = vmatprep.subr.mxu0 0.0
  %3918 = vmatpush2.xpose.msra.mxu0 0.0
  %3919 = vmatprep.subr.mxu0 0.0
  %3920 = vmatpush2.xpose.msra.mxu0 0.0
  %3921 = vmatprep.subr.mxu0 0.0
  %3922 = vmatpush2.xpose.msra.mxu0 0.0
  %3923 = vmatprep.subr.mxu0 0.0
  %3924 = vmatpush2.xpose.msra.mxu0 0.0
  %3925 = vmatprep.subr.mxu0 0.0
  %3926 = vmatpush2.xpose.msra.mxu0 0.0
  %3927 = vmatprep.subr.mxu0 0.0
  %3928 = vmatpush2.xpose.msra.mxu0 0.0
  %3929 = vmatprep.mubr.f32.mxu0 0.0
  %3930 = vmatmul.mubr.f32.gmra.mxu0 %v3854
  %v3931 = vpop.f32.mrf.mxu0
  %v3932 = vadd.f32 0.0, %v3931
  %v3933 = vpop.f32.mrf.mxu0
  %3934 = vmatprep.mubr.f32.mxu0 0.0
  %3935 = vmatmul.mubr.f32.gmra.mxu0 %v3857
  %v3936 = vpop.f32.mrf.mxu0
  %v3937 = vadd.f32 0.0, %v3936
  %v3938 = vpop.f32.mrf.mxu0
  %3939 = vmatprep.mubr.f32.mxu0 0.0
  %3940 = vmatmul.mubr.f32.gmra.mxu0 %v3860
  %v3941 = vpop.f32.mrf.mxu0
  %v3942 = vadd.f32 0.0, %v3941
  %v3943 = vpop.f32.mrf.mxu0
  %3944 = vdwg.mxu0
  %v3945 = vmul.f32 %v3932, 100.0
  %v3946 = vmul.f32 %v3937, 100.0
  %v3947 = vmul.f32 %v3942, 100.0
  %vm3948 = vcmask 48128
  %v3949 = vsel %vm3948, %v3945, -inf
  %3950 = vmax.xlane.f32.xlu0 %v3949
  %v3951 = vpop.xlane.xlu0 %3950
  %v3952 = vsel %vm3948, %v3946, -inf
  %3953 = vmax.xlane.f32.xlu0 %v3952
  %v3954 = vpop.xlane.xlu0 %3953
  %v3955 = vsel %vm3948, %v3947, -inf
  %3956 = vmax.xlane.f32.xlu0 %v3955
  %v3957 = vpop.xlane.xlu0 %3956
  %v3958 = vsub.f32 %v3945, %v3951
  %v3959 = vsub.f32 %v3946, %v3954
  %v3960 = vsub.f32 %v3947, %v3957
  %v3961 = vmul.f32 %v3958, 1.442695
  %v3962 = vpow.pop %v3961
  %v3963 = vmul.f32 %v3959, 1.442695
  %v3964 = vpow.pop %v3963
  %v3965 = vmul.f32 %v3960, 1.442695
  %v3966 = vpow.pop %v3965
  %v3967 = vsel %vm3948, %v3962, 0.0
  %3968 = vadd.xlane.f32.xlu0 %v3967
  %v3969 = vpop.xlane.xlu0 %3968
  %v3970 = vsel %vm3948, %v3964, 0.0
  %3971 = vadd.xlane.f32.xlu0 %v3970
  %v3972 = vpop.xlane.xlu0 %3971
  %v3973 = vsel %vm3948, %v3966, 0.0
  %3974 = vadd.xlane.f32.xlu0 %v3973
  %v3975 = vpop.xlane.xlu0 %3974
  %v3976 = vrcp.pop %v3969
  %v3977 = vmul.f32 %v3962, %v3976
  %v3978 = vrcp.pop %v3972
  %v3979 = vmul.f32 %v3964, %v3978
  %v3980 = vrcp.pop %v3975
  %v3981 = vmul.f32 %v3966, %v3980
  %v3982 = vmul.f32 %v3977, %v103
  %v3983 = vmul.f32 %v3979, %v104
  %v3984 = vmul.f32 %v3981, %v105
  %v3985 = vsel %vm338, %v2799, 0.0
  %v3986 = vsel %vm338, %v2801, 0.0
  %v3987 = vadd.f32 %v3985, %v3986
  %v3988 = vsel %vm338, %v2803, 0.0
  %v3989 = vadd.f32 %v3987, %v3988
  %v3990 = vrot.slane %v3989, 4
  %v3991 = vadd.f32 %v3989, %v3990
  %v3992 = vrot.slane %v3991, 2
  %v3993 = vadd.f32 %v3991, %v3992
  %v3994 = vrot.slane %v3993, 1
  %v3995 = vadd.f32 %v3993, %v3994
  %v3996 = vrcp.pop %v3995
  %v3997 = vmul.f32 %v2799, %v3996
  %v3998 = vmul.f32 %v2801, %v3996
  %v3999 = vmul.f32 %v2803, %v3996
  %v4000 = vsel %vm338, %v3997, 0.0
  %4001 = vadd.xlane.f32.xlu0 %v4000
  %v4002 = vpop.xlane.xlu0 %4001
  %v4003 = vsel %vm338, %v3998, 0.0
  %4004 = vadd.xlane.f32.xlu0 %v4003
  %v4005 = vpop.xlane.xlu0 %4004
  %v4006 = vsel %vm338, %v3999, 0.0
  %4007 = vadd.xlane.f32.xlu0 %v4006
  %v4008 = vpop.xlane.xlu0 %4007
  %v4009 = vrcp.pop %v4002
  %v4010 = vmul.f32 %v3997, %v4009
  %v4011 = vrcp.pop %v4005
  %v4012 = vmul.f32 %v3998, %v4011
  %v4013 = vrcp.pop %v4008
  %v4014 = vmul.f32 %v3999, %v4013
  %4015 = vxpose.xlu0.b32.start [1/16] %v4010, 128
  %4016 = vxpose.xlu0.b32.cont [2/16] %v4012, 128
  %4017 = vxpose.xlu0.b32.cont [3/16] %v4014, 128
  %4018 = vxpose.xlu0.b32.cont [4/16] 0.0, 128
  %4019 = vxpose.xlu0.b32.cont [5/16] 0.0, 128
  %4020 = vxpose.xlu0.b32.cont [6/16] 0.0, 128
  %4021 = vxpose.xlu0.b32.cont [7/16] 0.0, 128
  %4022 = vxpose.xlu0.b32.cont [8/16] 0.0, 128
  %4023 = vxpose.xlu0.b32.cont [9/16] 0.0, 128
  %4024 = vxpose.xlu0.b32.cont [10/16] 0.0, 128
  %4025 = vxpose.xlu0.b32.cont [11/16] 0.0, 128
  %4026 = vxpose.xlu0.b32.cont [12/16] 0.0, 128
  %4027 = vxpose.xlu0.b32.cont [13/16] 0.0, 128
  %4028 = vxpose.xlu0.b32.cont [14/16] 0.0, 128
  %4029 = vxpose.xlu0.b32.cont [15/16] 0.0, 128
  %4030 = vxpose.xlu0.b32.end [16/16] 0.0, 128
  %v4031 = vpop.trf.xlu0
  %v4032 = vpop.trf.xlu0
  %v4033 = vpop.trf.xlu0
  %v4034 = vpop.trf.xlu0
  %v4035 = vpop.trf.xlu0
  %v4036 = vpop.trf.xlu0
  %v4037 = vpop.trf.xlu0
  %v4038 = vpop.trf.xlu0
  %v4039 = vpop.trf.xlu0
  %v4040 = vpop.trf.xlu0
  %v4041 = vpop.trf.xlu0
  %v4042 = vpop.trf.xlu0
  %v4043 = vpop.trf.xlu0
  %v4044 = vpop.trf.xlu0
  %v4045 = vpop.trf.xlu0
  %v4046 = vpop.trf.xlu0
  %v4047 = vadd.f32 %v4010, %v4031
  %v4048 = vadd.f32 %v4012, %v4032
  %v4049 = vadd.f32 %v4014, %v4033
  %v4050 = vmul.f32 %v4047, 0.5
  %v4051 = vmul.f32 %v4048, 0.5
  %v4052 = vmul.f32 %v4049, 0.5
  %v4053 = vsel %vm338, %v4050, -inf
  %v4054 = vsel %vm338, %v4051, -inf
  %v4055 = vsel %vm338, %v4052, -inf
  %v4056 = vmax.f32 %v4053, %v4054
  %v4057 = vmax.f32 %v4056, %v4055
  %v4058 = vrot.slane %v4057, 4
  %v4059 = vmax.f32 %v4057, %v4058
  %v4060 = vrot.slane %v4059, 2
  %v4061 = vmax.f32 %v4059, %v4060
  %v4062 = vrot.slane %v4061, 1
  %v4063 = vmax.f32 %v4061, %v4062
  %v4064 = vmul.f32 %v4063, 0.2
  %v4065 = vsub.f32 %v4050, %v4064
  %v4066 = vsub.f32 %v4051, %v4064
  %v4067 = vsub.f32 %v4052, %v4064
  %v4068 = vmax.f32 %v4065, 0.0
  %v4069 = vmax.f32 %v4066, 0.0
  %v4070 = vmax.f32 %v4067, 0.0
  %v4071 = vsel %vm338, %v4068, 0.0
  %4072 = vadd.xlane.f32.xlu0 %v4071
  %v4073 = vpop.xlane.xlu0 %4072
  %v4074 = vsel %vm338, %v4069, 0.0
  %4075 = vadd.xlane.f32.xlu0 %v4074
  %v4076 = vpop.xlane.xlu0 %4075
  %v4077 = vsel %vm338, %v4070, 0.0
  %4078 = vadd.xlane.f32.xlu0 %v4077
  %v4079 = vpop.xlane.xlu0 %4078
  %v4080 = vrcp.pop %v4073
  %v4081 = vmul.f32 %v4068, %v4080
  %v4082 = vrcp.pop %v4076
  %v4083 = vmul.f32 %v4069, %v4082
  %v4084 = vrcp.pop %v4079
  %v4085 = vmul.f32 %v4070, %v4084
  %v4086 = vsel %vm338, %v2900, 0.0
  %v4087 = vsel %vm338, %v2902, 0.0
  %v4088 = vadd.f32 %v4086, %v4087
  %v4089 = vsel %vm338, %v2904, 0.0
  %v4090 = vadd.f32 %v4088, %v4089
  %v4091 = vrot.slane %v4090, 4
  %v4092 = vadd.f32 %v4090, %v4091
  %v4093 = vrot.slane %v4092, 2
  %v4094 = vadd.f32 %v4092, %v4093
  %v4095 = vrot.slane %v4094, 1
  %v4096 = vadd.f32 %v4094, %v4095
  %v4097 = vrcp.pop %v4096
  %v4098 = vmul.f32 %v2900, %v4097
  %v4099 = vmul.f32 %v2902, %v4097
  %v4100 = vmul.f32 %v2904, %v4097
  %v4101 = vsel %vm338, %v4098, 0.0
  %4102 = vadd.xlane.f32.xlu0 %v4101
  %v4103 = vpop.xlane.xlu0 %4102
  %v4104 = vsel %vm338, %v4099, 0.0
  %4105 = vadd.xlane.f32.xlu0 %v4104
  %v4106 = vpop.xlane.xlu0 %4105
  %v4107 = vsel %vm338, %v4100, 0.0
  %4108 = vadd.xlane.f32.xlu0 %v4107
  %v4109 = vpop.xlane.xlu0 %4108
  %v4110 = vrcp.pop %v4103
  %v4111 = vmul.f32 %v4098, %v4110
  %v4112 = vrcp.pop %v4106
  %v4113 = vmul.f32 %v4099, %v4112
  %v4114 = vrcp.pop %v4109
  %v4115 = vmul.f32 %v4100, %v4114
  %4116 = vxpose.xlu0.b32.start [1/16] %v4111, 128
  %4117 = vxpose.xlu0.b32.cont [2/16] %v4113, 128
  %4118 = vxpose.xlu0.b32.cont [3/16] %v4115, 128
  %4119 = vxpose.xlu0.b32.cont [4/16] 0.0, 128
  %4120 = vxpose.xlu0.b32.cont [5/16] 0.0, 128
  %4121 = vxpose.xlu0.b32.cont [6/16] 0.0, 128
  %4122 = vxpose.xlu0.b32.cont [7/16] 0.0, 128
  %4123 = vxpose.xlu0.b32.cont [8/16] 0.0, 128
  %4124 = vxpose.xlu0.b32.cont [9/16] 0.0, 128
  %4125 = vxpose.xlu0.b32.cont [10/16] 0.0, 128
  %4126 = vxpose.xlu0.b32.cont [11/16] 0.0, 128
  %4127 = vxpose.xlu0.b32.cont [12/16] 0.0, 128
  %4128 = vxpose.xlu0.b32.cont [13/16] 0.0, 128
  %4129 = vxpose.xlu0.b32.cont [14/16] 0.0, 128
  %4130 = vxpose.xlu0.b32.cont [15/16] 0.0, 128
  %4131 = vxpose.xlu0.b32.end [16/16] 0.0, 128
  %v4132 = vpop.trf.xlu0
  %v4133 = vpop.trf.xlu0
  %v4134 = vpop.trf.xlu0
  %v4135 = vpop.trf.xlu0
  %v4136 = vpop.trf.xlu0
  %v4137 = vpop.trf.xlu0
  %v4138 = vpop.trf.xlu0
  %v4139 = vpop.trf.xlu0
  %v4140 = vpop.trf.xlu0
  %v4141 = vpop.trf.xlu0
  %v4142 = vpop.trf.xlu0
  %v4143 = vpop.trf.xlu0
  %v4144 = vpop.trf.xlu0
  %v4145 = vpop.trf.xlu0
  %v4146 = vpop.trf.xlu0
  %v4147 = vpop.trf.xlu0
  %v4148 = vadd.f32 %v4111, %v4132
  %v4149 = vadd.f32 %v4113, %v4133
  %v4150 = vadd.f32 %v4115, %v4134
  %v4151 = vmul.f32 %v4148, 0.5
  %v4152 = vmul.f32 %v4149, 0.5
  %v4153 = vmul.f32 %v4150, 0.5
  %v4154 = vsel %vm338, %v4151, -inf
  %v4155 = vsel %vm338, %v4152, -inf
  %v4156 = vsel %vm338, %v4153, -inf
  %v4157 = vmax.f32 %v4154, %v4155
  %v4158 = vmax.f32 %v4157, %v4156
  %v4159 = vrot.slane %v4158, 4
  %v4160 = vmax.f32 %v4158, %v4159
  %v4161 = vrot.slane %v4160, 2
  %v4162 = vmax.f32 %v4160, %v4161
  %v4163 = vrot.slane %v4162, 1
  %v4164 = vmax.f32 %v4162, %v4163
  %v4165 = vmul.f32 %v4164, 0.2
  %v4166 = vsub.f32 %v4151, %v4165
  %v4167 = vsub.f32 %v4152, %v4165
  %v4168 = vsub.f32 %v4153, %v4165
  %v4169 = vmax.f32 %v4166, 0.0
  %v4170 = vmax.f32 %v4167, 0.0
  %v4171 = vmax.f32 %v4168, 0.0
  %v4172 = vsel %vm338, %v4169, 0.0
  %4173 = vadd.xlane.f32.xlu0 %v4172
  %v4174 = vpop.xlane.xlu0 %4173
  %v4175 = vsel %vm338, %v4170, 0.0
  %4176 = vadd.xlane.f32.xlu0 %v4175
  %v4177 = vpop.xlane.xlu0 %4176
  %v4178 = vsel %vm338, %v4171, 0.0
  %4179 = vadd.xlane.f32.xlu0 %v4178
  %v4180 = vpop.xlane.xlu0 %4179
  %v4181 = vrcp.pop %v4174
  %v4182 = vmul.f32 %v4169, %v4181
  %v4183 = vrcp.pop %v4177
  %v4184 = vmul.f32 %v4170, %v4183
  %v4185 = vrcp.pop %v4180
  %v4186 = vmul.f32 %v4171, %v4185
  %v4187 = vsel %vm338, %v3001, 0.0
  %v4188 = vsel %vm338, %v3003, 0.0
  %v4189 = vadd.f32 %v4187, %v4188
  %v4190 = vsel %vm338, %v3005, 0.0
  %v4191 = vadd.f32 %v4189, %v4190
  %v4192 = vrot.slane %v4191, 4
  %v4193 = vadd.f32 %v4191, %v4192
  %v4194 = vrot.slane %v4193, 2
  %v4195 = vadd.f32 %v4193, %v4194
  %v4196 = vrot.slane %v4195, 1
  %v4197 = vadd.f32 %v4195, %v4196
  %v4198 = vrcp.pop %v4197
  %v4199 = vmul.f32 %v3001, %v4198
  %v4200 = vmul.f32 %v3003, %v4198
  %v4201 = vmul.f32 %v3005, %v4198
  %v4202 = vsel %vm338, %v4199, 0.0
  %4203 = vadd.xlane.f32.xlu0 %v4202
  %v4204 = vpop.xlane.xlu0 %4203
  %v4205 = vsel %vm338, %v4200, 0.0
  %4206 = vadd.xlane.f32.xlu0 %v4205
  %v4207 = vpop.xlane.xlu0 %4206
  %v4208 = vsel %vm338, %v4201, 0.0
  %4209 = vadd.xlane.f32.xlu0 %v4208
  %v4210 = vpop.xlane.xlu0 %4209
  %v4211 = vrcp.pop %v4204
  %v4212 = vmul.f32 %v4199, %v4211
  %v4213 = vrcp.pop %v4207
  %v4214 = vmul.f32 %v4200, %v4213
  %v4215 = vrcp.pop %v4210
  %v4216 = vmul.f32 %v4201, %v4215
  %4217 = vxpose.xlu0.b32.start [1/16] %v4212, 128
  %4218 = vxpose.xlu0.b32.cont [2/16] %v4214, 128
  %4219 = vxpose.xlu0.b32.cont [3/16] %v4216, 128
  %4220 = vxpose.xlu0.b32.cont [4/16] 0.0, 128
  %4221 = vxpose.xlu0.b32.cont [5/16] 0.0, 128
  %4222 = vxpose.xlu0.b32.cont [6/16] 0.0, 128
  %4223 = vxpose.xlu0.b32.cont [7/16] 0.0, 128
  %4224 = vxpose.xlu0.b32.cont [8/16] 0.0, 128
  %4225 = vxpose.xlu0.b32.cont [9/16] 0.0, 128
  %4226 = vxpose.xlu0.b32.cont [10/16] 0.0, 128
  %4227 = vxpose.xlu0.b32.cont [11/16] 0.0, 128
  %4228 = vxpose.xlu0.b32.cont [12/16] 0.0, 128
  %4229 = vxpose.xlu0.b32.cont [13/16] 0.0, 128
  %4230 = vxpose.xlu0.b32.cont [14/16] 0.0, 128
  %4231 = vxpose.xlu0.b32.cont [15/16] 0.0, 128
  %4232 = vxpose.xlu0.b32.end [16/16] 0.0, 128
  %v4233 = vpop.trf.xlu0
  %v4234 = vpop.trf.xlu0
  %v4235 = vpop.trf.xlu0
  %v4236 = vpop.trf.xlu0
  %v4237 = vpop.trf.xlu0
  %v4238 = vpop.trf.xlu0
  %v4239 = vpop.trf.xlu0
  %v4240 = vpop.trf.xlu0
  %v4241 = vpop.trf.xlu0
  %v4242 = vpop.trf.xlu0
  %v4243 = vpop.trf.xlu0
  %v4244 = vpop.trf.xlu0
  %v4245 = vpop.trf.xlu0
  %v4246 = vpop.trf.xlu0
  %v4247 = vpop.trf.xlu0
  %v4248 = vpop.trf.xlu0
  %v4249 = vadd.f32 %v4212, %v4233
  %v4250 = vadd.f32 %v4214, %v4234
  %v4251 = vadd.f32 %v4216, %v4235
  %v4252 = vmul.f32 %v4249, 0.5
  %v4253 = vmul.f32 %v4250, 0.5
  %v4254 = vmul.f32 %v4251, 0.5
  %v4255 = vsel %vm338, %v4252, -inf
  %v4256 = vsel %vm338, %v4253, -inf
  %v4257 = vsel %vm338, %v4254, -inf
  %v4258 = vmax.f32 %v4255, %v4256
  %v4259 = vmax.f32 %v4258, %v4257
  %v4260 = vrot.slane %v4259, 4
  %v4261 = vmax.f32 %v4259, %v4260
  %v4262 = vrot.slane %v4261, 2
  %v4263 = vmax.f32 %v4261, %v4262
  %v4264 = vrot.slane %v4263, 1
  %v4265 = vmax.f32 %v4263, %v4264
  %v4266 = vmul.f32 %v4265, 0.2
  %v4267 = vsub.f32 %v4252, %v4266
  %v4268 = vsub.f32 %v4253, %v4266
  %v4269 = vsub.f32 %v4254, %v4266
  %v4270 = vmax.f32 %v4267, 0.0
  %v4271 = vmax.f32 %v4268, 0.0
  %v4272 = vmax.f32 %v4269, 0.0
  %v4273 = vsel %vm338, %v4270, 0.0
  %4274 = vadd.xlane.f32.xlu0 %v4273
  %v4275 = vpop.xlane.xlu0 %4274
  %v4276 = vsel %vm338, %v4271, 0.0
  %4277 = vadd.xlane.f32.xlu0 %v4276
  %v4278 = vpop.xlane.xlu0 %4277
  %v4279 = vsel %vm338, %v4272, 0.0
  %4280 = vadd.xlane.f32.xlu0 %v4279
  %v4281 = vpop.xlane.xlu0 %4280
  %v4282 = vrcp.pop %v4275
  %v4283 = vmul.f32 %v4270, %v4282
  %v4284 = vrcp.pop %v4278
  %v4285 = vmul.f32 %v4271, %v4284
  %v4286 = vrcp.pop %v4281
  %v4287 = vmul.f32 %v4272, %v4286
  %v4288 = vsel %vm338, %v3102, 0.0
  %v4289 = vsel %vm338, %v3104, 0.0
  %v4290 = vadd.f32 %v4288, %v4289
  %v4291 = vsel %vm338, %v3106, 0.0
  %v4292 = vadd.f32 %v4290, %v4291
  %v4293 = vrot.slane %v4292, 4
  %v4294 = vadd.f32 %v4292, %v4293
  %v4295 = vrot.slane %v4294, 2
  %v4296 = vadd.f32 %v4294, %v4295
  %v4297 = vrot.slane %v4296, 1
  %v4298 = vadd.f32 %v4296, %v4297
  %v4299 = vrcp.pop %v4298
  %v4300 = vmul.f32 %v3102, %v4299
  %v4301 = vmul.f32 %v3104, %v4299
  %v4302 = vmul.f32 %v3106, %v4299
  %v4303 = vsel %vm338, %v4300, 0.0
  %4304 = vadd.xlane.f32.xlu0 %v4303
  %v4305 = vpop.xlane.xlu0 %4304
  %v4306 = vsel %vm338, %v4301, 0.0
  %4307 = vadd.xlane.f32.xlu0 %v4306
  %v4308 = vpop.xlane.xlu0 %4307
  %v4309 = vsel %vm338, %v4302, 0.0
  %4310 = vadd.xlane.f32.xlu0 %v4309
  %v4311 = vpop.xlane.xlu0 %4310
  %v4312 = vrcp.pop %v4305
  %v4313 = vmul.f32 %v4300, %v4312
  %v4314 = vrcp.pop %v4308
  %v4315 = vmul.f32 %v4301, %v4314
  %v4316 = vrcp.pop %v4311
  %v4317 = vmul.f32 %v4302, %v4316
  %4318 = vxpose.xlu0.b32.start [1/16] %v4313, 128
  %4319 = vxpose.xlu0.b32.cont [2/16] %v4315, 128
  %4320 = vxpose.xlu0.b32.cont [3/16] %v4317, 128
  %4321 = vxpose.xlu0.b32.cont [4/16] 0.0, 128
  %4322 = vxpose.xlu0.b32.cont [5/16] 0.0, 128
  %4323 = vxpose.xlu0.b32.cont [6/16] 0.0, 128
  %4324 = vxpose.xlu0.b32.cont [7/16] 0.0, 128
  %4325 = vxpose.xlu0.b32.cont [8/16] 0.0, 128
  %4326 = vxpose.xlu0.b32.cont [9/16] 0.0, 128
  %4327 = vxpose.xlu0.b32.cont [10/16] 0.0, 128
  %4328 = vxpose.xlu0.b32.cont [11/16] 0.0, 128
  %4329 = vxpose.xlu0.b32.cont [12/16] 0.0, 128
  %4330 = vxpose.xlu0.b32.cont [13/16] 0.0, 128
  %4331 = vxpose.xlu0.b32.cont [14/16] 0.0, 128
  %4332 = vxpose.xlu0.b32.cont [15/16] 0.0, 128
  %4333 = vxpose.xlu0.b32.end [16/16] 0.0, 128
  %v4334 = vpop.trf.xlu0
  %v4335 = vpop.trf.xlu0
  %v4336 = vpop.trf.xlu0
  %v4337 = vpop.trf.xlu0
  %v4338 = vpop.trf.xlu0
  %v4339 = vpop.trf.xlu0
  %v4340 = vpop.trf.xlu0
  %v4341 = vpop.trf.xlu0
  %v4342 = vpop.trf.xlu0
  %v4343 = vpop.trf.xlu0
  %v4344 = vpop.trf.xlu0
  %v4345 = vpop.trf.xlu0
  %v4346 = vpop.trf.xlu0
  %v4347 = vpop.trf.xlu0
  %v4348 = vpop.trf.xlu0
  %v4349 = vpop.trf.xlu0
  %v4350 = vadd.f32 %v4313, %v4334
  %v4351 = vadd.f32 %v4315, %v4335
  %v4352 = vadd.f32 %v4317, %v4336
  %v4353 = vmul.f32 %v4350, 0.5
  %v4354 = vmul.f32 %v4351, 0.5
  %v4355 = vmul.f32 %v4352, 0.5
  %v4356 = vsel %vm338, %v4353, -inf
  %v4357 = vsel %vm338, %v4354, -inf
  %v4358 = vsel %vm338, %v4355, -inf
  %v4359 = vmax.f32 %v4356, %v4357
  %v4360 = vmax.f32 %v4359, %v4358
  %v4361 = vrot.slane %v4360, 4
  %v4362 = vmax.f32 %v4360, %v4361
  %v4363 = vrot.slane %v4362, 2
  %v4364 = vmax.f32 %v4362, %v4363
  %v4365 = vrot.slane %v4364, 1
  %v4366 = vmax.f32 %v4364, %v4365
  %v4367 = vmul.f32 %v4366, 0.2
  %v4368 = vsub.f32 %v4353, %v4367
  %v4369 = vsub.f32 %v4354, %v4367
  %v4370 = vsub.f32 %v4355, %v4367
  %v4371 = vmax.f32 %v4368, 0.0
  %v4372 = vmax.f32 %v4369, 0.0
  %v4373 = vmax.f32 %v4370, 0.0
  %v4374 = vsel %vm338, %v4371, 0.0
  %4375 = vadd.xlane.f32.xlu0 %v4374
  %v4376 = vpop.xlane.xlu0 %4375
  %v4377 = vsel %vm338, %v4372, 0.0
  %4378 = vadd.xlane.f32.xlu0 %v4377
  %v4379 = vpop.xlane.xlu0 %4378
  %v4380 = vsel %vm338, %v4373, 0.0
  %4381 = vadd.xlane.f32.xlu0 %v4380
  %v4382 = vpop.xlane.xlu0 %4381
  %v4383 = vrcp.pop %v4376
  %v4384 = vmul.f32 %v4371, %v4383
  %v4385 = vrcp.pop %v4379
  %v4386 = vmul.f32 %v4372, %v4385
  %v4387 = vrcp.pop %v4382
  %v4388 = vmul.f32 %v4373, %v4387
  %v4389 = vld [vmem:[%s13] sm:$0x1]
  %v4390 = vld [vmem:[%s14] sm:$0x1]
  %v4391 = vsel %vm123, %v1502, 0.0
  %4392 = vadd.xlane.f32.xlu0 %v4391
  %v4393 = vpop.xlane.xlu0 %4392
  %v4394 = vsel %vm123, %v1503, 0.0
  %4395 = vadd.xlane.f32.xlu0 %v4394
  %v4396 = vpop.xlane.xlu0 %4395
  %v4397 = vsel %vm123, %v1504, 0.0
  %4398 = vadd.xlane.f32.xlu0 %v4397
  %v4399 = vpop.xlane.xlu0 %4398
  %v4400 = vmul.f32 %v4393, %v133
  %v4401 = vmul.f32 %v4396, %v133
  %v4402 = vmul.f32 %v4399, %v133
  %v4403 = vsub.f32 %v1502, %v4400
  %v4404 = vsub.f32 %v1503, %v4401
  %v4405 = vsub.f32 %v1504, %v4402
  %v4406 = vmul.f32 %v4403, %v4403
  %v4407 = vmul.f32 %v4404, %v4404
  %v4408 = vmul.f32 %v4405, %v4405
  %v4409 = vsel %vm123, %v4406, 0.0
  %4410 = vadd.xlane.f32.xlu0 %v4409
  %v4411 = vpop.xlane.xlu0 %4410
  %v4412 = vsel %vm123, %v4407, 0.0
  %4413 = vadd.xlane.f32.xlu0 %v4412
  %v4414 = vpop.xlane.xlu0 %4413
  %v4415 = vsel %vm123, %v4408, 0.0
  %4416 = vadd.xlane.f32.xlu0 %v4415
  %v4417 = vpop.xlane.xlu0 %4416
  %v4418 = vmul.f32 %v4411, %v133
  %v4419 = vmul.f32 %v4414, %v133
  %v4420 = vmul.f32 %v4417, %v133
  %v4421 = vadd.f32 %v4418, 1e-05
  %v4422 = vadd.f32 %v4419, 1e-05
  %v4423 = vadd.f32 %v4420, 1e-05
  %v4424 = vrsqrt.pop %v4421
  %v4425 = vrsqrt.pop %v4422
  %v4426 = vrsqrt.pop %v4423
  %v4427 = vmul.f32 %v4403, %v4424
  %v4428 = vmul.f32 %v4404, %v4425
  %v4429 = vmul.f32 %v4405, %v4426
  %v4431 = vlaneseq
  %v4432 = vshrl.u32 %v4431, 7
  %v4433 = vsub.s32 0, %v4432
  %v4434 = vrot.slane %v4389, %v4433
  %v4436 = vmul.f32 %v4427, %v4434
  %v4437 = vmul.f32 %v4428, %v4434
  %v4438 = vmul.f32 %v4429, %v4434
  %v4440 = vlaneseq
  %v4441 = vshrl.u32 %v4440, 7
  %v4442 = vsub.s32 0, %v4441
  %v4443 = vrot.slane %v4390, %v4442
  %v4445 = vadd.f32 %v4436, %v4443
  %v4446 = vadd.f32 %v4437, %v4443
  %v4447 = vadd.f32 %v4438, %v4443
  %v4448 = vld [vmem:[%s15] sm:$0xf]
  %v4449 = vld [vmem:[%s15 + $0x4] sm:$0xf]
  %v4450 = vld [vmem:[%s15 + $0x8] sm:$0xf]
  %v4451 = vld [vmem:[%s15 + $0xc] sm:$0xf]
  %v4452 = vpack.c.bf16 %v4446, %v4445
  %v4453 = vpack.c.bf16 %v4447, %v4447
  %v4454 = vld [vmem:[%s16] sm:$0x1]
  %v4456 = vlaneseq
  %v4457 = vshrl.u32 %v4456, 7
  %v4458 = vsub.s32 0, %v4457
  %v4459 = vrot.slane %v4454, %v4458
  %v4465 = vunpack.c.l.b16 %v4448
  %v4466 = vunpack.c.l.b16 %v4449
  %v4467 = vunpack.c.l.b16 %v4450
  %v4468 = vunpack.c.l.b16 %v4451
  %v4469 = vpack.c.b16 %v4466, %v4465
  %v4470 = vpack.c.b16 %v4468, %v4467
  %v4474 = vsel %vm123, %v4452, 0
  %v4477 = vsel %vm123, %v4453, 0
  %4479 = vmatprep.subr.bf16.mxu0 0
  %4480 = vmatpush1.bf16.msra.mxu0 0
  %4481 = vmatprep.subr.bf16.mxu0 0
  %4482 = vmatpush1.bf16.msra.mxu0 0
  %4483 = vmatprep.subr.bf16.mxu0 0
  %4484 = vmatpush1.bf16.msra.mxu0 0
  %4485 = vmatprep.subr.bf16.mxu0 0
  %4486 = vmatpush1.bf16.msra.mxu0 0
  %4487 = vmatprep.subr.bf16.mxu0 0
  %4488 = vmatpush1.bf16.msra.mxu0 0
  %4489 = vmatprep.subr.bf16.mxu0 0
  %4490 = vmatpush1.bf16.msra.mxu0 0
  %4491 = vmatprep.subr.bf16.mxu0 0
  %4492 = vmatpush1.bf16.msra.mxu0 %v4470
  %4493 = vmatprep.subr.bf16.mxu0 0
  %4494 = vmatpush1.bf16.msra.mxu0 %v4469
  %4495 = vmatprep.subr.bf16.mxu0 0
  %4496 = vmatpush2.bf16.msra.mxu0 0
  %4497 = vmatprep.subr.bf16.mxu0 0
  %4498 = vmatpush2.bf16.msra.mxu0 0
  %4499 = vmatprep.subr.bf16.mxu0 0
  %4500 = vmatpush2.bf16.msra.mxu0 0
  %4501 = vmatprep.subr.bf16.mxu0 0
  %4502 = vmatpush2.bf16.msra.mxu0 0
  %4503 = vmatprep.subr.bf16.mxu0 0
  %4504 = vmatpush2.bf16.msra.mxu0 0
  %4505 = vmatprep.subr.bf16.mxu0 0
  %4506 = vmatpush2.bf16.msra.mxu0 0
  %4507 = vmatprep.subr.bf16.mxu0 0
  %4508 = vmatpush2.bf16.msra.mxu0 0
  %4509 = vmatprep.subr.bf16.mxu0 0
  %4510 = vmatpush2.bf16.msra.mxu0 0
  %4511 = vmatprep.mubr.bf16.mxu0 0
  %4512 = vmatmul.mubr.bf16.gmra.mxu0 %v4474
  %v4513 = vpop.f32.mrf.mxu0
  %v4514 = vadd.f32 %v4459, %v4513
  %v4515 = vpop.f32.mrf.mxu0
  %v4516 = vpop.f32.mrf.mxu0
  %v4517 = vadd.f32 %v4459, %v4516
  %v4518 = vpop.f32.mrf.mxu0
  %4519 = vmatprep.mubr.bf16.mxu0 0
  %4520 = vmatmul.mubr.bf16.gmra.mxu0 %v4477
  %v4521 = vpop.f32.mrf.mxu0
  %v4522 = vadd.f32 %v4459, %v4521
  %v4523 = vpop.f32.mrf.mxu0
  %v4524 = vpop.f32.mrf.mxu0
  %v4525 = vpop.f32.mrf.mxu0
  %4526 = vdwg.mxu0
  %v4527 = vpack.c.bf16 %v4083, %v4081
  %v4528 = vpack.c.bf16 %v4085, %v4085
  %v4529 = vpack.c.bf16 %v4517, %v4514
  %v4530 = vpack.c.bf16 %v4522, %v4522
  %v4532 = vsel %vm338, %v4527, 0
  %v4535 = vsel %vm338, %v4528, 0
  %v4538 = vsel %vm391, %v4530, 0
  %4540 = vmatprep.subr.bf16.mxu0 0
  %4541 = vmatpush1.bf16.msra.mxu0 0
  %4542 = vmatprep.subr.bf16.mxu0 0
  %4543 = vmatpush1.bf16.msra.mxu0 0
  %4544 = vmatprep.subr.bf16.mxu0 0
  %4545 = vmatpush1.bf16.msra.mxu0 0
  %4546 = vmatprep.subr.bf16.mxu0 0
  %4547 = vmatpush1.bf16.msra.mxu0 0
  %4548 = vmatprep.subr.bf16.mxu0 0
  %4549 = vmatpush1.bf16.msra.mxu0 0
  %4550 = vmatprep.subr.bf16.mxu0 0
  %4551 = vmatpush1.bf16.msra.mxu0 0
  %4552 = vmatprep.subr.bf16.mxu0 0
  %4553 = vmatpush1.bf16.msra.mxu0 %v4538
  %4554 = vmatprep.subr.bf16.mxu0 0
  %4555 = vmatpush1.bf16.msra.mxu0 %v4529
  %4556 = vmatprep.subr.bf16.mxu0 0
  %4557 = vmatpush2.bf16.msra.mxu0 0
  %4558 = vmatprep.subr.bf16.mxu0 0
  %4559 = vmatpush2.bf16.msra.mxu0 0
  %4560 = vmatprep.subr.bf16.mxu0 0
  %4561 = vmatpush2.bf16.msra.mxu0 0
  %4562 = vmatprep.subr.bf16.mxu0 0
  %4563 = vmatpush2.bf16.msra.mxu0 0
  %4564 = vmatprep.subr.bf16.mxu0 0
  %4565 = vmatpush2.bf16.msra.mxu0 0
  %4566 = vmatprep.subr.bf16.mxu0 0
  %4567 = vmatpush2.bf16.msra.mxu0 0
  %4568 = vmatprep.subr.bf16.mxu0 0
  %4569 = vmatpush2.bf16.msra.mxu0 0
  %4570 = vmatprep.subr.bf16.mxu0 0
  %4571 = vmatpush2.bf16.msra.mxu0 0
  %4572 = vmatprep.mubr.bf16.mxu0 0
  %4573 = vmatmul.mubr.bf16.gmra.mxu0 %v4532
  %v4574 = vpop.f32.mrf.mxu0
  %v4575 = vadd.f32 0.0, %v4574
  %v4576 = vpop.f32.mrf.mxu0
  %v4577 = vpop.f32.mrf.mxu0
  %v4578 = vadd.f32 0.0, %v4577
  %v4579 = vpop.f32.mrf.mxu0
  %4580 = vmatprep.mubr.bf16.mxu0 0
  %4581 = vmatmul.mubr.bf16.gmra.mxu0 %v4535
  %v4582 = vpop.f32.mrf.mxu0
  %v4583 = vadd.f32 0.0, %v4582
  %v4584 = vpop.f32.mrf.mxu0
  %v4585 = vpop.f32.mrf.mxu0
  %v4586 = vpop.f32.mrf.mxu0
  %4587 = vdwg.mxu0
  %v4588 = vpack.c.bf16 %v4184, %v4182
  %v4589 = vpack.c.bf16 %v4186, %v4186
  %4592 = vrot.lane.b32.xlu0 %v4529, 120
  %v4593 = vpop.permute.xlu0 %4592
  %4594 = vrot.lane.b32.xlu0 %v4530, 120
  %v4595 = vpop.permute.xlu0 %4594
  %v4598 = vsel %vm338, %v4588, 0
  %v4601 = vsel %vm338, %v4589, 0
  %v4604 = vsel %vm391, %v4595, 0
  %4606 = vmatprep.subr.bf16.mxu0 0
  %4607 = vmatpush1.bf16.msra.mxu0 0
  %4608 = vmatprep.subr.bf16.mxu0 0
  %4609 = vmatpush1.bf16.msra.mxu0 0
  %4610 = vmatprep.subr.bf16.mxu0 0
  %4611 = vmatpush1.bf16.msra.mxu0 0
  %4612 = vmatprep.subr.bf16.mxu0 0
  %4613 = vmatpush1.bf16.msra.mxu0 0
  %4614 = vmatprep.subr.bf16.mxu0 0
  %4615 = vmatpush1.bf16.msra.mxu0 0
  %4616 = vmatprep.subr.bf16.mxu0 0
  %4617 = vmatpush1.bf16.msra.mxu0 0
  %4618 = vmatprep.subr.bf16.mxu0 0
  %4619 = vmatpush1.bf16.msra.mxu0 %v4604
  %4620 = vmatprep.subr.bf16.mxu0 0
  %4621 = vmatpush1.bf16.msra.mxu0 %v4593
  %4622 = vmatprep.subr.bf16.mxu0 0
  %4623 = vmatpush2.bf16.msra.mxu0 0
  %4624 = vmatprep.subr.bf16.mxu0 0
  %4625 = vmatpush2.bf16.msra.mxu0 0
  %4626 = vmatprep.subr.bf16.mxu0 0
  %4627 = vmatpush2.bf16.msra.mxu0 0
  %4628 = vmatprep.subr.bf16.mxu0 0
  %4629 = vmatpush2.bf16.msra.mxu0 0
  %4630 = vmatprep.subr.bf16.mxu0 0
  %4631 = vmatpush2.bf16.msra.mxu0 0
  %4632 = vmatprep.subr.bf16.mxu0 0
  %4633 = vmatpush2.bf16.msra.mxu0 0
  %4634 = vmatprep.subr.bf16.mxu0 0
  %4635 = vmatpush2.bf16.msra.mxu0 0
  %4636 = vmatprep.subr.bf16.mxu0 0
  %4637 = vmatpush2.bf16.msra.mxu0 0
  %4638 = vmatprep.mubr.bf16.mxu0 0
  %4639 = vmatmul.mubr.bf16.gmra.mxu0 %v4598
  %v4640 = vpop.f32.mrf.mxu0
  %v4641 = vadd.f32 0.0, %v4640
  %v4642 = vpop.f32.mrf.mxu0
  %v4643 = vpop.f32.mrf.mxu0
  %v4644 = vadd.f32 0.0, %v4643
  %v4645 = vpop.f32.mrf.mxu0
  %4646 = vmatprep.mubr.bf16.mxu0 0
  %4647 = vmatmul.mubr.bf16.gmra.mxu0 %v4601
  %v4648 = vpop.f32.mrf.mxu0
  %v4649 = vadd.f32 0.0, %v4648
  %v4650 = vpop.f32.mrf.mxu0
  %v4651 = vpop.f32.mrf.mxu0
  %v4652 = vpop.f32.mrf.mxu0
  %4653 = vdwg.mxu0
  %v4654 = vpack.c.bf16 %v4285, %v4283
  %v4655 = vpack.c.bf16 %v4287, %v4287
  %4656 = vrot.lane.b32.xlu0 %v4529, 112
  %v4657 = vpop.permute.xlu0 %4656
  %4658 = vrot.lane.b32.xlu0 %v4530, 112
  %v4659 = vpop.permute.xlu0 %4658
  %v4662 = vsel %vm338, %v4654, 0
  %v4665 = vsel %vm338, %v4655, 0
  %v4668 = vsel %vm391, %v4659, 0
  %4670 = vmatprep.subr.bf16.mxu0 0
  %4671 = vmatpush1.bf16.msra.mxu0 0
  %4672 = vmatprep.subr.bf16.mxu0 0
  %4673 = vmatpush1.bf16.msra.mxu0 0
  %4674 = vmatprep.subr.bf16.mxu0 0
  %4675 = vmatpush1.bf16.msra.mxu0 0
  %4676 = vmatprep.subr.bf16.mxu0 0
  %4677 = vmatpush1.bf16.msra.mxu0 0
  %4678 = vmatprep.subr.bf16.mxu0 0
  %4679 = vmatpush1.bf16.msra.mxu0 0
  %4680 = vmatprep.subr.bf16.mxu0 0
  %4681 = vmatpush1.bf16.msra.mxu0 0
  %4682 = vmatprep.subr.bf16.mxu0 0
  %4683 = vmatpush1.bf16.msra.mxu0 %v4668
  %4684 = vmatprep.subr.bf16.mxu0 0
  %4685 = vmatpush1.bf16.msra.mxu0 %v4657
  %4686 = vmatprep.subr.bf16.mxu0 0
  %4687 = vmatpush2.bf16.msra.mxu0 0
  %4688 = vmatprep.subr.bf16.mxu0 0
  %4689 = vmatpush2.bf16.msra.mxu0 0
  %4690 = vmatprep.subr.bf16.mxu0 0
  %4691 = vmatpush2.bf16.msra.mxu0 0
  %4692 = vmatprep.subr.bf16.mxu0 0
  %4693 = vmatpush2.bf16.msra.mxu0 0
  %4694 = vmatprep.subr.bf16.mxu0 0
  %4695 = vmatpush2.bf16.msra.mxu0 0
  %4696 = vmatprep.subr.bf16.mxu0 0
  %4697 = vmatpush2.bf16.msra.mxu0 0
  %4698 = vmatprep.subr.bf16.mxu0 0
  %4699 = vmatpush2.bf16.msra.mxu0 0
  %4700 = vmatprep.subr.bf16.mxu0 0
  %4701 = vmatpush2.bf16.msra.mxu0 0
  %4702 = vmatprep.mubr.bf16.mxu0 0
  %4703 = vmatmul.mubr.bf16.gmra.mxu0 %v4662
  %v4704 = vpop.f32.mrf.mxu0
  %v4705 = vadd.f32 0.0, %v4704
  %v4706 = vpop.f32.mrf.mxu0
  %v4707 = vpop.f32.mrf.mxu0
  %v4708 = vadd.f32 0.0, %v4707
  %v4709 = vpop.f32.mrf.mxu0
  %4710 = vmatprep.mubr.bf16.mxu0 0
  %4711 = vmatmul.mubr.bf16.gmra.mxu0 %v4665
  %v4712 = vpop.f32.mrf.mxu0
  %v4713 = vadd.f32 0.0, %v4712
  %v4714 = vpop.f32.mrf.mxu0
  %v4715 = vpop.f32.mrf.mxu0
  %v4716 = vpop.f32.mrf.mxu0
  %4717 = vdwg.mxu0
  %v4718 = vpack.c.bf16 %v4386, %v4384
  %v4719 = vpack.c.bf16 %v4388, %v4388
  %4720 = vrot.lane.b32.xlu0 %v4529, 104
  %v4721 = vpop.permute.xlu0 %4720
  %4722 = vrot.lane.b32.xlu0 %v4530, 104
  %v4723 = vpop.permute.xlu0 %4722
  %v4726 = vsel %vm338, %v4718, 0
  %v4729 = vsel %vm338, %v4719, 0
  %v4732 = vsel %vm391, %v4723, 0
  %4734 = vmatprep.subr.bf16.mxu0 0
  %4735 = vmatpush1.bf16.msra.mxu0 0
  %4736 = vmatprep.subr.bf16.mxu0 0
  %4737 = vmatpush1.bf16.msra.mxu0 0
  %4738 = vmatprep.subr.bf16.mxu0 0
  %4739 = vmatpush1.bf16.msra.mxu0 0
  %4740 = vmatprep.subr.bf16.mxu0 0
  %4741 = vmatpush1.bf16.msra.mxu0 0
  %4742 = vmatprep.subr.bf16.mxu0 0
  %4743 = vmatpush1.bf16.msra.mxu0 0
  %4744 = vmatprep.subr.bf16.mxu0 0
  %4745 = vmatpush1.bf16.msra.mxu0 0
  %4746 = vmatprep.subr.bf16.mxu0 0
  %4747 = vmatpush1.bf16.msra.mxu0 %v4732
  %4748 = vmatprep.subr.bf16.mxu0 0
  %4749 = vmatpush1.bf16.msra.mxu0 %v4721
  %4750 = vmatprep.subr.bf16.mxu0 0
  %4751 = vmatpush2.bf16.msra.mxu0 0
  %4752 = vmatprep.subr.bf16.mxu0 0
  %4753 = vmatpush2.bf16.msra.mxu0 0
  %4754 = vmatprep.subr.bf16.mxu0 0
  %4755 = vmatpush2.bf16.msra.mxu0 0
  %4756 = vmatprep.subr.bf16.mxu0 0
  %4757 = vmatpush2.bf16.msra.mxu0 0
  %4758 = vmatprep.subr.bf16.mxu0 0
  %4759 = vmatpush2.bf16.msra.mxu0 0
  %4760 = vmatprep.subr.bf16.mxu0 0
  %4761 = vmatpush2.bf16.msra.mxu0 0
  %4762 = vmatprep.subr.bf16.mxu0 0
  %4763 = vmatpush2.bf16.msra.mxu0 0
  %4764 = vmatprep.subr.bf16.mxu0 0
  %4765 = vmatpush2.bf16.msra.mxu0 0
  %4766 = vmatprep.mubr.bf16.mxu0 0
  %4767 = vmatmul.mubr.bf16.gmra.mxu0 %v4726
  %v4768 = vpop.f32.mrf.mxu0
  %v4769 = vadd.f32 0.0, %v4768
  %v4770 = vpop.f32.mrf.mxu0
  %v4771 = vpop.f32.mrf.mxu0
  %v4772 = vadd.f32 0.0, %v4771
  %v4773 = vpop.f32.mrf.mxu0
  %4774 = vmatprep.mubr.bf16.mxu0 0
  %4775 = vmatmul.mubr.bf16.gmra.mxu0 %v4729
  %v4776 = vpop.f32.mrf.mxu0
  %v4777 = vadd.f32 0.0, %v4776
  %v4778 = vpop.f32.mrf.mxu0
  %v4779 = vpop.f32.mrf.mxu0
  %v4780 = vpop.f32.mrf.mxu0
  %4781 = vdwg.mxu0
  %4785 = vrot.lane.b32.xlu0 %v4641, 8
  %v4786 = vpop.permute.xlu0 %4785
  %4787 = vrot.lane.b32.xlu0 %v4644, 8
  %v4788 = vpop.permute.xlu0 %4787
  %4789 = vrot.lane.b32.xlu0 %v4649, 8
  %v4790 = vpop.permute.xlu0 %4789
  %4797 = vrot.lane.b32.xlu0 %v4705, 16
  %v4798 = vpop.permute.xlu0 %4797
  %4799 = vrot.lane.b32.xlu0 %v4708, 16
  %v4800 = vpop.permute.xlu0 %4799
  %4801 = vrot.lane.b32.xlu0 %v4713, 16
  %v4802 = vpop.permute.xlu0 %4801
  %4809 = vrot.lane.b32.xlu0 %v4769, 24
  %v4810 = vpop.permute.xlu0 %4809
  %4811 = vrot.lane.b32.xlu0 %v4772, 24
  %v4812 = vpop.permute.xlu0 %4811
  %4813 = vrot.lane.b32.xlu0 %v4777, 24
  %v4814 = vpop.permute.xlu0 %4813
  %v4818 = vsel %vm274, %v4575, %v4786
  %v4819 = vsel %vm274, %v4578, %v4788
  %v4820 = vsel %vm274, %v4583, %v4790
  %v4821 = vsel %vm1006, %v4818, %v4798
  %v4822 = vsel %vm1006, %v4819, %v4800
  %v4823 = vsel %vm1006, %v4820, %v4802
  %v4824 = vsel %vm338, %v4821, %v4810
  %v4825 = vsel %vm338, %v4822, %v4812
  %v4826 = vsel %vm338, %v4823, %v4814
  %v4827 = vld [vmem:[%s17] sm:$0xf]
  %v4828 = vld [vmem:[%s17 + $0x4] sm:$0xf]
  %v4829 = vld [vmem:[%s17 + $0x8] sm:$0xf]
  %v4830 = vld [vmem:[%s17 + $0xc] sm:$0xf]
  %v4831 = vpack.c.bf16 %v4825, %v4824
  %v4832 = vpack.c.bf16 %v4826, %v4826
  %v4833 = vld [vmem:[%s18] sm:$0x1]
  %v4835 = vlaneseq
  %v4836 = vshrl.u32 %v4835, 7
  %v4837 = vsub.s32 0, %v4836
  %v4838 = vrot.slane %v4833, %v4837
  %v4844 = vunpack.c.l.b16 %v4827
  %v4845 = vunpack.c.l.b16 %v4828
  %v4846 = vunpack.c.l.b16 %v4829
  %v4847 = vunpack.c.l.b16 %v4830
  %v4848 = vpack.c.b16 %v4845, %v4844
  %v4849 = vpack.c.b16 %v4847, %v4846
  %v4853 = vsel %vm123, %v4831, 0
  %v4856 = vsel %vm123, %v4832, 0
  %4858 = vmatprep.subr.bf16.mxu0 0
  %4859 = vmatpush1.bf16.msra.mxu0 0
  %4860 = vmatprep.subr.bf16.mxu0 0
  %4861 = vmatpush1.bf16.msra.mxu0 0
  %4862 = vmatprep.subr.bf16.mxu0 0
  %4863 = vmatpush1.bf16.msra.mxu0 0
  %4864 = vmatprep.subr.bf16.mxu0 0
  %4865 = vmatpush1.bf16.msra.mxu0 0
  %4866 = vmatprep.subr.bf16.mxu0 0
  %4867 = vmatpush1.bf16.msra.mxu0 0
  %4868 = vmatprep.subr.bf16.mxu0 0
  %4869 = vmatpush1.bf16.msra.mxu0 0
  %4870 = vmatprep.subr.bf16.mxu0 0
  %4871 = vmatpush1.bf16.msra.mxu0 %v4849
  %4872 = vmatprep.subr.bf16.mxu0 0
  %4873 = vmatpush1.bf16.msra.mxu0 %v4848
  %4874 = vmatprep.subr.bf16.mxu0 0
  %4875 = vmatpush2.bf16.msra.mxu0 0
  %4876 = vmatprep.subr.bf16.mxu0 0
  %4877 = vmatpush2.bf16.msra.mxu0 0
  %4878 = vmatprep.subr.bf16.mxu0 0
  %4879 = vmatpush2.bf16.msra.mxu0 0
  %4880 = vmatprep.subr.bf16.mxu0 0
  %4881 = vmatpush2.bf16.msra.mxu0 0
  %4882 = vmatprep.subr.bf16.mxu0 0
  %4883 = vmatpush2.bf16.msra.mxu0 0
  %4884 = vmatprep.subr.bf16.mxu0 0
  %4885 = vmatpush2.bf16.msra.mxu0 0
  %4886 = vmatprep.subr.bf16.mxu0 0
  %4887 = vmatpush2.bf16.msra.mxu0 0
  %4888 = vmatprep.subr.bf16.mxu0 0
  %4889 = vmatpush2.bf16.msra.mxu0 0
  %4890 = vmatprep.mubr.bf16.mxu0 0
  %4891 = vmatmul.mubr.bf16.gmra.mxu0 %v4853
  %v4892 = vpop.f32.mrf.mxu0
  %v4893 = vadd.f32 %v4838, %v4892
  %v4894 = vpop.f32.mrf.mxu0
  %v4895 = vpop.f32.mrf.mxu0
  %v4896 = vadd.f32 %v4838, %v4895
  %v4897 = vpop.f32.mrf.mxu0
  %4898 = vmatprep.mubr.bf16.mxu0 0
  %4899 = vmatmul.mubr.bf16.gmra.mxu0 %v4856
  %v4900 = vpop.f32.mrf.mxu0
  %v4901 = vadd.f32 %v4838, %v4900
  %v4902 = vpop.f32.mrf.mxu0
  %v4903 = vpop.f32.mrf.mxu0
  %v4904 = vpop.f32.mrf.mxu0
  %4905 = vdwg.mxu0
  %v4906 = vsub.f32 %v4893, %v1502
  %v4907 = vsub.f32 %v4896, %v1503
  %v4908 = vsub.f32 %v4901, %v1504
  %v4909 = vld [vmem:[%s19] sm:$0x1]
  %v4910 = vld [vmem:[%s20] sm:$0x1]
  %v4911 = vsel %vm123, %v4906, 0.0
  %4912 = vadd.xlane.f32.xlu0 %v4911
  %v4913 = vpop.xlane.xlu0 %4912
  %v4914 = vsel %vm123, %v4907, 0.0
  %4915 = vadd.xlane.f32.xlu0 %v4914
  %v4916 = vpop.xlane.xlu0 %4915
  %v4917 = vsel %vm123, %v4908, 0.0
  %4918 = vadd.xlane.f32.xlu0 %v4917
  %v4919 = vpop.xlane.xlu0 %4918
  %v4920 = vmul.f32 %v4913, %v133
  %v4921 = vmul.f32 %v4916, %v133
  %v4922 = vmul.f32 %v4919, %v133
  %v4923 = vsub.f32 %v4906, %v4920
  %v4924 = vsub.f32 %v4907, %v4921
  %v4925 = vsub.f32 %v4908, %v4922
  %v4926 = vmul.f32 %v4923, %v4923
  %v4927 = vmul.f32 %v4924, %v4924
  %v4928 = vmul.f32 %v4925, %v4925
  %v4929 = vsel %vm123, %v4926, 0.0
  %4930 = vadd.xlane.f32.xlu0 %v4929
  %v4931 = vpop.xlane.xlu0 %4930
  %v4932 = vsel %vm123, %v4927, 0.0
  %4933 = vadd.xlane.f32.xlu0 %v4932
  %v4934 = vpop.xlane.xlu0 %4933
  %v4935 = vsel %vm123, %v4928, 0.0
  %4936 = vadd.xlane.f32.xlu0 %v4935
  %v4937 = vpop.xlane.xlu0 %4936
  %v4938 = vmul.f32 %v4931, %v133
  %v4939 = vmul.f32 %v4934, %v133
  %v4940 = vmul.f32 %v4937, %v133
  %v4941 = vadd.f32 %v4938, 1e-05
  %v4942 = vadd.f32 %v4939, 1e-05
  %v4943 = vadd.f32 %v4940, 1e-05
  %v4944 = vrsqrt.pop %v4941
  %v4945 = vrsqrt.pop %v4942
  %v4946 = vrsqrt.pop %v4943
  %v4947 = vmul.f32 %v4923, %v4944
  %v4948 = vmul.f32 %v4924, %v4945
  %v4949 = vmul.f32 %v4925, %v4946
  %v4951 = vlaneseq
  %v4952 = vshrl.u32 %v4951, 7
  %v4953 = vsub.s32 0, %v4952
  %v4954 = vrot.slane %v4909, %v4953
  %v4956 = vmul.f32 %v4947, %v4954
  %v4957 = vmul.f32 %v4948, %v4954
  %v4958 = vmul.f32 %v4949, %v4954
  %v4960 = vlaneseq
  %v4961 = vshrl.u32 %v4960, 7
  %v4962 = vsub.s32 0, %v4961
  %v4963 = vrot.slane %v4910, %v4962
  %v4965 = vadd.f32 %v4956, %v4963
  %v4966 = vadd.f32 %v4957, %v4963
  %v4967 = vadd.f32 %v4958, %v4963
  %v4968 = vld [vmem:[%s21] sm:$0xf]
  %v4969 = vld [vmem:[%s21 + $0x4] sm:$0xf]
  %v4970 = vld [vmem:[%s21 + $0x8] sm:$0xf]
  %v4971 = vld [vmem:[%s21 + $0xc] sm:$0xf]
  %v4972 = vpack.c.bf16 %v4966, %v4965
  %v4973 = vpack.c.bf16 %v4967, %v4967
  %v4978 = vunpack.c.l.b16 %v4968
  %v4979 = vunpack.c.l.b16 %v4969
  %v4980 = vunpack.c.l.b16 %v4970
  %v4981 = vunpack.c.l.b16 %v4971
  %v4982 = vpack.c.b16 %v4979, %v4978
  %v4983 = vpack.c.b16 %v4981, %v4980
  %v4987 = vsel %vm123, %v4972, 0
  %v4990 = vsel %vm123, %v4973, 0
  %4992 = vmatprep.subr.bf16.mxu0 0
  %4993 = vmatpush1.bf16.msra.mxu0 0
  %4994 = vmatprep.subr.bf16.mxu0 0
  %4995 = vmatpush1.bf16.msra.mxu0 0
  %4996 = vmatprep.subr.bf16.mxu0 0
  %4997 = vmatpush1.bf16.msra.mxu0 0
  %4998 = vmatprep.subr.bf16.mxu0 0
  %4999 = vmatpush1.bf16.msra.mxu0 0
  %5000 = vmatprep.subr.bf16.mxu0 0
  %5001 = vmatpush1.bf16.msra.mxu0 0
  %5002 = vmatprep.subr.bf16.mxu0 0
  %5003 = vmatpush1.bf16.msra.mxu0 0
  %5004 = vmatprep.subr.bf16.mxu0 0
  %5005 = vmatpush1.bf16.msra.mxu0 %v4983
  %5006 = vmatprep.subr.bf16.mxu0 0
  %5007 = vmatpush1.bf16.msra.mxu0 %v4982
  %5008 = vmatprep.subr.bf16.mxu0 0
  %5009 = vmatpush2.bf16.msra.mxu0 0
  %5010 = vmatprep.subr.bf16.mxu0 0
  %5011 = vmatpush2.bf16.msra.mxu0 0
  %5012 = vmatprep.subr.bf16.mxu0 0
  %5013 = vmatpush2.bf16.msra.mxu0 0
  %5014 = vmatprep.subr.bf16.mxu0 0
  %5015 = vmatpush2.bf16.msra.mxu0 0
  %5016 = vmatprep.subr.bf16.mxu0 0
  %5017 = vmatpush2.bf16.msra.mxu0 0
  %5018 = vmatprep.subr.bf16.mxu0 0
  %5019 = vmatpush2.bf16.msra.mxu0 0
  %5020 = vmatprep.subr.bf16.mxu0 0
  %5021 = vmatpush2.bf16.msra.mxu0 0
  %5022 = vmatprep.subr.bf16.mxu0 0
  %5023 = vmatpush2.bf16.msra.mxu0 0
  %5024 = vmatprep.mubr.bf16.mxu0 0
  %5025 = vmatmul.mubr.bf16.gmra.mxu0 %v4987
  %v5026 = vpop.f32.mrf.mxu0
  %v5027 = vadd.f32 0.0, %v5026
  %v5028 = vpop.f32.mrf.mxu0
  %v5029 = vpop.f32.mrf.mxu0
  %v5030 = vadd.f32 0.0, %v5029
  %v5031 = vpop.f32.mrf.mxu0
  %5032 = vmatprep.mubr.bf16.mxu0 0
  %5033 = vmatmul.mubr.bf16.gmra.mxu0 %v4990
  %v5034 = vpop.f32.mrf.mxu0
  %v5035 = vadd.f32 0.0, %v5034
  %v5036 = vpop.f32.mrf.mxu0
  %v5037 = vpop.f32.mrf.mxu0
  %v5038 = vpop.f32.mrf.mxu0
  %5039 = vdwg.mxu0
  %s5040 = scalar_lea.vmem %s23, 24
  %5041 = vst.msk [vmem:[%s5040] sm:$0xff] %vm1006, %v5027
  %5042 = vst.msk [vmem:[%s5040 + $0x8] sm:$0xff] %vm1006, %v5030
  %5043 = vst.msk [vmem:[%s5040 + $0x10] sm:$0xff] %vm1006, %v5035
  %v5044 = vmul.f32 %v5027, %v5027
  %v5045 = vmul.f32 %v5030, %v5030
  %v5046 = vmul.f32 %v5035, %v5035
  %v5047 = vsel %vm1006, %v5044, 0.0
  %5048 = vadd.xlane.f32.xlu0 %v5047
  %v5049 = vpop.xlane.xlu0 %5048
  %v5050 = vsel %vm1006, %v5045, 0.0
  %5051 = vadd.xlane.f32.xlu0 %v5050
  %v5052 = vpop.xlane.xlu0 %5051
  %v5053 = vsel %vm1006, %v5046, 0.0
  %5054 = vadd.xlane.f32.xlu0 %v5053
  %v5055 = vpop.xlane.xlu0 %5054
  %v5056 = vadd.f32 %v5049, 1e-12
  %v5057 = vadd.f32 %v5052, 1e-12
  %v5058 = vadd.f32 %v5055, 1e-12
  %v5059 = vrsqrt.pop %v5056
  %v5060 = vrsqrt.pop %v5057
  %v5061 = vrsqrt.pop %v5058
  %v5062 = vmul.f32 %v5027, %v5059
  %v5063 = vmul.f32 %v5030, %v5060
  %v5064 = vmul.f32 %v5035, %v5061
  %v5066 = vsel %vm1006, %v5062, 0
  %v5069 = vsel %vm1006, %v5063, 0
  %v5072 = vsel %vm1006, %v5064, 0
  %5074 = vmatprep.subr.mxu0 0.0
  %5075 = vmatpush1.xpose.msra.mxu0 0.0
  %5076 = vmatprep.subr.mxu0 0.0
  %5077 = vmatpush1.xpose.msra.mxu0 0.0
  %5078 = vmatprep.subr.mxu0 0.0
  %5079 = vmatpush1.xpose.msra.mxu0 0.0
  %5080 = vmatprep.subr.mxu0 0.0
  %5081 = vmatpush1.xpose.msra.mxu0 0.0
  %5082 = vmatprep.subr.mxu0 0.0
  %5083 = vmatpush1.xpose.msra.mxu0 0.0
  %5084 = vmatprep.subr.mxu0 0.0
  %5085 = vmatpush1.xpose.msra.mxu0 0.0
  %5086 = vmatprep.subr.mxu0 0.0
  %5087 = vmatpush1.xpose.msra.mxu0 0.0
  %5088 = vmatprep.subr.mxu0 0.0
  %5089 = vmatpush1.xpose.msra.mxu0 0.0
  %5090 = vmatprep.subr.mxu0 0.0
  %5091 = vmatpush1.xpose.msra.mxu0 0.0
  %5092 = vmatprep.subr.mxu0 0.0
  %5093 = vmatpush1.xpose.msra.mxu0 0.0
  %5094 = vmatprep.subr.mxu0 0.0
  %5095 = vmatpush1.xpose.msra.mxu0 0.0
  %5096 = vmatprep.subr.mxu0 0.0
  %5097 = vmatpush1.xpose.msra.mxu0 0.0
  %5098 = vmatprep.subr.mxu0 0.0
  %5099 = vmatpush1.xpose.msra.mxu0 0.0
  %5100 = vmatprep.subr.mxu0 0.0
  %5101 = vmatpush1.xpose.msra.mxu0 0.0
  %5102 = vmatprep.subr.mxu0 0.0
  %5103 = vmatpush1.xpose.msra.mxu0 0.0
  %5104 = vmatprep.subr.mxu0 0.0
  %5105 = vmatpush1.xpose.msra.mxu0 %v3863
  %5106 = vmatprep.subr.mxu0 0.0
  %5107 = vmatpush2.xpose.msra.mxu0 0.0
  %5108 = vmatprep.subr.mxu0 0.0
  %5109 = vmatpush2.xpose.msra.mxu0 0.0
  %5110 = vmatprep.subr.mxu0 0.0
  %5111 = vmatpush2.xpose.msra.mxu0 0.0
  %5112 = vmatprep.subr.mxu0 0.0
  %5113 = vmatpush2.xpose.msra.mxu0 0.0
  %5114 = vmatprep.subr.mxu0 0.0
  %5115 = vmatpush2.xpose.msra.mxu0 0.0
  %5116 = vmatprep.subr.mxu0 0.0
  %5117 = vmatpush2.xpose.msra.mxu0 0.0
  %5118 = vmatprep.subr.mxu0 0.0
  %5119 = vmatpush2.xpose.msra.mxu0 0.0
  %5120 = vmatprep.subr.mxu0 0.0
  %5121 = vmatpush2.xpose.msra.mxu0 0.0
  %5122 = vmatprep.subr.mxu0 0.0
  %5123 = vmatpush2.xpose.msra.mxu0 0.0
  %5124 = vmatprep.subr.mxu0 0.0
  %5125 = vmatpush2.xpose.msra.mxu0 0.0
  %5126 = vmatprep.subr.mxu0 0.0
  %5127 = vmatpush2.xpose.msra.mxu0 0.0
  %5128 = vmatprep.subr.mxu0 0.0
  %5129 = vmatpush2.xpose.msra.mxu0 0.0
  %5130 = vmatprep.subr.mxu0 0.0
  %5131 = vmatpush2.xpose.msra.mxu0 0.0
  %5132 = vmatprep.subr.mxu0 0.0
  %5133 = vmatpush2.xpose.msra.mxu0 0.0
  %5134 = vmatprep.subr.mxu0 0.0
  %5135 = vmatpush2.xpose.msra.mxu0 0.0
  %5136 = vmatprep.subr.mxu0 0.0
  %5137 = vmatpush2.xpose.msra.mxu0 0.0
  %5138 = vmatprep.mubr.f32.mxu0 0.0
  %5139 = vmatmul.mubr.f32.gmra.mxu0 %v5066
  %v5140 = vpop.f32.mrf.mxu0
  %v5141 = vadd.f32 0.0, %v5140
  %v5142 = vpop.f32.mrf.mxu0
  %5143 = vmatprep.mubr.f32.mxu0 0.0
  %5144 = vmatmul.mubr.f32.gmra.mxu0 %v5069
  %v5145 = vpop.f32.mrf.mxu0
  %v5146 = vadd.f32 0.0, %v5145
  %v5147 = vpop.f32.mrf.mxu0
  %5148 = vmatprep.mubr.f32.mxu0 0.0
  %5149 = vmatmul.mubr.f32.gmra.mxu0 %v5072
  %v5150 = vpop.f32.mrf.mxu0
  %v5151 = vadd.f32 0.0, %v5150
  %v5152 = vpop.f32.mrf.mxu0
  %5153 = vdwg.mxu0
  %v5154 = vmul.f32 %v5141, 100.0
  %v5155 = vmul.f32 %v5146, 100.0
  %v5156 = vmul.f32 %v5151, 100.0
  %v5157 = vsel %vm3948, %v5154, -inf
  %5158 = vmax.xlane.f32.xlu0 %v5157
  %v5159 = vpop.xlane.xlu0 %5158
  %v5160 = vsel %vm3948, %v5155, -inf
  %5161 = vmax.xlane.f32.xlu0 %v5160
  %v5162 = vpop.xlane.xlu0 %5161
  %v5163 = vsel %vm3948, %v5156, -inf
  %5164 = vmax.xlane.f32.xlu0 %v5163
  %v5165 = vpop.xlane.xlu0 %5164
  %v5166 = vsub.f32 %v5154, %v5159
  %v5167 = vsub.f32 %v5155, %v5162
  %v5168 = vsub.f32 %v5156, %v5165
  %v5169 = vmul.f32 %v5166, 1.442695
  %v5170 = vpow.pop %v5169
  %v5171 = vmul.f32 %v5167, 1.442695
  %v5172 = vpow.pop %v5171
  %v5173 = vmul.f32 %v5168, 1.442695
  %v5174 = vpow.pop %v5173
  %v5175 = vsel %vm3948, %v5170, 0.0
  %5176 = vadd.xlane.f32.xlu0 %v5175
  %v5177 = vpop.xlane.xlu0 %5176
  %v5178 = vsel %vm3948, %v5172, 0.0
  %5179 = vadd.xlane.f32.xlu0 %v5178
  %v5180 = vpop.xlane.xlu0 %5179
  %v5181 = vsel %vm3948, %v5174, 0.0
  %5182 = vadd.xlane.f32.xlu0 %v5181
  %v5183 = vpop.xlane.xlu0 %5182
  %v5184 = vrcp.pop %v5177
  %v5185 = vmul.f32 %v5170, %v5184
  %v5186 = vrcp.pop %v5180
  %v5187 = vmul.f32 %v5172, %v5186
  %v5188 = vrcp.pop %v5183
  %v5189 = vmul.f32 %v5174, %v5188
  %v5190 = vmul.f32 %v5185, %v103
  %v5191 = vmul.f32 %v5187, %v104
  %v5192 = vmul.f32 %v5189, %v105
  %v5193 = vsel %vm338, %v4010, 0.0
  %v5194 = vsel %vm338, %v4012, 0.0
  %v5195 = vadd.f32 %v5193, %v5194
  %v5196 = vsel %vm338, %v4014, 0.0
  %v5197 = vadd.f32 %v5195, %v5196
  %v5198 = vrot.slane %v5197, 4
  %v5199 = vadd.f32 %v5197, %v5198
  %v5200 = vrot.slane %v5199, 2
  %v5201 = vadd.f32 %v5199, %v5200
  %v5202 = vrot.slane %v5201, 1
  %v5203 = vadd.f32 %v5201, %v5202
  %v5204 = vrcp.pop %v5203
  %v5205 = vmul.f32 %v4010, %v5204
  %v5206 = vmul.f32 %v4012, %v5204
  %v5207 = vmul.f32 %v4014, %v5204
  %v5208 = vsel %vm338, %v5205, 0.0
  %5209 = vadd.xlane.f32.xlu0 %v5208
  %v5210 = vpop.xlane.xlu0 %5209
  %v5211 = vsel %vm338, %v5206, 0.0
  %5212 = vadd.xlane.f32.xlu0 %v5211
  %v5213 = vpop.xlane.xlu0 %5212
  %v5214 = vsel %vm338, %v5207, 0.0
  %5215 = vadd.xlane.f32.xlu0 %v5214
  %v5216 = vpop.xlane.xlu0 %5215
  %v5217 = vrcp.pop %v5210
  %v5218 = vmul.f32 %v5205, %v5217
  %v5219 = vrcp.pop %v5213
  %v5220 = vmul.f32 %v5206, %v5219
  %v5221 = vrcp.pop %v5216
  %v5222 = vmul.f32 %v5207, %v5221
  %5223 = vxpose.xlu0.b32.start [1/16] %v5218, 128
  %5224 = vxpose.xlu0.b32.cont [2/16] %v5220, 128
  %5225 = vxpose.xlu0.b32.cont [3/16] %v5222, 128
  %5226 = vxpose.xlu0.b32.cont [4/16] 0.0, 128
  %5227 = vxpose.xlu0.b32.cont [5/16] 0.0, 128
  %5228 = vxpose.xlu0.b32.cont [6/16] 0.0, 128
  %5229 = vxpose.xlu0.b32.cont [7/16] 0.0, 128
  %5230 = vxpose.xlu0.b32.cont [8/16] 0.0, 128
  %5231 = vxpose.xlu0.b32.cont [9/16] 0.0, 128
  %5232 = vxpose.xlu0.b32.cont [10/16] 0.0, 128
  %5233 = vxpose.xlu0.b32.cont [11/16] 0.0, 128
  %5234 = vxpose.xlu0.b32.cont [12/16] 0.0, 128
  %5235 = vxpose.xlu0.b32.cont [13/16] 0.0, 128
  %5236 = vxpose.xlu0.b32.cont [14/16] 0.0, 128
  %5237 = vxpose.xlu0.b32.cont [15/16] 0.0, 128
  %5238 = vxpose.xlu0.b32.end [16/16] 0.0, 128
  %v5239 = vpop.trf.xlu0
  %v5240 = vpop.trf.xlu0
  %v5241 = vpop.trf.xlu0
  %v5242 = vpop.trf.xlu0
  %v5243 = vpop.trf.xlu0
  %v5244 = vpop.trf.xlu0
  %v5245 = vpop.trf.xlu0
  %v5246 = vpop.trf.xlu0
  %v5247 = vpop.trf.xlu0
  %v5248 = vpop.trf.xlu0
  %v5249 = vpop.trf.xlu0
  %v5250 = vpop.trf.xlu0
  %v5251 = vpop.trf.xlu0
  %v5252 = vpop.trf.xlu0
  %v5253 = vpop.trf.xlu0
  %v5254 = vpop.trf.xlu0
  %v5255 = vadd.f32 %v5218, %v5239
  %v5256 = vadd.f32 %v5220, %v5240
  %v5257 = vadd.f32 %v5222, %v5241
  %v5258 = vmul.f32 %v5255, 0.5
  %v5259 = vmul.f32 %v5256, 0.5
  %v5260 = vmul.f32 %v5257, 0.5
  %v5261 = vsel %vm338, %v5258, -inf
  %v5262 = vsel %vm338, %v5259, -inf
  %v5263 = vsel %vm338, %v5260, -inf
  %v5264 = vmax.f32 %v5261, %v5262
  %v5265 = vmax.f32 %v5264, %v5263
  %v5266 = vrot.slane %v5265, 4
  %v5267 = vmax.f32 %v5265, %v5266
  %v5268 = vrot.slane %v5267, 2
  %v5269 = vmax.f32 %v5267, %v5268
  %v5270 = vrot.slane %v5269, 1
  %v5271 = vmax.f32 %v5269, %v5270
  %v5272 = vmul.f32 %v5271, 0.2
  %v5273 = vsub.f32 %v5258, %v5272
  %v5274 = vsub.f32 %v5259, %v5272
  %v5275 = vsub.f32 %v5260, %v5272
  %v5276 = vmax.f32 %v5273, 0.0
  %v5277 = vmax.f32 %v5274, 0.0
  %v5278 = vmax.f32 %v5275, 0.0
  %v5279 = vsel %vm338, %v5276, 0.0
  %5280 = vadd.xlane.f32.xlu0 %v5279
  %v5281 = vpop.xlane.xlu0 %5280
  %v5282 = vsel %vm338, %v5277, 0.0
  %5283 = vadd.xlane.f32.xlu0 %v5282
  %v5284 = vpop.xlane.xlu0 %5283
  %v5285 = vsel %vm338, %v5278, 0.0
  %5286 = vadd.xlane.f32.xlu0 %v5285
  %v5287 = vpop.xlane.xlu0 %5286
  %v5288 = vrcp.pop %v5281
  %v5289 = vmul.f32 %v5276, %v5288
  %v5290 = vrcp.pop %v5284
  %v5291 = vmul.f32 %v5277, %v5290
  %v5292 = vrcp.pop %v5287
  %v5293 = vmul.f32 %v5278, %v5292
  %v5294 = vsel %vm338, %v4111, 0.0
  %v5295 = vsel %vm338, %v4113, 0.0
  %v5296 = vadd.f32 %v5294, %v5295
  %v5297 = vsel %vm338, %v4115, 0.0
  %v5298 = vadd.f32 %v5296, %v5297
  %v5299 = vrot.slane %v5298, 4
  %v5300 = vadd.f32 %v5298, %v5299
  %v5301 = vrot.slane %v5300, 2
  %v5302 = vadd.f32 %v5300, %v5301
  %v5303 = vrot.slane %v5302, 1
  %v5304 = vadd.f32 %v5302, %v5303
  %v5305 = vrcp.pop %v5304
  %v5306 = vmul.f32 %v4111, %v5305
  %v5307 = vmul.f32 %v4113, %v5305
  %v5308 = vmul.f32 %v4115, %v5305
  %v5309 = vsel %vm338, %v5306, 0.0
  %5310 = vadd.xlane.f32.xlu0 %v5309
  %v5311 = vpop.xlane.xlu0 %5310
  %v5312 = vsel %vm338, %v5307, 0.0
  %5313 = vadd.xlane.f32.xlu0 %v5312
  %v5314 = vpop.xlane.xlu0 %5313
  %v5315 = vsel %vm338, %v5308, 0.0
  %5316 = vadd.xlane.f32.xlu0 %v5315
  %v5317 = vpop.xlane.xlu0 %5316
  %v5318 = vrcp.pop %v5311
  %v5319 = vmul.f32 %v5306, %v5318
  %v5320 = vrcp.pop %v5314
  %v5321 = vmul.f32 %v5307, %v5320
  %v5322 = vrcp.pop %v5317
  %v5323 = vmul.f32 %v5308, %v5322
  %5324 = vxpose.xlu0.b32.start [1/16] %v5319, 128
  %5325 = vxpose.xlu0.b32.cont [2/16] %v5321, 128
  %5326 = vxpose.xlu0.b32.cont [3/16] %v5323, 128
  %5327 = vxpose.xlu0.b32.cont [4/16] 0.0, 128
  %5328 = vxpose.xlu0.b32.cont [5/16] 0.0, 128
  %5329 = vxpose.xlu0.b32.cont [6/16] 0.0, 128
  %5330 = vxpose.xlu0.b32.cont [7/16] 0.0, 128
  %5331 = vxpose.xlu0.b32.cont [8/16] 0.0, 128
  %5332 = vxpose.xlu0.b32.cont [9/16] 0.0, 128
  %5333 = vxpose.xlu0.b32.cont [10/16] 0.0, 128
  %5334 = vxpose.xlu0.b32.cont [11/16] 0.0, 128
  %5335 = vxpose.xlu0.b32.cont [12/16] 0.0, 128
  %5336 = vxpose.xlu0.b32.cont [13/16] 0.0, 128
  %5337 = vxpose.xlu0.b32.cont [14/16] 0.0, 128
  %5338 = vxpose.xlu0.b32.cont [15/16] 0.0, 128
  %5339 = vxpose.xlu0.b32.end [16/16] 0.0, 128
  %v5340 = vpop.trf.xlu0
  %v5341 = vpop.trf.xlu0
  %v5342 = vpop.trf.xlu0
  %v5343 = vpop.trf.xlu0
  %v5344 = vpop.trf.xlu0
  %v5345 = vpop.trf.xlu0
  %v5346 = vpop.trf.xlu0
  %v5347 = vpop.trf.xlu0
  %v5348 = vpop.trf.xlu0
  %v5349 = vpop.trf.xlu0
  %v5350 = vpop.trf.xlu0
  %v5351 = vpop.trf.xlu0
  %v5352 = vpop.trf.xlu0
  %v5353 = vpop.trf.xlu0
  %v5354 = vpop.trf.xlu0
  %v5355 = vpop.trf.xlu0
  %v5356 = vadd.f32 %v5319, %v5340
  %v5357 = vadd.f32 %v5321, %v5341
  %v5358 = vadd.f32 %v5323, %v5342
  %v5359 = vmul.f32 %v5356, 0.5
  %v5360 = vmul.f32 %v5357, 0.5
  %v5361 = vmul.f32 %v5358, 0.5
  %v5362 = vsel %vm338, %v5359, -inf
  %v5363 = vsel %vm338, %v5360, -inf
  %v5364 = vsel %vm338, %v5361, -inf
  %v5365 = vmax.f32 %v5362, %v5363
  %v5366 = vmax.f32 %v5365, %v5364
  %v5367 = vrot.slane %v5366, 4
  %v5368 = vmax.f32 %v5366, %v5367
  %v5369 = vrot.slane %v5368, 2
  %v5370 = vmax.f32 %v5368, %v5369
  %v5371 = vrot.slane %v5370, 1
  %v5372 = vmax.f32 %v5370, %v5371
  %v5373 = vmul.f32 %v5372, 0.2
  %v5374 = vsub.f32 %v5359, %v5373
  %v5375 = vsub.f32 %v5360, %v5373
  %v5376 = vsub.f32 %v5361, %v5373
  %v5377 = vmax.f32 %v5374, 0.0
  %v5378 = vmax.f32 %v5375, 0.0
  %v5379 = vmax.f32 %v5376, 0.0
  %v5380 = vsel %vm338, %v5377, 0.0
  %5381 = vadd.xlane.f32.xlu0 %v5380
  %v5382 = vpop.xlane.xlu0 %5381
  %v5383 = vsel %vm338, %v5378, 0.0
  %5384 = vadd.xlane.f32.xlu0 %v5383
  %v5385 = vpop.xlane.xlu0 %5384
  %v5386 = vsel %vm338, %v5379, 0.0
  %5387 = vadd.xlane.f32.xlu0 %v5386
  %v5388 = vpop.xlane.xlu0 %5387
  %v5389 = vrcp.pop %v5382
  %v5390 = vmul.f32 %v5377, %v5389
  %v5391 = vrcp.pop %v5385
  %v5392 = vmul.f32 %v5378, %v5391
  %v5393 = vrcp.pop %v5388
  %v5394 = vmul.f32 %v5379, %v5393
  %v5395 = vsel %vm338, %v4212, 0.0
  %v5396 = vsel %vm338, %v4214, 0.0
  %v5397 = vadd.f32 %v5395, %v5396
  %v5398 = vsel %vm338, %v4216, 0.0
  %v5399 = vadd.f32 %v5397, %v5398
  %v5400 = vrot.slane %v5399, 4
  %v5401 = vadd.f32 %v5399, %v5400
  %v5402 = vrot.slane %v5401, 2
  %v5403 = vadd.f32 %v5401, %v5402
  %v5404 = vrot.slane %v5403, 1
  %v5405 = vadd.f32 %v5403, %v5404
  %v5406 = vrcp.pop %v5405
  %v5407 = vmul.f32 %v4212, %v5406
  %v5408 = vmul.f32 %v4214, %v5406
  %v5409 = vmul.f32 %v4216, %v5406
  %v5410 = vsel %vm338, %v5407, 0.0
  %5411 = vadd.xlane.f32.xlu0 %v5410
  %v5412 = vpop.xlane.xlu0 %5411
  %v5413 = vsel %vm338, %v5408, 0.0
  %5414 = vadd.xlane.f32.xlu0 %v5413
  %v5415 = vpop.xlane.xlu0 %5414
  %v5416 = vsel %vm338, %v5409, 0.0
  %5417 = vadd.xlane.f32.xlu0 %v5416
  %v5418 = vpop.xlane.xlu0 %5417
  %v5419 = vrcp.pop %v5412
  %v5420 = vmul.f32 %v5407, %v5419
  %v5421 = vrcp.pop %v5415
  %v5422 = vmul.f32 %v5408, %v5421
  %v5423 = vrcp.pop %v5418
  %v5424 = vmul.f32 %v5409, %v5423
  %5425 = vxpose.xlu0.b32.start [1/16] %v5420, 128
  %5426 = vxpose.xlu0.b32.cont [2/16] %v5422, 128
  %5427 = vxpose.xlu0.b32.cont [3/16] %v5424, 128
  %5428 = vxpose.xlu0.b32.cont [4/16] 0.0, 128
  %5429 = vxpose.xlu0.b32.cont [5/16] 0.0, 128
  %5430 = vxpose.xlu0.b32.cont [6/16] 0.0, 128
  %5431 = vxpose.xlu0.b32.cont [7/16] 0.0, 128
  %5432 = vxpose.xlu0.b32.cont [8/16] 0.0, 128
  %5433 = vxpose.xlu0.b32.cont [9/16] 0.0, 128
  %5434 = vxpose.xlu0.b32.cont [10/16] 0.0, 128
  %5435 = vxpose.xlu0.b32.cont [11/16] 0.0, 128
  %5436 = vxpose.xlu0.b32.cont [12/16] 0.0, 128
  %5437 = vxpose.xlu0.b32.cont [13/16] 0.0, 128
  %5438 = vxpose.xlu0.b32.cont [14/16] 0.0, 128
  %5439 = vxpose.xlu0.b32.cont [15/16] 0.0, 128
  %5440 = vxpose.xlu0.b32.end [16/16] 0.0, 128
  %v5441 = vpop.trf.xlu0
  %v5442 = vpop.trf.xlu0
  %v5443 = vpop.trf.xlu0
  %v5444 = vpop.trf.xlu0
  %v5445 = vpop.trf.xlu0
  %v5446 = vpop.trf.xlu0
  %v5447 = vpop.trf.xlu0
  %v5448 = vpop.trf.xlu0
  %v5449 = vpop.trf.xlu0
  %v5450 = vpop.trf.xlu0
  %v5451 = vpop.trf.xlu0
  %v5452 = vpop.trf.xlu0
  %v5453 = vpop.trf.xlu0
  %v5454 = vpop.trf.xlu0
  %v5455 = vpop.trf.xlu0
  %v5456 = vpop.trf.xlu0
  %v5457 = vadd.f32 %v5420, %v5441
  %v5458 = vadd.f32 %v5422, %v5442
  %v5459 = vadd.f32 %v5424, %v5443
  %v5460 = vmul.f32 %v5457, 0.5
  %v5461 = vmul.f32 %v5458, 0.5
  %v5462 = vmul.f32 %v5459, 0.5
  %v5463 = vsel %vm338, %v5460, -inf
  %v5464 = vsel %vm338, %v5461, -inf
  %v5465 = vsel %vm338, %v5462, -inf
  %v5466 = vmax.f32 %v5463, %v5464
  %v5467 = vmax.f32 %v5466, %v5465
  %v5468 = vrot.slane %v5467, 4
  %v5469 = vmax.f32 %v5467, %v5468
  %v5470 = vrot.slane %v5469, 2
  %v5471 = vmax.f32 %v5469, %v5470
  %v5472 = vrot.slane %v5471, 1
  %v5473 = vmax.f32 %v5471, %v5472
  %v5474 = vmul.f32 %v5473, 0.2
  %v5475 = vsub.f32 %v5460, %v5474
  %v5476 = vsub.f32 %v5461, %v5474
  %v5477 = vsub.f32 %v5462, %v5474
  %v5478 = vmax.f32 %v5475, 0.0
  %v5479 = vmax.f32 %v5476, 0.0
  %v5480 = vmax.f32 %v5477, 0.0
  %v5481 = vsel %vm338, %v5478, 0.0
  %5482 = vadd.xlane.f32.xlu0 %v5481
  %v5483 = vpop.xlane.xlu0 %5482
  %v5484 = vsel %vm338, %v5479, 0.0
  %5485 = vadd.xlane.f32.xlu0 %v5484
  %v5486 = vpop.xlane.xlu0 %5485
  %v5487 = vsel %vm338, %v5480, 0.0
  %5488 = vadd.xlane.f32.xlu0 %v5487
  %v5489 = vpop.xlane.xlu0 %5488
  %v5490 = vrcp.pop %v5483
  %v5491 = vmul.f32 %v5478, %v5490
  %v5492 = vrcp.pop %v5486
  %v5493 = vmul.f32 %v5479, %v5492
  %v5494 = vrcp.pop %v5489
  %v5495 = vmul.f32 %v5480, %v5494
  %v5496 = vsel %vm338, %v4313, 0.0
  %v5497 = vsel %vm338, %v4315, 0.0
  %v5498 = vadd.f32 %v5496, %v5497
  %v5499 = vsel %vm338, %v4317, 0.0
  %v5500 = vadd.f32 %v5498, %v5499
  %v5501 = vrot.slane %v5500, 4
  %v5502 = vadd.f32 %v5500, %v5501
  %v5503 = vrot.slane %v5502, 2
  %v5504 = vadd.f32 %v5502, %v5503
  %v5505 = vrot.slane %v5504, 1
  %v5506 = vadd.f32 %v5504, %v5505
  %v5507 = vrcp.pop %v5506
  %v5508 = vmul.f32 %v4313, %v5507
  %v5509 = vmul.f32 %v4315, %v5507
  %v5510 = vmul.f32 %v4317, %v5507
  %v5511 = vsel %vm338, %v5508, 0.0
  %5512 = vadd.xlane.f32.xlu0 %v5511
  %v5513 = vpop.xlane.xlu0 %5512
  %v5514 = vsel %vm338, %v5509, 0.0
  %5515 = vadd.xlane.f32.xlu0 %v5514
  %v5516 = vpop.xlane.xlu0 %5515
  %v5517 = vsel %vm338, %v5510, 0.0
  %5518 = vadd.xlane.f32.xlu0 %v5517
  %v5519 = vpop.xlane.xlu0 %5518
  %v5520 = vrcp.pop %v5513
  %v5521 = vmul.f32 %v5508, %v5520
  %v5522 = vrcp.pop %v5516
  %v5523 = vmul.f32 %v5509, %v5522
  %v5524 = vrcp.pop %v5519
  %v5525 = vmul.f32 %v5510, %v5524
  %5526 = vxpose.xlu0.b32.start [1/16] %v5521, 128
  %5527 = vxpose.xlu0.b32.cont [2/16] %v5523, 128
  %5528 = vxpose.xlu0.b32.cont [3/16] %v5525, 128
  %5529 = vxpose.xlu0.b32.cont [4/16] 0.0, 128
  %5530 = vxpose.xlu0.b32.cont [5/16] 0.0, 128
  %5531 = vxpose.xlu0.b32.cont [6/16] 0.0, 128
  %5532 = vxpose.xlu0.b32.cont [7/16] 0.0, 128
  %5533 = vxpose.xlu0.b32.cont [8/16] 0.0, 128
  %5534 = vxpose.xlu0.b32.cont [9/16] 0.0, 128
  %5535 = vxpose.xlu0.b32.cont [10/16] 0.0, 128
  %5536 = vxpose.xlu0.b32.cont [11/16] 0.0, 128
  %5537 = vxpose.xlu0.b32.cont [12/16] 0.0, 128
  %5538 = vxpose.xlu0.b32.cont [13/16] 0.0, 128
  %5539 = vxpose.xlu0.b32.cont [14/16] 0.0, 128
  %5540 = vxpose.xlu0.b32.cont [15/16] 0.0, 128
  %5541 = vxpose.xlu0.b32.end [16/16] 0.0, 128
  %v5542 = vpop.trf.xlu0
  %v5543 = vpop.trf.xlu0
  %v5544 = vpop.trf.xlu0
  %v5545 = vpop.trf.xlu0
  %v5546 = vpop.trf.xlu0
  %v5547 = vpop.trf.xlu0
  %v5548 = vpop.trf.xlu0
  %v5549 = vpop.trf.xlu0
  %v5550 = vpop.trf.xlu0
  %v5551 = vpop.trf.xlu0
  %v5552 = vpop.trf.xlu0
  %v5553 = vpop.trf.xlu0
  %v5554 = vpop.trf.xlu0
  %v5555 = vpop.trf.xlu0
  %v5556 = vpop.trf.xlu0
  %v5557 = vpop.trf.xlu0
  %v5558 = vadd.f32 %v5521, %v5542
  %v5559 = vadd.f32 %v5523, %v5543
  %v5560 = vadd.f32 %v5525, %v5544
  %v5561 = vmul.f32 %v5558, 0.5
  %v5562 = vmul.f32 %v5559, 0.5
  %v5563 = vmul.f32 %v5560, 0.5
  %v5564 = vsel %vm338, %v5561, -inf
  %v5565 = vsel %vm338, %v5562, -inf
  %v5566 = vsel %vm338, %v5563, -inf
  %v5567 = vmax.f32 %v5564, %v5565
  %v5568 = vmax.f32 %v5567, %v5566
  %v5569 = vrot.slane %v5568, 4
  %v5570 = vmax.f32 %v5568, %v5569
  %v5571 = vrot.slane %v5570, 2
  %v5572 = vmax.f32 %v5570, %v5571
  %v5573 = vrot.slane %v5572, 1
  %v5574 = vmax.f32 %v5572, %v5573
  %v5575 = vmul.f32 %v5574, 0.2
  %v5576 = vsub.f32 %v5561, %v5575
  %v5577 = vsub.f32 %v5562, %v5575
  %v5578 = vsub.f32 %v5563, %v5575
  %v5579 = vmax.f32 %v5576, 0.0
  %v5580 = vmax.f32 %v5577, 0.0
  %v5581 = vmax.f32 %v5578, 0.0
  %v5582 = vsel %vm338, %v5579, 0.0
  %5583 = vadd.xlane.f32.xlu0 %v5582
  %v5584 = vpop.xlane.xlu0 %5583
  %v5585 = vsel %vm338, %v5580, 0.0
  %5586 = vadd.xlane.f32.xlu0 %v5585
  %v5587 = vpop.xlane.xlu0 %5586
  %v5588 = vsel %vm338, %v5581, 0.0
  %5589 = vadd.xlane.f32.xlu0 %v5588
  %v5590 = vpop.xlane.xlu0 %5589
  %v5591 = vrcp.pop %v5584
  %v5592 = vmul.f32 %v5579, %v5591
  %v5593 = vrcp.pop %v5587
  %v5594 = vmul.f32 %v5580, %v5593
  %v5595 = vrcp.pop %v5590
  %v5596 = vmul.f32 %v5581, %v5595
  %v5597 = vld [vmem:[%s13] sm:$0x1]
  %v5598 = vld [vmem:[%s14] sm:$0x1]
  %v5599 = vsel %vm123, %v2770, 0.0
  %5600 = vadd.xlane.f32.xlu0 %v5599
  %v5601 = vpop.xlane.xlu0 %5600
  %v5602 = vsel %vm123, %v2771, 0.0
  %5603 = vadd.xlane.f32.xlu0 %v5602
  %v5604 = vpop.xlane.xlu0 %5603
  %v5605 = vsel %vm123, %v2772, 0.0
  %5606 = vadd.xlane.f32.xlu0 %v5605
  %v5607 = vpop.xlane.xlu0 %5606
  %v5608 = vmul.f32 %v5601, %v133
  %v5609 = vmul.f32 %v5604, %v133
  %v5610 = vmul.f32 %v5607, %v133
  %v5611 = vsub.f32 %v2770, %v5608
  %v5612 = vsub.f32 %v2771, %v5609
  %v5613 = vsub.f32 %v2772, %v5610
  %v5614 = vmul.f32 %v5611, %v5611
  %v5615 = vmul.f32 %v5612, %v5612
  %v5616 = vmul.f32 %v5613, %v5613
  %v5617 = vsel %vm123, %v5614, 0.0
  %5618 = vadd.xlane.f32.xlu0 %v5617
  %v5619 = vpop.xlane.xlu0 %5618
  %v5620 = vsel %vm123, %v5615, 0.0
  %5621 = vadd.xlane.f32.xlu0 %v5620
  %v5622 = vpop.xlane.xlu0 %5621
  %v5623 = vsel %vm123, %v5616, 0.0
  %5624 = vadd.xlane.f32.xlu0 %v5623
  %v5625 = vpop.xlane.xlu0 %5624
  %v5626 = vmul.f32 %v5619, %v133
  %v5627 = vmul.f32 %v5622, %v133
  %v5628 = vmul.f32 %v5625, %v133
  %v5629 = vadd.f32 %v5626, 1e-05
  %v5630 = vadd.f32 %v5627, 1e-05
  %v5631 = vadd.f32 %v5628, 1e-05
  %v5632 = vrsqrt.pop %v5629
  %v5633 = vrsqrt.pop %v5630
  %v5634 = vrsqrt.pop %v5631
  %v5635 = vmul.f32 %v5611, %v5632
  %v5636 = vmul.f32 %v5612, %v5633
  %v5637 = vmul.f32 %v5613, %v5634
  %v5639 = vlaneseq
  %v5640 = vshrl.u32 %v5639, 7
  %v5641 = vsub.s32 0, %v5640
  %v5642 = vrot.slane %v5597, %v5641
  %v5644 = vmul.f32 %v5635, %v5642
  %v5645 = vmul.f32 %v5636, %v5642
  %v5646 = vmul.f32 %v5637, %v5642
  %v5648 = vlaneseq
  %v5649 = vshrl.u32 %v5648, 7
  %v5650 = vsub.s32 0, %v5649
  %v5651 = vrot.slane %v5598, %v5650
  %v5653 = vadd.f32 %v5644, %v5651
  %v5654 = vadd.f32 %v5645, %v5651
  %v5655 = vadd.f32 %v5646, %v5651
  %v5656 = vld [vmem:[%s15] sm:$0xf]
  %v5657 = vld [vmem:[%s15 + $0x4] sm:$0xf]
  %v5658 = vld [vmem:[%s15 + $0x8] sm:$0xf]
  %v5659 = vld [vmem:[%s15 + $0xc] sm:$0xf]
  %v5660 = vpack.c.bf16 %v5654, %v5653
  %v5661 = vpack.c.bf16 %v5655, %v5655
  %v5662 = vld [vmem:[%s16] sm:$0x1]
  %v5664 = vlaneseq
  %v5665 = vshrl.u32 %v5664, 7
  %v5666 = vsub.s32 0, %v5665
  %v5667 = vrot.slane %v5662, %v5666
  %v5673 = vunpack.c.l.b16 %v5656
  %v5674 = vunpack.c.l.b16 %v5657
  %v5675 = vunpack.c.l.b16 %v5658
  %v5676 = vunpack.c.l.b16 %v5659
  %v5677 = vpack.c.b16 %v5674, %v5673
  %v5678 = vpack.c.b16 %v5676, %v5675
  %v5682 = vsel %vm123, %v5660, 0
  %v5685 = vsel %vm123, %v5661, 0
  %5687 = vmatprep.subr.bf16.mxu0 0
  %5688 = vmatpush1.bf16.msra.mxu0 0
  %5689 = vmatprep.subr.bf16.mxu0 0
  %5690 = vmatpush1.bf16.msra.mxu0 0
  %5691 = vmatprep.subr.bf16.mxu0 0
  %5692 = vmatpush1.bf16.msra.mxu0 0
  %5693 = vmatprep.subr.bf16.mxu0 0
  %5694 = vmatpush1.bf16.msra.mxu0 0
  %5695 = vmatprep.subr.bf16.mxu0 0
  %5696 = vmatpush1.bf16.msra.mxu0 0
  %5697 = vmatprep.subr.bf16.mxu0 0
  %5698 = vmatpush1.bf16.msra.mxu0 0
  %5699 = vmatprep.subr.bf16.mxu0 0
  %5700 = vmatpush1.bf16.msra.mxu0 %v5678
  %5701 = vmatprep.subr.bf16.mxu0 0
  %5702 = vmatpush1.bf16.msra.mxu0 %v5677
  %5703 = vmatprep.subr.bf16.mxu0 0
  %5704 = vmatpush2.bf16.msra.mxu0 0
  %5705 = vmatprep.subr.bf16.mxu0 0
  %5706 = vmatpush2.bf16.msra.mxu0 0
  %5707 = vmatprep.subr.bf16.mxu0 0
  %5708 = vmatpush2.bf16.msra.mxu0 0
  %5709 = vmatprep.subr.bf16.mxu0 0
  %5710 = vmatpush2.bf16.msra.mxu0 0
  %5711 = vmatprep.subr.bf16.mxu0 0
  %5712 = vmatpush2.bf16.msra.mxu0 0
  %5713 = vmatprep.subr.bf16.mxu0 0
  %5714 = vmatpush2.bf16.msra.mxu0 0
  %5715 = vmatprep.subr.bf16.mxu0 0
  %5716 = vmatpush2.bf16.msra.mxu0 0
  %5717 = vmatprep.subr.bf16.mxu0 0
  %5718 = vmatpush2.bf16.msra.mxu0 0
  %5719 = vmatprep.mubr.bf16.mxu0 0
  %5720 = vmatmul.mubr.bf16.gmra.mxu0 %v5682
  %v5721 = vpop.f32.mrf.mxu0
  %v5722 = vadd.f32 %v5667, %v5721
  %v5723 = vpop.f32.mrf.mxu0
  %v5724 = vpop.f32.mrf.mxu0
  %v5725 = vadd.f32 %v5667, %v5724
  %v5726 = vpop.f32.mrf.mxu0
  %5727 = vmatprep.mubr.bf16.mxu0 0
  %5728 = vmatmul.mubr.bf16.gmra.mxu0 %v5685
  %v5729 = vpop.f32.mrf.mxu0
  %v5730 = vadd.f32 %v5667, %v5729
  %v5731 = vpop.f32.mrf.mxu0
  %v5732 = vpop.f32.mrf.mxu0
  %v5733 = vpop.f32.mrf.mxu0
  %5734 = vdwg.mxu0
  %v5735 = vpack.c.bf16 %v5291, %v5289
  %v5736 = vpack.c.bf16 %v5293, %v5293
  %v5737 = vpack.c.bf16 %v5725, %v5722
  %v5738 = vpack.c.bf16 %v5730, %v5730
  %v5740 = vsel %vm338, %v5735, 0
  %v5743 = vsel %vm338, %v5736, 0
  %v5746 = vsel %vm391, %v5738, 0
  %5748 = vmatprep.subr.bf16.mxu0 0
  %5749 = vmatpush1.bf16.msra.mxu0 0
  %5750 = vmatprep.subr.bf16.mxu0 0
  %5751 = vmatpush1.bf16.msra.mxu0 0
  %5752 = vmatprep.subr.bf16.mxu0 0
  %5753 = vmatpush1.bf16.msra.mxu0 0
  %5754 = vmatprep.subr.bf16.mxu0 0
  %5755 = vmatpush1.bf16.msra.mxu0 0
  %5756 = vmatprep.subr.bf16.mxu0 0
  %5757 = vmatpush1.bf16.msra.mxu0 0
  %5758 = vmatprep.subr.bf16.mxu0 0
  %5759 = vmatpush1.bf16.msra.mxu0 0
  %5760 = vmatprep.subr.bf16.mxu0 0
  %5761 = vmatpush1.bf16.msra.mxu0 %v5746
  %5762 = vmatprep.subr.bf16.mxu0 0
  %5763 = vmatpush1.bf16.msra.mxu0 %v5737
  %5764 = vmatprep.subr.bf16.mxu0 0
  %5765 = vmatpush2.bf16.msra.mxu0 0
  %5766 = vmatprep.subr.bf16.mxu0 0
  %5767 = vmatpush2.bf16.msra.mxu0 0
  %5768 = vmatprep.subr.bf16.mxu0 0
  %5769 = vmatpush2.bf16.msra.mxu0 0
  %5770 = vmatprep.subr.bf16.mxu0 0
  %5771 = vmatpush2.bf16.msra.mxu0 0
  %5772 = vmatprep.subr.bf16.mxu0 0
  %5773 = vmatpush2.bf16.msra.mxu0 0
  %5774 = vmatprep.subr.bf16.mxu0 0
  %5775 = vmatpush2.bf16.msra.mxu0 0
  %5776 = vmatprep.subr.bf16.mxu0 0
  %5777 = vmatpush2.bf16.msra.mxu0 0
  %5778 = vmatprep.subr.bf16.mxu0 0
  %5779 = vmatpush2.bf16.msra.mxu0 0
  %5780 = vmatprep.mubr.bf16.mxu0 0
  %5781 = vmatmul.mubr.bf16.gmra.mxu0 %v5740
  %v5782 = vpop.f32.mrf.mxu0
  %v5783 = vadd.f32 0.0, %v5782
  %v5784 = vpop.f32.mrf.mxu0
  %v5785 = vpop.f32.mrf.mxu0
  %v5786 = vadd.f32 0.0, %v5785
  %v5787 = vpop.f32.mrf.mxu0
  %5788 = vmatprep.mubr.bf16.mxu0 0
  %5789 = vmatmul.mubr.bf16.gmra.mxu0 %v5743
  %v5790 = vpop.f32.mrf.mxu0
  %v5791 = vadd.f32 0.0, %v5790
  %v5792 = vpop.f32.mrf.mxu0
  %v5793 = vpop.f32.mrf.mxu0
  %v5794 = vpop.f32.mrf.mxu0
  %5795 = vdwg.mxu0
  %v5796 = vpack.c.bf16 %v5392, %v5390
  %v5797 = vpack.c.bf16 %v5394, %v5394
  %5800 = vrot.lane.b32.xlu0 %v5737, 120
  %v5801 = vpop.permute.xlu0 %5800
  %5802 = vrot.lane.b32.xlu0 %v5738, 120
  %v5803 = vpop.permute.xlu0 %5802
  %v5806 = vsel %vm338, %v5796, 0
  %v5809 = vsel %vm338, %v5797, 0
  %v5812 = vsel %vm391, %v5803, 0
  %5814 = vmatprep.subr.bf16.mxu0 0
  %5815 = vmatpush1.bf16.msra.mxu0 0
  %5816 = vmatprep.subr.bf16.mxu0 0
  %5817 = vmatpush1.bf16.msra.mxu0 0
  %5818 = vmatprep.subr.bf16.mxu0 0
  %5819 = vmatpush1.bf16.msra.mxu0 0
  %5820 = vmatprep.subr.bf16.mxu0 0
  %5821 = vmatpush1.bf16.msra.mxu0 0
  %5822 = vmatprep.subr.bf16.mxu0 0
  %5823 = vmatpush1.bf16.msra.mxu0 0
  %5824 = vmatprep.subr.bf16.mxu0 0
  %5825 = vmatpush1.bf16.msra.mxu0 0
  %5826 = vmatprep.subr.bf16.mxu0 0
  %5827 = vmatpush1.bf16.msra.mxu0 %v5812
  %5828 = vmatprep.subr.bf16.mxu0 0
  %5829 = vmatpush1.bf16.msra.mxu0 %v5801
  %5830 = vmatprep.subr.bf16.mxu0 0
  %5831 = vmatpush2.bf16.msra.mxu0 0
  %5832 = vmatprep.subr.bf16.mxu0 0
  %5833 = vmatpush2.bf16.msra.mxu0 0
  %5834 = vmatprep.subr.bf16.mxu0 0
  %5835 = vmatpush2.bf16.msra.mxu0 0
  %5836 = vmatprep.subr.bf16.mxu0 0
  %5837 = vmatpush2.bf16.msra.mxu0 0
  %5838 = vmatprep.subr.bf16.mxu0 0
  %5839 = vmatpush2.bf16.msra.mxu0 0
  %5840 = vmatprep.subr.bf16.mxu0 0
  %5841 = vmatpush2.bf16.msra.mxu0 0
  %5842 = vmatprep.subr.bf16.mxu0 0
  %5843 = vmatpush2.bf16.msra.mxu0 0
  %5844 = vmatprep.subr.bf16.mxu0 0
  %5845 = vmatpush2.bf16.msra.mxu0 0
  %5846 = vmatprep.mubr.bf16.mxu0 0
  %5847 = vmatmul.mubr.bf16.gmra.mxu0 %v5806
  %v5848 = vpop.f32.mrf.mxu0
  %v5849 = vadd.f32 0.0, %v5848
  %v5850 = vpop.f32.mrf.mxu0
  %v5851 = vpop.f32.mrf.mxu0
  %v5852 = vadd.f32 0.0, %v5851
  %v5853 = vpop.f32.mrf.mxu0
  %5854 = vmatprep.mubr.bf16.mxu0 0
  %5855 = vmatmul.mubr.bf16.gmra.mxu0 %v5809
  %v5856 = vpop.f32.mrf.mxu0
  %v5857 = vadd.f32 0.0, %v5856
  %v5858 = vpop.f32.mrf.mxu0
  %v5859 = vpop.f32.mrf.mxu0
  %v5860 = vpop.f32.mrf.mxu0
  %5861 = vdwg.mxu0
  %v5862 = vpack.c.bf16 %v5493, %v5491
  %v5863 = vpack.c.bf16 %v5495, %v5495
  %5864 = vrot.lane.b32.xlu0 %v5737, 112
  %v5865 = vpop.permute.xlu0 %5864
  %5866 = vrot.lane.b32.xlu0 %v5738, 112
  %v5867 = vpop.permute.xlu0 %5866
  %v5870 = vsel %vm338, %v5862, 0
  %v5873 = vsel %vm338, %v5863, 0
  %v5876 = vsel %vm391, %v5867, 0
  %5878 = vmatprep.subr.bf16.mxu0 0
  %5879 = vmatpush1.bf16.msra.mxu0 0
  %5880 = vmatprep.subr.bf16.mxu0 0
  %5881 = vmatpush1.bf16.msra.mxu0 0
  %5882 = vmatprep.subr.bf16.mxu0 0
  %5883 = vmatpush1.bf16.msra.mxu0 0
  %5884 = vmatprep.subr.bf16.mxu0 0
  %5885 = vmatpush1.bf16.msra.mxu0 0
  %5886 = vmatprep.subr.bf16.mxu0 0
  %5887 = vmatpush1.bf16.msra.mxu0 0
  %5888 = vmatprep.subr.bf16.mxu0 0
  %5889 = vmatpush1.bf16.msra.mxu0 0
  %5890 = vmatprep.subr.bf16.mxu0 0
  %5891 = vmatpush1.bf16.msra.mxu0 %v5876
  %5892 = vmatprep.subr.bf16.mxu0 0
  %5893 = vmatpush1.bf16.msra.mxu0 %v5865
  %5894 = vmatprep.subr.bf16.mxu0 0
  %5895 = vmatpush2.bf16.msra.mxu0 0
  %5896 = vmatprep.subr.bf16.mxu0 0
  %5897 = vmatpush2.bf16.msra.mxu0 0
  %5898 = vmatprep.subr.bf16.mxu0 0
  %5899 = vmatpush2.bf16.msra.mxu0 0
  %5900 = vmatprep.subr.bf16.mxu0 0
  %5901 = vmatpush2.bf16.msra.mxu0 0
  %5902 = vmatprep.subr.bf16.mxu0 0
  %5903 = vmatpush2.bf16.msra.mxu0 0
  %5904 = vmatprep.subr.bf16.mxu0 0
  %5905 = vmatpush2.bf16.msra.mxu0 0
  %5906 = vmatprep.subr.bf16.mxu0 0
  %5907 = vmatpush2.bf16.msra.mxu0 0
  %5908 = vmatprep.subr.bf16.mxu0 0
  %5909 = vmatpush2.bf16.msra.mxu0 0
  %5910 = vmatprep.mubr.bf16.mxu0 0
  %5911 = vmatmul.mubr.bf16.gmra.mxu0 %v5870
  %v5912 = vpop.f32.mrf.mxu0
  %v5913 = vadd.f32 0.0, %v5912
  %v5914 = vpop.f32.mrf.mxu0
  %v5915 = vpop.f32.mrf.mxu0
  %v5916 = vadd.f32 0.0, %v5915
  %v5917 = vpop.f32.mrf.mxu0
  %5918 = vmatprep.mubr.bf16.mxu0 0
  %5919 = vmatmul.mubr.bf16.gmra.mxu0 %v5873
  %v5920 = vpop.f32.mrf.mxu0
  %v5921 = vadd.f32 0.0, %v5920
  %v5922 = vpop.f32.mrf.mxu0
  %v5923 = vpop.f32.mrf.mxu0
  %v5924 = vpop.f32.mrf.mxu0
  %5925 = vdwg.mxu0
  %v5926 = vpack.c.bf16 %v5594, %v5592
  %v5927 = vpack.c.bf16 %v5596, %v5596
  %5928 = vrot.lane.b32.xlu0 %v5737, 104
  %v5929 = vpop.permute.xlu0 %5928
  %5930 = vrot.lane.b32.xlu0 %v5738, 104
  %v5931 = vpop.permute.xlu0 %5930
  %v5934 = vsel %vm338, %v5926, 0
  %v5937 = vsel %vm338, %v5927, 0
  %v5940 = vsel %vm391, %v5931, 0
  %5942 = vmatprep.subr.bf16.mxu0 0
  %5943 = vmatpush1.bf16.msra.mxu0 0
  %5944 = vmatprep.subr.bf16.mxu0 0
  %5945 = vmatpush1.bf16.msra.mxu0 0
  %5946 = vmatprep.subr.bf16.mxu0 0
  %5947 = vmatpush1.bf16.msra.mxu0 0
  %5948 = vmatprep.subr.bf16.mxu0 0
  %5949 = vmatpush1.bf16.msra.mxu0 0
  %5950 = vmatprep.subr.bf16.mxu0 0
  %5951 = vmatpush1.bf16.msra.mxu0 0
  %5952 = vmatprep.subr.bf16.mxu0 0
  %5953 = vmatpush1.bf16.msra.mxu0 0
  %5954 = vmatprep.subr.bf16.mxu0 0
  %5955 = vmatpush1.bf16.msra.mxu0 %v5940
  %5956 = vmatprep.subr.bf16.mxu0 0
  %5957 = vmatpush1.bf16.msra.mxu0 %v5929
  %5958 = vmatprep.subr.bf16.mxu0 0
  %5959 = vmatpush2.bf16.msra.mxu0 0
  %5960 = vmatprep.subr.bf16.mxu0 0
  %5961 = vmatpush2.bf16.msra.mxu0 0
  %5962 = vmatprep.subr.bf16.mxu0 0
  %5963 = vmatpush2.bf16.msra.mxu0 0
  %5964 = vmatprep.subr.bf16.mxu0 0
  %5965 = vmatpush2.bf16.msra.mxu0 0
  %5966 = vmatprep.subr.bf16.mxu0 0
  %5967 = vmatpush2.bf16.msra.mxu0 0
  %5968 = vmatprep.subr.bf16.mxu0 0
  %5969 = vmatpush2.bf16.msra.mxu0 0
  %5970 = vmatprep.subr.bf16.mxu0 0
  %5971 = vmatpush2.bf16.msra.mxu0 0
  %5972 = vmatprep.subr.bf16.mxu0 0
  %5973 = vmatpush2.bf16.msra.mxu0 0
  %5974 = vmatprep.mubr.bf16.mxu0 0
  %5975 = vmatmul.mubr.bf16.gmra.mxu0 %v5934
  %v5976 = vpop.f32.mrf.mxu0
  %v5977 = vadd.f32 0.0, %v5976
  %v5978 = vpop.f32.mrf.mxu0
  %v5979 = vpop.f32.mrf.mxu0
  %v5980 = vadd.f32 0.0, %v5979
  %v5981 = vpop.f32.mrf.mxu0
  %5982 = vmatprep.mubr.bf16.mxu0 0
  %5983 = vmatmul.mubr.bf16.gmra.mxu0 %v5937
  %v5984 = vpop.f32.mrf.mxu0
  %v5985 = vadd.f32 0.0, %v5984
  %v5986 = vpop.f32.mrf.mxu0
  %v5987 = vpop.f32.mrf.mxu0
  %v5988 = vpop.f32.mrf.mxu0
  %5989 = vdwg.mxu0
  %5993 = vrot.lane.b32.xlu0 %v5849, 8
  %v5994 = vpop.permute.xlu0 %5993
  %5995 = vrot.lane.b32.xlu0 %v5852, 8
  %v5996 = vpop.permute.xlu0 %5995
  %5997 = vrot.lane.b32.xlu0 %v5857, 8
  %v5998 = vpop.permute.xlu0 %5997
  %6005 = vrot.lane.b32.xlu0 %v5913, 16
  %v6006 = vpop.permute.xlu0 %6005
  %6007 = vrot.lane.b32.xlu0 %v5916, 16
  %v6008 = vpop.permute.xlu0 %6007
  %6009 = vrot.lane.b32.xlu0 %v5921, 16
  %v6010 = vpop.permute.xlu0 %6009
  %6017 = vrot.lane.b32.xlu0 %v5977, 24
  %v6018 = vpop.permute.xlu0 %6017
  %6019 = vrot.lane.b32.xlu0 %v5980, 24
  %v6020 = vpop.permute.xlu0 %6019
  %6021 = vrot.lane.b32.xlu0 %v5985, 24
  %v6022 = vpop.permute.xlu0 %6021
  %v6026 = vsel %vm274, %v5783, %v5994
  %v6027 = vsel %vm274, %v5786, %v5996
  %v6028 = vsel %vm274, %v5791, %v5998
  %v6029 = vsel %vm1006, %v6026, %v6006
  %v6030 = vsel %vm1006, %v6027, %v6008
  %v6031 = vsel %vm1006, %v6028, %v6010
  %v6032 = vsel %vm338, %v6029, %v6018
  %v6033 = vsel %vm338, %v6030, %v6020
  %v6034 = vsel %vm338, %v6031, %v6022
  %v6035 = vld [vmem:[%s17] sm:$0xf]
  %v6036 = vld [vmem:[%s17 + $0x4] sm:$0xf]
  %v6037 = vld [vmem:[%s17 + $0x8] sm:$0xf]
  %v6038 = vld [vmem:[%s17 + $0xc] sm:$0xf]
  %v6039 = vpack.c.bf16 %v6033, %v6032
  %v6040 = vpack.c.bf16 %v6034, %v6034
  %v6041 = vld [vmem:[%s18] sm:$0x1]
  %v6043 = vlaneseq
  %v6044 = vshrl.u32 %v6043, 7
  %v6045 = vsub.s32 0, %v6044
  %v6046 = vrot.slane %v6041, %v6045
  %v6052 = vunpack.c.l.b16 %v6035
  %v6053 = vunpack.c.l.b16 %v6036
  %v6054 = vunpack.c.l.b16 %v6037
  %v6055 = vunpack.c.l.b16 %v6038
  %v6056 = vpack.c.b16 %v6053, %v6052
  %v6057 = vpack.c.b16 %v6055, %v6054
  %v6061 = vsel %vm123, %v6039, 0
  %v6064 = vsel %vm123, %v6040, 0
  %6066 = vmatprep.subr.bf16.mxu0 0
  %6067 = vmatpush1.bf16.msra.mxu0 0
  %6068 = vmatprep.subr.bf16.mxu0 0
  %6069 = vmatpush1.bf16.msra.mxu0 0
  %6070 = vmatprep.subr.bf16.mxu0 0
  %6071 = vmatpush1.bf16.msra.mxu0 0
  %6072 = vmatprep.subr.bf16.mxu0 0
  %6073 = vmatpush1.bf16.msra.mxu0 0
  %6074 = vmatprep.subr.bf16.mxu0 0
  %6075 = vmatpush1.bf16.msra.mxu0 0
  %6076 = vmatprep.subr.bf16.mxu0 0
  %6077 = vmatpush1.bf16.msra.mxu0 0
  %6078 = vmatprep.subr.bf16.mxu0 0
  %6079 = vmatpush1.bf16.msra.mxu0 %v6057
  %6080 = vmatprep.subr.bf16.mxu0 0
  %6081 = vmatpush1.bf16.msra.mxu0 %v6056
  %6082 = vmatprep.subr.bf16.mxu0 0
  %6083 = vmatpush2.bf16.msra.mxu0 0
  %6084 = vmatprep.subr.bf16.mxu0 0
  %6085 = vmatpush2.bf16.msra.mxu0 0
  %6086 = vmatprep.subr.bf16.mxu0 0
  %6087 = vmatpush2.bf16.msra.mxu0 0
  %6088 = vmatprep.subr.bf16.mxu0 0
  %6089 = vmatpush2.bf16.msra.mxu0 0
  %6090 = vmatprep.subr.bf16.mxu0 0
  %6091 = vmatpush2.bf16.msra.mxu0 0
  %6092 = vmatprep.subr.bf16.mxu0 0
  %6093 = vmatpush2.bf16.msra.mxu0 0
  %6094 = vmatprep.subr.bf16.mxu0 0
  %6095 = vmatpush2.bf16.msra.mxu0 0
  %6096 = vmatprep.subr.bf16.mxu0 0
  %6097 = vmatpush2.bf16.msra.mxu0 0
  %6098 = vmatprep.mubr.bf16.mxu0 0
  %6099 = vmatmul.mubr.bf16.gmra.mxu0 %v6061
  %v6100 = vpop.f32.mrf.mxu0
  %v6101 = vadd.f32 %v6046, %v6100
  %v6102 = vpop.f32.mrf.mxu0
  %v6103 = vpop.f32.mrf.mxu0
  %v6104 = vadd.f32 %v6046, %v6103
  %v6105 = vpop.f32.mrf.mxu0
  %6106 = vmatprep.mubr.bf16.mxu0 0
  %6107 = vmatmul.mubr.bf16.gmra.mxu0 %v6064
  %v6108 = vpop.f32.mrf.mxu0
  %v6109 = vadd.f32 %v6046, %v6108
  %v6110 = vpop.f32.mrf.mxu0
  %v6111 = vpop.f32.mrf.mxu0
  %v6112 = vpop.f32.mrf.mxu0
  %6113 = vdwg.mxu0
  %v6114 = vsub.f32 %v6101, %v2770
  %v6115 = vsub.f32 %v6104, %v2771
  %v6116 = vsub.f32 %v6109, %v2772
  %v6117 = vld [vmem:[%s19] sm:$0x1]
  %v6118 = vld [vmem:[%s20] sm:$0x1]
  %v6119 = vsel %vm123, %v6114, 0.0
  %6120 = vadd.xlane.f32.xlu0 %v6119
  %v6121 = vpop.xlane.xlu0 %6120
  %v6122 = vsel %vm123, %v6115, 0.0
  %6123 = vadd.xlane.f32.xlu0 %v6122
  %v6124 = vpop.xlane.xlu0 %6123
  %v6125 = vsel %vm123, %v6116, 0.0
  %6126 = vadd.xlane.f32.xlu0 %v6125
  %v6127 = vpop.xlane.xlu0 %6126
  %v6128 = vmul.f32 %v6121, %v133
  %v6129 = vmul.f32 %v6124, %v133
  %v6130 = vmul.f32 %v6127, %v133
  %v6131 = vsub.f32 %v6114, %v6128
  %v6132 = vsub.f32 %v6115, %v6129
  %v6133 = vsub.f32 %v6116, %v6130
  %v6134 = vmul.f32 %v6131, %v6131
  %v6135 = vmul.f32 %v6132, %v6132
  %v6136 = vmul.f32 %v6133, %v6133
  %v6137 = vsel %vm123, %v6134, 0.0
  %6138 = vadd.xlane.f32.xlu0 %v6137
  %v6139 = vpop.xlane.xlu0 %6138
  %v6140 = vsel %vm123, %v6135, 0.0
  %6141 = vadd.xlane.f32.xlu0 %v6140
  %v6142 = vpop.xlane.xlu0 %6141
  %v6143 = vsel %vm123, %v6136, 0.0
  %6144 = vadd.xlane.f32.xlu0 %v6143
  %v6145 = vpop.xlane.xlu0 %6144
  %v6146 = vmul.f32 %v6139, %v133
  %v6147 = vmul.f32 %v6142, %v133
  %v6148 = vmul.f32 %v6145, %v133
  %v6149 = vadd.f32 %v6146, 1e-05
  %v6150 = vadd.f32 %v6147, 1e-05
  %v6151 = vadd.f32 %v6148, 1e-05
  %v6152 = vrsqrt.pop %v6149
  %v6153 = vrsqrt.pop %v6150
  %v6154 = vrsqrt.pop %v6151
  %v6155 = vmul.f32 %v6131, %v6152
  %v6156 = vmul.f32 %v6132, %v6153
  %v6157 = vmul.f32 %v6133, %v6154
  %v6159 = vlaneseq
  %v6160 = vshrl.u32 %v6159, 7
  %v6161 = vsub.s32 0, %v6160
  %v6162 = vrot.slane %v6117, %v6161
  %v6164 = vmul.f32 %v6155, %v6162
  %v6165 = vmul.f32 %v6156, %v6162
  %v6166 = vmul.f32 %v6157, %v6162
  %v6168 = vlaneseq
  %v6169 = vshrl.u32 %v6168, 7
  %v6170 = vsub.s32 0, %v6169
  %v6171 = vrot.slane %v6118, %v6170
  %v6173 = vadd.f32 %v6164, %v6171
  %v6174 = vadd.f32 %v6165, %v6171
  %v6175 = vadd.f32 %v6166, %v6171
  %v6176 = vld [vmem:[%s21] sm:$0xf]
  %v6177 = vld [vmem:[%s21 + $0x4] sm:$0xf]
  %v6178 = vld [vmem:[%s21 + $0x8] sm:$0xf]
  %v6179 = vld [vmem:[%s21 + $0xc] sm:$0xf]
  %v6180 = vpack.c.bf16 %v6174, %v6173
  %v6181 = vpack.c.bf16 %v6175, %v6175
  %v6186 = vunpack.c.l.b16 %v6176
  %v6187 = vunpack.c.l.b16 %v6177
  %v6188 = vunpack.c.l.b16 %v6178
  %v6189 = vunpack.c.l.b16 %v6179
  %v6190 = vpack.c.b16 %v6187, %v6186
  %v6191 = vpack.c.b16 %v6189, %v6188
  %v6195 = vsel %vm123, %v6180, 0
  %v6198 = vsel %vm123, %v6181, 0
  %6200 = vmatprep.subr.bf16.mxu0 0
  %6201 = vmatpush1.bf16.msra.mxu0 0
  %6202 = vmatprep.subr.bf16.mxu0 0
  %6203 = vmatpush1.bf16.msra.mxu0 0
  %6204 = vmatprep.subr.bf16.mxu0 0
  %6205 = vmatpush1.bf16.msra.mxu0 0
  %6206 = vmatprep.subr.bf16.mxu0 0
  %6207 = vmatpush1.bf16.msra.mxu0 0
  %6208 = vmatprep.subr.bf16.mxu0 0
  %6209 = vmatpush1.bf16.msra.mxu0 0
  %6210 = vmatprep.subr.bf16.mxu0 0
  %6211 = vmatpush1.bf16.msra.mxu0 0
  %6212 = vmatprep.subr.bf16.mxu0 0
  %6213 = vmatpush1.bf16.msra.mxu0 %v6191
  %6214 = vmatprep.subr.bf16.mxu0 0
  %6215 = vmatpush1.bf16.msra.mxu0 %v6190
  %6216 = vmatprep.subr.bf16.mxu0 0
  %6217 = vmatpush2.bf16.msra.mxu0 0
  %6218 = vmatprep.subr.bf16.mxu0 0
  %6219 = vmatpush2.bf16.msra.mxu0 0
  %6220 = vmatprep.subr.bf16.mxu0 0
  %6221 = vmatpush2.bf16.msra.mxu0 0
  %6222 = vmatprep.subr.bf16.mxu0 0
  %6223 = vmatpush2.bf16.msra.mxu0 0
  %6224 = vmatprep.subr.bf16.mxu0 0
  %6225 = vmatpush2.bf16.msra.mxu0 0
  %6226 = vmatprep.subr.bf16.mxu0 0
  %6227 = vmatpush2.bf16.msra.mxu0 0
  %6228 = vmatprep.subr.bf16.mxu0 0
  %6229 = vmatpush2.bf16.msra.mxu0 0
  %6230 = vmatprep.subr.bf16.mxu0 0
  %6231 = vmatpush2.bf16.msra.mxu0 0
  %6232 = vmatprep.mubr.bf16.mxu0 0
  %6233 = vmatmul.mubr.bf16.gmra.mxu0 %v6195
  %v6234 = vpop.f32.mrf.mxu0
  %v6235 = vadd.f32 0.0, %v6234
  %v6236 = vpop.f32.mrf.mxu0
  %v6237 = vpop.f32.mrf.mxu0
  %v6238 = vadd.f32 0.0, %v6237
  %v6239 = vpop.f32.mrf.mxu0
  %6240 = vmatprep.mubr.bf16.mxu0 0
  %6241 = vmatmul.mubr.bf16.gmra.mxu0 %v6198
  %v6242 = vpop.f32.mrf.mxu0
  %v6243 = vadd.f32 0.0, %v6242
  %v6244 = vpop.f32.mrf.mxu0
  %v6245 = vpop.f32.mrf.mxu0
  %v6246 = vpop.f32.mrf.mxu0
  %6247 = vdwg.mxu0
  %s6248 = scalar_lea.vmem %s23, 48
  %6249 = vst.msk [vmem:[%s6248] sm:$0xff] %vm1006, %v6235
  %6250 = vst.msk [vmem:[%s6248 + $0x8] sm:$0xff] %vm1006, %v6238
  %6251 = vst.msk [vmem:[%s6248 + $0x10] sm:$0xff] %vm1006, %v6243
  %v6252 = vmul.f32 %v6235, %v6235
  %v6253 = vmul.f32 %v6238, %v6238
  %v6254 = vmul.f32 %v6243, %v6243
  %v6255 = vsel %vm1006, %v6252, 0.0
  %6256 = vadd.xlane.f32.xlu0 %v6255
  %v6257 = vpop.xlane.xlu0 %6256
  %v6258 = vsel %vm1006, %v6253, 0.0
  %6259 = vadd.xlane.f32.xlu0 %v6258
  %v6260 = vpop.xlane.xlu0 %6259
  %v6261 = vsel %vm1006, %v6254, 0.0
  %6262 = vadd.xlane.f32.xlu0 %v6261
  %v6263 = vpop.xlane.xlu0 %6262
  %v6264 = vadd.f32 %v6257, 1e-12
  %v6265 = vadd.f32 %v6260, 1e-12
  %v6266 = vadd.f32 %v6263, 1e-12
  %v6267 = vrsqrt.pop %v6264
  %v6268 = vrsqrt.pop %v6265
  %v6269 = vrsqrt.pop %v6266
  %v6270 = vmul.f32 %v6235, %v6267
  %v6271 = vmul.f32 %v6238, %v6268
  %v6272 = vmul.f32 %v6243, %v6269
  %v6274 = vsel %vm1006, %v6270, 0
  %v6277 = vsel %vm1006, %v6271, 0
  %v6280 = vsel %vm1006, %v6272, 0
  %6282 = vmatprep.subr.mxu0 0.0
  %6283 = vmatpush1.xpose.msra.mxu0 0.0
  %6284 = vmatprep.subr.mxu0 0.0
  %6285 = vmatpush1.xpose.msra.mxu0 0.0
  %6286 = vmatprep.subr.mxu0 0.0
  %6287 = vmatpush1.xpose.msra.mxu0 0.0
  %6288 = vmatprep.subr.mxu0 0.0
  %6289 = vmatpush1.xpose.msra.mxu0 0.0
  %6290 = vmatprep.subr.mxu0 0.0
  %6291 = vmatpush1.xpose.msra.mxu0 0.0
  %6292 = vmatprep.subr.mxu0 0.0
  %6293 = vmatpush1.xpose.msra.mxu0 0.0
  %6294 = vmatprep.subr.mxu0 0.0
  %6295 = vmatpush1.xpose.msra.mxu0 0.0
  %6296 = vmatprep.subr.mxu0 0.0
  %6297 = vmatpush1.xpose.msra.mxu0 0.0
  %6298 = vmatprep.subr.mxu0 0.0
  %6299 = vmatpush1.xpose.msra.mxu0 0.0
  %6300 = vmatprep.subr.mxu0 0.0
  %6301 = vmatpush1.xpose.msra.mxu0 0.0
  %6302 = vmatprep.subr.mxu0 0.0
  %6303 = vmatpush1.xpose.msra.mxu0 0.0
  %6304 = vmatprep.subr.mxu0 0.0
  %6305 = vmatpush1.xpose.msra.mxu0 0.0
  %6306 = vmatprep.subr.mxu0 0.0
  %6307 = vmatpush1.xpose.msra.mxu0 0.0
  %6308 = vmatprep.subr.mxu0 0.0
  %6309 = vmatpush1.xpose.msra.mxu0 0.0
  %6310 = vmatprep.subr.mxu0 0.0
  %6311 = vmatpush1.xpose.msra.mxu0 0.0
  %6312 = vmatprep.subr.mxu0 0.0
  %6313 = vmatpush1.xpose.msra.mxu0 %v3863
  %6314 = vmatprep.subr.mxu0 0.0
  %6315 = vmatpush2.xpose.msra.mxu0 0.0
  %6316 = vmatprep.subr.mxu0 0.0
  %6317 = vmatpush2.xpose.msra.mxu0 0.0
  %6318 = vmatprep.subr.mxu0 0.0
  %6319 = vmatpush2.xpose.msra.mxu0 0.0
  %6320 = vmatprep.subr.mxu0 0.0
  %6321 = vmatpush2.xpose.msra.mxu0 0.0
  %6322 = vmatprep.subr.mxu0 0.0
  %6323 = vmatpush2.xpose.msra.mxu0 0.0
  %6324 = vmatprep.subr.mxu0 0.0
  %6325 = vmatpush2.xpose.msra.mxu0 0.0
  %6326 = vmatprep.subr.mxu0 0.0
  %6327 = vmatpush2.xpose.msra.mxu0 0.0
  %6328 = vmatprep.subr.mxu0 0.0
  %6329 = vmatpush2.xpose.msra.mxu0 0.0
  %6330 = vmatprep.subr.mxu0 0.0
  %6331 = vmatpush2.xpose.msra.mxu0 0.0
  %6332 = vmatprep.subr.mxu0 0.0
  %6333 = vmatpush2.xpose.msra.mxu0 0.0
  %6334 = vmatprep.subr.mxu0 0.0
  %6335 = vmatpush2.xpose.msra.mxu0 0.0
  %6336 = vmatprep.subr.mxu0 0.0
  %6337 = vmatpush2.xpose.msra.mxu0 0.0
  %6338 = vmatprep.subr.mxu0 0.0
  %6339 = vmatpush2.xpose.msra.mxu0 0.0
  %6340 = vmatprep.subr.mxu0 0.0
  %6341 = vmatpush2.xpose.msra.mxu0 0.0
  %6342 = vmatprep.subr.mxu0 0.0
  %6343 = vmatpush2.xpose.msra.mxu0 0.0
  %6344 = vmatprep.subr.mxu0 0.0
  %6345 = vmatpush2.xpose.msra.mxu0 0.0
  %6346 = vmatprep.mubr.f32.mxu0 0.0
  %6347 = vmatmul.mubr.f32.gmra.mxu0 %v6274
  %v6348 = vpop.f32.mrf.mxu0
  %v6349 = vadd.f32 0.0, %v6348
  %v6350 = vpop.f32.mrf.mxu0
  %6351 = vmatprep.mubr.f32.mxu0 0.0
  %6352 = vmatmul.mubr.f32.gmra.mxu0 %v6277
  %v6353 = vpop.f32.mrf.mxu0
  %v6354 = vadd.f32 0.0, %v6353
  %v6355 = vpop.f32.mrf.mxu0
  %6356 = vmatprep.mubr.f32.mxu0 0.0
  %6357 = vmatmul.mubr.f32.gmra.mxu0 %v6280
  %v6358 = vpop.f32.mrf.mxu0
  %v6359 = vadd.f32 0.0, %v6358
  %v6360 = vpop.f32.mrf.mxu0
  %6361 = vdwg.mxu0
  %v6362 = vmul.f32 %v6349, 100.0
  %v6363 = vmul.f32 %v6354, 100.0
  %v6364 = vmul.f32 %v6359, 100.0
  %v6365 = vsel %vm3948, %v6362, -inf
  %6366 = vmax.xlane.f32.xlu0 %v6365
  %v6367 = vpop.xlane.xlu0 %6366
  %v6368 = vsel %vm3948, %v6363, -inf
  %6369 = vmax.xlane.f32.xlu0 %v6368
  %v6370 = vpop.xlane.xlu0 %6369
  %v6371 = vsel %vm3948, %v6364, -inf
  %6372 = vmax.xlane.f32.xlu0 %v6371
  %v6373 = vpop.xlane.xlu0 %6372
  %v6374 = vsub.f32 %v6362, %v6367
  %v6375 = vsub.f32 %v6363, %v6370
  %v6376 = vsub.f32 %v6364, %v6373
  %v6377 = vmul.f32 %v6374, 1.442695
  %v6378 = vpow.pop %v6377
  %v6379 = vmul.f32 %v6375, 1.442695
  %v6380 = vpow.pop %v6379
  %v6381 = vmul.f32 %v6376, 1.442695
  %v6382 = vpow.pop %v6381
  %v6383 = vsel %vm3948, %v6378, 0.0
  %6384 = vadd.xlane.f32.xlu0 %v6383
  %v6385 = vpop.xlane.xlu0 %6384
  %v6386 = vsel %vm3948, %v6380, 0.0
  %6387 = vadd.xlane.f32.xlu0 %v6386
  %v6388 = vpop.xlane.xlu0 %6387
  %v6389 = vsel %vm3948, %v6382, 0.0
  %6390 = vadd.xlane.f32.xlu0 %v6389
  %v6391 = vpop.xlane.xlu0 %6390
  %v6392 = vrcp.pop %v6385
  %v6393 = vmul.f32 %v6378, %v6392
  %v6394 = vrcp.pop %v6388
  %v6395 = vmul.f32 %v6380, %v6394
  %v6396 = vrcp.pop %v6391
  %v6397 = vmul.f32 %v6382, %v6396
  %v6398 = vmul.f32 %v6393, %v103
  %v6399 = vmul.f32 %v6395, %v104
  %v6400 = vmul.f32 %v6397, %v105
  %v6401 = vadd.f32 %v5289, 0.0
  %v6402 = vadd.f32 %v5291, 0.0
  %v6403 = vadd.f32 %v5293, 0.0
  %v6404 = vadd.f32 %v6401, %v5390
  %v6405 = vadd.f32 %v6402, %v5392
  %v6406 = vadd.f32 %v6403, %v5394
  %v6407 = vadd.f32 %v6404, %v5491
  %v6408 = vadd.f32 %v6405, %v5493
  %v6409 = vadd.f32 %v6406, %v5495
  %v6410 = vadd.f32 %v6407, %v5592
  %v6411 = vadd.f32 %v6408, %v5594
  %v6412 = vadd.f32 %v6409, %v5596
  %v6413 = vmul.f32 %v6410, 0.25
  %v6414 = vmul.f32 %v6411, 0.25
  %v6415 = vmul.f32 %v6412, 0.25
  %vm6416 = vcmask 23552
  %v6417 = vsel %vm6416, %v6398, -inf
  %v6418 = vsel %vm6416, %v6399, -inf
  %v6419 = vsel %vm6416, %v6400, -inf
  %v6420 = vmax.f32 %v6417, %v6418
  %v6421 = vmax.f32 %v6420, %v6419
  %v6422 = vrot.slane %v6421, 4
  %v6423 = vmax.f32 %v6421, %v6422
  %v6424 = vrot.slane %v6423, 2
  %v6425 = vmax.f32 %v6423, %v6424
  %v6426 = vrot.slane %v6425, 1
  %v6427 = vmax.f32 %v6425, %v6426
  %v6428 = vmul.f32 %v6427, 0.1
  %vm6429 = vcmp.lt.f32.partialorder %v6398, %v6428
  %vm6430 = vcmp.lt.f32.partialorder %v6399, %v6428
  %vm6431 = vcmp.lt.f32.partialorder %v6400, %v6428
  %v6432 = vsel %vm6429, 0.0, %v6398
  %v6433 = vsel %vm6430, 0.0, %v6399
  %v6434 = vsel %vm6431, 0.0, %v6400
  %v6435 = vadd.f32 %v3982, 0.0
  %v6436 = vadd.f32 %v3983, 0.0
  %v6437 = vadd.f32 %v3984, 0.0
  %v6438 = vadd.f32 %v6435, %v5190
  %v6439 = vadd.f32 %v6436, %v5191
  %v6440 = vadd.f32 %v6437, %v5192
  %v6441 = vmul.f32 %v6438, 0.1
  %v6442 = vmul.f32 %v6439, 0.1
  %v6443 = vmul.f32 %v6440, 0.1
  %v6445 = vsel %vm338, %v6413, 0
  %v6448 = vsel %vm338, %v6414, 0
  %v6451 = vsel %vm338, %v6415, 0
  %6453 = vmatprep.subr.mxu0 0.0
  %6454 = vmatpush1.msra.mxu0 0.0
  %6455 = vmatprep.subr.mxu0 0.0
  %6456 = vmatpush1.msra.mxu0 0.0
  %6457 = vmatprep.subr.mxu0 0.0
  %6458 = vmatpush1.msra.mxu0 0.0
  %6459 = vmatprep.subr.mxu0 0.0
  %6460 = vmatpush1.msra.mxu0 0.0
  %6461 = vmatprep.subr.mxu0 0.0
  %6462 = vmatpush1.msra.mxu0 0.0
  %6463 = vmatprep.subr.mxu0 0.0
  %6464 = vmatpush1.msra.mxu0 0.0
  %6465 = vmatprep.subr.mxu0 0.0
  %6466 = vmatpush1.msra.mxu0 0.0
  %6467 = vmatprep.subr.mxu0 0.0
  %6468 = vmatpush1.msra.mxu0 0.0
  %6469 = vmatprep.subr.mxu0 0.0
  %6470 = vmatpush1.msra.mxu0 0.0
  %6471 = vmatprep.subr.mxu0 0.0
  %6472 = vmatpush1.msra.mxu0 0.0
  %6473 = vmatprep.subr.mxu0 0.0
  %6474 = vmatpush1.msra.mxu0 0.0
  %6475 = vmatprep.subr.mxu0 0.0
  %6476 = vmatpush1.msra.mxu0 0.0
  %6477 = vmatprep.subr.mxu0 0.0
  %6478 = vmatpush1.msra.mxu0 0.0
  %6479 = vmatprep.subr.mxu0 0.0
  %6480 = vmatpush1.msra.mxu0 %v6434
  %6481 = vmatprep.subr.mxu0 0.0
  %6482 = vmatpush1.msra.mxu0 %v6433
  %6483 = vmatprep.subr.mxu0 0.0
  %6484 = vmatpush1.msra.mxu0 %v6432
  %6485 = vmatprep.subr.mxu0 0.0
  %6486 = vmatpush2.msra.mxu0 0.0
  %6487 = vmatprep.subr.mxu0 0.0
  %6488 = vmatpush2.msra.mxu0 0.0
  %6489 = vmatprep.subr.mxu0 0.0
  %6490 = vmatpush2.msra.mxu0 0.0
  %6491 = vmatprep.subr.mxu0 0.0
  %6492 = vmatpush2.msra.mxu0 0.0
  %6493 = vmatprep.subr.mxu0 0.0
  %6494 = vmatpush2.msra.mxu0 0.0
  %6495 = vmatprep.subr.mxu0 0.0
  %6496 = vmatpush2.msra.mxu0 0.0
  %6497 = vmatprep.subr.mxu0 0.0
  %6498 = vmatpush2.msra.mxu0 0.0
  %6499 = vmatprep.subr.mxu0 0.0
  %6500 = vmatpush2.msra.mxu0 0.0
  %6501 = vmatprep.subr.mxu0 0.0
  %6502 = vmatpush2.msra.mxu0 0.0
  %6503 = vmatprep.subr.mxu0 0.0
  %6504 = vmatpush2.msra.mxu0 0.0
  %6505 = vmatprep.subr.mxu0 0.0
  %6506 = vmatpush2.msra.mxu0 0.0
  %6507 = vmatprep.subr.mxu0 0.0
  %6508 = vmatpush2.msra.mxu0 0.0
  %6509 = vmatprep.subr.mxu0 0.0
  %6510 = vmatpush2.msra.mxu0 0.0
  %6511 = vmatprep.subr.mxu0 0.0
  %6512 = vmatpush2.msra.mxu0 0.0
  %6513 = vmatprep.subr.mxu0 0.0
  %6514 = vmatpush2.msra.mxu0 0.0
  %6515 = vmatprep.subr.mxu0 0.0
  %6516 = vmatpush2.msra.mxu0 0.0
  %6517 = vmatprep.mubr.f32.mxu0 0.0
  %6518 = vmatmul.mubr.f32.gmra.mxu0 %v6445
  %v6519 = vpop.f32.mrf.mxu0
  %v6520 = vadd.f32 %v6441, %v6519
  %v6521 = vpop.f32.mrf.mxu0
  %6522 = vmatprep.mubr.f32.mxu0 0.0
  %6523 = vmatmul.mubr.f32.gmra.mxu0 %v6448
  %v6524 = vpop.f32.mrf.mxu0
  %v6525 = vadd.f32 %v6442, %v6524
  %v6526 = vpop.f32.mrf.mxu0
  %6527 = vmatprep.mubr.f32.mxu0 0.0
  %6528 = vmatmul.mubr.f32.gmra.mxu0 %v6451
  %v6529 = vpop.f32.mrf.mxu0
  %v6530 = vadd.f32 %v6443, %v6529
  %v6531 = vpop.f32.mrf.mxu0
  %6532 = vdwg.mxu0
  %v6533 = vmul.f32 %v6520, %v103
  %v6534 = vmul.f32 %v6525, %v104
  %v6535 = vmul.f32 %v6530, %v105
  %v6536 = vsel %vm6416, %v6533, -inf
  %v6537 = vsel %vm6416, %v6534, -inf
  %v6538 = vsel %vm6416, %v6535, -inf
  %v6539 = vmax.f32 %v6536, %v6537
  %v6540 = vmax.f32 %v6539, %v6538
  %v6541 = vrot.slane %v6540, 4
  %v6542 = vmax.f32 %v6540, %v6541
  %v6543 = vrot.slane %v6542, 2
  %v6544 = vmax.f32 %v6542, %v6543
  %v6545 = vrot.slane %v6544, 1
  %v6546 = vmax.f32 %v6544, %v6545
  %v6547 = vmax.f32 %v6546, 1.0
  %v6548 = vrcp.pop %v6547
  %v6549 = vmul.f32 %v6533, %v6548
  %v6550 = vmul.f32 %v6534, %v6548
  %v6551 = vmul.f32 %v6535, %v6548
  %6552 = vst.msk [vmem:[%s24] sm:$0xff] %vm338, %v6413
  %6553 = vst.msk [vmem:[%s24 + $0x8] sm:$0xff] %vm338, %v6414
  %6554 = vst.msk [vmem:[%s24 + $0x10] sm:$0xff] %vm338, %v6415
  %6555 = vst.msk [vmem:[%s25] sm:$0xff] %vm6416, %v6549
  %6556 = vst.msk [vmem:[%s25 + $0x8] sm:$0xff] %vm6416, %v6550
  %6557 = vst.msk [vmem:[%s25 + $0x10] sm:$0xff] %vm6416, %v6551
  // Predicated region
  $region94: #{openclip_forward.1} parent=0 // pred_check
    _
  $region95: #{openclip_forward.1} parent=0 // pred_check_branch
    %6559 = sbr.rel (0) target = $region97
  $region96: #{openclip_forward.1} parent=0 // pred_region
    _
  $region97: #{openclip_forward.1} parent=0 // pred_fallthru
    _
  // Predicated region
  $region98: #{openclip_forward.1} parent=0 // pred_check
    _
  $region99: #{openclip_forward.1} parent=0 // pred_check_branch
    %6561 = sbr.rel (0) target = $region101
  $region100: #{openclip_forward.1} parent=0 // pred_region
    _
  $region101: #{openclip_forward.1} parent=0 // pred_fallthru
    _
  // Predicated region
  $region102: #{openclip_forward.1} parent=0 // pred_check
    _
  $region103: #{openclip_forward.1} parent=0 // pred_check_branch
    %6563 = sbr.rel (0) target = $region105
  $region104: #{openclip_forward.1} parent=0 // pred_region
    _
  $region105: #{openclip_forward.1} parent=0 // pred_fallthru
    _
  // Predicated region
  $region106: #{openclip_forward.1} parent=0 // pred_check
    _
  $region107: #{openclip_forward.1} parent=0 // pred_check_branch
    %6565 = sbr.rel (0) target = $region109
  $region108: #{openclip_forward.1} parent=0 // pred_region
    _
  $region109: #{openclip_forward.1} parent=0 // pred_fallthru
    _
  // Predicated region
  $region110: #{openclip_forward.1} parent=0 // pred_check
    _
  $region111: #{openclip_forward.1} parent=0 // pred_check_branch
    %6567 = sbr.rel (0) target = $region113
  $region112: #{openclip_forward.1} parent=0 // pred_region
    _
  $region113: #{openclip_forward.1} parent=0 // pred_fallthru
    _
  // Predicated region
  $region114: #{openclip_forward.1} parent=0 // pred_check
    _
  $region115: #{openclip_forward.1} parent=0 // pred_check_branch
    %6569 = sbr.rel (0) target = $region117
  $region116: #{openclip_forward.1} parent=0 // pred_region
    _
  $region117: #{openclip_forward.1} parent=0 // pred_fallthru
    _

</llo_original>
